<compile_context>
chip_gen: v7x
topology: tpu7x:2x2x1
jax: 0.10.0
libtpu: 0.0.40
codegen_flags: <defaults>
</compile_context>

<pallas_src>
import functools

import jax
import jax.numpy as jnp
from jax.experimental import pallas as pl
from jax.experimental.pallas import tpu as pltpu


def _residual_block_kernel(x_ref, w1_ref, g1_ref, be1_ref, w2_ref, g2_ref, be2_ref,
                           o_ref, xpad_ref, *, alpha, slope, eps):
    """Fused (conv3x3 -> BN -> LeakyReLU -> conv3x3 -> BN) + alpha * x.

    x_ref    : (N, H, W, C)      NHWC input (also the residual)
    w*_ref   : (9*C, C)          im2col-flattened HWIO conv weights
    g*/be*   : (1, C)            BN gamma / beta
    o_ref    : (N*H, W*C)        lane-dense output (last dim is a multiple of 128)
    xpad_ref : (N, H+2, W+2, C)  VMEM scratch holding the zero-padded activation
    """
    N, H, W, C = x_ref.shape
    M = N * H * W
    inv_m = 1.0 / float(M)

    def conv_bn(w_flat, gamma, beta):
        # 3x3 conv (padding already in the scratch) as a single im2col matmul on the MXU.
        taps = []
        for dy in range(3):
            for dx in range(3):
                taps.append(xpad_ref[:, dy:dy + H, dx:dx + W, :].reshape(M, C))
        patches = jnp.concatenate(taps, axis=1)                        # (M, 9C)
        acc = jnp.dot(patches, w_flat,
                      preferred_element_type=jnp.float32)              # (M, C)
        # One-pass BatchNorm statistics (training mode, biased variance).
        s = jnp.sum(acc, axis=0, keepdims=True)
        ss = jnp.sum(acc * acc, axis=0, keepdims=True)
        mean = s * inv_m
        var = ss * inv_m - mean * mean
        return gamma * (acc - mean) * jax.lax.rsqrt(var + eps) + beta  # (M, C)

    x = x_ref[...].astype(jnp.float32)                                 # (N, H, W, C)

    # Zero the padded scratch once; the halo stays zero for both stages.
    xpad_ref[...] = jnp.zeros_like(xpad_ref)

    # ---- stage 1: conv1 + BN1 + LeakyReLU ----
    # (conv bias omitted: a per-channel constant before training-mode BN cancels exactly)
    xpad_ref[:, 1:H + 1, 1:W + 1, :] = x
    h = conv_bn(w1_ref[...].astype(jnp.float32),
                g1_ref[...].astype(jnp.float32),
                be1_ref[...].astype(jnp.float32))
    h = jnp.where(h > 0, h, slope * h)

    # ---- stage 2: conv2 + BN2, reusing the same padded scratch (halo still zero) ----
    xpad_ref[:, 1:H + 1, 1:W + 1, :] = h.reshape(N, H, W, C)
    h = conv_bn(w2_ref[...].astype(jnp.float32),
                g2_ref[...].astype(jnp.float32),
                be2_ref[...].astype(jnp.float32))

    # ---- residual: alpha_l * x + conv_block(x) ----
    out = h + alpha * x.reshape(M, C)                                  # (M, C)
    out4 = out.reshape(N, H, W, C)

    # Lane-dense store: fill the (N*H, W*C) output buffer in W-strips of C lanes. This keeps
    # the HBM output contiguous / 128-wide without relying on a lane-merging register reshape.
    for w in range(W):
        o_ref[:, w * C:(w + 1) * C] = out4[:, :, w, :].reshape(N * H, C).astype(o_ref.dtype)


def residual_block_forward(x_nchw, params, *, alpha_l, leaky_relu_slope=0.2, eps=1e-5):
    """Forward matching ResidualBlock.forward: alpha_l * x + conv_block(x).  x: (N,C,H,W)."""
    N, C, H, W = x_nchw.shape
    x = jnp.transpose(x_nchw, (0, 2, 3, 1))          # NCHW -> NHWC (boundary only)

    # im2col-flatten HWIO weights once: (3,3,Cin,Cout) -> (9*Cin, Cout). Free reshape.
    w1 = params["w1"].reshape(9 * C, C)
    w2 = params["w2"].reshape(9 * C, C)
    # Note: params["b1"]/["b2"] (conv biases) are intentionally NOT passed to the kernel --
    # they cancel exactly under training-mode BatchNorm's mean subtraction.

    kernel = functools.partial(_residual_block_kernel,
                               alpha=float(alpha_l),
                               slope=float(leaky_relu_slope),
                               eps=float(eps))
    vmem = pl.BlockSpec(memory_space=pltpu.MemorySpace.VMEM)

    y2d = pl.pallas_call(
        kernel,
        out_shape=jax.ShapeDtypeStruct((N * H, W * C), jnp.float32),
        in_specs=[vmem] * 7,
        out_specs=vmem,
        scratch_shapes=[pltpu.VMEM((N, H + 2, W + 2, C), jnp.float32)],
    )(x, w1, params["g1"], params["be1"], w2, params["g2"], params["be2"])

    y = y2d.reshape(N, H, W, C)                       # free row-major regroup
    return jnp.transpose(y, (0, 3, 1, 2))             # NHWC -> NCHW


# ----------------------------- pure-JAX reference -----------------------------
def _reference_forward(x_nchw, params, *, alpha_l, slope=0.2, eps=1e-5):
    x = jnp.transpose(x_nchw, (0, 2, 3, 1))
    dn = ("NHWC", "HWIO", "NHWC")

    def conv_bn(inp, w, b, g, be):
        h = jax.lax.conv_general_dilated(inp, w, (1, 1), "SAME",
                                         dimension_numbers=dn) + b
        mean = jnp.mean(h, axis=(0, 1, 2), keepdims=True)
        var = jnp.mean((h - mean) ** 2, axis=(0, 1, 2), keepdims=True)
        return g * (h - mean) * jax.lax.rsqrt(var + eps) + be

    h = conv_bn(x, params["w1"], params["b1"], params["g1"], params["be1"])
    h = jnp.where(h > 0, h, slope * h)
    h = conv_bn(h, params["w2"], params["b2"], params["g2"], params["be2"])
    y = alpha_l * x + h
    return jnp.transpose(y, (0, 3, 1, 2))


def _calculate_alpha_l(depth, total_depth, alpha_min):
    delta_alpha = (1.0 - alpha_min) / total_depth
    return 1.0 - delta_alpha * depth


if __name__ == "__main__":
    # Small shapes consistent with the module: num_filters=8, batch=2, spatial=16.
    N, C, H, W = 2, 8, 16, 16
    depth, total_depth, alpha_min = 2, 4, 0.5
    alpha_l = _calculate_alpha_l(depth, total_depth, alpha_min)   # = 0.75

    key = jax.random.PRNGKey(0)
    kx, k1, k2 = jax.random.split(key, 3)

    x = jax.random.normal(kx, (N, C, H, W), dtype=jnp.float32)

    # Deterministic synthetic parameters (HWIO weights; BN gamma=1, beta=0 as in PyTorch init).
    params = {
        "w1": 0.1 * jax.random.normal(k1, (3, 3, C, C), dtype=jnp.float32),
        "b1": jnp.zeros((1, C), jnp.float32) + 0.01,
        "g1": jnp.ones((1, C), jnp.float32),
        "be1": jnp.zeros((1, C), jnp.float32),
        "w2": 0.1 * jax.random.normal(k2, (3, 3, C, C), dtype=jnp.float32),
        "b2": jnp.zeros((1, C), jnp.float32) - 0.01,
        "g2": jnp.ones((1, C), jnp.float32),
        "be2": jnp.zeros((1, C), jnp.float32),
    }

    out = residual_block_forward(x, params, alpha_l=alpha_l)
    out = jax.block_until_ready(out)
    assert out.shape == (N, C, H, W) and out.dtype == jnp.float32

    ref = jax.block_until_ready(_reference_forward(x, params, alpha_l=alpha_l))
    assert jnp.allclose(out, ref, atol=1e-3, rtol=1e-3), "mismatch vs JAX reference"

    print("KERNEL_OK")
</pallas_src>

<mosaic_0001>
module attributes {stable_mosaic.version = 11 : i64} {
  func.func @_residual_block_kernel(%arg0: memref<2x16x16x8xf32, #tpu.memory_space<vmem>>, %arg1: memref<72x8xf32, #tpu.memory_space<vmem>>, %arg2: memref<1x8xf32, #tpu.memory_space<vmem>>, %arg3: memref<1x8xf32, #tpu.memory_space<vmem>>, %arg4: memref<72x8xf32, #tpu.memory_space<vmem>>, %arg5: memref<1x8xf32, #tpu.memory_space<vmem>>, %arg6: memref<1x8xf32, #tpu.memory_space<vmem>>, %arg7: memref<32x128xf32, #tpu.memory_space<vmem>>, %arg8: memref<2x18x18x8xf32, #tpu.memory_space<vmem>>) attributes {dimension_semantics = [], scalar_prefetch = 0 : i64, scratch_operands = 1 : i64, tpu.core_type = #tpu.core_type<tc>} {
    %c0 = arith.constant 0 : index
    %c0_0 = arith.constant 0 : index
    %c0_1 = arith.constant 0 : index
    %c0_2 = arith.constant 0 : index
    %0 = vector.load %arg0[%c0, %c0_0, %c0_1, %c0_2] : memref<2x16x16x8xf32, #tpu.memory_space<vmem>>, vector<2x16x16x8xf32>
    %cst = arith.constant 0.000000e+00 : f32
    %1 = vector.broadcast %cst : f32 to vector<2x18x18x8xf32>
    %c0_3 = arith.constant 0 : index
    %c0_4 = arith.constant 0 : index
    %c0_5 = arith.constant 0 : index
    %c0_6 = arith.constant 0 : index
    %2 = vector.load %arg8[%c0_3, %c0_4, %c0_5, %c0_6] : memref<2x18x18x8xf32, #tpu.memory_space<vmem>>, vector<2x18x18x8xf32>
    tpu.vector_store %arg8[%c0_3, %c0_4, %c0_5, %c0_6], %1 {strides = array<i32>} : memref<2x18x18x8xf32, #tpu.memory_space<vmem>>, vector<2x18x18x8xf32>,
    %c0_7 = arith.constant 0 : index
    %c1 = arith.constant 1 : index
    %c1_8 = arith.constant 1 : index
    %c0_9 = arith.constant 0 : index
    %3 = vector.load %arg8[%c0_7, %c1, %c1_8, %c0_9] : memref<2x18x18x8xf32, #tpu.memory_space<vmem>>, vector<2x16x16x8xf32>
    tpu.vector_store %arg8[%c0_7, %c1, %c1_8, %c0_9], %0 {strides = array<i32>} : memref<2x18x18x8xf32, #tpu.memory_space<vmem>>, vector<2x16x16x8xf32>,
    %c0_10 = arith.constant 0 : index
    %c0_11 = arith.constant 0 : index
    %4 = vector.load %arg1[%c0_10, %c0_11] : memref<72x8xf32, #tpu.memory_space<vmem>>, vector<72x8xf32>
    %c0_12 = arith.constant 0 : index
    %c0_13 = arith.constant 0 : index
    %5 = vector.load %arg2[%c0_12, %c0_13] : memref<1x8xf32, #tpu.memory_space<vmem>>, vector<1x8xf32>
    %c0_14 = arith.constant 0 : index
    %c0_15 = arith.constant 0 : index
    %6 = vector.load %arg3[%c0_14, %c0_15] : memref<1x8xf32, #tpu.memory_space<vmem>>, vector<1x8xf32>
    %c0_16 = arith.constant 0 : index
    %c0_17 = arith.constant 0 : index
    %c0_18 = arith.constant 0 : index
    %c0_19 = arith.constant 0 : index
    %7 = vector.load %arg8[%c0_16, %c0_17, %c0_18, %c0_19] : memref<2x18x18x8xf32, #tpu.memory_space<vmem>>, vector<2x16x16x8xf32>
    %8 = vector.shape_cast %7 : vector<2x16x16x8xf32> to vector<512x8xf32>
    %c0_20 = arith.constant 0 : index
    %c0_21 = arith.constant 0 : index
    %c1_22 = arith.constant 1 : index
    %c0_23 = arith.constant 0 : index
    %9 = vector.load %arg8[%c0_20, %c0_21, %c1_22, %c0_23] : memref<2x18x18x8xf32, #tpu.memory_space<vmem>>, vector<2x16x16x8xf32>
    %10 = vector.shape_cast %9 : vector<2x16x16x8xf32> to vector<512x8xf32>
    %c0_24 = arith.constant 0 : index
    %c0_25 = arith.constant 0 : index
    %c2 = arith.constant 2 : index
    %c0_26 = arith.constant 0 : index
    %11 = vector.load %arg8[%c0_24, %c0_25, %c2, %c0_26] : memref<2x18x18x8xf32, #tpu.memory_space<vmem>>, vector<2x16x16x8xf32>
    %12 = vector.shape_cast %11 : vector<2x16x16x8xf32> to vector<512x8xf32>
    %c0_27 = arith.constant 0 : index
    %c1_28 = arith.constant 1 : index
    %c0_29 = arith.constant 0 : index
    %c0_30 = arith.constant 0 : index
    %13 = vector.load %arg8[%c0_27, %c1_28, %c0_29, %c0_30] : memref<2x18x18x8xf32, #tpu.memory_space<vmem>>, vector<2x16x16x8xf32>
    %14 = vector.shape_cast %13 : vector<2x16x16x8xf32> to vector<512x8xf32>
    %c0_31 = arith.constant 0 : index
    %c1_32 = arith.constant 1 : index
    %c1_33 = arith.constant 1 : index
    %c0_34 = arith.constant 0 : index
    %15 = vector.load %arg8[%c0_31, %c1_32, %c1_33, %c0_34] : memref<2x18x18x8xf32, #tpu.memory_space<vmem>>, vector<2x16x16x8xf32>
    %16 = vector.shape_cast %15 : vector<2x16x16x8xf32> to vector<512x8xf32>
    %c0_35 = arith.constant 0 : index
    %c1_36 = arith.constant 1 : index
    %c2_37 = arith.constant 2 : index
    %c0_38 = arith.constant 0 : index
    %17 = vector.load %arg8[%c0_35, %c1_36, %c2_37, %c0_38] : memref<2x18x18x8xf32, #tpu.memory_space<vmem>>, vector<2x16x16x8xf32>
    %18 = vector.shape_cast %17 : vector<2x16x16x8xf32> to vector<512x8xf32>
    %c0_39 = arith.constant 0 : index
    %c2_40 = arith.constant 2 : index
    %c0_41 = arith.constant 0 : index
    %c0_42 = arith.constant 0 : index
    %19 = vector.load %arg8[%c0_39, %c2_40, %c0_41, %c0_42] : memref<2x18x18x8xf32, #tpu.memory_space<vmem>>, vector<2x16x16x8xf32>
    %20 = vector.shape_cast %19 : vector<2x16x16x8xf32> to vector<512x8xf32>
    %c0_43 = arith.constant 0 : index
    %c2_44 = arith.constant 2 : index
    %c1_45 = arith.constant 1 : index
    %c0_46 = arith.constant 0 : index
    %21 = vector.load %arg8[%c0_43, %c2_44, %c1_45, %c0_46] : memref<2x18x18x8xf32, #tpu.memory_space<vmem>>, vector<2x16x16x8xf32>
    %22 = vector.shape_cast %21 : vector<2x16x16x8xf32> to vector<512x8xf32>
    %c0_47 = arith.constant 0 : index
    %c2_48 = arith.constant 2 : index
    %c2_49 = arith.constant 2 : index
    %c0_50 = arith.constant 0 : index
    %23 = vector.load %arg8[%c0_47, %c2_48, %c2_49, %c0_50] : memref<2x18x18x8xf32, #tpu.memory_space<vmem>>, vector<2x16x16x8xf32>
    %24 = vector.shape_cast %23 : vector<2x16x16x8xf32> to vector<512x8xf32>
    %25 = tpu.concatenate %8, %10, %12, %14, %16, %18, %20, %22, %24 in 1 : vector<512x8xf32>, vector<512x8xf32>, vector<512x8xf32>, vector<512x8xf32>, vector<512x8xf32>, vector<512x8xf32>, vector<512x8xf32>, vector<512x8xf32>, vector<512x8xf32> -> vector<512x72xf32>
    %cst_51 = arith.constant dense<0.000000e+00> : vector<512x8xf32>
    %26 = tpu.matmul %25, %4, %cst_51 {dimension_numbers = #tpu.dot_dimension_numbers<[1], [0], [0], [1], [0, 0, 1, 1], [], []>} : vector<512x72xf32>, vector<72x8xf32>, vector<512x8xf32> -> vector<512x8xf32>
    %cst_52 = arith.constant dense<0.000000e+00> : vector<8xf32>
    %27 = vector.multi_reduction <add>, %26, %cst_52 [0] : vector<512x8xf32> to vector<8xf32>
    %28 = vector.shape_cast %27 : vector<8xf32> to vector<1x8xf32>
    %29 = arith.mulf %26, %26 : vector<512x8xf32>
    %cst_53 = arith.constant dense<0.000000e+00> : vector<8xf32>
    %30 = vector.multi_reduction <add>, %29, %cst_53 [0] : vector<512x8xf32> to vector<8xf32>
    %31 = vector.shape_cast %30 : vector<8xf32> to vector<1x8xf32>
    %cst_54 = arith.constant 0.001953125 : f32
    %32 = vector.broadcast %cst_54 : f32 to vector<1x8xf32>
    %33 = arith.mulf %28, %32 : vector<1x8xf32>
    %cst_55 = arith.constant 0.001953125 : f32
    %34 = vector.broadcast %cst_55 : f32 to vector<1x8xf32>
    %35 = arith.mulf %31, %34 : vector<1x8xf32>
    %36 = arith.mulf %33, %33 : vector<1x8xf32>
    %37 = arith.subf %35, %36 : vector<1x8xf32>
    %38 = vector.broadcast %33 : vector<1x8xf32> to vector<512x8xf32>
    %39 = arith.subf %26, %38 : vector<512x8xf32>
    %40 = vector.broadcast %5 : vector<1x8xf32> to vector<512x8xf32>
    %41 = arith.mulf %40, %39 : vector<512x8xf32>
    %cst_56 = arith.constant 9.99999974E-6 : f32
    %42 = vector.broadcast %cst_56 : f32 to vector<1x8xf32>
    %43 = arith.addf %37, %42 : vector<1x8xf32>
    %44 = math.rsqrt %43 : vector<1x8xf32>
    %45 = vector.broadcast %44 : vector<1x8xf32> to vector<512x8xf32>
    %46 = arith.mulf %41, %45 : vector<512x8xf32>
    %47 = vector.broadcast %6 : vector<1x8xf32> to vector<512x8xf32>
    %48 = arith.addf %46, %47 : vector<512x8xf32>
    %cst_57 = arith.constant 0.000000e+00 : f32
    %49 = vector.broadcast %cst_57 : f32 to vector<512x8xf32>
    %50 = arith.cmpf ogt, %48, %49 : vector<512x8xf32>
    %cst_58 = arith.constant 2.000000e-01 : f32
    %51 = vector.broadcast %cst_58 : f32 to vector<512x8xf32>
    %52 = arith.mulf %51, %48 : vector<512x8xf32>
    %53 = arith.select %50, %48, %52 : vector<512x8xi1>, vector<512x8xf32>
    %54 = vector.shape_cast %53 : vector<512x8xf32> to vector<2x16x16x8xf32>
    %c0_59 = arith.constant 0 : index
    %c1_60 = arith.constant 1 : index
    %c1_61 = arith.constant 1 : index
    %c0_62 = arith.constant 0 : index
    %55 = vector.load %arg8[%c0_59, %c1_60, %c1_61, %c0_62] : memref<2x18x18x8xf32, #tpu.memory_space<vmem>>, vector<2x16x16x8xf32>
    tpu.vector_store %arg8[%c0_59, %c1_60, %c1_61, %c0_62], %54 {strides = array<i32>} : memref<2x18x18x8xf32, #tpu.memory_space<vmem>>, vector<2x16x16x8xf32>,
    %c0_63 = arith.constant 0 : index
    %c0_64 = arith.constant 0 : index
    %56 = vector.load %arg4[%c0_63, %c0_64] : memref<72x8xf32, #tpu.memory_space<vmem>>, vector<72x8xf32>
    %c0_65 = arith.constant 0 : index
    %c0_66 = arith.constant 0 : index
    %57 = vector.load %arg5[%c0_65, %c0_66] : memref<1x8xf32, #tpu.memory_space<vmem>>, vector<1x8xf32>
    %c0_67 = arith.constant 0 : index
    %c0_68 = arith.constant 0 : index
    %58 = vector.load %arg6[%c0_67, %c0_68] : memref<1x8xf32, #tpu.memory_space<vmem>>, vector<1x8xf32>
    %c0_69 = arith.constant 0 : index
    %c0_70 = arith.constant 0 : index
    %c0_71 = arith.constant 0 : index
    %c0_72 = arith.constant 0 : index
    %59 = vector.load %arg8[%c0_69, %c0_70, %c0_71, %c0_72] : memref<2x18x18x8xf32, #tpu.memory_space<vmem>>, vector<2x16x16x8xf32>
    %60 = vector.shape_cast %59 : vector<2x16x16x8xf32> to vector<512x8xf32>
    %c0_73 = arith.constant 0 : index
    %c0_74 = arith.constant 0 : index
    %c1_75 = arith.constant 1 : index
    %c0_76 = arith.constant 0 : index
    %61 = vector.load %arg8[%c0_73, %c0_74, %c1_75, %c0_76] : memref<2x18x18x8xf32, #tpu.memory_space<vmem>>, vector<2x16x16x8xf32>
    %62 = vector.shape_cast %61 : vector<2x16x16x8xf32> to vector<512x8xf32>
    %c0_77 = arith.constant 0 : index
    %c0_78 = arith.constant 0 : index
    %c2_79 = arith.constant 2 : index
    %c0_80 = arith.constant 0 : index
    %63 = vector.load %arg8[%c0_77, %c0_78, %c2_79, %c0_80] : memref<2x18x18x8xf32, #tpu.memory_space<vmem>>, vector<2x16x16x8xf32>
    %64 = vector.shape_cast %63 : vector<2x16x16x8xf32> to vector<512x8xf32>
    %c0_81 = arith.constant 0 : index
    %c1_82 = arith.constant 1 : index
    %c0_83 = arith.constant 0 : index
    %c0_84 = arith.constant 0 : index
    %65 = vector.load %arg8[%c0_81, %c1_82, %c0_83, %c0_84] : memref<2x18x18x8xf32, #tpu.memory_space<vmem>>, vector<2x16x16x8xf32>
    %66 = vector.shape_cast %65 : vector<2x16x16x8xf32> to vector<512x8xf32>
    %c0_85 = arith.constant 0 : index
    %c1_86 = arith.constant 1 : index
    %c1_87 = arith.constant 1 : index
    %c0_88 = arith.constant 0 : index
    %67 = vector.load %arg8[%c0_85, %c1_86, %c1_87, %c0_88] : memref<2x18x18x8xf32, #tpu.memory_space<vmem>>, vector<2x16x16x8xf32>
    %68 = vector.shape_cast %67 : vector<2x16x16x8xf32> to vector<512x8xf32>
    %c0_89 = arith.constant 0 : index
    %c1_90 = arith.constant 1 : index
    %c2_91 = arith.constant 2 : index
    %c0_92 = arith.constant 0 : index
    %69 = vector.load %arg8[%c0_89, %c1_90, %c2_91, %c0_92] : memref<2x18x18x8xf32, #tpu.memory_space<vmem>>, vector<2x16x16x8xf32>
    %70 = vector.shape_cast %69 : vector<2x16x16x8xf32> to vector<512x8xf32>
    %c0_93 = arith.constant 0 : index
    %c2_94 = arith.constant 2 : index
    %c0_95 = arith.constant 0 : index
    %c0_96 = arith.constant 0 : index
    %71 = vector.load %arg8[%c0_93, %c2_94, %c0_95, %c0_96] : memref<2x18x18x8xf32, #tpu.memory_space<vmem>>, vector<2x16x16x8xf32>
    %72 = vector.shape_cast %71 : vector<2x16x16x8xf32> to vector<512x8xf32>
    %c0_97 = arith.constant 0 : index
    %c2_98 = arith.constant 2 : index
    %c1_99 = arith.constant 1 : index
    %c0_100 = arith.constant 0 : index
    %73 = vector.load %arg8[%c0_97, %c2_98, %c1_99, %c0_100] : memref<2x18x18x8xf32, #tpu.memory_space<vmem>>, vector<2x16x16x8xf32>
    %74 = vector.shape_cast %73 : vector<2x16x16x8xf32> to vector<512x8xf32>
    %c0_101 = arith.constant 0 : index
    %c2_102 = arith.constant 2 : index
    %c2_103 = arith.constant 2 : index
    %c0_104 = arith.constant 0 : index
    %75 = vector.load %arg8[%c0_101, %c2_102, %c2_103, %c0_104] : memref<2x18x18x8xf32, #tpu.memory_space<vmem>>, vector<2x16x16x8xf32>
    %76 = vector.shape_cast %75 : vector<2x16x16x8xf32> to vector<512x8xf32>
    %77 = tpu.concatenate %60, %62, %64, %66, %68, %70, %72, %74, %76 in 1 : vector<512x8xf32>, vector<512x8xf32>, vector<512x8xf32>, vector<512x8xf32>, vector<512x8xf32>, vector<512x8xf32>, vector<512x8xf32>, vector<512x8xf32>, vector<512x8xf32> -> vector<512x72xf32>
    %cst_105 = arith.constant dense<0.000000e+00> : vector<512x8xf32>
    %78 = tpu.matmul %77, %56, %cst_105 {dimension_numbers = #tpu.dot_dimension_numbers<[1], [0], [0], [1], [0, 0, 1, 1], [], []>} : vector<512x72xf32>, vector<72x8xf32>, vector<512x8xf32> -> vector<512x8xf32>
    %cst_106 = arith.constant dense<0.000000e+00> : vector<8xf32>
    %79 = vector.multi_reduction <add>, %78, %cst_106 [0] : vector<512x8xf32> to vector<8xf32>
    %80 = vector.shape_cast %79 : vector<8xf32> to vector<1x8xf32>
    %81 = arith.mulf %78, %78 : vector<512x8xf32>
    %cst_107 = arith.constant dense<0.000000e+00> : vector<8xf32>
    %82 = vector.multi_reduction <add>, %81, %cst_107 [0] : vector<512x8xf32> to vector<8xf32>
    %83 = vector.shape_cast %82 : vector<8xf32> to vector<1x8xf32>
    %cst_108 = arith.constant 0.001953125 : f32
    %84 = vector.broadcast %cst_108 : f32 to vector<1x8xf32>
    %85 = arith.mulf %80, %84 : vector<1x8xf32>
    %cst_109 = arith.constant 0.001953125 : f32
    %86 = vector.broadcast %cst_109 : f32 to vector<1x8xf32>
    %87 = arith.mulf %83, %86 : vector<1x8xf32>
    %88 = arith.mulf %85, %85 : vector<1x8xf32>
    %89 = arith.subf %87, %88 : vector<1x8xf32>
    %90 = vector.broadcast %85 : vector<1x8xf32> to vector<512x8xf32>
    %91 = arith.subf %78, %90 : vector<512x8xf32>
    %92 = vector.broadcast %57 : vector<1x8xf32> to vector<512x8xf32>
    %93 = arith.mulf %92, %91 : vector<512x8xf32>
    %cst_110 = arith.constant 9.99999974E-6 : f32
    %94 = vector.broadcast %cst_110 : f32 to vector<1x8xf32>
    %95 = arith.addf %89, %94 : vector<1x8xf32>
    %96 = math.rsqrt %95 : vector<1x8xf32>
    %97 = vector.broadcast %96 : vector<1x8xf32> to vector<512x8xf32>
    %98 = arith.mulf %93, %97 : vector<512x8xf32>
    %99 = vector.broadcast %58 : vector<1x8xf32> to vector<512x8xf32>
    %100 = arith.addf %98, %99 : vector<512x8xf32>
    %101 = vector.shape_cast %0 : vector<2x16x16x8xf32> to vector<512x8xf32>
    %cst_111 = arith.constant 7.500000e-01 : f32
    %102 = vector.broadcast %cst_111 : f32 to vector<512x8xf32>
    %103 = arith.mulf %102, %101 : vector<512x8xf32>
    %104 = arith.addf %100, %103 : vector<512x8xf32>
    %105 = vector.shape_cast %104 : vector<512x8xf32> to vector<2x16x16x8xf32>
    %106 = vector.extract_strided_slice %105 {offsets = [0, 0, 0, 0], sizes = [2, 16, 1, 8], strides = [1, 1, 1, 1]} : vector<2x16x16x8xf32> to vector<2x16x1x8xf32>
    %107 = vector.shape_cast %106 : vector<2x16x1x8xf32> to vector<2x16x8xf32>
    %108 = vector.shape_cast %107 : vector<2x16x8xf32> to vector<32x8xf32>
    %c0_112 = arith.constant 0 : index
    %c0_113 = arith.constant 0 : index
    %109 = vector.load %arg7[%c0_112, %c0_113] : memref<32x128xf32, #tpu.memory_space<vmem>>, vector<32x8xf32>
    tpu.vector_store %arg7[%c0_112, %c0_113], %108 {strides = array<i32>} : memref<32x128xf32, #tpu.memory_space<vmem>>, vector<32x8xf32>,
    %110 = vector.extract_strided_slice %105 {offsets = [0, 0, 1, 0], sizes = [2, 16, 1, 8], strides = [1, 1, 1, 1]} : vector<2x16x16x8xf32> to vector<2x16x1x8xf32>
    %111 = vector.shape_cast %110 : vector<2x16x1x8xf32> to vector<2x16x8xf32>
    %112 = vector.shape_cast %111 : vector<2x16x8xf32> to vector<32x8xf32>
    %c0_114 = arith.constant 0 : index
    %c8 = arith.constant 8 : index
    %113 = vector.load %arg7[%c0_114, %c8] : memref<32x128xf32, #tpu.memory_space<vmem>>, vector<32x8xf32>
    tpu.vector_store %arg7[%c0_114, %c8], %112 {strides = array<i32>} : memref<32x128xf32, #tpu.memory_space<vmem>>, vector<32x8xf32>,
    %114 = vector.extract_strided_slice %105 {offsets = [0, 0, 2, 0], sizes = [2, 16, 1, 8], strides = [1, 1, 1, 1]} : vector<2x16x16x8xf32> to vector<2x16x1x8xf32>
    %115 = vector.shape_cast %114 : vector<2x16x1x8xf32> to vector<2x16x8xf32>
    %116 = vector.shape_cast %115 : vector<2x16x8xf32> to vector<32x8xf32>
    %c0_115 = arith.constant 0 : index
    %c16 = arith.constant 16 : index
    %117 = vector.load %arg7[%c0_115, %c16] : memref<32x128xf32, #tpu.memory_space<vmem>>, vector<32x8xf32>
    tpu.vector_store %arg7[%c0_115, %c16], %116 {strides = array<i32>} : memref<32x128xf32, #tpu.memory_space<vmem>>, vector<32x8xf32>,
    %118 = vector.extract_strided_slice %105 {offsets = [0, 0, 3, 0], sizes = [2, 16, 1, 8], strides = [1, 1, 1, 1]} : vector<2x16x16x8xf32> to vector<2x16x1x8xf32>
    %119 = vector.shape_cast %118 : vector<2x16x1x8xf32> to vector<2x16x8xf32>
    %120 = vector.shape_cast %119 : vector<2x16x8xf32> to vector<32x8xf32>
    %c0_116 = arith.constant 0 : index
    %c24 = arith.constant 24 : index
    %121 = vector.load %arg7[%c0_116, %c24] : memref<32x128xf32, #tpu.memory_space<vmem>>, vector<32x8xf32>
    tpu.vector_store %arg7[%c0_116, %c24], %120 {strides = array<i32>} : memref<32x128xf32, #tpu.memory_space<vmem>>, vector<32x8xf32>,
    %122 = vector.extract_strided_slice %105 {offsets = [0, 0, 4, 0], sizes = [2, 16, 1, 8], strides = [1, 1, 1, 1]} : vector<2x16x16x8xf32> to vector<2x16x1x8xf32>
    %123 = vector.shape_cast %122 : vector<2x16x1x8xf32> to vector<2x16x8xf32>
    %124 = vector.shape_cast %123 : vector<2x16x8xf32> to vector<32x8xf32>
    %c0_117 = arith.constant 0 : index
    %c32 = arith.constant 32 : index
    %125 = vector.load %arg7[%c0_117, %c32] : memref<32x128xf32, #tpu.memory_space<vmem>>, vector<32x8xf32>
    tpu.vector_store %arg7[%c0_117, %c32], %124 {strides = array<i32>} : memref<32x128xf32, #tpu.memory_space<vmem>>, vector<32x8xf32>,
    %126 = vector.extract_strided_slice %105 {offsets = [0, 0, 5, 0], sizes = [2, 16, 1, 8], strides = [1, 1, 1, 1]} : vector<2x16x16x8xf32> to vector<2x16x1x8xf32>
    %127 = vector.shape_cast %126 : vector<2x16x1x8xf32> to vector<2x16x8xf32>
    %128 = vector.shape_cast %127 : vector<2x16x8xf32> to vector<32x8xf32>
    %c0_118 = arith.constant 0 : index
    %c40 = arith.constant 40 : index
    %129 = vector.load %arg7[%c0_118, %c40] : memref<32x128xf32, #tpu.memory_space<vmem>>, vector<32x8xf32>
    tpu.vector_store %arg7[%c0_118, %c40], %128 {strides = array<i32>} : memref<32x128xf32, #tpu.memory_space<vmem>>, vector<32x8xf32>,
    %130 = vector.extract_strided_slice %105 {offsets = [0, 0, 6, 0], sizes = [2, 16, 1, 8], strides = [1, 1, 1, 1]} : vector<2x16x16x8xf32> to vector<2x16x1x8xf32>
    %131 = vector.shape_cast %130 : vector<2x16x1x8xf32> to vector<2x16x8xf32>
    %132 = vector.shape_cast %131 : vector<2x16x8xf32> to vector<32x8xf32>
    %c0_119 = arith.constant 0 : index
    %c48 = arith.constant 48 : index
    %133 = vector.load %arg7[%c0_119, %c48] : memref<32x128xf32, #tpu.memory_space<vmem>>, vector<32x8xf32>
    tpu.vector_store %arg7[%c0_119, %c48], %132 {strides = array<i32>} : memref<32x128xf32, #tpu.memory_space<vmem>>, vector<32x8xf32>,
    %134 = vector.extract_strided_slice %105 {offsets = [0, 0, 7, 0], sizes = [2, 16, 1, 8], strides = [1, 1, 1, 1]} : vector<2x16x16x8xf32> to vector<2x16x1x8xf32>
    %135 = vector.shape_cast %134 : vector<2x16x1x8xf32> to vector<2x16x8xf32>
    %136 = vector.shape_cast %135 : vector<2x16x8xf32> to vector<32x8xf32>
    %c0_120 = arith.constant 0 : index
    %c56 = arith.constant 56 : index
    %137 = vector.load %arg7[%c0_120, %c56] : memref<32x128xf32, #tpu.memory_space<vmem>>, vector<32x8xf32>
    tpu.vector_store %arg7[%c0_120, %c56], %136 {strides = array<i32>} : memref<32x128xf32, #tpu.memory_space<vmem>>, vector<32x8xf32>,
    %138 = vector.extract_strided_slice %105 {offsets = [0, 0, 8, 0], sizes = [2, 16, 1, 8], strides = [1, 1, 1, 1]} : vector<2x16x16x8xf32> to vector<2x16x1x8xf32>
    %139 = vector.shape_cast %138 : vector<2x16x1x8xf32> to vector<2x16x8xf32>
    %140 = vector.shape_cast %139 : vector<2x16x8xf32> to vector<32x8xf32>
    %c0_121 = arith.constant 0 : index
    %c64 = arith.constant 64 : index
    %141 = vector.load %arg7[%c0_121, %c64] : memref<32x128xf32, #tpu.memory_space<vmem>>, vector<32x8xf32>
    tpu.vector_store %arg7[%c0_121, %c64], %140 {strides = array<i32>} : memref<32x128xf32, #tpu.memory_space<vmem>>, vector<32x8xf32>,
    %142 = vector.extract_strided_slice %105 {offsets = [0, 0, 9, 0], sizes = [2, 16, 1, 8], strides = [1, 1, 1, 1]} : vector<2x16x16x8xf32> to vector<2x16x1x8xf32>
    %143 = vector.shape_cast %142 : vector<2x16x1x8xf32> to vector<2x16x8xf32>
    %144 = vector.shape_cast %143 : vector<2x16x8xf32> to vector<32x8xf32>
    %c0_122 = arith.constant 0 : index
    %c72 = arith.constant 72 : index
    %145 = vector.load %arg7[%c0_122, %c72] : memref<32x128xf32, #tpu.memory_space<vmem>>, vector<32x8xf32>
    tpu.vector_store %arg7[%c0_122, %c72], %144 {strides = array<i32>} : memref<32x128xf32, #tpu.memory_space<vmem>>, vector<32x8xf32>,
    %146 = vector.extract_strided_slice %105 {offsets = [0, 0, 10, 0], sizes = [2, 16, 1, 8], strides = [1, 1, 1, 1]} : vector<2x16x16x8xf32> to vector<2x16x1x8xf32>
    %147 = vector.shape_cast %146 : vector<2x16x1x8xf32> to vector<2x16x8xf32>
    %148 = vector.shape_cast %147 : vector<2x16x8xf32> to vector<32x8xf32>
    %c0_123 = arith.constant 0 : index
    %c80 = arith.constant 80 : index
    %149 = vector.load %arg7[%c0_123, %c80] : memref<32x128xf32, #tpu.memory_space<vmem>>, vector<32x8xf32>
    tpu.vector_store %arg7[%c0_123, %c80], %148 {strides = array<i32>} : memref<32x128xf32, #tpu.memory_space<vmem>>, vector<32x8xf32>,
    %150 = vector.extract_strided_slice %105 {offsets = [0, 0, 11, 0], sizes = [2, 16, 1, 8], strides = [1, 1, 1, 1]} : vector<2x16x16x8xf32> to vector<2x16x1x8xf32>
    %151 = vector.shape_cast %150 : vector<2x16x1x8xf32> to vector<2x16x8xf32>
    %152 = vector.shape_cast %151 : vector<2x16x8xf32> to vector<32x8xf32>
    %c0_124 = arith.constant 0 : index
    %c88 = arith.constant 88 : index
    %153 = vector.load %arg7[%c0_124, %c88] : memref<32x128xf32, #tpu.memory_space<vmem>>, vector<32x8xf32>
    tpu.vector_store %arg7[%c0_124, %c88], %152 {strides = array<i32>} : memref<32x128xf32, #tpu.memory_space<vmem>>, vector<32x8xf32>,
    %154 = vector.extract_strided_slice %105 {offsets = [0, 0, 12, 0], sizes = [2, 16, 1, 8], strides = [1, 1, 1, 1]} : vector<2x16x16x8xf32> to vector<2x16x1x8xf32>
    %155 = vector.shape_cast %154 : vector<2x16x1x8xf32> to vector<2x16x8xf32>
    %156 = vector.shape_cast %155 : vector<2x16x8xf32> to vector<32x8xf32>
    %c0_125 = arith.constant 0 : index
    %c96 = arith.constant 96 : index
    %157 = vector.load %arg7[%c0_125, %c96] : memref<32x128xf32, #tpu.memory_space<vmem>>, vector<32x8xf32>
    tpu.vector_store %arg7[%c0_125, %c96], %156 {strides = array<i32>} : memref<32x128xf32, #tpu.memory_space<vmem>>, vector<32x8xf32>,
    %158 = vector.extract_strided_slice %105 {offsets = [0, 0, 13, 0], sizes = [2, 16, 1, 8], strides = [1, 1, 1, 1]} : vector<2x16x16x8xf32> to vector<2x16x1x8xf32>
    %159 = vector.shape_cast %158 : vector<2x16x1x8xf32> to vector<2x16x8xf32>
    %160 = vector.shape_cast %159 : vector<2x16x8xf32> to vector<32x8xf32>
    %c0_126 = arith.constant 0 : index
    %c104 = arith.constant 104 : index
    %161 = vector.load %arg7[%c0_126, %c104] : memref<32x128xf32, #tpu.memory_space<vmem>>, vector<32x8xf32>
    tpu.vector_store %arg7[%c0_126, %c104], %160 {strides = array<i32>} : memref<32x128xf32, #tpu.memory_space<vmem>>, vector<32x8xf32>,
    %162 = vector.extract_strided_slice %105 {offsets = [0, 0, 14, 0], sizes = [2, 16, 1, 8], strides = [1, 1, 1, 1]} : vector<2x16x16x8xf32> to vector<2x16x1x8xf32>
    %163 = vector.shape_cast %162 : vector<2x16x1x8xf32> to vector<2x16x8xf32>
    %164 = vector.shape_cast %163 : vector<2x16x8xf32> to vector<32x8xf32>
    %c0_127 = arith.constant 0 : index
    %c112 = arith.constant 112 : index
    %165 = vector.load %arg7[%c0_127, %c112] : memref<32x128xf32, #tpu.memory_space<vmem>>, vector<32x8xf32>
    tpu.vector_store %arg7[%c0_127, %c112], %164 {strides = array<i32>} : memref<32x128xf32, #tpu.memory_space<vmem>>, vector<32x8xf32>,
    %166 = vector.extract_strided_slice %105 {offsets = [0, 0, 15, 0], sizes = [2, 16, 1, 8], strides = [1, 1, 1, 1]} : vector<2x16x16x8xf32> to vector<2x16x1x8xf32>
    %167 = vector.shape_cast %166 : vector<2x16x1x8xf32> to vector<2x16x8xf32>
    %168 = vector.shape_cast %167 : vector<2x16x8xf32> to vector<32x8xf32>
    %c0_128 = arith.constant 0 : index
    %c120 = arith.constant 120 : index
    %169 = vector.load %arg7[%c0_128, %c120] : memref<32x128xf32, #tpu.memory_space<vmem>>, vector<32x8xf32>
    tpu.vector_store %arg7[%c0_128, %c120], %168 {strides = array<i32>} : memref<32x128xf32, #tpu.memory_space<vmem>>, vector<32x8xf32>,
    return
  }
}

</mosaic_0001>

<llo_original>
// kernel: tpu_custom_call.1
$region0: #{tpu_custom_call.1}
  #allocation0 [shape = 'u32[]', space=smem, size = 0x4, offset = 0x4, fixed_abs, tag = 'smem constant byte address 0x4 - core index']
  #allocation1 [shape = 'u32[144,128]{1,0:T(1,128)}', space=vmem, size = 0x12000, scoped, tag = 'internal scratch']
  #allocation2 [shape = 'f32[2,18,18,8]{3,2,1,0:T(8,128)}', space=vmem, size = 0x6c000, scoped, tag = 'scratch operand']
  %s0 = inlined_call_operand.vmem [shape: f32[2,16,16,8], index: 0, kind: input, shape index: {}]
  %s1 = inlined_call_operand.vmem [shape: f32[72,8], index: 1, kind: input, shape index: {}]
  %s2 = inlined_call_operand.vmem [shape: f32[1,8], index: 2, kind: input, shape index: {}]
  %s3 = inlined_call_operand.vmem [shape: f32[1,8], index: 3, kind: input, shape index: {}]
  %s4 = inlined_call_operand.vmem [shape: f32[72,8], index: 4, kind: input, shape index: {}]
  %s5 = inlined_call_operand.vmem [shape: f32[1,8], index: 5, kind: input, shape index: {}]
  %s6 = inlined_call_operand.vmem [shape: f32[1,8], index: 6, kind: input, shape index: {}]
  %s7 = inlined_call_operand.hbm [shape: f32[32,128], index: 7, kind: output, shape index: {}]
  %s8 = sld [smem:[#allocation0]]
  $region38: #{tpu_custom_call.1} parent=0
    _
  %s10 = ssub.s32 1, %s8
  %s11 = scalar_select 0, %s10, %s8
  $region1: #{tpu_custom_call.1} parent=0
    #allocation3 [shape = 'u8[16384]{0}', space=vmem, size = 0x4000, scoped, tag = 'output window, operand 0, single buffered']
    #allocation4 [shape = 's32[1]{0}', space=sflag, size = 0x4, scoped, tag = 'scoped memory for tpu_custom_call.1']
    %12 = vsyncpa [#allocation4], 0
    // Predicated region
    $region2: #{tpu_custom_call.1} parent=1 // pred_check
      _
    $region3: #{tpu_custom_call.1} parent=1 // pred_check_branch
      %14 = sbr.rel (0) target = $region5
    $region4: #{tpu_custom_call.1} parent=1 // pred_region
      _
    $region5: #{tpu_custom_call.1} parent=1 // pred_fallthru
      _
    // Predicated region
    $region6: #{tpu_custom_call.1} parent=1 // pred_check
      _
    $region7: #{tpu_custom_call.1} parent=1 // pred_check_branch
      %16 = sbr.rel (0) target = $region9
    $region8: #{tpu_custom_call.1} parent=1 // pred_region
      _
    $region9: #{tpu_custom_call.1} parent=1 // pred_fallthru
      _
    // Predicated region
    $region10: #{tpu_custom_call.1} parent=1 // pred_check
      _
    $region11: #{tpu_custom_call.1} parent=1 // pred_check_branch
      %18 = sbr.rel (0) target = $region13
    $region12: #{tpu_custom_call.1} parent=1 // pred_region
      _
    $region13: #{tpu_custom_call.1} parent=1 // pred_fallthru
      _
    // Predicated region
    $region14: #{tpu_custom_call.1} parent=1 // pred_check
      _
    $region15: #{tpu_custom_call.1} parent=1 // pred_check_branch
      %20 = sbr.rel (0) target = $region17
    $region16: #{tpu_custom_call.1} parent=1 // pred_region
      _
    $region17: #{tpu_custom_call.1} parent=1 // pred_fallthru
      _
    // Predicated region
    $region18: #{tpu_custom_call.1} parent=1 // pred_check
      _
    $region19: #{tpu_custom_call.1} parent=1 // pred_check_branch
      %22 = sbr.rel (0) target = $region21
    $region20: #{tpu_custom_call.1} parent=1 // pred_region
      _
    $region21: #{tpu_custom_call.1} parent=1 // pred_fallthru
      _
    // Predicated region
    $region22: #{tpu_custom_call.1} parent=1 // pred_check
      _
    $region23: #{tpu_custom_call.1} parent=1 // pred_check_branch
      %24 = sbr.rel (0) target = $region25
    $region24: #{tpu_custom_call.1} parent=1 // pred_region
      _
    $region25: #{tpu_custom_call.1} parent=1 // pred_fallthru
      _
    // Predicated region
    $region26: #{tpu_custom_call.1} parent=1 // pred_check
      _
    $region27: #{tpu_custom_call.1} parent=1 // pred_check_branch
      %26 = sbr.rel (0) target = $region29
    $region28: #{tpu_custom_call.1} parent=1 // pred_region
      _
    $region29: #{tpu_custom_call.1} parent=1 // pred_fallthru
      _
    %v27 = vld [vmem:[%s0] sm:$0xff]
    %v28 = vld [vmem:[%s0 + $0x8] sm:$0xff]
    %v29 = vld [vmem:[%s0 + $0x10] sm:$0xff]
    %v30 = vld [vmem:[%s0 + $0x18] sm:$0xff]
    %v31 = vld [vmem:[%s0 + $0x20] sm:$0xff]
    %v32 = vld [vmem:[%s0 + $0x28] sm:$0xff]
    %v33 = vld [vmem:[%s0 + $0x30] sm:$0xff]
    %v34 = vld [vmem:[%s0 + $0x38] sm:$0xff]
    %v35 = vld [vmem:[%s0 + $0x40] sm:$0xff]
    %v36 = vld [vmem:[%s0 + $0x48] sm:$0xff]
    %v37 = vld [vmem:[%s0 + $0x50] sm:$0xff]
    %v38 = vld [vmem:[%s0 + $0x58] sm:$0xff]
    %v39 = vld [vmem:[%s0 + $0x60] sm:$0xff]
    %v40 = vld [vmem:[%s0 + $0x68] sm:$0xff]
    %v41 = vld [vmem:[%s0 + $0x70] sm:$0xff]
    %v42 = vld [vmem:[%s0 + $0x78] sm:$0xff]
    %v43 = vld [vmem:[%s0 + $0x80] sm:$0xff]
    %v44 = vld [vmem:[%s0 + $0x88] sm:$0xff]
    %v45 = vld [vmem:[%s0 + $0x90] sm:$0xff]
    %v46 = vld [vmem:[%s0 + $0x98] sm:$0xff]
    %v47 = vld [vmem:[%s0 + $0xa0] sm:$0xff]
    %v48 = vld [vmem:[%s0 + $0xa8] sm:$0xff]
    %v49 = vld [vmem:[%s0 + $0xb0] sm:$0xff]
    %v50 = vld [vmem:[%s0 + $0xb8] sm:$0xff]
    %v51 = vld [vmem:[%s0 + $0xc0] sm:$0xff]
    %v52 = vld [vmem:[%s0 + $0xc8] sm:$0xff]
    %v53 = vld [vmem:[%s0 + $0xd0] sm:$0xff]
    %v54 = vld [vmem:[%s0 + $0xd8] sm:$0xff]
    %v55 = vld [vmem:[%s0 + $0xe0] sm:$0xff]
    %v56 = vld [vmem:[%s0 + $0xe8] sm:$0xff]
    %v57 = vld [vmem:[%s0 + $0xf0] sm:$0xff]
    %v58 = vld [vmem:[%s0 + $0xf8] sm:$0xff]
    %v59 = vld [vmem:[%s0 + $0x100] sm:$0xff]
    %v60 = vld [vmem:[%s0 + $0x108] sm:$0xff]
    %v61 = vld [vmem:[%s0 + $0x110] sm:$0xff]
    %v62 = vld [vmem:[%s0 + $0x118] sm:$0xff]
    %v63 = vld [vmem:[%s0 + $0x120] sm:$0xff]
    %v64 = vld [vmem:[%s0 + $0x128] sm:$0xff]
    %v65 = vld [vmem:[%s0 + $0x130] sm:$0xff]
    %v66 = vld [vmem:[%s0 + $0x138] sm:$0xff]
    %v67 = vld [vmem:[%s0 + $0x140] sm:$0xff]
    %v68 = vld [vmem:[%s0 + $0x148] sm:$0xff]
    %v69 = vld [vmem:[%s0 + $0x150] sm:$0xff]
    %v70 = vld [vmem:[%s0 + $0x158] sm:$0xff]
    %v71 = vld [vmem:[%s0 + $0x160] sm:$0xff]
    %v72 = vld [vmem:[%s0 + $0x168] sm:$0xff]
    %v73 = vld [vmem:[%s0 + $0x170] sm:$0xff]
    %v74 = vld [vmem:[%s0 + $0x178] sm:$0xff]
    %v75 = vld [vmem:[%s0 + $0x180] sm:$0xff]
    %v76 = vld [vmem:[%s0 + $0x188] sm:$0xff]
    %v77 = vld [vmem:[%s0 + $0x190] sm:$0xff]
    %v78 = vld [vmem:[%s0 + $0x198] sm:$0xff]
    %v79 = vld [vmem:[%s0 + $0x1a0] sm:$0xff]
    %v80 = vld [vmem:[%s0 + $0x1a8] sm:$0xff]
    %v81 = vld [vmem:[%s0 + $0x1b0] sm:$0xff]
    %v82 = vld [vmem:[%s0 + $0x1b8] sm:$0xff]
    %v83 = vld [vmem:[%s0 + $0x1c0] sm:$0xff]
    %v84 = vld [vmem:[%s0 + $0x1c8] sm:$0xff]
    %v85 = vld [vmem:[%s0 + $0x1d0] sm:$0xff]
    %v86 = vld [vmem:[%s0 + $0x1d8] sm:$0xff]
    %v87 = vld [vmem:[%s0 + $0x1e0] sm:$0xff]
    %v88 = vld [vmem:[%s0 + $0x1e8] sm:$0xff]
    %v89 = vld [vmem:[%s0 + $0x1f0] sm:$0xff]
    %v90 = vld [vmem:[%s0 + $0x1f8] sm:$0xff]
    %vm91 = vcmask 64512
    %92 = vst.msk [vmem:[#allocation2] sm:$0xff] %vm91, 0.0
    %93 = vst.msk [vmem:[#allocation2 + $0x8] sm:$0xff] %vm91, 0.0
    %vm94 = vcmask 58368
    %95 = vst.msk [vmem:[#allocation2 + $0x10] sm:$0x3] %vm94, 0.0
    %96 = vst.msk [vmem:[#allocation2 + $0x18] sm:$0xff] %vm91, 0.0
    %97 = vst.msk [vmem:[#allocation2 + $0x20] sm:$0xff] %vm91, 0.0
    %98 = vst.msk [vmem:[#allocation2 + $0x28] sm:$0x3] %vm94, 0.0
    %99 = vst.msk [vmem:[#allocation2 + $0x30] sm:$0xff] %vm91, 0.0
    %100 = vst.msk [vmem:[#allocation2 + $0x38] sm:$0xff] %vm91, 0.0
    %101 = vst.msk [vmem:[#allocation2 + $0x40] sm:$0x3] %vm94, 0.0
    %102 = vst.msk [vmem:[#allocation2 + $0x48] sm:$0xff] %vm91, 0.0
    %103 = vst.msk [vmem:[#allocation2 + $0x50] sm:$0xff] %vm91, 0.0
    %104 = vst.msk [vmem:[#allocation2 + $0x58] sm:$0x3] %vm94, 0.0
    %105 = vst.msk [vmem:[#allocation2 + $0x60] sm:$0xff] %vm91, 0.0
    %106 = vst.msk [vmem:[#allocation2 + $0x68] sm:$0xff] %vm91, 0.0
    %107 = vst.msk [vmem:[#allocation2 + $0x70] sm:$0x3] %vm94, 0.0
    %108 = vst.msk [vmem:[#allocation2 + $0x78] sm:$0xff] %vm91, 0.0
    %109 = vst.msk [vmem:[#allocation2 + $0x80] sm:$0xff] %vm91, 0.0
    %110 = vst.msk [vmem:[#allocation2 + $0x88] sm:$0x3] %vm94, 0.0
    %111 = vst.msk [vmem:[#allocation2 + $0x90] sm:$0xff] %vm91, 0.0
    %112 = vst.msk [vmem:[#allocation2 + $0x98] sm:$0xff] %vm91, 0.0
    %113 = vst.msk [vmem:[#allocation2 + $0xa0] sm:$0x3] %vm94, 0.0
    %114 = vst.msk [vmem:[#allocation2 + $0xa8] sm:$0xff] %vm91, 0.0
    %115 = vst.msk [vmem:[#allocation2 + $0xb0] sm:$0xff] %vm91, 0.0
    %116 = vst.msk [vmem:[#allocation2 + $0xb8] sm:$0x3] %vm94, 0.0
    %117 = vst.msk [vmem:[#allocation2 + $0xc0] sm:$0xff] %vm91, 0.0
    %118 = vst.msk [vmem:[#allocation2 + $0xc8] sm:$0xff] %vm91, 0.0
    %119 = vst.msk [vmem:[#allocation2 + $0xd0] sm:$0x3] %vm94, 0.0
    %120 = vst.msk [vmem:[#allocation2 + $0xd8] sm:$0xff] %vm91, 0.0
    %121 = vst.msk [vmem:[#allocation2 + $0xe0] sm:$0xff] %vm91, 0.0
    %122 = vst.msk [vmem:[#allocation2 + $0xe8] sm:$0x3] %vm94, 0.0
    %123 = vst.msk [vmem:[#allocation2 + $0xf0] sm:$0xff] %vm91, 0.0
    %124 = vst.msk [vmem:[#allocation2 + $0xf8] sm:$0xff] %vm91, 0.0
    %125 = vst.msk [vmem:[#allocation2 + $0x100] sm:$0x3] %vm94, 0.0
    %126 = vst.msk [vmem:[#allocation2 + $0x108] sm:$0xff] %vm91, 0.0
    %127 = vst.msk [vmem:[#allocation2 + $0x110] sm:$0xff] %vm91, 0.0
    %128 = vst.msk [vmem:[#allocation2 + $0x118] sm:$0x3] %vm94, 0.0
    %129 = vst.msk [vmem:[#allocation2 + $0x120] sm:$0xff] %vm91, 0.0
    %130 = vst.msk [vmem:[#allocation2 + $0x128] sm:$0xff] %vm91, 0.0
    %131 = vst.msk [vmem:[#allocation2 + $0x130] sm:$0x3] %vm94, 0.0
    %132 = vst.msk [vmem:[#allocation2 + $0x138] sm:$0xff] %vm91, 0.0
    %133 = vst.msk [vmem:[#allocation2 + $0x140] sm:$0xff] %vm91, 0.0
    %134 = vst.msk [vmem:[#allocation2 + $0x148] sm:$0x3] %vm94, 0.0
    %135 = vst.msk [vmem:[#allocation2 + $0x150] sm:$0xff] %vm91, 0.0
    %136 = vst.msk [vmem:[#allocation2 + $0x158] sm:$0xff] %vm91, 0.0
    %137 = vst.msk [vmem:[#allocation2 + $0x160] sm:$0x3] %vm94, 0.0
    %138 = vst.msk [vmem:[#allocation2 + $0x168] sm:$0xff] %vm91, 0.0
    %139 = vst.msk [vmem:[#allocation2 + $0x170] sm:$0xff] %vm91, 0.0
    %140 = vst.msk [vmem:[#allocation2 + $0x178] sm:$0x3] %vm94, 0.0
    %141 = vst.msk [vmem:[#allocation2 + $0x180] sm:$0xff] %vm91, 0.0
    %142 = vst.msk [vmem:[#allocation2 + $0x188] sm:$0xff] %vm91, 0.0
    %143 = vst.msk [vmem:[#allocation2 + $0x190] sm:$0x3] %vm94, 0.0
    %144 = vst.msk [vmem:[#allocation2 + $0x198] sm:$0xff] %vm91, 0.0
    %145 = vst.msk [vmem:[#allocation2 + $0x1a0] sm:$0xff] %vm91, 0.0
    %146 = vst.msk [vmem:[#allocation2 + $0x1a8] sm:$0x3] %vm94, 0.0
    %147 = vst.msk [vmem:[#allocation2 + $0x1b0] sm:$0xff] %vm91, 0.0
    %148 = vst.msk [vmem:[#allocation2 + $0x1b8] sm:$0xff] %vm91, 0.0
    %149 = vst.msk [vmem:[#allocation2 + $0x1c0] sm:$0x3] %vm94, 0.0
    %150 = vst.msk [vmem:[#allocation2 + $0x1c8] sm:$0xff] %vm91, 0.0
    %151 = vst.msk [vmem:[#allocation2 + $0x1d0] sm:$0xff] %vm91, 0.0
    %152 = vst.msk [vmem:[#allocation2 + $0x1d8] sm:$0x3] %vm94, 0.0
    %153 = vst.msk [vmem:[#allocation2 + $0x1e0] sm:$0xff] %vm91, 0.0
    %154 = vst.msk [vmem:[#allocation2 + $0x1e8] sm:$0xff] %vm91, 0.0
    %155 = vst.msk [vmem:[#allocation2 + $0x1f0] sm:$0x3] %vm94, 0.0
    %156 = vst.msk [vmem:[#allocation2 + $0x1f8] sm:$0xff] %vm91, 0.0
    %157 = vst.msk [vmem:[#allocation2 + $0x200] sm:$0xff] %vm91, 0.0
    %158 = vst.msk [vmem:[#allocation2 + $0x208] sm:$0x3] %vm94, 0.0
    %159 = vst.msk [vmem:[#allocation2 + $0x210] sm:$0xff] %vm91, 0.0
    %160 = vst.msk [vmem:[#allocation2 + $0x218] sm:$0xff] %vm91, 0.0
    %161 = vst.msk [vmem:[#allocation2 + $0x220] sm:$0x3] %vm94, 0.0
    %162 = vst.msk [vmem:[#allocation2 + $0x228] sm:$0xff] %vm91, 0.0
    %163 = vst.msk [vmem:[#allocation2 + $0x230] sm:$0xff] %vm91, 0.0
    %164 = vst.msk [vmem:[#allocation2 + $0x238] sm:$0x3] %vm94, 0.0
    %165 = vst.msk [vmem:[#allocation2 + $0x240] sm:$0xff] %vm91, 0.0
    %166 = vst.msk [vmem:[#allocation2 + $0x248] sm:$0xff] %vm91, 0.0
    %167 = vst.msk [vmem:[#allocation2 + $0x250] sm:$0x3] %vm94, 0.0
    %168 = vst.msk [vmem:[#allocation2 + $0x258] sm:$0xff] %vm91, 0.0
    %169 = vst.msk [vmem:[#allocation2 + $0x260] sm:$0xff] %vm91, 0.0
    %170 = vst.msk [vmem:[#allocation2 + $0x268] sm:$0x3] %vm94, 0.0
    %171 = vst.msk [vmem:[#allocation2 + $0x270] sm:$0xff] %vm91, 0.0
    %172 = vst.msk [vmem:[#allocation2 + $0x278] sm:$0xff] %vm91, 0.0
    %173 = vst.msk [vmem:[#allocation2 + $0x280] sm:$0x3] %vm94, 0.0
    %174 = vst.msk [vmem:[#allocation2 + $0x288] sm:$0xff] %vm91, 0.0
    %175 = vst.msk [vmem:[#allocation2 + $0x290] sm:$0xff] %vm91, 0.0
    %176 = vst.msk [vmem:[#allocation2 + $0x298] sm:$0x3] %vm94, 0.0
    %177 = vst.msk [vmem:[#allocation2 + $0x2a0] sm:$0xff] %vm91, 0.0
    %178 = vst.msk [vmem:[#allocation2 + $0x2a8] sm:$0xff] %vm91, 0.0
    %179 = vst.msk [vmem:[#allocation2 + $0x2b0] sm:$0x3] %vm94, 0.0
    %180 = vst.msk [vmem:[#allocation2 + $0x2b8] sm:$0xff] %vm91, 0.0
    %181 = vst.msk [vmem:[#allocation2 + $0x2c0] sm:$0xff] %vm91, 0.0
    %182 = vst.msk [vmem:[#allocation2 + $0x2c8] sm:$0x3] %vm94, 0.0
    %183 = vst.msk [vmem:[#allocation2 + $0x2d0] sm:$0xff] %vm91, 0.0
    %184 = vst.msk [vmem:[#allocation2 + $0x2d8] sm:$0xff] %vm91, 0.0
    %185 = vst.msk [vmem:[#allocation2 + $0x2e0] sm:$0x3] %vm94, 0.0
    %186 = vst.msk [vmem:[#allocation2 + $0x2e8] sm:$0xff] %vm91, 0.0
    %187 = vst.msk [vmem:[#allocation2 + $0x2f0] sm:$0xff] %vm91, 0.0
    %188 = vst.msk [vmem:[#allocation2 + $0x2f8] sm:$0x3] %vm94, 0.0
    %189 = vst.msk [vmem:[#allocation2 + $0x300] sm:$0xff] %vm91, 0.0
    %190 = vst.msk [vmem:[#allocation2 + $0x308] sm:$0xff] %vm91, 0.0
    %191 = vst.msk [vmem:[#allocation2 + $0x310] sm:$0x3] %vm94, 0.0
    %192 = vst.msk [vmem:[#allocation2 + $0x318] sm:$0xff] %vm91, 0.0
    %193 = vst.msk [vmem:[#allocation2 + $0x320] sm:$0xff] %vm91, 0.0
    %194 = vst.msk [vmem:[#allocation2 + $0x328] sm:$0x3] %vm94, 0.0
    %195 = vst.msk [vmem:[#allocation2 + $0x330] sm:$0xff] %vm91, 0.0
    %196 = vst.msk [vmem:[#allocation2 + $0x338] sm:$0xff] %vm91, 0.0
    %197 = vst.msk [vmem:[#allocation2 + $0x340] sm:$0x3] %vm94, 0.0
    %198 = vst.msk [vmem:[#allocation2 + $0x348] sm:$0xff] %vm91, 0.0
    %199 = vst.msk [vmem:[#allocation2 + $0x350] sm:$0xff] %vm91, 0.0
    %200 = vst.msk [vmem:[#allocation2 + $0x358] sm:$0x3] %vm94, 0.0
    %s201 = scalar_lea.vmem [#allocation2], 24
    %202 = vst.msk [vmem:[%s201 + $0x1] sm:$0xff] %vm91, %v27
    %203 = vst.msk [vmem:[%s201 + $0x9] sm:$0xff] %vm91, %v28
    %204 = vst.msk [vmem:[%s201 + $0x19] sm:$0xff] %vm91, %v29
    %205 = vst.msk [vmem:[%s201 + $0x21] sm:$0xff] %vm91, %v30
    %206 = vst.msk [vmem:[%s201 + $0x31] sm:$0xff] %vm91, %v31
    %207 = vst.msk [vmem:[%s201 + $0x39] sm:$0xff] %vm91, %v32
    %208 = vst.msk [vmem:[%s201 + $0x49] sm:$0xff] %vm91, %v33
    %209 = vst.msk [vmem:[%s201 + $0x51] sm:$0xff] %vm91, %v34
    %210 = vst.msk [vmem:[%s201 + $0x61] sm:$0xff] %vm91, %v35
    %211 = vst.msk [vmem:[%s201 + $0x69] sm:$0xff] %vm91, %v36
    %212 = vst.msk [vmem:[%s201 + $0x79] sm:$0xff] %vm91, %v37
    %213 = vst.msk [vmem:[%s201 + $0x81] sm:$0xff] %vm91, %v38
    %214 = vst.msk [vmem:[%s201 + $0x91] sm:$0xff] %vm91, %v39
    %215 = vst.msk [vmem:[%s201 + $0x99] sm:$0xff] %vm91, %v40
    %216 = vst.msk [vmem:[%s201 + $0xa9] sm:$0xff] %vm91, %v41
    %217 = vst.msk [vmem:[%s201 + $0xb1] sm:$0xff] %vm91, %v42
    %218 = vst.msk [vmem:[%s201 + $0xc1] sm:$0xff] %vm91, %v43
    %219 = vst.msk [vmem:[%s201 + $0xc9] sm:$0xff] %vm91, %v44
    %220 = vst.msk [vmem:[%s201 + $0xd9] sm:$0xff] %vm91, %v45
    %221 = vst.msk [vmem:[%s201 + $0xe1] sm:$0xff] %vm91, %v46
    %222 = vst.msk [vmem:[%s201 + $0xf1] sm:$0xff] %vm91, %v47
    %223 = vst.msk [vmem:[%s201 + $0xf9] sm:$0xff] %vm91, %v48
    %224 = vst.msk [vmem:[%s201 + $0x109] sm:$0xff] %vm91, %v49
    %225 = vst.msk [vmem:[%s201 + $0x111] sm:$0xff] %vm91, %v50
    %226 = vst.msk [vmem:[%s201 + $0x121] sm:$0xff] %vm91, %v51
    %227 = vst.msk [vmem:[%s201 + $0x129] sm:$0xff] %vm91, %v52
    %228 = vst.msk [vmem:[%s201 + $0x139] sm:$0xff] %vm91, %v53
    %229 = vst.msk [vmem:[%s201 + $0x141] sm:$0xff] %vm91, %v54
    %230 = vst.msk [vmem:[%s201 + $0x151] sm:$0xff] %vm91, %v55
    %231 = vst.msk [vmem:[%s201 + $0x159] sm:$0xff] %vm91, %v56
    %232 = vst.msk [vmem:[%s201 + $0x169] sm:$0xff] %vm91, %v57
    %233 = vst.msk [vmem:[%s201 + $0x171] sm:$0xff] %vm91, %v58
    %234 = vst.msk [vmem:[%s201 + $0x1b1] sm:$0xff] %vm91, %v59
    %235 = vst.msk [vmem:[%s201 + $0x1b9] sm:$0xff] %vm91, %v60
    %236 = vst.msk [vmem:[%s201 + $0x1c9] sm:$0xff] %vm91, %v61
    %237 = vst.msk [vmem:[%s201 + $0x1d1] sm:$0xff] %vm91, %v62
    %238 = vst.msk [vmem:[%s201 + $0x1e1] sm:$0xff] %vm91, %v63
    %239 = vst.msk [vmem:[%s201 + $0x1e9] sm:$0xff] %vm91, %v64
    %240 = vst.msk [vmem:[%s201 + $0x1f9] sm:$0xff] %vm91, %v65
    %241 = vst.msk [vmem:[%s201 + $0x201] sm:$0xff] %vm91, %v66
    %242 = vst.msk [vmem:[%s201 + $0x211] sm:$0xff] %vm91, %v67
    %243 = vst.msk [vmem:[%s201 + $0x219] sm:$0xff] %vm91, %v68
    %244 = vst.msk [vmem:[%s201 + $0x229] sm:$0xff] %vm91, %v69
    %245 = vst.msk [vmem:[%s201 + $0x231] sm:$0xff] %vm91, %v70
    %246 = vst.msk [vmem:[%s201 + $0x241] sm:$0xff] %vm91, %v71
    %247 = vst.msk [vmem:[%s201 + $0x249] sm:$0xff] %vm91, %v72
    %248 = vst.msk [vmem:[%s201 + $0x259] sm:$0xff] %vm91, %v73
    %249 = vst.msk [vmem:[%s201 + $0x261] sm:$0xff] %vm91, %v74
    %250 = vst.msk [vmem:[%s201 + $0x271] sm:$0xff] %vm91, %v75
    %251 = vst.msk [vmem:[%s201 + $0x279] sm:$0xff] %vm91, %v76
    %252 = vst.msk [vmem:[%s201 + $0x289] sm:$0xff] %vm91, %v77
    %253 = vst.msk [vmem:[%s201 + $0x291] sm:$0xff] %vm91, %v78
    %254 = vst.msk [vmem:[%s201 + $0x2a1] sm:$0xff] %vm91, %v79
    %255 = vst.msk [vmem:[%s201 + $0x2a9] sm:$0xff] %vm91, %v80
    %256 = vst.msk [vmem:[%s201 + $0x2b9] sm:$0xff] %vm91, %v81
    %257 = vst.msk [vmem:[%s201 + $0x2c1] sm:$0xff] %vm91, %v82
    %258 = vst.msk [vmem:[%s201 + $0x2d1] sm:$0xff] %vm91, %v83
    %259 = vst.msk [vmem:[%s201 + $0x2d9] sm:$0xff] %vm91, %v84
    %260 = vst.msk [vmem:[%s201 + $0x2e9] sm:$0xff] %vm91, %v85
    %261 = vst.msk [vmem:[%s201 + $0x2f1] sm:$0xff] %vm91, %v86
    %262 = vst.msk [vmem:[%s201 + $0x301] sm:$0xff] %vm91, %v87
    %263 = vst.msk [vmem:[%s201 + $0x309] sm:$0xff] %vm91, %v88
    %264 = vst.msk [vmem:[%s201 + $0x319] sm:$0xff] %vm91, %v89
    %265 = vst.msk [vmem:[%s201 + $0x321] sm:$0xff] %vm91, %v90
    %v266 = vld [vmem:[%s1] sm:$0xff]
    %v267 = vld [vmem:[%s1 + $0x8] sm:$0xff]
    %v268 = vld [vmem:[%s1 + $0x10] sm:$0xff]
    %v269 = vld [vmem:[%s1 + $0x18] sm:$0xff]
    %v270 = vld [vmem:[%s1 + $0x20] sm:$0xff]
    %v271 = vld [vmem:[%s1 + $0x28] sm:$0xff]
    %v272 = vld [vmem:[%s1 + $0x30] sm:$0xff]
    %v273 = vld [vmem:[%s1 + $0x38] sm:$0xff]
    %v274 = vld [vmem:[%s1 + $0x40] sm:$0xff]
    %v275 = vld [vmem:[%s2] sm:$0x1]
    %v276 = vld [vmem:[%s3] sm:$0x1]
    %v277 = vld [vmem:[#allocation2] sm:$0xff]
    %v278 = vld [vmem:[#allocation2 + $0x8] sm:$0xff]
    %v279 = vld [vmem:[#allocation2 + $0x18] sm:$0xff]
    %v280 = vld [vmem:[#allocation2 + $0x20] sm:$0xff]
    %v281 = vld [vmem:[#allocation2 + $0x30] sm:$0xff]
    %v282 = vld [vmem:[#allocation2 + $0x38] sm:$0xff]
    %v283 = vld [vmem:[#allocation2 + $0x48] sm:$0xff]
    %v284 = vld [vmem:[#allocation2 + $0x50] sm:$0xff]
    %v285 = vld [vmem:[#allocation2 + $0x60] sm:$0xff]
    %v286 = vld [vmem:[#allocation2 + $0x68] sm:$0xff]
    %v287 = vld [vmem:[#allocation2 + $0x78] sm:$0xff]
    %v288 = vld [vmem:[#allocation2 + $0x80] sm:$0xff]
    %v289 = vld [vmem:[#allocation2 + $0x90] sm:$0xff]
    %v290 = vld [vmem:[#allocation2 + $0x98] sm:$0xff]
    %v291 = vld [vmem:[#allocation2 + $0xa8] sm:$0xff]
    %v292 = vld [vmem:[#allocation2 + $0xb0] sm:$0xff]
    %v293 = vld [vmem:[#allocation2 + $0xc0] sm:$0xff]
    %v294 = vld [vmem:[#allocation2 + $0xc8] sm:$0xff]
    %v295 = vld [vmem:[#allocation2 + $0xd8] sm:$0xff]
    %v296 = vld [vmem:[#allocation2 + $0xe0] sm:$0xff]
    %v297 = vld [vmem:[#allocation2 + $0xf0] sm:$0xff]
    %v298 = vld [vmem:[#allocation2 + $0xf8] sm:$0xff]
    %v299 = vld [vmem:[#allocation2 + $0x108] sm:$0xff]
    %v300 = vld [vmem:[#allocation2 + $0x110] sm:$0xff]
    %v301 = vld [vmem:[#allocation2 + $0x120] sm:$0xff]
    %v302 = vld [vmem:[#allocation2 + $0x128] sm:$0xff]
    %v303 = vld [vmem:[#allocation2 + $0x138] sm:$0xff]
    %v304 = vld [vmem:[#allocation2 + $0x140] sm:$0xff]
    %v305 = vld [vmem:[#allocation2 + $0x150] sm:$0xff]
    %v306 = vld [vmem:[#allocation2 + $0x158] sm:$0xff]
    %v307 = vld [vmem:[#allocation2 + $0x168] sm:$0xff]
    %v308 = vld [vmem:[#allocation2 + $0x170] sm:$0xff]
    %v309 = vld [vmem:[#allocation2 + $0x1b0] sm:$0xff]
    %v310 = vld [vmem:[#allocation2 + $0x1b8] sm:$0xff]
    %v311 = vld [vmem:[#allocation2 + $0x1c8] sm:$0xff]
    %v312 = vld [vmem:[#allocation2 + $0x1d0] sm:$0xff]
    %v313 = vld [vmem:[#allocation2 + $0x1e0] sm:$0xff]
    %v314 = vld [vmem:[#allocation2 + $0x1e8] sm:$0xff]
    %v315 = vld [vmem:[#allocation2 + $0x1f8] sm:$0xff]
    %v316 = vld [vmem:[#allocation2 + $0x200] sm:$0xff]
    %v317 = vld [vmem:[#allocation2 + $0x210] sm:$0xff]
    %v318 = vld [vmem:[#allocation2 + $0x218] sm:$0xff]
    %v319 = vld [vmem:[#allocation2 + $0x228] sm:$0xff]
    %v320 = vld [vmem:[#allocation2 + $0x230] sm:$0xff]
    %v321 = vld [vmem:[#allocation2 + $0x240] sm:$0xff]
    %v322 = vld [vmem:[#allocation2 + $0x248] sm:$0xff]
    %v323 = vld [vmem:[#allocation2 + $0x258] sm:$0xff]
    %v324 = vld [vmem:[#allocation2 + $0x260] sm:$0xff]
    %v325 = vld [vmem:[#allocation2 + $0x270] sm:$0xff]
    %v326 = vld [vmem:[#allocation2 + $0x278] sm:$0xff]
    %v327 = vld [vmem:[#allocation2 + $0x288] sm:$0xff]
    %v328 = vld [vmem:[#allocation2 + $0x290] sm:$0xff]
    %v329 = vld [vmem:[#allocation2 + $0x2a0] sm:$0xff]
    %v330 = vld [vmem:[#allocation2 + $0x2a8] sm:$0xff]
    %v331 = vld [vmem:[#allocation2 + $0x2b8] sm:$0xff]
    %v332 = vld [vmem:[#allocation2 + $0x2c0] sm:$0xff]
    %v333 = vld [vmem:[#allocation2 + $0x2d0] sm:$0xff]
    %v334 = vld [vmem:[#allocation2 + $0x2d8] sm:$0xff]
    %v335 = vld [vmem:[#allocation2 + $0x2e8] sm:$0xff]
    %v336 = vld [vmem:[#allocation2 + $0x2f0] sm:$0xff]
    %v337 = vld [vmem:[#allocation2 + $0x300] sm:$0xff]
    %v338 = vld [vmem:[#allocation2 + $0x308] sm:$0xff]
    %v339 = vld [vmem:[#allocation2 + $0x318] sm:$0xff]
    %v340 = vld [vmem:[#allocation2 + $0x320] sm:$0xff]
    %v341 = vld [vmem:[#allocation2 + $0x1] sm:$0xff]
    %v342 = vld [vmem:[#allocation2 + $0x9] sm:$0xff]
    %v343 = vld [vmem:[#allocation2 + $0x19] sm:$0xff]
    %v344 = vld [vmem:[#allocation2 + $0x21] sm:$0xff]
    %v345 = vld [vmem:[#allocation2 + $0x31] sm:$0xff]
    %v346 = vld [vmem:[#allocation2 + $0x39] sm:$0xff]
    %v347 = vld [vmem:[#allocation2 + $0x49] sm:$0xff]
    %v348 = vld [vmem:[#allocation2 + $0x51] sm:$0xff]
    %v349 = vld [vmem:[#allocation2 + $0x61] sm:$0xff]
    %v350 = vld [vmem:[#allocation2 + $0x69] sm:$0xff]
    %v351 = vld [vmem:[#allocation2 + $0x79] sm:$0xff]
    %v352 = vld [vmem:[#allocation2 + $0x81] sm:$0xff]
    %v353 = vld [vmem:[#allocation2 + $0x91] sm:$0xff]
    %v354 = vld [vmem:[#allocation2 + $0x99] sm:$0xff]
    %v355 = vld [vmem:[#allocation2 + $0xa9] sm:$0xff]
    %v356 = vld [vmem:[#allocation2 + $0xb1] sm:$0xff]
    %v357 = vld [vmem:[#allocation2 + $0xc1] sm:$0xff]
    %v358 = vld [vmem:[#allocation2 + $0xc9] sm:$0xff]
    %v359 = vld [vmem:[#allocation2 + $0xd9] sm:$0xff]
    %v360 = vld [vmem:[#allocation2 + $0xe1] sm:$0xff]
    %v361 = vld [vmem:[#allocation2 + $0xf1] sm:$0xff]
    %v362 = vld [vmem:[#allocation2 + $0xf9] sm:$0xff]
    %v363 = vld [vmem:[#allocation2 + $0x109] sm:$0xff]
    %v364 = vld [vmem:[#allocation2 + $0x111] sm:$0xff]
    %v365 = vld [vmem:[#allocation2 + $0x121] sm:$0xff]
    %v366 = vld [vmem:[#allocation2 + $0x129] sm:$0xff]
    %v367 = vld [vmem:[#allocation2 + $0x139] sm:$0xff]
    %v368 = vld [vmem:[#allocation2 + $0x141] sm:$0xff]
    %v369 = vld [vmem:[#allocation2 + $0x151] sm:$0xff]
    %v370 = vld [vmem:[#allocation2 + $0x159] sm:$0xff]
    %v371 = vld [vmem:[#allocation2 + $0x169] sm:$0xff]
    %v372 = vld [vmem:[#allocation2 + $0x171] sm:$0xff]
    %v373 = vld [vmem:[#allocation2 + $0x1b1] sm:$0xff]
    %v374 = vld [vmem:[#allocation2 + $0x1b9] sm:$0xff]
    %v375 = vld [vmem:[#allocation2 + $0x1c9] sm:$0xff]
    %v376 = vld [vmem:[#allocation2 + $0x1d1] sm:$0xff]
    %v377 = vld [vmem:[#allocation2 + $0x1e1] sm:$0xff]
    %v378 = vld [vmem:[#allocation2 + $0x1e9] sm:$0xff]
    %v379 = vld [vmem:[#allocation2 + $0x1f9] sm:$0xff]
    %v380 = vld [vmem:[#allocation2 + $0x201] sm:$0xff]
    %v381 = vld [vmem:[#allocation2 + $0x211] sm:$0xff]
    %v382 = vld [vmem:[#allocation2 + $0x219] sm:$0xff]
    %v383 = vld [vmem:[#allocation2 + $0x229] sm:$0xff]
    %v384 = vld [vmem:[#allocation2 + $0x231] sm:$0xff]
    %v385 = vld [vmem:[#allocation2 + $0x241] sm:$0xff]
    %v386 = vld [vmem:[#allocation2 + $0x249] sm:$0xff]
    %v387 = vld [vmem:[#allocation2 + $0x259] sm:$0xff]
    %v388 = vld [vmem:[#allocation2 + $0x261] sm:$0xff]
    %v389 = vld [vmem:[#allocation2 + $0x271] sm:$0xff]
    %v390 = vld [vmem:[#allocation2 + $0x279] sm:$0xff]
    %v391 = vld [vmem:[#allocation2 + $0x289] sm:$0xff]
    %v392 = vld [vmem:[#allocation2 + $0x291] sm:$0xff]
    %v393 = vld [vmem:[#allocation2 + $0x2a1] sm:$0xff]
    %v394 = vld [vmem:[#allocation2 + $0x2a9] sm:$0xff]
    %v395 = vld [vmem:[#allocation2 + $0x2b9] sm:$0xff]
    %v396 = vld [vmem:[#allocation2 + $0x2c1] sm:$0xff]
    %v397 = vld [vmem:[#allocation2 + $0x2d1] sm:$0xff]
    %v398 = vld [vmem:[#allocation2 + $0x2d9] sm:$0xff]
    %v399 = vld [vmem:[#allocation2 + $0x2e9] sm:$0xff]
    %v400 = vld [vmem:[#allocation2 + $0x2f1] sm:$0xff]
    %v401 = vld [vmem:[#allocation2 + $0x301] sm:$0xff]
    %v402 = vld [vmem:[#allocation2 + $0x309] sm:$0xff]
    %v403 = vld [vmem:[#allocation2 + $0x319] sm:$0xff]
    %v404 = vld [vmem:[#allocation2 + $0x321] sm:$0xff]
    %v405 = vld [vmem:[#allocation2 + $0x2] sm:$0xff]
    %v406 = vld [vmem:[#allocation2 + $0xa] sm:$0xff]
    %v407 = vld [vmem:[#allocation2 + $0x1a] sm:$0xff]
    %v408 = vld [vmem:[#allocation2 + $0x22] sm:$0xff]
    %v409 = vld [vmem:[#allocation2 + $0x32] sm:$0xff]
    %v410 = vld [vmem:[#allocation2 + $0x3a] sm:$0xff]
    %v411 = vld [vmem:[#allocation2 + $0x4a] sm:$0xff]
    %v412 = vld [vmem:[#allocation2 + $0x52] sm:$0xff]
    %v413 = vld [vmem:[#allocation2 + $0x62] sm:$0xff]
    %v414 = vld [vmem:[#allocation2 + $0x6a] sm:$0xff]
    %v415 = vld [vmem:[#allocation2 + $0x7a] sm:$0xff]
    %v416 = vld [vmem:[#allocation2 + $0x82] sm:$0xff]
    %v417 = vld [vmem:[#allocation2 + $0x92] sm:$0xff]
    %v418 = vld [vmem:[#allocation2 + $0x9a] sm:$0xff]
    %v419 = vld [vmem:[#allocation2 + $0xaa] sm:$0xff]
    %v420 = vld [vmem:[#allocation2 + $0xb2] sm:$0xff]
    %v421 = vld [vmem:[#allocation2 + $0xc2] sm:$0xff]
    %v422 = vld [vmem:[#allocation2 + $0xca] sm:$0xff]
    %v423 = vld [vmem:[#allocation2 + $0xda] sm:$0xff]
    %v424 = vld [vmem:[#allocation2 + $0xe2] sm:$0xff]
    %v425 = vld [vmem:[#allocation2 + $0xf2] sm:$0xff]
    %v426 = vld [vmem:[#allocation2 + $0xfa] sm:$0xff]
    %v427 = vld [vmem:[#allocation2 + $0x10a] sm:$0xff]
    %v428 = vld [vmem:[#allocation2 + $0x112] sm:$0xff]
    %v429 = vld [vmem:[#allocation2 + $0x122] sm:$0xff]
    %v430 = vld [vmem:[#allocation2 + $0x12a] sm:$0xff]
    %v431 = vld [vmem:[#allocation2 + $0x13a] sm:$0xff]
    %v432 = vld [vmem:[#allocation2 + $0x142] sm:$0xff]
    %v433 = vld [vmem:[#allocation2 + $0x152] sm:$0xff]
    %v434 = vld [vmem:[#allocation2 + $0x15a] sm:$0xff]
    %v435 = vld [vmem:[#allocation2 + $0x16a] sm:$0xff]
    %v436 = vld [vmem:[#allocation2 + $0x172] sm:$0xff]
    %v437 = vld [vmem:[#allocation2 + $0x1b2] sm:$0xff]
    %v438 = vld [vmem:[#allocation2 + $0x1ba] sm:$0xff]
    %v439 = vld [vmem:[#allocation2 + $0x1ca] sm:$0xff]
    %v440 = vld [vmem:[#allocation2 + $0x1d2] sm:$0xff]
    %v441 = vld [vmem:[#allocation2 + $0x1e2] sm:$0xff]
    %v442 = vld [vmem:[#allocation2 + $0x1ea] sm:$0xff]
    %v443 = vld [vmem:[#allocation2 + $0x1fa] sm:$0xff]
    %v444 = vld [vmem:[#allocation2 + $0x202] sm:$0xff]
    %v445 = vld [vmem:[#allocation2 + $0x212] sm:$0xff]
    %v446 = vld [vmem:[#allocation2 + $0x21a] sm:$0xff]
    %v447 = vld [vmem:[#allocation2 + $0x22a] sm:$0xff]
    %v448 = vld [vmem:[#allocation2 + $0x232] sm:$0xff]
    %v449 = vld [vmem:[#allocation2 + $0x242] sm:$0xff]
    %v450 = vld [vmem:[#allocation2 + $0x24a] sm:$0xff]
    %v451 = vld [vmem:[#allocation2 + $0x25a] sm:$0xff]
    %v452 = vld [vmem:[#allocation2 + $0x262] sm:$0xff]
    %v453 = vld [vmem:[#allocation2 + $0x272] sm:$0xff]
    %v454 = vld [vmem:[#allocation2 + $0x27a] sm:$0xff]
    %v455 = vld [vmem:[#allocation2 + $0x28a] sm:$0xff]
    %v456 = vld [vmem:[#allocation2 + $0x292] sm:$0xff]
    %v457 = vld [vmem:[#allocation2 + $0x2a2] sm:$0xff]
    %v458 = vld [vmem:[#allocation2 + $0x2aa] sm:$0xff]
    %v459 = vld [vmem:[#allocation2 + $0x2ba] sm:$0xff]
    %v460 = vld [vmem:[#allocation2 + $0x2c2] sm:$0xff]
    %v461 = vld [vmem:[#allocation2 + $0x2d2] sm:$0xff]
    %v462 = vld [vmem:[#allocation2 + $0x2da] sm:$0xff]
    %v463 = vld [vmem:[#allocation2 + $0x2ea] sm:$0xff]
    %v464 = vld [vmem:[#allocation2 + $0x2f2] sm:$0xff]
    %v465 = vld [vmem:[#allocation2 + $0x302] sm:$0xff]
    %v466 = vld [vmem:[#allocation2 + $0x30a] sm:$0xff]
    %v467 = vld [vmem:[#allocation2 + $0x31a] sm:$0xff]
    %v468 = vld [vmem:[#allocation2 + $0x322] sm:$0xff]
    %v469 = vld [vmem:[%s201] sm:$0xff]
    %v470 = vld [vmem:[%s201 + $0x8] sm:$0xff]
    %v471 = vld [vmem:[%s201 + $0x18] sm:$0xff]
    %v472 = vld [vmem:[%s201 + $0x20] sm:$0xff]
    %v473 = vld [vmem:[%s201 + $0x30] sm:$0xff]
    %v474 = vld [vmem:[%s201 + $0x38] sm:$0xff]
    %v475 = vld [vmem:[%s201 + $0x48] sm:$0xff]
    %v476 = vld [vmem:[%s201 + $0x50] sm:$0xff]
    %v477 = vld [vmem:[%s201 + $0x60] sm:$0xff]
    %v478 = vld [vmem:[%s201 + $0x68] sm:$0xff]
    %v479 = vld [vmem:[%s201 + $0x78] sm:$0xff]
    %v480 = vld [vmem:[%s201 + $0x80] sm:$0xff]
    %v481 = vld [vmem:[%s201 + $0x90] sm:$0xff]
    %v482 = vld [vmem:[%s201 + $0x98] sm:$0xff]
    %v483 = vld [vmem:[%s201 + $0xa8] sm:$0xff]
    %v484 = vld [vmem:[%s201 + $0xb0] sm:$0xff]
    %v485 = vld [vmem:[%s201 + $0xc0] sm:$0xff]
    %v486 = vld [vmem:[%s201 + $0xc8] sm:$0xff]
    %v487 = vld [vmem:[%s201 + $0xd8] sm:$0xff]
    %v488 = vld [vmem:[%s201 + $0xe0] sm:$0xff]
    %v489 = vld [vmem:[%s201 + $0xf0] sm:$0xff]
    %v490 = vld [vmem:[%s201 + $0xf8] sm:$0xff]
    %v491 = vld [vmem:[%s201 + $0x108] sm:$0xff]
    %v492 = vld [vmem:[%s201 + $0x110] sm:$0xff]
    %v493 = vld [vmem:[%s201 + $0x120] sm:$0xff]
    %v494 = vld [vmem:[%s201 + $0x128] sm:$0xff]
    %v495 = vld [vmem:[%s201 + $0x138] sm:$0xff]
    %v496 = vld [vmem:[%s201 + $0x140] sm:$0xff]
    %v497 = vld [vmem:[%s201 + $0x150] sm:$0xff]
    %v498 = vld [vmem:[%s201 + $0x158] sm:$0xff]
    %v499 = vld [vmem:[%s201 + $0x168] sm:$0xff]
    %v500 = vld [vmem:[%s201 + $0x170] sm:$0xff]
    %v501 = vld [vmem:[%s201 + $0x1b0] sm:$0xff]
    %v502 = vld [vmem:[%s201 + $0x1b8] sm:$0xff]
    %v503 = vld [vmem:[%s201 + $0x1c8] sm:$0xff]
    %v504 = vld [vmem:[%s201 + $0x1d0] sm:$0xff]
    %v505 = vld [vmem:[%s201 + $0x1e0] sm:$0xff]
    %v506 = vld [vmem:[%s201 + $0x1e8] sm:$0xff]
    %v507 = vld [vmem:[%s201 + $0x1f8] sm:$0xff]
    %v508 = vld [vmem:[%s201 + $0x200] sm:$0xff]
    %v509 = vld [vmem:[%s201 + $0x210] sm:$0xff]
    %v510 = vld [vmem:[%s201 + $0x218] sm:$0xff]
    %v511 = vld [vmem:[%s201 + $0x228] sm:$0xff]
    %v512 = vld [vmem:[%s201 + $0x230] sm:$0xff]
    %v513 = vld [vmem:[%s201 + $0x240] sm:$0xff]
    %v514 = vld [vmem:[%s201 + $0x248] sm:$0xff]
    %v515 = vld [vmem:[%s201 + $0x258] sm:$0xff]
    %v516 = vld [vmem:[%s201 + $0x260] sm:$0xff]
    %v517 = vld [vmem:[%s201 + $0x270] sm:$0xff]
    %v518 = vld [vmem:[%s201 + $0x278] sm:$0xff]
    %v519 = vld [vmem:[%s201 + $0x288] sm:$0xff]
    %v520 = vld [vmem:[%s201 + $0x290] sm:$0xff]
    %v521 = vld [vmem:[%s201 + $0x2a0] sm:$0xff]
    %v522 = vld [vmem:[%s201 + $0x2a8] sm:$0xff]
    %v523 = vld [vmem:[%s201 + $0x2b8] sm:$0xff]
    %v524 = vld [vmem:[%s201 + $0x2c0] sm:$0xff]
    %v525 = vld [vmem:[%s201 + $0x2d0] sm:$0xff]
    %v526 = vld [vmem:[%s201 + $0x2d8] sm:$0xff]
    %v527 = vld [vmem:[%s201 + $0x2e8] sm:$0xff]
    %v528 = vld [vmem:[%s201 + $0x2f0] sm:$0xff]
    %v529 = vld [vmem:[%s201 + $0x300] sm:$0xff]
    %v530 = vld [vmem:[%s201 + $0x308] sm:$0xff]
    %v531 = vld [vmem:[%s201 + $0x318] sm:$0xff]
    %v532 = vld [vmem:[%s201 + $0x320] sm:$0xff]
    %v533 = vld [vmem:[%s201 + $0x1] sm:$0xff]
    %v534 = vld [vmem:[%s201 + $0x9] sm:$0xff]
    %v535 = vld [vmem:[%s201 + $0x19] sm:$0xff]
    %v536 = vld [vmem:[%s201 + $0x21] sm:$0xff]
    %v537 = vld [vmem:[%s201 + $0x31] sm:$0xff]
    %v538 = vld [vmem:[%s201 + $0x39] sm:$0xff]
    %v539 = vld [vmem:[%s201 + $0x49] sm:$0xff]
    %v540 = vld [vmem:[%s201 + $0x51] sm:$0xff]
    %v541 = vld [vmem:[%s201 + $0x61] sm:$0xff]
    %v542 = vld [vmem:[%s201 + $0x69] sm:$0xff]
    %v543 = vld [vmem:[%s201 + $0x79] sm:$0xff]
    %v544 = vld [vmem:[%s201 + $0x81] sm:$0xff]
    %v545 = vld [vmem:[%s201 + $0x91] sm:$0xff]
    %v546 = vld [vmem:[%s201 + $0x99] sm:$0xff]
    %v547 = vld [vmem:[%s201 + $0xa9] sm:$0xff]
    %v548 = vld [vmem:[%s201 + $0xb1] sm:$0xff]
    %v549 = vld [vmem:[%s201 + $0xc1] sm:$0xff]
    %v550 = vld [vmem:[%s201 + $0xc9] sm:$0xff]
    %v551 = vld [vmem:[%s201 + $0xd9] sm:$0xff]
    %v552 = vld [vmem:[%s201 + $0xe1] sm:$0xff]
    %v553 = vld [vmem:[%s201 + $0xf1] sm:$0xff]
    %v554 = vld [vmem:[%s201 + $0xf9] sm:$0xff]
    %v555 = vld [vmem:[%s201 + $0x109] sm:$0xff]
    %v556 = vld [vmem:[%s201 + $0x111] sm:$0xff]
    %v557 = vld [vmem:[%s201 + $0x121] sm:$0xff]
    %v558 = vld [vmem:[%s201 + $0x129] sm:$0xff]
    %v559 = vld [vmem:[%s201 + $0x139] sm:$0xff]
    %v560 = vld [vmem:[%s201 + $0x141] sm:$0xff]
    %v561 = vld [vmem:[%s201 + $0x151] sm:$0xff]
    %v562 = vld [vmem:[%s201 + $0x159] sm:$0xff]
    %v563 = vld [vmem:[%s201 + $0x169] sm:$0xff]
    %v564 = vld [vmem:[%s201 + $0x171] sm:$0xff]
    %v565 = vld [vmem:[%s201 + $0x1b1] sm:$0xff]
    %v566 = vld [vmem:[%s201 + $0x1b9] sm:$0xff]
    %v567 = vld [vmem:[%s201 + $0x1c9] sm:$0xff]
    %v568 = vld [vmem:[%s201 + $0x1d1] sm:$0xff]
    %v569 = vld [vmem:[%s201 + $0x1e1] sm:$0xff]
    %v570 = vld [vmem:[%s201 + $0x1e9] sm:$0xff]
    %v571 = vld [vmem:[%s201 + $0x1f9] sm:$0xff]
    %v572 = vld [vmem:[%s201 + $0x201] sm:$0xff]
    %v573 = vld [vmem:[%s201 + $0x211] sm:$0xff]
    %v574 = vld [vmem:[%s201 + $0x219] sm:$0xff]
    %v575 = vld [vmem:[%s201 + $0x229] sm:$0xff]
    %v576 = vld [vmem:[%s201 + $0x231] sm:$0xff]
    %v577 = vld [vmem:[%s201 + $0x241] sm:$0xff]
    %v578 = vld [vmem:[%s201 + $0x249] sm:$0xff]
    %v579 = vld [vmem:[%s201 + $0x259] sm:$0xff]
    %v580 = vld [vmem:[%s201 + $0x261] sm:$0xff]
    %v581 = vld [vmem:[%s201 + $0x271] sm:$0xff]
    %v582 = vld [vmem:[%s201 + $0x279] sm:$0xff]
    %v583 = vld [vmem:[%s201 + $0x289] sm:$0xff]
    %v584 = vld [vmem:[%s201 + $0x291] sm:$0xff]
    %v585 = vld [vmem:[%s201 + $0x2a1] sm:$0xff]
    %v586 = vld [vmem:[%s201 + $0x2a9] sm:$0xff]
    %v587 = vld [vmem:[%s201 + $0x2b9] sm:$0xff]
    %v588 = vld [vmem:[%s201 + $0x2c1] sm:$0xff]
    %v589 = vld [vmem:[%s201 + $0x2d1] sm:$0xff]
    %v590 = vld [vmem:[%s201 + $0x2d9] sm:$0xff]
    %v591 = vld [vmem:[%s201 + $0x2e9] sm:$0xff]
    %v592 = vld [vmem:[%s201 + $0x2f1] sm:$0xff]
    %v593 = vld [vmem:[%s201 + $0x301] sm:$0xff]
    %v594 = vld [vmem:[%s201 + $0x309] sm:$0xff]
    %v595 = vld [vmem:[%s201 + $0x319] sm:$0xff]
    %v596 = vld [vmem:[%s201 + $0x321] sm:$0xff]
    %v597 = vld [vmem:[%s201 + $0x2] sm:$0xff]
    %v598 = vld [vmem:[%s201 + $0xa] sm:$0xff]
    %v599 = vld [vmem:[%s201 + $0x1a] sm:$0xff]
    %v600 = vld [vmem:[%s201 + $0x22] sm:$0xff]
    %v601 = vld [vmem:[%s201 + $0x32] sm:$0xff]
    %v602 = vld [vmem:[%s201 + $0x3a] sm:$0xff]
    %v603 = vld [vmem:[%s201 + $0x4a] sm:$0xff]
    %v604 = vld [vmem:[%s201 + $0x52] sm:$0xff]
    %v605 = vld [vmem:[%s201 + $0x62] sm:$0xff]
    %v606 = vld [vmem:[%s201 + $0x6a] sm:$0xff]
    %v607 = vld [vmem:[%s201 + $0x7a] sm:$0xff]
    %v608 = vld [vmem:[%s201 + $0x82] sm:$0xff]
    %v609 = vld [vmem:[%s201 + $0x92] sm:$0xff]
    %v610 = vld [vmem:[%s201 + $0x9a] sm:$0xff]
    %v611 = vld [vmem:[%s201 + $0xaa] sm:$0xff]
    %v612 = vld [vmem:[%s201 + $0xb2] sm:$0xff]
    %v613 = vld [vmem:[%s201 + $0xc2] sm:$0xff]
    %v614 = vld [vmem:[%s201 + $0xca] sm:$0xff]
    %v615 = vld [vmem:[%s201 + $0xda] sm:$0xff]
    %v616 = vld [vmem:[%s201 + $0xe2] sm:$0xff]
    %v617 = vld [vmem:[%s201 + $0xf2] sm:$0xff]
    %v618 = vld [vmem:[%s201 + $0xfa] sm:$0xff]
    %v619 = vld [vmem:[%s201 + $0x10a] sm:$0xff]
    %v620 = vld [vmem:[%s201 + $0x112] sm:$0xff]
    %v621 = vld [vmem:[%s201 + $0x122] sm:$0xff]
    %v622 = vld [vmem:[%s201 + $0x12a] sm:$0xff]
    %v623 = vld [vmem:[%s201 + $0x13a] sm:$0xff]
    %v624 = vld [vmem:[%s201 + $0x142] sm:$0xff]
    %v625 = vld [vmem:[%s201 + $0x152] sm:$0xff]
    %v626 = vld [vmem:[%s201 + $0x15a] sm:$0xff]
    %v627 = vld [vmem:[%s201 + $0x16a] sm:$0xff]
    %v628 = vld [vmem:[%s201 + $0x172] sm:$0xff]
    %v629 = vld [vmem:[%s201 + $0x1b2] sm:$0xff]
    %v630 = vld [vmem:[%s201 + $0x1ba] sm:$0xff]
    %v631 = vld [vmem:[%s201 + $0x1ca] sm:$0xff]
    %v632 = vld [vmem:[%s201 + $0x1d2] sm:$0xff]
    %v633 = vld [vmem:[%s201 + $0x1e2] sm:$0xff]
    %v634 = vld [vmem:[%s201 + $0x1ea] sm:$0xff]
    %v635 = vld [vmem:[%s201 + $0x1fa] sm:$0xff]
    %v636 = vld [vmem:[%s201 + $0x202] sm:$0xff]
    %v637 = vld [vmem:[%s201 + $0x212] sm:$0xff]
    %v638 = vld [vmem:[%s201 + $0x21a] sm:$0xff]
    %v639 = vld [vmem:[%s201 + $0x22a] sm:$0xff]
    %v640 = vld [vmem:[%s201 + $0x232] sm:$0xff]
    %v641 = vld [vmem:[%s201 + $0x242] sm:$0xff]
    %v642 = vld [vmem:[%s201 + $0x24a] sm:$0xff]
    %v643 = vld [vmem:[%s201 + $0x25a] sm:$0xff]
    %v644 = vld [vmem:[%s201 + $0x262] sm:$0xff]
    %v645 = vld [vmem:[%s201 + $0x272] sm:$0xff]
    %v646 = vld [vmem:[%s201 + $0x27a] sm:$0xff]
    %v647 = vld [vmem:[%s201 + $0x28a] sm:$0xff]
    %v648 = vld [vmem:[%s201 + $0x292] sm:$0xff]
    %v649 = vld [vmem:[%s201 + $0x2a2] sm:$0xff]
    %v650 = vld [vmem:[%s201 + $0x2aa] sm:$0xff]
    %v651 = vld [vmem:[%s201 + $0x2ba] sm:$0xff]
    %v652 = vld [vmem:[%s201 + $0x2c2] sm:$0xff]
    %v653 = vld [vmem:[%s201 + $0x2d2] sm:$0xff]
    %v654 = vld [vmem:[%s201 + $0x2da] sm:$0xff]
    %v655 = vld [vmem:[%s201 + $0x2ea] sm:$0xff]
    %v656 = vld [vmem:[%s201 + $0x2f2] sm:$0xff]
    %v657 = vld [vmem:[%s201 + $0x302] sm:$0xff]
    %v658 = vld [vmem:[%s201 + $0x30a] sm:$0xff]
    %v659 = vld [vmem:[%s201 + $0x31a] sm:$0xff]
    %v660 = vld [vmem:[%s201 + $0x322] sm:$0xff]
    %s661 = scalar_lea.vmem [#allocation2], 48
    %v662 = vld [vmem:[%s661] sm:$0xff]
    %v663 = vld [vmem:[%s661 + $0x8] sm:$0xff]
    %v664 = vld [vmem:[%s661 + $0x18] sm:$0xff]
    %v665 = vld [vmem:[%s661 + $0x20] sm:$0xff]
    %v666 = vld [vmem:[%s661 + $0x30] sm:$0xff]
    %v667 = vld [vmem:[%s661 + $0x38] sm:$0xff]
    %v668 = vld [vmem:[%s661 + $0x48] sm:$0xff]
    %v669 = vld [vmem:[%s661 + $0x50] sm:$0xff]
    %v670 = vld [vmem:[%s661 + $0x60] sm:$0xff]
    %v671 = vld [vmem:[%s661 + $0x68] sm:$0xff]
    %v672 = vld [vmem:[%s661 + $0x78] sm:$0xff]
    %v673 = vld [vmem:[%s661 + $0x80] sm:$0xff]
    %v674 = vld [vmem:[%s661 + $0x90] sm:$0xff]
    %v675 = vld [vmem:[%s661 + $0x98] sm:$0xff]
    %v676 = vld [vmem:[%s661 + $0xa8] sm:$0xff]
    %v677 = vld [vmem:[%s661 + $0xb0] sm:$0xff]
    %v678 = vld [vmem:[%s661 + $0xc0] sm:$0xff]
    %v679 = vld [vmem:[%s661 + $0xc8] sm:$0xff]
    %v680 = vld [vmem:[%s661 + $0xd8] sm:$0xff]
    %v681 = vld [vmem:[%s661 + $0xe0] sm:$0xff]
    %v682 = vld [vmem:[%s661 + $0xf0] sm:$0xff]
    %v683 = vld [vmem:[%s661 + $0xf8] sm:$0xff]
    %v684 = vld [vmem:[%s661 + $0x108] sm:$0xff]
    %v685 = vld [vmem:[%s661 + $0x110] sm:$0xff]
    %v686 = vld [vmem:[%s661 + $0x120] sm:$0xff]
    %v687 = vld [vmem:[%s661 + $0x128] sm:$0xff]
    %v688 = vld [vmem:[%s661 + $0x138] sm:$0xff]
    %v689 = vld [vmem:[%s661 + $0x140] sm:$0xff]
    %v690 = vld [vmem:[%s661 + $0x150] sm:$0xff]
    %v691 = vld [vmem:[%s661 + $0x158] sm:$0xff]
    %v692 = vld [vmem:[%s661 + $0x168] sm:$0xff]
    %v693 = vld [vmem:[%s661 + $0x170] sm:$0xff]
    %v694 = vld [vmem:[%s661 + $0x1b0] sm:$0xff]
    %v695 = vld [vmem:[%s661 + $0x1b8] sm:$0xff]
    %v696 = vld [vmem:[%s661 + $0x1c8] sm:$0xff]
    %v697 = vld [vmem:[%s661 + $0x1d0] sm:$0xff]
    %v698 = vld [vmem:[%s661 + $0x1e0] sm:$0xff]
    %v699 = vld [vmem:[%s661 + $0x1e8] sm:$0xff]
    %v700 = vld [vmem:[%s661 + $0x1f8] sm:$0xff]
    %v701 = vld [vmem:[%s661 + $0x200] sm:$0xff]
    %v702 = vld [vmem:[%s661 + $0x210] sm:$0xff]
    %v703 = vld [vmem:[%s661 + $0x218] sm:$0xff]
    %v704 = vld [vmem:[%s661 + $0x228] sm:$0xff]
    %v705 = vld [vmem:[%s661 + $0x230] sm:$0xff]
    %v706 = vld [vmem:[%s661 + $0x240] sm:$0xff]
    %v707 = vld [vmem:[%s661 + $0x248] sm:$0xff]
    %v708 = vld [vmem:[%s661 + $0x258] sm:$0xff]
    %v709 = vld [vmem:[%s661 + $0x260] sm:$0xff]
    %v710 = vld [vmem:[%s661 + $0x270] sm:$0xff]
    %v711 = vld [vmem:[%s661 + $0x278] sm:$0xff]
    %v712 = vld [vmem:[%s661 + $0x288] sm:$0xff]
    %v713 = vld [vmem:[%s661 + $0x290] sm:$0xff]
    %v714 = vld [vmem:[%s661 + $0x2a0] sm:$0xff]
    %v715 = vld [vmem:[%s661 + $0x2a8] sm:$0xff]
    %v716 = vld [vmem:[%s661 + $0x2b8] sm:$0xff]
    %v717 = vld [vmem:[%s661 + $0x2c0] sm:$0xff]
    %v718 = vld [vmem:[%s661 + $0x2d0] sm:$0xff]
    %v719 = vld [vmem:[%s661 + $0x2d8] sm:$0xff]
    %v720 = vld [vmem:[%s661 + $0x2e8] sm:$0xff]
    %v721 = vld [vmem:[%s661 + $0x2f0] sm:$0xff]
    %v722 = vld [vmem:[%s661 + $0x300] sm:$0xff]
    %v723 = vld [vmem:[%s661 + $0x308] sm:$0xff]
    %v724 = vld [vmem:[%s661 + $0x318] sm:$0xff]
    %v725 = vld [vmem:[%s661 + $0x320] sm:$0xff]
    %v726 = vld [vmem:[%s661 + $0x1] sm:$0xff]
    %v727 = vld [vmem:[%s661 + $0x9] sm:$0xff]
    %v728 = vld [vmem:[%s661 + $0x19] sm:$0xff]
    %v729 = vld [vmem:[%s661 + $0x21] sm:$0xff]
    %v730 = vld [vmem:[%s661 + $0x31] sm:$0xff]
    %v731 = vld [vmem:[%s661 + $0x39] sm:$0xff]
    %v732 = vld [vmem:[%s661 + $0x49] sm:$0xff]
    %v733 = vld [vmem:[%s661 + $0x51] sm:$0xff]
    %v734 = vld [vmem:[%s661 + $0x61] sm:$0xff]
    %v735 = vld [vmem:[%s661 + $0x69] sm:$0xff]
    %v736 = vld [vmem:[%s661 + $0x79] sm:$0xff]
    %v737 = vld [vmem:[%s661 + $0x81] sm:$0xff]
    %v738 = vld [vmem:[%s661 + $0x91] sm:$0xff]
    %v739 = vld [vmem:[%s661 + $0x99] sm:$0xff]
    %v740 = vld [vmem:[%s661 + $0xa9] sm:$0xff]
    %v741 = vld [vmem:[%s661 + $0xb1] sm:$0xff]
    %v742 = vld [vmem:[%s661 + $0xc1] sm:$0xff]
    %v743 = vld [vmem:[%s661 + $0xc9] sm:$0xff]
    %v744 = vld [vmem:[%s661 + $0xd9] sm:$0xff]
    %v745 = vld [vmem:[%s661 + $0xe1] sm:$0xff]
    %v746 = vld [vmem:[%s661 + $0xf1] sm:$0xff]
    %v747 = vld [vmem:[%s661 + $0xf9] sm:$0xff]
    %v748 = vld [vmem:[%s661 + $0x109] sm:$0xff]
    %v749 = vld [vmem:[%s661 + $0x111] sm:$0xff]
    %v750 = vld [vmem:[%s661 + $0x121] sm:$0xff]
    %v751 = vld [vmem:[%s661 + $0x129] sm:$0xff]
    %v752 = vld [vmem:[%s661 + $0x139] sm:$0xff]
    %v753 = vld [vmem:[%s661 + $0x141] sm:$0xff]
    %v754 = vld [vmem:[%s661 + $0x151] sm:$0xff]
    %v755 = vld [vmem:[%s661 + $0x159] sm:$0xff]
    %v756 = vld [vmem:[%s661 + $0x169] sm:$0xff]
    %v757 = vld [vmem:[%s661 + $0x171] sm:$0xff]
    %v758 = vld [vmem:[%s661 + $0x1b1] sm:$0xff]
    %v759 = vld [vmem:[%s661 + $0x1b9] sm:$0xff]
    %v760 = vld [vmem:[%s661 + $0x1c9] sm:$0xff]
    %v761 = vld [vmem:[%s661 + $0x1d1] sm:$0xff]
    %v762 = vld [vmem:[%s661 + $0x1e1] sm:$0xff]
    %v763 = vld [vmem:[%s661 + $0x1e9] sm:$0xff]
    %v764 = vld [vmem:[%s661 + $0x1f9] sm:$0xff]
    %v765 = vld [vmem:[%s661 + $0x201] sm:$0xff]
    %v766 = vld [vmem:[%s661 + $0x211] sm:$0xff]
    %v767 = vld [vmem:[%s661 + $0x219] sm:$0xff]
    %v768 = vld [vmem:[%s661 + $0x229] sm:$0xff]
    %v769 = vld [vmem:[%s661 + $0x231] sm:$0xff]
    %v770 = vld [vmem:[%s661 + $0x241] sm:$0xff]
    %v771 = vld [vmem:[%s661 + $0x249] sm:$0xff]
    %v772 = vld [vmem:[%s661 + $0x259] sm:$0xff]
    %v773 = vld [vmem:[%s661 + $0x261] sm:$0xff]
    %v774 = vld [vmem:[%s661 + $0x271] sm:$0xff]
    %v775 = vld [vmem:[%s661 + $0x279] sm:$0xff]
    %v776 = vld [vmem:[%s661 + $0x289] sm:$0xff]
    %v777 = vld [vmem:[%s661 + $0x291] sm:$0xff]
    %v778 = vld [vmem:[%s661 + $0x2a1] sm:$0xff]
    %v779 = vld [vmem:[%s661 + $0x2a9] sm:$0xff]
    %v780 = vld [vmem:[%s661 + $0x2b9] sm:$0xff]
    %v781 = vld [vmem:[%s661 + $0x2c1] sm:$0xff]
    %v782 = vld [vmem:[%s661 + $0x2d1] sm:$0xff]
    %v783 = vld [vmem:[%s661 + $0x2d9] sm:$0xff]
    %v784 = vld [vmem:[%s661 + $0x2e9] sm:$0xff]
    %v785 = vld [vmem:[%s661 + $0x2f1] sm:$0xff]
    %v786 = vld [vmem:[%s661 + $0x301] sm:$0xff]
    %v787 = vld [vmem:[%s661 + $0x309] sm:$0xff]
    %v788 = vld [vmem:[%s661 + $0x319] sm:$0xff]
    %v789 = vld [vmem:[%s661 + $0x321] sm:$0xff]
    %v790 = vld [vmem:[%s661 + $0x2] sm:$0xff]
    %v791 = vld [vmem:[%s661 + $0xa] sm:$0xff]
    %v792 = vld [vmem:[%s661 + $0x1a] sm:$0xff]
    %v793 = vld [vmem:[%s661 + $0x22] sm:$0xff]
    %v794 = vld [vmem:[%s661 + $0x32] sm:$0xff]
    %v795 = vld [vmem:[%s661 + $0x3a] sm:$0xff]
    %v796 = vld [vmem:[%s661 + $0x4a] sm:$0xff]
    %v797 = vld [vmem:[%s661 + $0x52] sm:$0xff]
    %v798 = vld [vmem:[%s661 + $0x62] sm:$0xff]
    %v799 = vld [vmem:[%s661 + $0x6a] sm:$0xff]
    %v800 = vld [vmem:[%s661 + $0x7a] sm:$0xff]
    %v801 = vld [vmem:[%s661 + $0x82] sm:$0xff]
    %v802 = vld [vmem:[%s661 + $0x92] sm:$0xff]
    %v803 = vld [vmem:[%s661 + $0x9a] sm:$0xff]
    %v804 = vld [vmem:[%s661 + $0xaa] sm:$0xff]
    %v805 = vld [vmem:[%s661 + $0xb2] sm:$0xff]
    %v806 = vld [vmem:[%s661 + $0xc2] sm:$0xff]
    %v807 = vld [vmem:[%s661 + $0xca] sm:$0xff]
    %v808 = vld [vmem:[%s661 + $0xda] sm:$0xff]
    %v809 = vld [vmem:[%s661 + $0xe2] sm:$0xff]
    %v810 = vld [vmem:[%s661 + $0xf2] sm:$0xff]
    %v811 = vld [vmem:[%s661 + $0xfa] sm:$0xff]
    %v812 = vld [vmem:[%s661 + $0x10a] sm:$0xff]
    %v813 = vld [vmem:[%s661 + $0x112] sm:$0xff]
    %v814 = vld [vmem:[%s661 + $0x122] sm:$0xff]
    %v815 = vld [vmem:[%s661 + $0x12a] sm:$0xff]
    %v816 = vld [vmem:[%s661 + $0x13a] sm:$0xff]
    %v817 = vld [vmem:[%s661 + $0x142] sm:$0xff]
    %v818 = vld [vmem:[%s661 + $0x152] sm:$0xff]
    %v819 = vld [vmem:[%s661 + $0x15a] sm:$0xff]
    %v820 = vld [vmem:[%s661 + $0x16a] sm:$0xff]
    %v821 = vld [vmem:[%s661 + $0x172] sm:$0xff]
    %v822 = vld [vmem:[%s661 + $0x1b2] sm:$0xff]
    %v823 = vld [vmem:[%s661 + $0x1ba] sm:$0xff]
    %v824 = vld [vmem:[%s661 + $0x1ca] sm:$0xff]
    %v825 = vld [vmem:[%s661 + $0x1d2] sm:$0xff]
    %v826 = vld [vmem:[%s661 + $0x1e2] sm:$0xff]
    %v827 = vld [vmem:[%s661 + $0x1ea] sm:$0xff]
    %v828 = vld [vmem:[%s661 + $0x1fa] sm:$0xff]
    %v829 = vld [vmem:[%s661 + $0x202] sm:$0xff]
    %v830 = vld [vmem:[%s661 + $0x212] sm:$0xff]
    %v831 = vld [vmem:[%s661 + $0x21a] sm:$0xff]
    %v832 = vld [vmem:[%s661 + $0x22a] sm:$0xff]
    %v833 = vld [vmem:[%s661 + $0x232] sm:$0xff]
    %v834 = vld [vmem:[%s661 + $0x242] sm:$0xff]
    %v835 = vld [vmem:[%s661 + $0x24a] sm:$0xff]
    %v836 = vld [vmem:[%s661 + $0x25a] sm:$0xff]
    %v837 = vld [vmem:[%s661 + $0x262] sm:$0xff]
    %v838 = vld [vmem:[%s661 + $0x272] sm:$0xff]
    %v839 = vld [vmem:[%s661 + $0x27a] sm:$0xff]
    %v840 = vld [vmem:[%s661 + $0x28a] sm:$0xff]
    %v841 = vld [vmem:[%s661 + $0x292] sm:$0xff]
    %v842 = vld [vmem:[%s661 + $0x2a2] sm:$0xff]
    %v843 = vld [vmem:[%s661 + $0x2aa] sm:$0xff]
    %v844 = vld [vmem:[%s661 + $0x2ba] sm:$0xff]
    %v845 = vld [vmem:[%s661 + $0x2c2] sm:$0xff]
    %v846 = vld [vmem:[%s661 + $0x2d2] sm:$0xff]
    %v847 = vld [vmem:[%s661 + $0x2da] sm:$0xff]
    %v848 = vld [vmem:[%s661 + $0x2ea] sm:$0xff]
    %v849 = vld [vmem:[%s661 + $0x2f2] sm:$0xff]
    %v850 = vld [vmem:[%s661 + $0x302] sm:$0xff]
    %v851 = vld [vmem:[%s661 + $0x30a] sm:$0xff]
    %v852 = vld [vmem:[%s661 + $0x31a] sm:$0xff]
    %v853 = vld [vmem:[%s661 + $0x322] sm:$0xff]
    %918 = vrot.lane.b32.xlu0 %v341, 8
    %v919 = vpop.permute.xlu0 %918
    %920 = vrot.lane.b32.xlu0 %v342, 8
    %v921 = vpop.permute.xlu0 %920
    %922 = vrot.lane.b32.xlu0 %v343, 8
    %v923 = vpop.permute.xlu0 %922
    %924 = vrot.lane.b32.xlu0 %v344, 8
    %v925 = vpop.permute.xlu0 %924
    %926 = vrot.lane.b32.xlu0 %v345, 8
    %v927 = vpop.permute.xlu0 %926
    %928 = vrot.lane.b32.xlu0 %v346, 8
    %v929 = vpop.permute.xlu0 %928
    %930 = vrot.lane.b32.xlu0 %v347, 8
    %v931 = vpop.permute.xlu0 %930
    %932 = vrot.lane.b32.xlu0 %v348, 8
    %v933 = vpop.permute.xlu0 %932
    %934 = vrot.lane.b32.xlu0 %v349, 8
    %v935 = vpop.permute.xlu0 %934
    %936 = vrot.lane.b32.xlu0 %v350, 8
    %v937 = vpop.permute.xlu0 %936
    %938 = vrot.lane.b32.xlu0 %v351, 8
    %v939 = vpop.permute.xlu0 %938
    %940 = vrot.lane.b32.xlu0 %v352, 8
    %v941 = vpop.permute.xlu0 %940
    %942 = vrot.lane.b32.xlu0 %v353, 8
    %v943 = vpop.permute.xlu0 %942
    %944 = vrot.lane.b32.xlu0 %v354, 8
    %v945 = vpop.permute.xlu0 %944
    %946 = vrot.lane.b32.xlu0 %v355, 8
    %v947 = vpop.permute.xlu0 %946
    %948 = vrot.lane.b32.xlu0 %v356, 8
    %v949 = vpop.permute.xlu0 %948
    %950 = vrot.lane.b32.xlu0 %v357, 8
    %v951 = vpop.permute.xlu0 %950
    %952 = vrot.lane.b32.xlu0 %v358, 8
    %v953 = vpop.permute.xlu0 %952
    %954 = vrot.lane.b32.xlu0 %v359, 8
    %v955 = vpop.permute.xlu0 %954
    %956 = vrot.lane.b32.xlu0 %v360, 8
    %v957 = vpop.permute.xlu0 %956
    %958 = vrot.lane.b32.xlu0 %v361, 8
    %v959 = vpop.permute.xlu0 %958
    %960 = vrot.lane.b32.xlu0 %v362, 8
    %v961 = vpop.permute.xlu0 %960
    %962 = vrot.lane.b32.xlu0 %v363, 8
    %v963 = vpop.permute.xlu0 %962
    %964 = vrot.lane.b32.xlu0 %v364, 8
    %v965 = vpop.permute.xlu0 %964
    %966 = vrot.lane.b32.xlu0 %v365, 8
    %v967 = vpop.permute.xlu0 %966
    %968 = vrot.lane.b32.xlu0 %v366, 8
    %v969 = vpop.permute.xlu0 %968
    %970 = vrot.lane.b32.xlu0 %v367, 8
    %v971 = vpop.permute.xlu0 %970
    %972 = vrot.lane.b32.xlu0 %v368, 8
    %v973 = vpop.permute.xlu0 %972
    %974 = vrot.lane.b32.xlu0 %v369, 8
    %v975 = vpop.permute.xlu0 %974
    %976 = vrot.lane.b32.xlu0 %v370, 8
    %v977 = vpop.permute.xlu0 %976
    %978 = vrot.lane.b32.xlu0 %v371, 8
    %v979 = vpop.permute.xlu0 %978
    %980 = vrot.lane.b32.xlu0 %v372, 8
    %v981 = vpop.permute.xlu0 %980
    %982 = vrot.lane.b32.xlu0 %v373, 8
    %v983 = vpop.permute.xlu0 %982
    %984 = vrot.lane.b32.xlu0 %v374, 8
    %v985 = vpop.permute.xlu0 %984
    %986 = vrot.lane.b32.xlu0 %v375, 8
    %v987 = vpop.permute.xlu0 %986
    %988 = vrot.lane.b32.xlu0 %v376, 8
    %v989 = vpop.permute.xlu0 %988
    %990 = vrot.lane.b32.xlu0 %v377, 8
    %v991 = vpop.permute.xlu0 %990
    %992 = vrot.lane.b32.xlu0 %v378, 8
    %v993 = vpop.permute.xlu0 %992
    %994 = vrot.lane.b32.xlu0 %v379, 8
    %v995 = vpop.permute.xlu0 %994
    %996 = vrot.lane.b32.xlu0 %v380, 8
    %v997 = vpop.permute.xlu0 %996
    %998 = vrot.lane.b32.xlu0 %v381, 8
    %v999 = vpop.permute.xlu0 %998
    %1000 = vrot.lane.b32.xlu0 %v382, 8
    %v1001 = vpop.permute.xlu0 %1000
    %1002 = vrot.lane.b32.xlu0 %v383, 8
    %v1003 = vpop.permute.xlu0 %1002
    %1004 = vrot.lane.b32.xlu0 %v384, 8
    %v1005 = vpop.permute.xlu0 %1004
    %1006 = vrot.lane.b32.xlu0 %v385, 8
    %v1007 = vpop.permute.xlu0 %1006
    %1008 = vrot.lane.b32.xlu0 %v386, 8
    %v1009 = vpop.permute.xlu0 %1008
    %1010 = vrot.lane.b32.xlu0 %v387, 8
    %v1011 = vpop.permute.xlu0 %1010
    %1012 = vrot.lane.b32.xlu0 %v388, 8
    %v1013 = vpop.permute.xlu0 %1012
    %1014 = vrot.lane.b32.xlu0 %v389, 8
    %v1015 = vpop.permute.xlu0 %1014
    %1016 = vrot.lane.b32.xlu0 %v390, 8
    %v1017 = vpop.permute.xlu0 %1016
    %1018 = vrot.lane.b32.xlu0 %v391, 8
    %v1019 = vpop.permute.xlu0 %1018
    %1020 = vrot.lane.b32.xlu0 %v392, 8
    %v1021 = vpop.permute.xlu0 %1020
    %1022 = vrot.lane.b32.xlu0 %v393, 8
    %v1023 = vpop.permute.xlu0 %1022
    %1024 = vrot.lane.b32.xlu0 %v394, 8
    %v1025 = vpop.permute.xlu0 %1024
    %1026 = vrot.lane.b32.xlu0 %v395, 8
    %v1027 = vpop.permute.xlu0 %1026
    %1028 = vrot.lane.b32.xlu0 %v396, 8
    %v1029 = vpop.permute.xlu0 %1028
    %1030 = vrot.lane.b32.xlu0 %v397, 8
    %v1031 = vpop.permute.xlu0 %1030
    %1032 = vrot.lane.b32.xlu0 %v398, 8
    %v1033 = vpop.permute.xlu0 %1032
    %1034 = vrot.lane.b32.xlu0 %v399, 8
    %v1035 = vpop.permute.xlu0 %1034
    %1036 = vrot.lane.b32.xlu0 %v400, 8
    %v1037 = vpop.permute.xlu0 %1036
    %1038 = vrot.lane.b32.xlu0 %v401, 8
    %v1039 = vpop.permute.xlu0 %1038
    %1040 = vrot.lane.b32.xlu0 %v402, 8
    %v1041 = vpop.permute.xlu0 %1040
    %1042 = vrot.lane.b32.xlu0 %v403, 8
    %v1043 = vpop.permute.xlu0 %1042
    %1044 = vrot.lane.b32.xlu0 %v404, 8
    %v1045 = vpop.permute.xlu0 %1044
    %1174 = vrot.lane.b32.xlu0 %v405, 16
    %v1175 = vpop.permute.xlu0 %1174
    %1176 = vrot.lane.b32.xlu0 %v406, 16
    %v1177 = vpop.permute.xlu0 %1176
    %1178 = vrot.lane.b32.xlu0 %v407, 16
    %v1179 = vpop.permute.xlu0 %1178
    %1180 = vrot.lane.b32.xlu0 %v408, 16
    %v1181 = vpop.permute.xlu0 %1180
    %1182 = vrot.lane.b32.xlu0 %v409, 16
    %v1183 = vpop.permute.xlu0 %1182
    %1184 = vrot.lane.b32.xlu0 %v410, 16
    %v1185 = vpop.permute.xlu0 %1184
    %1186 = vrot.lane.b32.xlu0 %v411, 16
    %v1187 = vpop.permute.xlu0 %1186
    %1188 = vrot.lane.b32.xlu0 %v412, 16
    %v1189 = vpop.permute.xlu0 %1188
    %1190 = vrot.lane.b32.xlu0 %v413, 16
    %v1191 = vpop.permute.xlu0 %1190
    %1192 = vrot.lane.b32.xlu0 %v414, 16
    %v1193 = vpop.permute.xlu0 %1192
    %1194 = vrot.lane.b32.xlu0 %v415, 16
    %v1195 = vpop.permute.xlu0 %1194
    %1196 = vrot.lane.b32.xlu0 %v416, 16
    %v1197 = vpop.permute.xlu0 %1196
    %1198 = vrot.lane.b32.xlu0 %v417, 16
    %v1199 = vpop.permute.xlu0 %1198
    %1200 = vrot.lane.b32.xlu0 %v418, 16
    %v1201 = vpop.permute.xlu0 %1200
    %1202 = vrot.lane.b32.xlu0 %v419, 16
    %v1203 = vpop.permute.xlu0 %1202
    %1204 = vrot.lane.b32.xlu0 %v420, 16
    %v1205 = vpop.permute.xlu0 %1204
    %1206 = vrot.lane.b32.xlu0 %v421, 16
    %v1207 = vpop.permute.xlu0 %1206
    %1208 = vrot.lane.b32.xlu0 %v422, 16
    %v1209 = vpop.permute.xlu0 %1208
    %1210 = vrot.lane.b32.xlu0 %v423, 16
    %v1211 = vpop.permute.xlu0 %1210
    %1212 = vrot.lane.b32.xlu0 %v424, 16
    %v1213 = vpop.permute.xlu0 %1212
    %1214 = vrot.lane.b32.xlu0 %v425, 16
    %v1215 = vpop.permute.xlu0 %1214
    %1216 = vrot.lane.b32.xlu0 %v426, 16
    %v1217 = vpop.permute.xlu0 %1216
    %1218 = vrot.lane.b32.xlu0 %v427, 16
    %v1219 = vpop.permute.xlu0 %1218
    %1220 = vrot.lane.b32.xlu0 %v428, 16
    %v1221 = vpop.permute.xlu0 %1220
    %1222 = vrot.lane.b32.xlu0 %v429, 16
    %v1223 = vpop.permute.xlu0 %1222
    %1224 = vrot.lane.b32.xlu0 %v430, 16
    %v1225 = vpop.permute.xlu0 %1224
    %1226 = vrot.lane.b32.xlu0 %v431, 16
    %v1227 = vpop.permute.xlu0 %1226
    %1228 = vrot.lane.b32.xlu0 %v432, 16
    %v1229 = vpop.permute.xlu0 %1228
    %1230 = vrot.lane.b32.xlu0 %v433, 16
    %v1231 = vpop.permute.xlu0 %1230
    %1232 = vrot.lane.b32.xlu0 %v434, 16
    %v1233 = vpop.permute.xlu0 %1232
    %1234 = vrot.lane.b32.xlu0 %v435, 16
    %v1235 = vpop.permute.xlu0 %1234
    %1236 = vrot.lane.b32.xlu0 %v436, 16
    %v1237 = vpop.permute.xlu0 %1236
    %1238 = vrot.lane.b32.xlu0 %v437, 16
    %v1239 = vpop.permute.xlu0 %1238
    %1240 = vrot.lane.b32.xlu0 %v438, 16
    %v1241 = vpop.permute.xlu0 %1240
    %1242 = vrot.lane.b32.xlu0 %v439, 16
    %v1243 = vpop.permute.xlu0 %1242
    %1244 = vrot.lane.b32.xlu0 %v440, 16
    %v1245 = vpop.permute.xlu0 %1244
    %1246 = vrot.lane.b32.xlu0 %v441, 16
    %v1247 = vpop.permute.xlu0 %1246
    %1248 = vrot.lane.b32.xlu0 %v442, 16
    %v1249 = vpop.permute.xlu0 %1248
    %1250 = vrot.lane.b32.xlu0 %v443, 16
    %v1251 = vpop.permute.xlu0 %1250
    %1252 = vrot.lane.b32.xlu0 %v444, 16
    %v1253 = vpop.permute.xlu0 %1252
    %1254 = vrot.lane.b32.xlu0 %v445, 16
    %v1255 = vpop.permute.xlu0 %1254
    %1256 = vrot.lane.b32.xlu0 %v446, 16
    %v1257 = vpop.permute.xlu0 %1256
    %1258 = vrot.lane.b32.xlu0 %v447, 16
    %v1259 = vpop.permute.xlu0 %1258
    %1260 = vrot.lane.b32.xlu0 %v448, 16
    %v1261 = vpop.permute.xlu0 %1260
    %1262 = vrot.lane.b32.xlu0 %v449, 16
    %v1263 = vpop.permute.xlu0 %1262
    %1264 = vrot.lane.b32.xlu0 %v450, 16
    %v1265 = vpop.permute.xlu0 %1264
    %1266 = vrot.lane.b32.xlu0 %v451, 16
    %v1267 = vpop.permute.xlu0 %1266
    %1268 = vrot.lane.b32.xlu0 %v452, 16
    %v1269 = vpop.permute.xlu0 %1268
    %1270 = vrot.lane.b32.xlu0 %v453, 16
    %v1271 = vpop.permute.xlu0 %1270
    %1272 = vrot.lane.b32.xlu0 %v454, 16
    %v1273 = vpop.permute.xlu0 %1272
    %1274 = vrot.lane.b32.xlu0 %v455, 16
    %v1275 = vpop.permute.xlu0 %1274
    %1276 = vrot.lane.b32.xlu0 %v456, 16
    %v1277 = vpop.permute.xlu0 %1276
    %1278 = vrot.lane.b32.xlu0 %v457, 16
    %v1279 = vpop.permute.xlu0 %1278
    %1280 = vrot.lane.b32.xlu0 %v458, 16
    %v1281 = vpop.permute.xlu0 %1280
    %1282 = vrot.lane.b32.xlu0 %v459, 16
    %v1283 = vpop.permute.xlu0 %1282
    %1284 = vrot.lane.b32.xlu0 %v460, 16
    %v1285 = vpop.permute.xlu0 %1284
    %1286 = vrot.lane.b32.xlu0 %v461, 16
    %v1287 = vpop.permute.xlu0 %1286
    %1288 = vrot.lane.b32.xlu0 %v462, 16
    %v1289 = vpop.permute.xlu0 %1288
    %1290 = vrot.lane.b32.xlu0 %v463, 16
    %v1291 = vpop.permute.xlu0 %1290
    %1292 = vrot.lane.b32.xlu0 %v464, 16
    %v1293 = vpop.permute.xlu0 %1292
    %1294 = vrot.lane.b32.xlu0 %v465, 16
    %v1295 = vpop.permute.xlu0 %1294
    %1296 = vrot.lane.b32.xlu0 %v466, 16
    %v1297 = vpop.permute.xlu0 %1296
    %1298 = vrot.lane.b32.xlu0 %v467, 16
    %v1299 = vpop.permute.xlu0 %1298
    %1300 = vrot.lane.b32.xlu0 %v468, 16
    %v1301 = vpop.permute.xlu0 %1300
    %1430 = vrot.lane.b32.xlu0 %v469, 24
    %v1431 = vpop.permute.xlu0 %1430
    %1432 = vrot.lane.b32.xlu0 %v470, 24
    %v1433 = vpop.permute.xlu0 %1432
    %1434 = vrot.lane.b32.xlu0 %v471, 24
    %v1435 = vpop.permute.xlu0 %1434
    %1436 = vrot.lane.b32.xlu0 %v472, 24
    %v1437 = vpop.permute.xlu0 %1436
    %1438 = vrot.lane.b32.xlu0 %v473, 24
    %v1439 = vpop.permute.xlu0 %1438
    %1440 = vrot.lane.b32.xlu0 %v474, 24
    %v1441 = vpop.permute.xlu0 %1440
    %1442 = vrot.lane.b32.xlu0 %v475, 24
    %v1443 = vpop.permute.xlu0 %1442
    %1444 = vrot.lane.b32.xlu0 %v476, 24
    %v1445 = vpop.permute.xlu0 %1444
    %1446 = vrot.lane.b32.xlu0 %v477, 24
    %v1447 = vpop.permute.xlu0 %1446
    %1448 = vrot.lane.b32.xlu0 %v478, 24
    %v1449 = vpop.permute.xlu0 %1448
    %1450 = vrot.lane.b32.xlu0 %v479, 24
    %v1451 = vpop.permute.xlu0 %1450
    %1452 = vrot.lane.b32.xlu0 %v480, 24
    %v1453 = vpop.permute.xlu0 %1452
    %1454 = vrot.lane.b32.xlu0 %v481, 24
    %v1455 = vpop.permute.xlu0 %1454
    %1456 = vrot.lane.b32.xlu0 %v482, 24
    %v1457 = vpop.permute.xlu0 %1456
    %1458 = vrot.lane.b32.xlu0 %v483, 24
    %v1459 = vpop.permute.xlu0 %1458
    %1460 = vrot.lane.b32.xlu0 %v484, 24
    %v1461 = vpop.permute.xlu0 %1460
    %1462 = vrot.lane.b32.xlu0 %v485, 24
    %v1463 = vpop.permute.xlu0 %1462
    %1464 = vrot.lane.b32.xlu0 %v486, 24
    %v1465 = vpop.permute.xlu0 %1464
    %1466 = vrot.lane.b32.xlu0 %v487, 24
    %v1467 = vpop.permute.xlu0 %1466
    %1468 = vrot.lane.b32.xlu0 %v488, 24
    %v1469 = vpop.permute.xlu0 %1468
    %1470 = vrot.lane.b32.xlu0 %v489, 24
    %v1471 = vpop.permute.xlu0 %1470
    %1472 = vrot.lane.b32.xlu0 %v490, 24
    %v1473 = vpop.permute.xlu0 %1472
    %1474 = vrot.lane.b32.xlu0 %v491, 24
    %v1475 = vpop.permute.xlu0 %1474
    %1476 = vrot.lane.b32.xlu0 %v492, 24
    %v1477 = vpop.permute.xlu0 %1476
    %1478 = vrot.lane.b32.xlu0 %v493, 24
    %v1479 = vpop.permute.xlu0 %1478
    %1480 = vrot.lane.b32.xlu0 %v494, 24
    %v1481 = vpop.permute.xlu0 %1480
    %1482 = vrot.lane.b32.xlu0 %v495, 24
    %v1483 = vpop.permute.xlu0 %1482
    %1484 = vrot.lane.b32.xlu0 %v496, 24
    %v1485 = vpop.permute.xlu0 %1484
    %1486 = vrot.lane.b32.xlu0 %v497, 24
    %v1487 = vpop.permute.xlu0 %1486
    %1488 = vrot.lane.b32.xlu0 %v498, 24
    %v1489 = vpop.permute.xlu0 %1488
    %1490 = vrot.lane.b32.xlu0 %v499, 24
    %v1491 = vpop.permute.xlu0 %1490
    %1492 = vrot.lane.b32.xlu0 %v500, 24
    %v1493 = vpop.permute.xlu0 %1492
    %1494 = vrot.lane.b32.xlu0 %v501, 24
    %v1495 = vpop.permute.xlu0 %1494
    %1496 = vrot.lane.b32.xlu0 %v502, 24
    %v1497 = vpop.permute.xlu0 %1496
    %1498 = vrot.lane.b32.xlu0 %v503, 24
    %v1499 = vpop.permute.xlu0 %1498
    %1500 = vrot.lane.b32.xlu0 %v504, 24
    %v1501 = vpop.permute.xlu0 %1500
    %1502 = vrot.lane.b32.xlu0 %v505, 24
    %v1503 = vpop.permute.xlu0 %1502
    %1504 = vrot.lane.b32.xlu0 %v506, 24
    %v1505 = vpop.permute.xlu0 %1504
    %1506 = vrot.lane.b32.xlu0 %v507, 24
    %v1507 = vpop.permute.xlu0 %1506
    %1508 = vrot.lane.b32.xlu0 %v508, 24
    %v1509 = vpop.permute.xlu0 %1508
    %1510 = vrot.lane.b32.xlu0 %v509, 24
    %v1511 = vpop.permute.xlu0 %1510
    %1512 = vrot.lane.b32.xlu0 %v510, 24
    %v1513 = vpop.permute.xlu0 %1512
    %1514 = vrot.lane.b32.xlu0 %v511, 24
    %v1515 = vpop.permute.xlu0 %1514
    %1516 = vrot.lane.b32.xlu0 %v512, 24
    %v1517 = vpop.permute.xlu0 %1516
    %1518 = vrot.lane.b32.xlu0 %v513, 24
    %v1519 = vpop.permute.xlu0 %1518
    %1520 = vrot.lane.b32.xlu0 %v514, 24
    %v1521 = vpop.permute.xlu0 %1520
    %1522 = vrot.lane.b32.xlu0 %v515, 24
    %v1523 = vpop.permute.xlu0 %1522
    %1524 = vrot.lane.b32.xlu0 %v516, 24
    %v1525 = vpop.permute.xlu0 %1524
    %1526 = vrot.lane.b32.xlu0 %v517, 24
    %v1527 = vpop.permute.xlu0 %1526
    %1528 = vrot.lane.b32.xlu0 %v518, 24
    %v1529 = vpop.permute.xlu0 %1528
    %1530 = vrot.lane.b32.xlu0 %v519, 24
    %v1531 = vpop.permute.xlu0 %1530
    %1532 = vrot.lane.b32.xlu0 %v520, 24
    %v1533 = vpop.permute.xlu0 %1532
    %1534 = vrot.lane.b32.xlu0 %v521, 24
    %v1535 = vpop.permute.xlu0 %1534
    %1536 = vrot.lane.b32.xlu0 %v522, 24
    %v1537 = vpop.permute.xlu0 %1536
    %1538 = vrot.lane.b32.xlu0 %v523, 24
    %v1539 = vpop.permute.xlu0 %1538
    %1540 = vrot.lane.b32.xlu0 %v524, 24
    %v1541 = vpop.permute.xlu0 %1540
    %1542 = vrot.lane.b32.xlu0 %v525, 24
    %v1543 = vpop.permute.xlu0 %1542
    %1544 = vrot.lane.b32.xlu0 %v526, 24
    %v1545 = vpop.permute.xlu0 %1544
    %1546 = vrot.lane.b32.xlu0 %v527, 24
    %v1547 = vpop.permute.xlu0 %1546
    %1548 = vrot.lane.b32.xlu0 %v528, 24
    %v1549 = vpop.permute.xlu0 %1548
    %1550 = vrot.lane.b32.xlu0 %v529, 24
    %v1551 = vpop.permute.xlu0 %1550
    %1552 = vrot.lane.b32.xlu0 %v530, 24
    %v1553 = vpop.permute.xlu0 %1552
    %1554 = vrot.lane.b32.xlu0 %v531, 24
    %v1555 = vpop.permute.xlu0 %1554
    %1556 = vrot.lane.b32.xlu0 %v532, 24
    %v1557 = vpop.permute.xlu0 %1556
    %1686 = vrot.lane.b32.xlu0 %v533, 32
    %v1687 = vpop.permute.xlu0 %1686
    %1688 = vrot.lane.b32.xlu0 %v534, 32
    %v1689 = vpop.permute.xlu0 %1688
    %1690 = vrot.lane.b32.xlu0 %v535, 32
    %v1691 = vpop.permute.xlu0 %1690
    %1692 = vrot.lane.b32.xlu0 %v536, 32
    %v1693 = vpop.permute.xlu0 %1692
    %1694 = vrot.lane.b32.xlu0 %v537, 32
    %v1695 = vpop.permute.xlu0 %1694
    %1696 = vrot.lane.b32.xlu0 %v538, 32
    %v1697 = vpop.permute.xlu0 %1696
    %1698 = vrot.lane.b32.xlu0 %v539, 32
    %v1699 = vpop.permute.xlu0 %1698
    %1700 = vrot.lane.b32.xlu0 %v540, 32
    %v1701 = vpop.permute.xlu0 %1700
    %1702 = vrot.lane.b32.xlu0 %v541, 32
    %v1703 = vpop.permute.xlu0 %1702
    %1704 = vrot.lane.b32.xlu0 %v542, 32
    %v1705 = vpop.permute.xlu0 %1704
    %1706 = vrot.lane.b32.xlu0 %v543, 32
    %v1707 = vpop.permute.xlu0 %1706
    %1708 = vrot.lane.b32.xlu0 %v544, 32
    %v1709 = vpop.permute.xlu0 %1708
    %1710 = vrot.lane.b32.xlu0 %v545, 32
    %v1711 = vpop.permute.xlu0 %1710
    %1712 = vrot.lane.b32.xlu0 %v546, 32
    %v1713 = vpop.permute.xlu0 %1712
    %1714 = vrot.lane.b32.xlu0 %v547, 32
    %v1715 = vpop.permute.xlu0 %1714
    %1716 = vrot.lane.b32.xlu0 %v548, 32
    %v1717 = vpop.permute.xlu0 %1716
    %1718 = vrot.lane.b32.xlu0 %v549, 32
    %v1719 = vpop.permute.xlu0 %1718
    %1720 = vrot.lane.b32.xlu0 %v550, 32
    %v1721 = vpop.permute.xlu0 %1720
    %1722 = vrot.lane.b32.xlu0 %v551, 32
    %v1723 = vpop.permute.xlu0 %1722
    %1724 = vrot.lane.b32.xlu0 %v552, 32
    %v1725 = vpop.permute.xlu0 %1724
    %1726 = vrot.lane.b32.xlu0 %v553, 32
    %v1727 = vpop.permute.xlu0 %1726
    %1728 = vrot.lane.b32.xlu0 %v554, 32
    %v1729 = vpop.permute.xlu0 %1728
    %1730 = vrot.lane.b32.xlu0 %v555, 32
    %v1731 = vpop.permute.xlu0 %1730
    %1732 = vrot.lane.b32.xlu0 %v556, 32
    %v1733 = vpop.permute.xlu0 %1732
    %1734 = vrot.lane.b32.xlu0 %v557, 32
    %v1735 = vpop.permute.xlu0 %1734
    %1736 = vrot.lane.b32.xlu0 %v558, 32
    %v1737 = vpop.permute.xlu0 %1736
    %1738 = vrot.lane.b32.xlu0 %v559, 32
    %v1739 = vpop.permute.xlu0 %1738
    %1740 = vrot.lane.b32.xlu0 %v560, 32
    %v1741 = vpop.permute.xlu0 %1740
    %1742 = vrot.lane.b32.xlu0 %v561, 32
    %v1743 = vpop.permute.xlu0 %1742
    %1744 = vrot.lane.b32.xlu0 %v562, 32
    %v1745 = vpop.permute.xlu0 %1744
    %1746 = vrot.lane.b32.xlu0 %v563, 32
    %v1747 = vpop.permute.xlu0 %1746
    %1748 = vrot.lane.b32.xlu0 %v564, 32
    %v1749 = vpop.permute.xlu0 %1748
    %1750 = vrot.lane.b32.xlu0 %v565, 32
    %v1751 = vpop.permute.xlu0 %1750
    %1752 = vrot.lane.b32.xlu0 %v566, 32
    %v1753 = vpop.permute.xlu0 %1752
    %1754 = vrot.lane.b32.xlu0 %v567, 32
    %v1755 = vpop.permute.xlu0 %1754
    %1756 = vrot.lane.b32.xlu0 %v568, 32
    %v1757 = vpop.permute.xlu0 %1756
    %1758 = vrot.lane.b32.xlu0 %v569, 32
    %v1759 = vpop.permute.xlu0 %1758
    %1760 = vrot.lane.b32.xlu0 %v570, 32
    %v1761 = vpop.permute.xlu0 %1760
    %1762 = vrot.lane.b32.xlu0 %v571, 32
    %v1763 = vpop.permute.xlu0 %1762
    %1764 = vrot.lane.b32.xlu0 %v572, 32
    %v1765 = vpop.permute.xlu0 %1764
    %1766 = vrot.lane.b32.xlu0 %v573, 32
    %v1767 = vpop.permute.xlu0 %1766
    %1768 = vrot.lane.b32.xlu0 %v574, 32
    %v1769 = vpop.permute.xlu0 %1768
    %1770 = vrot.lane.b32.xlu0 %v575, 32
    %v1771 = vpop.permute.xlu0 %1770
    %1772 = vrot.lane.b32.xlu0 %v576, 32
    %v1773 = vpop.permute.xlu0 %1772
    %1774 = vrot.lane.b32.xlu0 %v577, 32
    %v1775 = vpop.permute.xlu0 %1774
    %1776 = vrot.lane.b32.xlu0 %v578, 32
    %v1777 = vpop.permute.xlu0 %1776
    %1778 = vrot.lane.b32.xlu0 %v579, 32
    %v1779 = vpop.permute.xlu0 %1778
    %1780 = vrot.lane.b32.xlu0 %v580, 32
    %v1781 = vpop.permute.xlu0 %1780
    %1782 = vrot.lane.b32.xlu0 %v581, 32
    %v1783 = vpop.permute.xlu0 %1782
    %1784 = vrot.lane.b32.xlu0 %v582, 32
    %v1785 = vpop.permute.xlu0 %1784
    %1786 = vrot.lane.b32.xlu0 %v583, 32
    %v1787 = vpop.permute.xlu0 %1786
    %1788 = vrot.lane.b32.xlu0 %v584, 32
    %v1789 = vpop.permute.xlu0 %1788
    %1790 = vrot.lane.b32.xlu0 %v585, 32
    %v1791 = vpop.permute.xlu0 %1790
    %1792 = vrot.lane.b32.xlu0 %v586, 32
    %v1793 = vpop.permute.xlu0 %1792
    %1794 = vrot.lane.b32.xlu0 %v587, 32
    %v1795 = vpop.permute.xlu0 %1794
    %1796 = vrot.lane.b32.xlu0 %v588, 32
    %v1797 = vpop.permute.xlu0 %1796
    %1798 = vrot.lane.b32.xlu0 %v589, 32
    %v1799 = vpop.permute.xlu0 %1798
    %1800 = vrot.lane.b32.xlu0 %v590, 32
    %v1801 = vpop.permute.xlu0 %1800
    %1802 = vrot.lane.b32.xlu0 %v591, 32
    %v1803 = vpop.permute.xlu0 %1802
    %1804 = vrot.lane.b32.xlu0 %v592, 32
    %v1805 = vpop.permute.xlu0 %1804
    %1806 = vrot.lane.b32.xlu0 %v593, 32
    %v1807 = vpop.permute.xlu0 %1806
    %1808 = vrot.lane.b32.xlu0 %v594, 32
    %v1809 = vpop.permute.xlu0 %1808
    %1810 = vrot.lane.b32.xlu0 %v595, 32
    %v1811 = vpop.permute.xlu0 %1810
    %1812 = vrot.lane.b32.xlu0 %v596, 32
    %v1813 = vpop.permute.xlu0 %1812
    %1942 = vrot.lane.b32.xlu0 %v597, 40
    %v1943 = vpop.permute.xlu0 %1942
    %1944 = vrot.lane.b32.xlu0 %v598, 40
    %v1945 = vpop.permute.xlu0 %1944
    %1946 = vrot.lane.b32.xlu0 %v599, 40
    %v1947 = vpop.permute.xlu0 %1946
    %1948 = vrot.lane.b32.xlu0 %v600, 40
    %v1949 = vpop.permute.xlu0 %1948
    %1950 = vrot.lane.b32.xlu0 %v601, 40
    %v1951 = vpop.permute.xlu0 %1950
    %1952 = vrot.lane.b32.xlu0 %v602, 40
    %v1953 = vpop.permute.xlu0 %1952
    %1954 = vrot.lane.b32.xlu0 %v603, 40
    %v1955 = vpop.permute.xlu0 %1954
    %1956 = vrot.lane.b32.xlu0 %v604, 40
    %v1957 = vpop.permute.xlu0 %1956
    %1958 = vrot.lane.b32.xlu0 %v605, 40
    %v1959 = vpop.permute.xlu0 %1958
    %1960 = vrot.lane.b32.xlu0 %v606, 40
    %v1961 = vpop.permute.xlu0 %1960
    %1962 = vrot.lane.b32.xlu0 %v607, 40
    %v1963 = vpop.permute.xlu0 %1962
    %1964 = vrot.lane.b32.xlu0 %v608, 40
    %v1965 = vpop.permute.xlu0 %1964
    %1966 = vrot.lane.b32.xlu0 %v609, 40
    %v1967 = vpop.permute.xlu0 %1966
    %1968 = vrot.lane.b32.xlu0 %v610, 40
    %v1969 = vpop.permute.xlu0 %1968
    %1970 = vrot.lane.b32.xlu0 %v611, 40
    %v1971 = vpop.permute.xlu0 %1970
    %1972 = vrot.lane.b32.xlu0 %v612, 40
    %v1973 = vpop.permute.xlu0 %1972
    %1974 = vrot.lane.b32.xlu0 %v613, 40
    %v1975 = vpop.permute.xlu0 %1974
    %1976 = vrot.lane.b32.xlu0 %v614, 40
    %v1977 = vpop.permute.xlu0 %1976
    %1978 = vrot.lane.b32.xlu0 %v615, 40
    %v1979 = vpop.permute.xlu0 %1978
    %1980 = vrot.lane.b32.xlu0 %v616, 40
    %v1981 = vpop.permute.xlu0 %1980
    %1982 = vrot.lane.b32.xlu0 %v617, 40
    %v1983 = vpop.permute.xlu0 %1982
    %1984 = vrot.lane.b32.xlu0 %v618, 40
    %v1985 = vpop.permute.xlu0 %1984
    %1986 = vrot.lane.b32.xlu0 %v619, 40
    %v1987 = vpop.permute.xlu0 %1986
    %1988 = vrot.lane.b32.xlu0 %v620, 40
    %v1989 = vpop.permute.xlu0 %1988
    %1990 = vrot.lane.b32.xlu0 %v621, 40
    %v1991 = vpop.permute.xlu0 %1990
    %1992 = vrot.lane.b32.xlu0 %v622, 40
    %v1993 = vpop.permute.xlu0 %1992
    %1994 = vrot.lane.b32.xlu0 %v623, 40
    %v1995 = vpop.permute.xlu0 %1994
    %1996 = vrot.lane.b32.xlu0 %v624, 40
    %v1997 = vpop.permute.xlu0 %1996
    %1998 = vrot.lane.b32.xlu0 %v625, 40
    %v1999 = vpop.permute.xlu0 %1998
    %2000 = vrot.lane.b32.xlu0 %v626, 40
    %v2001 = vpop.permute.xlu0 %2000
    %2002 = vrot.lane.b32.xlu0 %v627, 40
    %v2003 = vpop.permute.xlu0 %2002
    %2004 = vrot.lane.b32.xlu0 %v628, 40
    %v2005 = vpop.permute.xlu0 %2004
    %2006 = vrot.lane.b32.xlu0 %v629, 40
    %v2007 = vpop.permute.xlu0 %2006
    %2008 = vrot.lane.b32.xlu0 %v630, 40
    %v2009 = vpop.permute.xlu0 %2008
    %2010 = vrot.lane.b32.xlu0 %v631, 40
    %v2011 = vpop.permute.xlu0 %2010
    %2012 = vrot.lane.b32.xlu0 %v632, 40
    %v2013 = vpop.permute.xlu0 %2012
    %2014 = vrot.lane.b32.xlu0 %v633, 40
    %v2015 = vpop.permute.xlu0 %2014
    %2016 = vrot.lane.b32.xlu0 %v634, 40
    %v2017 = vpop.permute.xlu0 %2016
    %2018 = vrot.lane.b32.xlu0 %v635, 40
    %v2019 = vpop.permute.xlu0 %2018
    %2020 = vrot.lane.b32.xlu0 %v636, 40
    %v2021 = vpop.permute.xlu0 %2020
    %2022 = vrot.lane.b32.xlu0 %v637, 40
    %v2023 = vpop.permute.xlu0 %2022
    %2024 = vrot.lane.b32.xlu0 %v638, 40
    %v2025 = vpop.permute.xlu0 %2024
    %2026 = vrot.lane.b32.xlu0 %v639, 40
    %v2027 = vpop.permute.xlu0 %2026
    %2028 = vrot.lane.b32.xlu0 %v640, 40
    %v2029 = vpop.permute.xlu0 %2028
    %2030 = vrot.lane.b32.xlu0 %v641, 40
    %v2031 = vpop.permute.xlu0 %2030
    %2032 = vrot.lane.b32.xlu0 %v642, 40
    %v2033 = vpop.permute.xlu0 %2032
    %2034 = vrot.lane.b32.xlu0 %v643, 40
    %v2035 = vpop.permute.xlu0 %2034
    %2036 = vrot.lane.b32.xlu0 %v644, 40
    %v2037 = vpop.permute.xlu0 %2036
    %2038 = vrot.lane.b32.xlu0 %v645, 40
    %v2039 = vpop.permute.xlu0 %2038
    %2040 = vrot.lane.b32.xlu0 %v646, 40
    %v2041 = vpop.permute.xlu0 %2040
    %2042 = vrot.lane.b32.xlu0 %v647, 40
    %v2043 = vpop.permute.xlu0 %2042
    %2044 = vrot.lane.b32.xlu0 %v648, 40
    %v2045 = vpop.permute.xlu0 %2044
    %2046 = vrot.lane.b32.xlu0 %v649, 40
    %v2047 = vpop.permute.xlu0 %2046
    %2048 = vrot.lane.b32.xlu0 %v650, 40
    %v2049 = vpop.permute.xlu0 %2048
    %2050 = vrot.lane.b32.xlu0 %v651, 40
    %v2051 = vpop.permute.xlu0 %2050
    %2052 = vrot.lane.b32.xlu0 %v652, 40
    %v2053 = vpop.permute.xlu0 %2052
    %2054 = vrot.lane.b32.xlu0 %v653, 40
    %v2055 = vpop.permute.xlu0 %2054
    %2056 = vrot.lane.b32.xlu0 %v654, 40
    %v2057 = vpop.permute.xlu0 %2056
    %2058 = vrot.lane.b32.xlu0 %v655, 40
    %v2059 = vpop.permute.xlu0 %2058
    %2060 = vrot.lane.b32.xlu0 %v656, 40
    %v2061 = vpop.permute.xlu0 %2060
    %2062 = vrot.lane.b32.xlu0 %v657, 40
    %v2063 = vpop.permute.xlu0 %2062
    %2064 = vrot.lane.b32.xlu0 %v658, 40
    %v2065 = vpop.permute.xlu0 %2064
    %2066 = vrot.lane.b32.xlu0 %v659, 40
    %v2067 = vpop.permute.xlu0 %2066
    %2068 = vrot.lane.b32.xlu0 %v660, 40
    %v2069 = vpop.permute.xlu0 %2068
    %2198 = vrot.lane.b32.xlu0 %v662, 48
    %v2199 = vpop.permute.xlu0 %2198
    %2200 = vrot.lane.b32.xlu0 %v663, 48
    %v2201 = vpop.permute.xlu0 %2200
    %2202 = vrot.lane.b32.xlu0 %v664, 48
    %v2203 = vpop.permute.xlu0 %2202
    %2204 = vrot.lane.b32.xlu0 %v665, 48
    %v2205 = vpop.permute.xlu0 %2204
    %2206 = vrot.lane.b32.xlu0 %v666, 48
    %v2207 = vpop.permute.xlu0 %2206
    %2208 = vrot.lane.b32.xlu0 %v667, 48
    %v2209 = vpop.permute.xlu0 %2208
    %2210 = vrot.lane.b32.xlu0 %v668, 48
    %v2211 = vpop.permute.xlu0 %2210
    %2212 = vrot.lane.b32.xlu0 %v669, 48
    %v2213 = vpop.permute.xlu0 %2212
    %2214 = vrot.lane.b32.xlu0 %v670, 48
    %v2215 = vpop.permute.xlu0 %2214
    %2216 = vrot.lane.b32.xlu0 %v671, 48
    %v2217 = vpop.permute.xlu0 %2216
    %2218 = vrot.lane.b32.xlu0 %v672, 48
    %v2219 = vpop.permute.xlu0 %2218
    %2220 = vrot.lane.b32.xlu0 %v673, 48
    %v2221 = vpop.permute.xlu0 %2220
    %2222 = vrot.lane.b32.xlu0 %v674, 48
    %v2223 = vpop.permute.xlu0 %2222
    %2224 = vrot.lane.b32.xlu0 %v675, 48
    %v2225 = vpop.permute.xlu0 %2224
    %2226 = vrot.lane.b32.xlu0 %v676, 48
    %v2227 = vpop.permute.xlu0 %2226
    %2228 = vrot.lane.b32.xlu0 %v677, 48
    %v2229 = vpop.permute.xlu0 %2228
    %2230 = vrot.lane.b32.xlu0 %v678, 48
    %v2231 = vpop.permute.xlu0 %2230
    %2232 = vrot.lane.b32.xlu0 %v679, 48
    %v2233 = vpop.permute.xlu0 %2232
    %2234 = vrot.lane.b32.xlu0 %v680, 48
    %v2235 = vpop.permute.xlu0 %2234
    %2236 = vrot.lane.b32.xlu0 %v681, 48
    %v2237 = vpop.permute.xlu0 %2236
    %2238 = vrot.lane.b32.xlu0 %v682, 48
    %v2239 = vpop.permute.xlu0 %2238
    %2240 = vrot.lane.b32.xlu0 %v683, 48
    %v2241 = vpop.permute.xlu0 %2240
    %2242 = vrot.lane.b32.xlu0 %v684, 48
    %v2243 = vpop.permute.xlu0 %2242
    %2244 = vrot.lane.b32.xlu0 %v685, 48
    %v2245 = vpop.permute.xlu0 %2244
    %2246 = vrot.lane.b32.xlu0 %v686, 48
    %v2247 = vpop.permute.xlu0 %2246
    %2248 = vrot.lane.b32.xlu0 %v687, 48
    %v2249 = vpop.permute.xlu0 %2248
    %2250 = vrot.lane.b32.xlu0 %v688, 48
    %v2251 = vpop.permute.xlu0 %2250
    %2252 = vrot.lane.b32.xlu0 %v689, 48
    %v2253 = vpop.permute.xlu0 %2252
    %2254 = vrot.lane.b32.xlu0 %v690, 48
    %v2255 = vpop.permute.xlu0 %2254
    %2256 = vrot.lane.b32.xlu0 %v691, 48
    %v2257 = vpop.permute.xlu0 %2256
    %2258 = vrot.lane.b32.xlu0 %v692, 48
    %v2259 = vpop.permute.xlu0 %2258
    %2260 = vrot.lane.b32.xlu0 %v693, 48
    %v2261 = vpop.permute.xlu0 %2260
    %2262 = vrot.lane.b32.xlu0 %v694, 48
    %v2263 = vpop.permute.xlu0 %2262
    %2264 = vrot.lane.b32.xlu0 %v695, 48
    %v2265 = vpop.permute.xlu0 %2264
    %2266 = vrot.lane.b32.xlu0 %v696, 48
    %v2267 = vpop.permute.xlu0 %2266
    %2268 = vrot.lane.b32.xlu0 %v697, 48
    %v2269 = vpop.permute.xlu0 %2268
    %2270 = vrot.lane.b32.xlu0 %v698, 48
    %v2271 = vpop.permute.xlu0 %2270
    %2272 = vrot.lane.b32.xlu0 %v699, 48
    %v2273 = vpop.permute.xlu0 %2272
    %2274 = vrot.lane.b32.xlu0 %v700, 48
    %v2275 = vpop.permute.xlu0 %2274
    %2276 = vrot.lane.b32.xlu0 %v701, 48
    %v2277 = vpop.permute.xlu0 %2276
    %2278 = vrot.lane.b32.xlu0 %v702, 48
    %v2279 = vpop.permute.xlu0 %2278
    %2280 = vrot.lane.b32.xlu0 %v703, 48
    %v2281 = vpop.permute.xlu0 %2280
    %2282 = vrot.lane.b32.xlu0 %v704, 48
    %v2283 = vpop.permute.xlu0 %2282
    %2284 = vrot.lane.b32.xlu0 %v705, 48
    %v2285 = vpop.permute.xlu0 %2284
    %2286 = vrot.lane.b32.xlu0 %v706, 48
    %v2287 = vpop.permute.xlu0 %2286
    %2288 = vrot.lane.b32.xlu0 %v707, 48
    %v2289 = vpop.permute.xlu0 %2288
    %2290 = vrot.lane.b32.xlu0 %v708, 48
    %v2291 = vpop.permute.xlu0 %2290
    %2292 = vrot.lane.b32.xlu0 %v709, 48
    %v2293 = vpop.permute.xlu0 %2292
    %2294 = vrot.lane.b32.xlu0 %v710, 48
    %v2295 = vpop.permute.xlu0 %2294
    %2296 = vrot.lane.b32.xlu0 %v711, 48
    %v2297 = vpop.permute.xlu0 %2296
    %2298 = vrot.lane.b32.xlu0 %v712, 48
    %v2299 = vpop.permute.xlu0 %2298
    %2300 = vrot.lane.b32.xlu0 %v713, 48
    %v2301 = vpop.permute.xlu0 %2300
    %2302 = vrot.lane.b32.xlu0 %v714, 48
    %v2303 = vpop.permute.xlu0 %2302
    %2304 = vrot.lane.b32.xlu0 %v715, 48
    %v2305 = vpop.permute.xlu0 %2304
    %2306 = vrot.lane.b32.xlu0 %v716, 48
    %v2307 = vpop.permute.xlu0 %2306
    %2308 = vrot.lane.b32.xlu0 %v717, 48
    %v2309 = vpop.permute.xlu0 %2308
    %2310 = vrot.lane.b32.xlu0 %v718, 48
    %v2311 = vpop.permute.xlu0 %2310
    %2312 = vrot.lane.b32.xlu0 %v719, 48
    %v2313 = vpop.permute.xlu0 %2312
    %2314 = vrot.lane.b32.xlu0 %v720, 48
    %v2315 = vpop.permute.xlu0 %2314
    %2316 = vrot.lane.b32.xlu0 %v721, 48
    %v2317 = vpop.permute.xlu0 %2316
    %2318 = vrot.lane.b32.xlu0 %v722, 48
    %v2319 = vpop.permute.xlu0 %2318
    %2320 = vrot.lane.b32.xlu0 %v723, 48
    %v2321 = vpop.permute.xlu0 %2320
    %2322 = vrot.lane.b32.xlu0 %v724, 48
    %v2323 = vpop.permute.xlu0 %2322
    %2324 = vrot.lane.b32.xlu0 %v725, 48
    %v2325 = vpop.permute.xlu0 %2324
    %2454 = vrot.lane.b32.xlu0 %v726, 56
    %v2455 = vpop.permute.xlu0 %2454
    %2456 = vrot.lane.b32.xlu0 %v727, 56
    %v2457 = vpop.permute.xlu0 %2456
    %2458 = vrot.lane.b32.xlu0 %v728, 56
    %v2459 = vpop.permute.xlu0 %2458
    %2460 = vrot.lane.b32.xlu0 %v729, 56
    %v2461 = vpop.permute.xlu0 %2460
    %2462 = vrot.lane.b32.xlu0 %v730, 56
    %v2463 = vpop.permute.xlu0 %2462
    %2464 = vrot.lane.b32.xlu0 %v731, 56
    %v2465 = vpop.permute.xlu0 %2464
    %2466 = vrot.lane.b32.xlu0 %v732, 56
    %v2467 = vpop.permute.xlu0 %2466
    %2468 = vrot.lane.b32.xlu0 %v733, 56
    %v2469 = vpop.permute.xlu0 %2468
    %2470 = vrot.lane.b32.xlu0 %v734, 56
    %v2471 = vpop.permute.xlu0 %2470
    %2472 = vrot.lane.b32.xlu0 %v735, 56
    %v2473 = vpop.permute.xlu0 %2472
    %2474 = vrot.lane.b32.xlu0 %v736, 56
    %v2475 = vpop.permute.xlu0 %2474
    %2476 = vrot.lane.b32.xlu0 %v737, 56
    %v2477 = vpop.permute.xlu0 %2476
    %2478 = vrot.lane.b32.xlu0 %v738, 56
    %v2479 = vpop.permute.xlu0 %2478
    %2480 = vrot.lane.b32.xlu0 %v739, 56
    %v2481 = vpop.permute.xlu0 %2480
    %2482 = vrot.lane.b32.xlu0 %v740, 56
    %v2483 = vpop.permute.xlu0 %2482
    %2484 = vrot.lane.b32.xlu0 %v741, 56
    %v2485 = vpop.permute.xlu0 %2484
    %2486 = vrot.lane.b32.xlu0 %v742, 56
    %v2487 = vpop.permute.xlu0 %2486
    %2488 = vrot.lane.b32.xlu0 %v743, 56
    %v2489 = vpop.permute.xlu0 %2488
    %2490 = vrot.lane.b32.xlu0 %v744, 56
    %v2491 = vpop.permute.xlu0 %2490
    %2492 = vrot.lane.b32.xlu0 %v745, 56
    %v2493 = vpop.permute.xlu0 %2492
    %2494 = vrot.lane.b32.xlu0 %v746, 56
    %v2495 = vpop.permute.xlu0 %2494
    %2496 = vrot.lane.b32.xlu0 %v747, 56
    %v2497 = vpop.permute.xlu0 %2496
    %2498 = vrot.lane.b32.xlu0 %v748, 56
    %v2499 = vpop.permute.xlu0 %2498
    %2500 = vrot.lane.b32.xlu0 %v749, 56
    %v2501 = vpop.permute.xlu0 %2500
    %2502 = vrot.lane.b32.xlu0 %v750, 56
    %v2503 = vpop.permute.xlu0 %2502
    %2504 = vrot.lane.b32.xlu0 %v751, 56
    %v2505 = vpop.permute.xlu0 %2504
    %2506 = vrot.lane.b32.xlu0 %v752, 56
    %v2507 = vpop.permute.xlu0 %2506
    %2508 = vrot.lane.b32.xlu0 %v753, 56
    %v2509 = vpop.permute.xlu0 %2508
    %2510 = vrot.lane.b32.xlu0 %v754, 56
    %v2511 = vpop.permute.xlu0 %2510
    %2512 = vrot.lane.b32.xlu0 %v755, 56
    %v2513 = vpop.permute.xlu0 %2512
    %2514 = vrot.lane.b32.xlu0 %v756, 56
    %v2515 = vpop.permute.xlu0 %2514
    %2516 = vrot.lane.b32.xlu0 %v757, 56
    %v2517 = vpop.permute.xlu0 %2516
    %2518 = vrot.lane.b32.xlu0 %v758, 56
    %v2519 = vpop.permute.xlu0 %2518
    %2520 = vrot.lane.b32.xlu0 %v759, 56
    %v2521 = vpop.permute.xlu0 %2520
    %2522 = vrot.lane.b32.xlu0 %v760, 56
    %v2523 = vpop.permute.xlu0 %2522
    %2524 = vrot.lane.b32.xlu0 %v761, 56
    %v2525 = vpop.permute.xlu0 %2524
    %2526 = vrot.lane.b32.xlu0 %v762, 56
    %v2527 = vpop.permute.xlu0 %2526
    %2528 = vrot.lane.b32.xlu0 %v763, 56
    %v2529 = vpop.permute.xlu0 %2528
    %2530 = vrot.lane.b32.xlu0 %v764, 56
    %v2531 = vpop.permute.xlu0 %2530
    %2532 = vrot.lane.b32.xlu0 %v765, 56
    %v2533 = vpop.permute.xlu0 %2532
    %2534 = vrot.lane.b32.xlu0 %v766, 56
    %v2535 = vpop.permute.xlu0 %2534
    %2536 = vrot.lane.b32.xlu0 %v767, 56
    %v2537 = vpop.permute.xlu0 %2536
    %2538 = vrot.lane.b32.xlu0 %v768, 56
    %v2539 = vpop.permute.xlu0 %2538
    %2540 = vrot.lane.b32.xlu0 %v769, 56
    %v2541 = vpop.permute.xlu0 %2540
    %2542 = vrot.lane.b32.xlu0 %v770, 56
    %v2543 = vpop.permute.xlu0 %2542
    %2544 = vrot.lane.b32.xlu0 %v771, 56
    %v2545 = vpop.permute.xlu0 %2544
    %2546 = vrot.lane.b32.xlu0 %v772, 56
    %v2547 = vpop.permute.xlu0 %2546
    %2548 = vrot.lane.b32.xlu0 %v773, 56
    %v2549 = vpop.permute.xlu0 %2548
    %2550 = vrot.lane.b32.xlu0 %v774, 56
    %v2551 = vpop.permute.xlu0 %2550
    %2552 = vrot.lane.b32.xlu0 %v775, 56
    %v2553 = vpop.permute.xlu0 %2552
    %2554 = vrot.lane.b32.xlu0 %v776, 56
    %v2555 = vpop.permute.xlu0 %2554
    %2556 = vrot.lane.b32.xlu0 %v777, 56
    %v2557 = vpop.permute.xlu0 %2556
    %2558 = vrot.lane.b32.xlu0 %v778, 56
    %v2559 = vpop.permute.xlu0 %2558
    %2560 = vrot.lane.b32.xlu0 %v779, 56
    %v2561 = vpop.permute.xlu0 %2560
    %2562 = vrot.lane.b32.xlu0 %v780, 56
    %v2563 = vpop.permute.xlu0 %2562
    %2564 = vrot.lane.b32.xlu0 %v781, 56
    %v2565 = vpop.permute.xlu0 %2564
    %2566 = vrot.lane.b32.xlu0 %v782, 56
    %v2567 = vpop.permute.xlu0 %2566
    %2568 = vrot.lane.b32.xlu0 %v783, 56
    %v2569 = vpop.permute.xlu0 %2568
    %2570 = vrot.lane.b32.xlu0 %v784, 56
    %v2571 = vpop.permute.xlu0 %2570
    %2572 = vrot.lane.b32.xlu0 %v785, 56
    %v2573 = vpop.permute.xlu0 %2572
    %2574 = vrot.lane.b32.xlu0 %v786, 56
    %v2575 = vpop.permute.xlu0 %2574
    %2576 = vrot.lane.b32.xlu0 %v787, 56
    %v2577 = vpop.permute.xlu0 %2576
    %2578 = vrot.lane.b32.xlu0 %v788, 56
    %v2579 = vpop.permute.xlu0 %2578
    %2580 = vrot.lane.b32.xlu0 %v789, 56
    %v2581 = vpop.permute.xlu0 %2580
    %2710 = vrot.lane.b32.xlu0 %v790, 64
    %v2711 = vpop.permute.xlu0 %2710
    %2712 = vrot.lane.b32.xlu0 %v791, 64
    %v2713 = vpop.permute.xlu0 %2712
    %2714 = vrot.lane.b32.xlu0 %v792, 64
    %v2715 = vpop.permute.xlu0 %2714
    %2716 = vrot.lane.b32.xlu0 %v793, 64
    %v2717 = vpop.permute.xlu0 %2716
    %2718 = vrot.lane.b32.xlu0 %v794, 64
    %v2719 = vpop.permute.xlu0 %2718
    %2720 = vrot.lane.b32.xlu0 %v795, 64
    %v2721 = vpop.permute.xlu0 %2720
    %2722 = vrot.lane.b32.xlu0 %v796, 64
    %v2723 = vpop.permute.xlu0 %2722
    %2724 = vrot.lane.b32.xlu0 %v797, 64
    %v2725 = vpop.permute.xlu0 %2724
    %2726 = vrot.lane.b32.xlu0 %v798, 64
    %v2727 = vpop.permute.xlu0 %2726
    %2728 = vrot.lane.b32.xlu0 %v799, 64
    %v2729 = vpop.permute.xlu0 %2728
    %2730 = vrot.lane.b32.xlu0 %v800, 64
    %v2731 = vpop.permute.xlu0 %2730
    %2732 = vrot.lane.b32.xlu0 %v801, 64
    %v2733 = vpop.permute.xlu0 %2732
    %2734 = vrot.lane.b32.xlu0 %v802, 64
    %v2735 = vpop.permute.xlu0 %2734
    %2736 = vrot.lane.b32.xlu0 %v803, 64
    %v2737 = vpop.permute.xlu0 %2736
    %2738 = vrot.lane.b32.xlu0 %v804, 64
    %v2739 = vpop.permute.xlu0 %2738
    %2740 = vrot.lane.b32.xlu0 %v805, 64
    %v2741 = vpop.permute.xlu0 %2740
    %2742 = vrot.lane.b32.xlu0 %v806, 64
    %v2743 = vpop.permute.xlu0 %2742
    %2744 = vrot.lane.b32.xlu0 %v807, 64
    %v2745 = vpop.permute.xlu0 %2744
    %2746 = vrot.lane.b32.xlu0 %v808, 64
    %v2747 = vpop.permute.xlu0 %2746
    %2748 = vrot.lane.b32.xlu0 %v809, 64
    %v2749 = vpop.permute.xlu0 %2748
    %2750 = vrot.lane.b32.xlu0 %v810, 64
    %v2751 = vpop.permute.xlu0 %2750
    %2752 = vrot.lane.b32.xlu0 %v811, 64
    %v2753 = vpop.permute.xlu0 %2752
    %2754 = vrot.lane.b32.xlu0 %v812, 64
    %v2755 = vpop.permute.xlu0 %2754
    %2756 = vrot.lane.b32.xlu0 %v813, 64
    %v2757 = vpop.permute.xlu0 %2756
    %2758 = vrot.lane.b32.xlu0 %v814, 64
    %v2759 = vpop.permute.xlu0 %2758
    %2760 = vrot.lane.b32.xlu0 %v815, 64
    %v2761 = vpop.permute.xlu0 %2760
    %2762 = vrot.lane.b32.xlu0 %v816, 64
    %v2763 = vpop.permute.xlu0 %2762
    %2764 = vrot.lane.b32.xlu0 %v817, 64
    %v2765 = vpop.permute.xlu0 %2764
    %2766 = vrot.lane.b32.xlu0 %v818, 64
    %v2767 = vpop.permute.xlu0 %2766
    %2768 = vrot.lane.b32.xlu0 %v819, 64
    %v2769 = vpop.permute.xlu0 %2768
    %2770 = vrot.lane.b32.xlu0 %v820, 64
    %v2771 = vpop.permute.xlu0 %2770
    %2772 = vrot.lane.b32.xlu0 %v821, 64
    %v2773 = vpop.permute.xlu0 %2772
    %2774 = vrot.lane.b32.xlu0 %v822, 64
    %v2775 = vpop.permute.xlu0 %2774
    %2776 = vrot.lane.b32.xlu0 %v823, 64
    %v2777 = vpop.permute.xlu0 %2776
    %2778 = vrot.lane.b32.xlu0 %v824, 64
    %v2779 = vpop.permute.xlu0 %2778
    %2780 = vrot.lane.b32.xlu0 %v825, 64
    %v2781 = vpop.permute.xlu0 %2780
    %2782 = vrot.lane.b32.xlu0 %v826, 64
    %v2783 = vpop.permute.xlu0 %2782
    %2784 = vrot.lane.b32.xlu0 %v827, 64
    %v2785 = vpop.permute.xlu0 %2784
    %2786 = vrot.lane.b32.xlu0 %v828, 64
    %v2787 = vpop.permute.xlu0 %2786
    %2788 = vrot.lane.b32.xlu0 %v829, 64
    %v2789 = vpop.permute.xlu0 %2788
    %2790 = vrot.lane.b32.xlu0 %v830, 64
    %v2791 = vpop.permute.xlu0 %2790
    %2792 = vrot.lane.b32.xlu0 %v831, 64
    %v2793 = vpop.permute.xlu0 %2792
    %2794 = vrot.lane.b32.xlu0 %v832, 64
    %v2795 = vpop.permute.xlu0 %2794
    %2796 = vrot.lane.b32.xlu0 %v833, 64
    %v2797 = vpop.permute.xlu0 %2796
    %2798 = vrot.lane.b32.xlu0 %v834, 64
    %v2799 = vpop.permute.xlu0 %2798
    %2800 = vrot.lane.b32.xlu0 %v835, 64
    %v2801 = vpop.permute.xlu0 %2800
    %2802 = vrot.lane.b32.xlu0 %v836, 64
    %v2803 = vpop.permute.xlu0 %2802
    %2804 = vrot.lane.b32.xlu0 %v837, 64
    %v2805 = vpop.permute.xlu0 %2804
    %2806 = vrot.lane.b32.xlu0 %v838, 64
    %v2807 = vpop.permute.xlu0 %2806
    %2808 = vrot.lane.b32.xlu0 %v839, 64
    %v2809 = vpop.permute.xlu0 %2808
    %2810 = vrot.lane.b32.xlu0 %v840, 64
    %v2811 = vpop.permute.xlu0 %2810
    %2812 = vrot.lane.b32.xlu0 %v841, 64
    %v2813 = vpop.permute.xlu0 %2812
    %2814 = vrot.lane.b32.xlu0 %v842, 64
    %v2815 = vpop.permute.xlu0 %2814
    %2816 = vrot.lane.b32.xlu0 %v843, 64
    %v2817 = vpop.permute.xlu0 %2816
    %2818 = vrot.lane.b32.xlu0 %v844, 64
    %v2819 = vpop.permute.xlu0 %2818
    %2820 = vrot.lane.b32.xlu0 %v845, 64
    %v2821 = vpop.permute.xlu0 %2820
    %2822 = vrot.lane.b32.xlu0 %v846, 64
    %v2823 = vpop.permute.xlu0 %2822
    %2824 = vrot.lane.b32.xlu0 %v847, 64
    %v2825 = vpop.permute.xlu0 %2824
    %2826 = vrot.lane.b32.xlu0 %v848, 64
    %v2827 = vpop.permute.xlu0 %2826
    %2828 = vrot.lane.b32.xlu0 %v849, 64
    %v2829 = vpop.permute.xlu0 %2828
    %2830 = vrot.lane.b32.xlu0 %v850, 64
    %v2831 = vpop.permute.xlu0 %2830
    %2832 = vrot.lane.b32.xlu0 %v851, 64
    %v2833 = vpop.permute.xlu0 %2832
    %2834 = vrot.lane.b32.xlu0 %v852, 64
    %v2835 = vpop.permute.xlu0 %2834
    %2836 = vrot.lane.b32.xlu0 %v853, 64
    %v2837 = vpop.permute.xlu0 %2836
    %v2902 = vsel %vm91, %v277, %v919
    %v2903 = vsel %vm91, %v278, %v921
    %v2904 = vsel %vm91, %v279, %v923
    %v2905 = vsel %vm91, %v280, %v925
    %v2906 = vsel %vm91, %v281, %v927
    %v2907 = vsel %vm91, %v282, %v929
    %v2908 = vsel %vm91, %v283, %v931
    %v2909 = vsel %vm91, %v284, %v933
    %v2910 = vsel %vm91, %v285, %v935
    %v2911 = vsel %vm91, %v286, %v937
    %v2912 = vsel %vm91, %v287, %v939
    %v2913 = vsel %vm91, %v288, %v941
    %v2914 = vsel %vm91, %v289, %v943
    %v2915 = vsel %vm91, %v290, %v945
    %v2916 = vsel %vm91, %v291, %v947
    %v2917 = vsel %vm91, %v292, %v949
    %v2918 = vsel %vm91, %v293, %v951
    %v2919 = vsel %vm91, %v294, %v953
    %v2920 = vsel %vm91, %v295, %v955
    %v2921 = vsel %vm91, %v296, %v957
    %v2922 = vsel %vm91, %v297, %v959
    %v2923 = vsel %vm91, %v298, %v961
    %v2924 = vsel %vm91, %v299, %v963
    %v2925 = vsel %vm91, %v300, %v965
    %v2926 = vsel %vm91, %v301, %v967
    %v2927 = vsel %vm91, %v302, %v969
    %v2928 = vsel %vm91, %v303, %v971
    %v2929 = vsel %vm91, %v304, %v973
    %v2930 = vsel %vm91, %v305, %v975
    %v2931 = vsel %vm91, %v306, %v977
    %v2932 = vsel %vm91, %v307, %v979
    %v2933 = vsel %vm91, %v308, %v981
    %v2934 = vsel %vm91, %v309, %v983
    %v2935 = vsel %vm91, %v310, %v985
    %v2936 = vsel %vm91, %v311, %v987
    %v2937 = vsel %vm91, %v312, %v989
    %v2938 = vsel %vm91, %v313, %v991
    %v2939 = vsel %vm91, %v314, %v993
    %v2940 = vsel %vm91, %v315, %v995
    %v2941 = vsel %vm91, %v316, %v997
    %v2942 = vsel %vm91, %v317, %v999
    %v2943 = vsel %vm91, %v318, %v1001
    %v2944 = vsel %vm91, %v319, %v1003
    %v2945 = vsel %vm91, %v320, %v1005
    %v2946 = vsel %vm91, %v321, %v1007
    %v2947 = vsel %vm91, %v322, %v1009
    %v2948 = vsel %vm91, %v323, %v1011
    %v2949 = vsel %vm91, %v324, %v1013
    %v2950 = vsel %vm91, %v325, %v1015
    %v2951 = vsel %vm91, %v326, %v1017
    %v2952 = vsel %vm91, %v327, %v1019
    %v2953 = vsel %vm91, %v328, %v1021
    %v2954 = vsel %vm91, %v329, %v1023
    %v2955 = vsel %vm91, %v330, %v1025
    %v2956 = vsel %vm91, %v331, %v1027
    %v2957 = vsel %vm91, %v332, %v1029
    %v2958 = vsel %vm91, %v333, %v1031
    %v2959 = vsel %vm91, %v334, %v1033
    %v2960 = vsel %vm91, %v335, %v1035
    %v2961 = vsel %vm91, %v336, %v1037
    %v2962 = vsel %vm91, %v337, %v1039
    %v2963 = vsel %vm91, %v338, %v1041
    %v2964 = vsel %vm91, %v339, %v1043
    %v2965 = vsel %vm91, %v340, %v1045
    %vm2966 = vcmask 130048
    %v2967 = vsel %vm2966, %v2902, %v1175
    %v2968 = vsel %vm2966, %v2903, %v1177
    %v2969 = vsel %vm2966, %v2904, %v1179
    %v2970 = vsel %vm2966, %v2905, %v1181
    %v2971 = vsel %vm2966, %v2906, %v1183
    %v2972 = vsel %vm2966, %v2907, %v1185
    %v2973 = vsel %vm2966, %v2908, %v1187
    %v2974 = vsel %vm2966, %v2909, %v1189
    %v2975 = vsel %vm2966, %v2910, %v1191
    %v2976 = vsel %vm2966, %v2911, %v1193
    %v2977 = vsel %vm2966, %v2912, %v1195
    %v2978 = vsel %vm2966, %v2913, %v1197
    %v2979 = vsel %vm2966, %v2914, %v1199
    %v2980 = vsel %vm2966, %v2915, %v1201
    %v2981 = vsel %vm2966, %v2916, %v1203
    %v2982 = vsel %vm2966, %v2917, %v1205
    %v2983 = vsel %vm2966, %v2918, %v1207
    %v2984 = vsel %vm2966, %v2919, %v1209
    %v2985 = vsel %vm2966, %v2920, %v1211
    %v2986 = vsel %vm2966, %v2921, %v1213
    %v2987 = vsel %vm2966, %v2922, %v1215
    %v2988 = vsel %vm2966, %v2923, %v1217
    %v2989 = vsel %vm2966, %v2924, %v1219
    %v2990 = vsel %vm2966, %v2925, %v1221
    %v2991 = vsel %vm2966, %v2926, %v1223
    %v2992 = vsel %vm2966, %v2927, %v1225
    %v2993 = vsel %vm2966, %v2928, %v1227
    %v2994 = vsel %vm2966, %v2929, %v1229
    %v2995 = vsel %vm2966, %v2930, %v1231
    %v2996 = vsel %vm2966, %v2931, %v1233
    %v2997 = vsel %vm2966, %v2932, %v1235
    %v2998 = vsel %vm2966, %v2933, %v1237
    %v2999 = vsel %vm2966, %v2934, %v1239
    %v3000 = vsel %vm2966, %v2935, %v1241
    %v3001 = vsel %vm2966, %v2936, %v1243
    %v3002 = vsel %vm2966, %v2937, %v1245
    %v3003 = vsel %vm2966, %v2938, %v1247
    %v3004 = vsel %vm2966, %v2939, %v1249
    %v3005 = vsel %vm2966, %v2940, %v1251
    %v3006 = vsel %vm2966, %v2941, %v1253
    %v3007 = vsel %vm2966, %v2942, %v1255
    %v3008 = vsel %vm2966, %v2943, %v1257
    %v3009 = vsel %vm2966, %v2944, %v1259
    %v3010 = vsel %vm2966, %v2945, %v1261
    %v3011 = vsel %vm2966, %v2946, %v1263
    %v3012 = vsel %vm2966, %v2947, %v1265
    %v3013 = vsel %vm2966, %v2948, %v1267
    %v3014 = vsel %vm2966, %v2949, %v1269
    %v3015 = vsel %vm2966, %v2950, %v1271
    %v3016 = vsel %vm2966, %v2951, %v1273
    %v3017 = vsel %vm2966, %v2952, %v1275
    %v3018 = vsel %vm2966, %v2953, %v1277
    %v3019 = vsel %vm2966, %v2954, %v1279
    %v3020 = vsel %vm2966, %v2955, %v1281
    %v3021 = vsel %vm2966, %v2956, %v1283
    %v3022 = vsel %vm2966, %v2957, %v1285
    %v3023 = vsel %vm2966, %v2958, %v1287
    %v3024 = vsel %vm2966, %v2959, %v1289
    %v3025 = vsel %vm2966, %v2960, %v1291
    %v3026 = vsel %vm2966, %v2961, %v1293
    %v3027 = vsel %vm2966, %v2962, %v1295
    %v3028 = vsel %vm2966, %v2963, %v1297
    %v3029 = vsel %vm2966, %v2964, %v1299
    %v3030 = vsel %vm2966, %v2965, %v1301
    %vm3031 = vcmask 195584
    %v3032 = vsel %vm3031, %v2967, %v1431
    %v3033 = vsel %vm3031, %v2968, %v1433
    %v3034 = vsel %vm3031, %v2969, %v1435
    %v3035 = vsel %vm3031, %v2970, %v1437
    %v3036 = vsel %vm3031, %v2971, %v1439
    %v3037 = vsel %vm3031, %v2972, %v1441
    %v3038 = vsel %vm3031, %v2973, %v1443
    %v3039 = vsel %vm3031, %v2974, %v1445
    %v3040 = vsel %vm3031, %v2975, %v1447
    %v3041 = vsel %vm3031, %v2976, %v1449
    %v3042 = vsel %vm3031, %v2977, %v1451
    %v3043 = vsel %vm3031, %v2978, %v1453
    %v3044 = vsel %vm3031, %v2979, %v1455
    %v3045 = vsel %vm3031, %v2980, %v1457
    %v3046 = vsel %vm3031, %v2981, %v1459
    %v3047 = vsel %vm3031, %v2982, %v1461
    %v3048 = vsel %vm3031, %v2983, %v1463
    %v3049 = vsel %vm3031, %v2984, %v1465
    %v3050 = vsel %vm3031, %v2985, %v1467
    %v3051 = vsel %vm3031, %v2986, %v1469
    %v3052 = vsel %vm3031, %v2987, %v1471
    %v3053 = vsel %vm3031, %v2988, %v1473
    %v3054 = vsel %vm3031, %v2989, %v1475
    %v3055 = vsel %vm3031, %v2990, %v1477
    %v3056 = vsel %vm3031, %v2991, %v1479
    %v3057 = vsel %vm3031, %v2992, %v1481
    %v3058 = vsel %vm3031, %v2993, %v1483
    %v3059 = vsel %vm3031, %v2994, %v1485
    %v3060 = vsel %vm3031, %v2995, %v1487
    %v3061 = vsel %vm3031, %v2996, %v1489
    %v3062 = vsel %vm3031, %v2997, %v1491
    %v3063 = vsel %vm3031, %v2998, %v1493
    %v3064 = vsel %vm3031, %v2999, %v1495
    %v3065 = vsel %vm3031, %v3000, %v1497
    %v3066 = vsel %vm3031, %v3001, %v1499
    %v3067 = vsel %vm3031, %v3002, %v1501
    %v3068 = vsel %vm3031, %v3003, %v1503
    %v3069 = vsel %vm3031, %v3004, %v1505
    %v3070 = vsel %vm3031, %v3005, %v1507
    %v3071 = vsel %vm3031, %v3006, %v1509
    %v3072 = vsel %vm3031, %v3007, %v1511
    %v3073 = vsel %vm3031, %v3008, %v1513
    %v3074 = vsel %vm3031, %v3009, %v1515
    %v3075 = vsel %vm3031, %v3010, %v1517
    %v3076 = vsel %vm3031, %v3011, %v1519
    %v3077 = vsel %vm3031, %v3012, %v1521
    %v3078 = vsel %vm3031, %v3013, %v1523
    %v3079 = vsel %vm3031, %v3014, %v1525
    %v3080 = vsel %vm3031, %v3015, %v1527
    %v3081 = vsel %vm3031, %v3016, %v1529
    %v3082 = vsel %vm3031, %v3017, %v1531
    %v3083 = vsel %vm3031, %v3018, %v1533
    %v3084 = vsel %vm3031, %v3019, %v1535
    %v3085 = vsel %vm3031, %v3020, %v1537
    %v3086 = vsel %vm3031, %v3021, %v1539
    %v3087 = vsel %vm3031, %v3022, %v1541
    %v3088 = vsel %vm3031, %v3023, %v1543
    %v3089 = vsel %vm3031, %v3024, %v1545
    %v3090 = vsel %vm3031, %v3025, %v1547
    %v3091 = vsel %vm3031, %v3026, %v1549
    %v3092 = vsel %vm3031, %v3027, %v1551
    %v3093 = vsel %vm3031, %v3028, %v1553
    %v3094 = vsel %vm3031, %v3029, %v1555
    %v3095 = vsel %vm3031, %v3030, %v1557
    %vm3096 = vcmask 261120
    %v3097 = vsel %vm3096, %v3032, %v1687
    %v3098 = vsel %vm3096, %v3033, %v1689
    %v3099 = vsel %vm3096, %v3034, %v1691
    %v3100 = vsel %vm3096, %v3035, %v1693
    %v3101 = vsel %vm3096, %v3036, %v1695
    %v3102 = vsel %vm3096, %v3037, %v1697
    %v3103 = vsel %vm3096, %v3038, %v1699
    %v3104 = vsel %vm3096, %v3039, %v1701
    %v3105 = vsel %vm3096, %v3040, %v1703
    %v3106 = vsel %vm3096, %v3041, %v1705
    %v3107 = vsel %vm3096, %v3042, %v1707
    %v3108 = vsel %vm3096, %v3043, %v1709
    %v3109 = vsel %vm3096, %v3044, %v1711
    %v3110 = vsel %vm3096, %v3045, %v1713
    %v3111 = vsel %vm3096, %v3046, %v1715
    %v3112 = vsel %vm3096, %v3047, %v1717
    %v3113 = vsel %vm3096, %v3048, %v1719
    %v3114 = vsel %vm3096, %v3049, %v1721
    %v3115 = vsel %vm3096, %v3050, %v1723
    %v3116 = vsel %vm3096, %v3051, %v1725
    %v3117 = vsel %vm3096, %v3052, %v1727
    %v3118 = vsel %vm3096, %v3053, %v1729
    %v3119 = vsel %vm3096, %v3054, %v1731
    %v3120 = vsel %vm3096, %v3055, %v1733
    %v3121 = vsel %vm3096, %v3056, %v1735
    %v3122 = vsel %vm3096, %v3057, %v1737
    %v3123 = vsel %vm3096, %v3058, %v1739
    %v3124 = vsel %vm3096, %v3059, %v1741
    %v3125 = vsel %vm3096, %v3060, %v1743
    %v3126 = vsel %vm3096, %v3061, %v1745
    %v3127 = vsel %vm3096, %v3062, %v1747
    %v3128 = vsel %vm3096, %v3063, %v1749
    %v3129 = vsel %vm3096, %v3064, %v1751
    %v3130 = vsel %vm3096, %v3065, %v1753
    %v3131 = vsel %vm3096, %v3066, %v1755
    %v3132 = vsel %vm3096, %v3067, %v1757
    %v3133 = vsel %vm3096, %v3068, %v1759
    %v3134 = vsel %vm3096, %v3069, %v1761
    %v3135 = vsel %vm3096, %v3070, %v1763
    %v3136 = vsel %vm3096, %v3071, %v1765
    %v3137 = vsel %vm3096, %v3072, %v1767
    %v3138 = vsel %vm3096, %v3073, %v1769
    %v3139 = vsel %vm3096, %v3074, %v1771
    %v3140 = vsel %vm3096, %v3075, %v1773
    %v3141 = vsel %vm3096, %v3076, %v1775
    %v3142 = vsel %vm3096, %v3077, %v1777
    %v3143 = vsel %vm3096, %v3078, %v1779
    %v3144 = vsel %vm3096, %v3079, %v1781
    %v3145 = vsel %vm3096, %v3080, %v1783
    %v3146 = vsel %vm3096, %v3081, %v1785
    %v3147 = vsel %vm3096, %v3082, %v1787
    %v3148 = vsel %vm3096, %v3083, %v1789
    %v3149 = vsel %vm3096, %v3084, %v1791
    %v3150 = vsel %vm3096, %v3085, %v1793
    %v3151 = vsel %vm3096, %v3086, %v1795
    %v3152 = vsel %vm3096, %v3087, %v1797
    %v3153 = vsel %vm3096, %v3088, %v1799
    %v3154 = vsel %vm3096, %v3089, %v1801
    %v3155 = vsel %vm3096, %v3090, %v1803
    %v3156 = vsel %vm3096, %v3091, %v1805
    %v3157 = vsel %vm3096, %v3092, %v1807
    %v3158 = vsel %vm3096, %v3093, %v1809
    %v3159 = vsel %vm3096, %v3094, %v1811
    %v3160 = vsel %vm3096, %v3095, %v1813
    %vm3161 = vcmask 326656
    %v3162 = vsel %vm3161, %v3097, %v1943
    %v3163 = vsel %vm3161, %v3098, %v1945
    %v3164 = vsel %vm3161, %v3099, %v1947
    %v3165 = vsel %vm3161, %v3100, %v1949
    %v3166 = vsel %vm3161, %v3101, %v1951
    %v3167 = vsel %vm3161, %v3102, %v1953
    %v3168 = vsel %vm3161, %v3103, %v1955
    %v3169 = vsel %vm3161, %v3104, %v1957
    %v3170 = vsel %vm3161, %v3105, %v1959
    %v3171 = vsel %vm3161, %v3106, %v1961
    %v3172 = vsel %vm3161, %v3107, %v1963
    %v3173 = vsel %vm3161, %v3108, %v1965
    %v3174 = vsel %vm3161, %v3109, %v1967
    %v3175 = vsel %vm3161, %v3110, %v1969
    %v3176 = vsel %vm3161, %v3111, %v1971
    %v3177 = vsel %vm3161, %v3112, %v1973
    %v3178 = vsel %vm3161, %v3113, %v1975
    %v3179 = vsel %vm3161, %v3114, %v1977
    %v3180 = vsel %vm3161, %v3115, %v1979
    %v3181 = vsel %vm3161, %v3116, %v1981
    %v3182 = vsel %vm3161, %v3117, %v1983
    %v3183 = vsel %vm3161, %v3118, %v1985
    %v3184 = vsel %vm3161, %v3119, %v1987
    %v3185 = vsel %vm3161, %v3120, %v1989
    %v3186 = vsel %vm3161, %v3121, %v1991
    %v3187 = vsel %vm3161, %v3122, %v1993
    %v3188 = vsel %vm3161, %v3123, %v1995
    %v3189 = vsel %vm3161, %v3124, %v1997
    %v3190 = vsel %vm3161, %v3125, %v1999
    %v3191 = vsel %vm3161, %v3126, %v2001
    %v3192 = vsel %vm3161, %v3127, %v2003
    %v3193 = vsel %vm3161, %v3128, %v2005
    %v3194 = vsel %vm3161, %v3129, %v2007
    %v3195 = vsel %vm3161, %v3130, %v2009
    %v3196 = vsel %vm3161, %v3131, %v2011
    %v3197 = vsel %vm3161, %v3132, %v2013
    %v3198 = vsel %vm3161, %v3133, %v2015
    %v3199 = vsel %vm3161, %v3134, %v2017
    %v3200 = vsel %vm3161, %v3135, %v2019
    %v3201 = vsel %vm3161, %v3136, %v2021
    %v3202 = vsel %vm3161, %v3137, %v2023
    %v3203 = vsel %vm3161, %v3138, %v2025
    %v3204 = vsel %vm3161, %v3139, %v2027
    %v3205 = vsel %vm3161, %v3140, %v2029
    %v3206 = vsel %vm3161, %v3141, %v2031
    %v3207 = vsel %vm3161, %v3142, %v2033
    %v3208 = vsel %vm3161, %v3143, %v2035
    %v3209 = vsel %vm3161, %v3144, %v2037
    %v3210 = vsel %vm3161, %v3145, %v2039
    %v3211 = vsel %vm3161, %v3146, %v2041
    %v3212 = vsel %vm3161, %v3147, %v2043
    %v3213 = vsel %vm3161, %v3148, %v2045
    %v3214 = vsel %vm3161, %v3149, %v2047
    %v3215 = vsel %vm3161, %v3150, %v2049
    %v3216 = vsel %vm3161, %v3151, %v2051
    %v3217 = vsel %vm3161, %v3152, %v2053
    %v3218 = vsel %vm3161, %v3153, %v2055
    %v3219 = vsel %vm3161, %v3154, %v2057
    %v3220 = vsel %vm3161, %v3155, %v2059
    %v3221 = vsel %vm3161, %v3156, %v2061
    %v3222 = vsel %vm3161, %v3157, %v2063
    %v3223 = vsel %vm3161, %v3158, %v2065
    %v3224 = vsel %vm3161, %v3159, %v2067
    %v3225 = vsel %vm3161, %v3160, %v2069
    %vm3226 = vcmask 392192
    %v3227 = vsel %vm3226, %v3162, %v2199
    %v3228 = vsel %vm3226, %v3163, %v2201
    %v3229 = vsel %vm3226, %v3164, %v2203
    %v3230 = vsel %vm3226, %v3165, %v2205
    %v3231 = vsel %vm3226, %v3166, %v2207
    %v3232 = vsel %vm3226, %v3167, %v2209
    %v3233 = vsel %vm3226, %v3168, %v2211
    %v3234 = vsel %vm3226, %v3169, %v2213
    %v3235 = vsel %vm3226, %v3170, %v2215
    %v3236 = vsel %vm3226, %v3171, %v2217
    %v3237 = vsel %vm3226, %v3172, %v2219
    %v3238 = vsel %vm3226, %v3173, %v2221
    %v3239 = vsel %vm3226, %v3174, %v2223
    %v3240 = vsel %vm3226, %v3175, %v2225
    %v3241 = vsel %vm3226, %v3176, %v2227
    %v3242 = vsel %vm3226, %v3177, %v2229
    %v3243 = vsel %vm3226, %v3178, %v2231
    %v3244 = vsel %vm3226, %v3179, %v2233
    %v3245 = vsel %vm3226, %v3180, %v2235
    %v3246 = vsel %vm3226, %v3181, %v2237
    %v3247 = vsel %vm3226, %v3182, %v2239
    %v3248 = vsel %vm3226, %v3183, %v2241
    %v3249 = vsel %vm3226, %v3184, %v2243
    %v3250 = vsel %vm3226, %v3185, %v2245
    %v3251 = vsel %vm3226, %v3186, %v2247
    %v3252 = vsel %vm3226, %v3187, %v2249
    %v3253 = vsel %vm3226, %v3188, %v2251
    %v3254 = vsel %vm3226, %v3189, %v2253
    %v3255 = vsel %vm3226, %v3190, %v2255
    %v3256 = vsel %vm3226, %v3191, %v2257
    %v3257 = vsel %vm3226, %v3192, %v2259
    %v3258 = vsel %vm3226, %v3193, %v2261
    %v3259 = vsel %vm3226, %v3194, %v2263
    %v3260 = vsel %vm3226, %v3195, %v2265
    %v3261 = vsel %vm3226, %v3196, %v2267
    %v3262 = vsel %vm3226, %v3197, %v2269
    %v3263 = vsel %vm3226, %v3198, %v2271
    %v3264 = vsel %vm3226, %v3199, %v2273
    %v3265 = vsel %vm3226, %v3200, %v2275
    %v3266 = vsel %vm3226, %v3201, %v2277
    %v3267 = vsel %vm3226, %v3202, %v2279
    %v3268 = vsel %vm3226, %v3203, %v2281
    %v3269 = vsel %vm3226, %v3204, %v2283
    %v3270 = vsel %vm3226, %v3205, %v2285
    %v3271 = vsel %vm3226, %v3206, %v2287
    %v3272 = vsel %vm3226, %v3207, %v2289
    %v3273 = vsel %vm3226, %v3208, %v2291
    %v3274 = vsel %vm3226, %v3209, %v2293
    %v3275 = vsel %vm3226, %v3210, %v2295
    %v3276 = vsel %vm3226, %v3211, %v2297
    %v3277 = vsel %vm3226, %v3212, %v2299
    %v3278 = vsel %vm3226, %v3213, %v2301
    %v3279 = vsel %vm3226, %v3214, %v2303
    %v3280 = vsel %vm3226, %v3215, %v2305
    %v3281 = vsel %vm3226, %v3216, %v2307
    %v3282 = vsel %vm3226, %v3217, %v2309
    %v3283 = vsel %vm3226, %v3218, %v2311
    %v3284 = vsel %vm3226, %v3219, %v2313
    %v3285 = vsel %vm3226, %v3220, %v2315
    %v3286 = vsel %vm3226, %v3221, %v2317
    %v3287 = vsel %vm3226, %v3222, %v2319
    %v3288 = vsel %vm3226, %v3223, %v2321
    %v3289 = vsel %vm3226, %v3224, %v2323
    %v3290 = vsel %vm3226, %v3225, %v2325
    %vm3291 = vcmask 457728
    %v3292 = vsel %vm3291, %v3227, %v2455
    %v3293 = vsel %vm3291, %v3228, %v2457
    %v3294 = vsel %vm3291, %v3229, %v2459
    %v3295 = vsel %vm3291, %v3230, %v2461
    %v3296 = vsel %vm3291, %v3231, %v2463
    %v3297 = vsel %vm3291, %v3232, %v2465
    %v3298 = vsel %vm3291, %v3233, %v2467
    %v3299 = vsel %vm3291, %v3234, %v2469
    %v3300 = vsel %vm3291, %v3235, %v2471
    %v3301 = vsel %vm3291, %v3236, %v2473
    %v3302 = vsel %vm3291, %v3237, %v2475
    %v3303 = vsel %vm3291, %v3238, %v2477
    %v3304 = vsel %vm3291, %v3239, %v2479
    %v3305 = vsel %vm3291, %v3240, %v2481
    %v3306 = vsel %vm3291, %v3241, %v2483
    %v3307 = vsel %vm3291, %v3242, %v2485
    %v3308 = vsel %vm3291, %v3243, %v2487
    %v3309 = vsel %vm3291, %v3244, %v2489
    %v3310 = vsel %vm3291, %v3245, %v2491
    %v3311 = vsel %vm3291, %v3246, %v2493
    %v3312 = vsel %vm3291, %v3247, %v2495
    %v3313 = vsel %vm3291, %v3248, %v2497
    %v3314 = vsel %vm3291, %v3249, %v2499
    %v3315 = vsel %vm3291, %v3250, %v2501
    %v3316 = vsel %vm3291, %v3251, %v2503
    %v3317 = vsel %vm3291, %v3252, %v2505
    %v3318 = vsel %vm3291, %v3253, %v2507
    %v3319 = vsel %vm3291, %v3254, %v2509
    %v3320 = vsel %vm3291, %v3255, %v2511
    %v3321 = vsel %vm3291, %v3256, %v2513
    %v3322 = vsel %vm3291, %v3257, %v2515
    %v3323 = vsel %vm3291, %v3258, %v2517
    %v3324 = vsel %vm3291, %v3259, %v2519
    %v3325 = vsel %vm3291, %v3260, %v2521
    %v3326 = vsel %vm3291, %v3261, %v2523
    %v3327 = vsel %vm3291, %v3262, %v2525
    %v3328 = vsel %vm3291, %v3263, %v2527
    %v3329 = vsel %vm3291, %v3264, %v2529
    %v3330 = vsel %vm3291, %v3265, %v2531
    %v3331 = vsel %vm3291, %v3266, %v2533
    %v3332 = vsel %vm3291, %v3267, %v2535
    %v3333 = vsel %vm3291, %v3268, %v2537
    %v3334 = vsel %vm3291, %v3269, %v2539
    %v3335 = vsel %vm3291, %v3270, %v2541
    %v3336 = vsel %vm3291, %v3271, %v2543
    %v3337 = vsel %vm3291, %v3272, %v2545
    %v3338 = vsel %vm3291, %v3273, %v2547
    %v3339 = vsel %vm3291, %v3274, %v2549
    %v3340 = vsel %vm3291, %v3275, %v2551
    %v3341 = vsel %vm3291, %v3276, %v2553
    %v3342 = vsel %vm3291, %v3277, %v2555
    %v3343 = vsel %vm3291, %v3278, %v2557
    %v3344 = vsel %vm3291, %v3279, %v2559
    %v3345 = vsel %vm3291, %v3280, %v2561
    %v3346 = vsel %vm3291, %v3281, %v2563
    %v3347 = vsel %vm3291, %v3282, %v2565
    %v3348 = vsel %vm3291, %v3283, %v2567
    %v3349 = vsel %vm3291, %v3284, %v2569
    %v3350 = vsel %vm3291, %v3285, %v2571
    %v3351 = vsel %vm3291, %v3286, %v2573
    %v3352 = vsel %vm3291, %v3287, %v2575
    %v3353 = vsel %vm3291, %v3288, %v2577
    %v3354 = vsel %vm3291, %v3289, %v2579
    %v3355 = vsel %vm3291, %v3290, %v2581
    %vm3356 = vcmask 523264
    %v3357 = vsel %vm3356, %v3292, %v2711
    %v3358 = vsel %vm3356, %v3293, %v2713
    %v3359 = vsel %vm3356, %v3294, %v2715
    %v3360 = vsel %vm3356, %v3295, %v2717
    %v3361 = vsel %vm3356, %v3296, %v2719
    %v3362 = vsel %vm3356, %v3297, %v2721
    %v3363 = vsel %vm3356, %v3298, %v2723
    %v3364 = vsel %vm3356, %v3299, %v2725
    %v3365 = vsel %vm3356, %v3300, %v2727
    %v3366 = vsel %vm3356, %v3301, %v2729
    %v3367 = vsel %vm3356, %v3302, %v2731
    %v3368 = vsel %vm3356, %v3303, %v2733
    %v3369 = vsel %vm3356, %v3304, %v2735
    %v3370 = vsel %vm3356, %v3305, %v2737
    %v3371 = vsel %vm3356, %v3306, %v2739
    %v3372 = vsel %vm3356, %v3307, %v2741
    %v3373 = vsel %vm3356, %v3308, %v2743
    %v3374 = vsel %vm3356, %v3309, %v2745
    %v3375 = vsel %vm3356, %v3310, %v2747
    %v3376 = vsel %vm3356, %v3311, %v2749
    %v3377 = vsel %vm3356, %v3312, %v2751
    %v3378 = vsel %vm3356, %v3313, %v2753
    %v3379 = vsel %vm3356, %v3314, %v2755
    %v3380 = vsel %vm3356, %v3315, %v2757
    %v3381 = vsel %vm3356, %v3316, %v2759
    %v3382 = vsel %vm3356, %v3317, %v2761
    %v3383 = vsel %vm3356, %v3318, %v2763
    %v3384 = vsel %vm3356, %v3319, %v2765
    %v3385 = vsel %vm3356, %v3320, %v2767
    %v3386 = vsel %vm3356, %v3321, %v2769
    %v3387 = vsel %vm3356, %v3322, %v2771
    %v3388 = vsel %vm3356, %v3323, %v2773
    %v3389 = vsel %vm3356, %v3324, %v2775
    %v3390 = vsel %vm3356, %v3325, %v2777
    %v3391 = vsel %vm3356, %v3326, %v2779
    %v3392 = vsel %vm3356, %v3327, %v2781
    %v3393 = vsel %vm3356, %v3328, %v2783
    %v3394 = vsel %vm3356, %v3329, %v2785
    %v3395 = vsel %vm3356, %v3330, %v2787
    %v3396 = vsel %vm3356, %v3331, %v2789
    %v3397 = vsel %vm3356, %v3332, %v2791
    %v3398 = vsel %vm3356, %v3333, %v2793
    %v3399 = vsel %vm3356, %v3334, %v2795
    %v3400 = vsel %vm3356, %v3335, %v2797
    %v3401 = vsel %vm3356, %v3336, %v2799
    %v3402 = vsel %vm3356, %v3337, %v2801
    %v3403 = vsel %vm3356, %v3338, %v2803
    %v3404 = vsel %vm3356, %v3339, %v2805
    %v3405 = vsel %vm3356, %v3340, %v2807
    %v3406 = vsel %vm3356, %v3341, %v2809
    %v3407 = vsel %vm3356, %v3342, %v2811
    %v3408 = vsel %vm3356, %v3343, %v2813
    %v3409 = vsel %vm3356, %v3344, %v2815
    %v3410 = vsel %vm3356, %v3345, %v2817
    %v3411 = vsel %vm3356, %v3346, %v2819
    %v3412 = vsel %vm3356, %v3347, %v2821
    %v3413 = vsel %vm3356, %v3348, %v2823
    %v3414 = vsel %vm3356, %v3349, %v2825
    %v3415 = vsel %vm3356, %v3350, %v2827
    %v3416 = vsel %vm3356, %v3351, %v2829
    %v3417 = vsel %vm3356, %v3352, %v2831
    %v3418 = vsel %vm3356, %v3353, %v2833
    %v3419 = vsel %vm3356, %v3354, %v2835
    %v3420 = vsel %vm3356, %v3355, %v2837
    %vm3421 = vcmask 588800
    %v3423 = vsel %vm3421, %v3357, 0
    %v3426 = vsel %vm3421, %v3358, 0
    %v3429 = vsel %vm3421, %v3359, 0
    %v3432 = vsel %vm3421, %v3360, 0
    %v3435 = vsel %vm3421, %v3361, 0
    %v3438 = vsel %vm3421, %v3362, 0
    %v3441 = vsel %vm3421, %v3363, 0
    %v3444 = vsel %vm3421, %v3364, 0
    %v3447 = vsel %vm3421, %v3365, 0
    %v3450 = vsel %vm3421, %v3366, 0
    %v3453 = vsel %vm3421, %v3367, 0
    %v3456 = vsel %vm3421, %v3368, 0
    %v3459 = vsel %vm3421, %v3369, 0
    %v3462 = vsel %vm3421, %v3370, 0
    %v3465 = vsel %vm3421, %v3371, 0
    %v3468 = vsel %vm3421, %v3372, 0
    %v3471 = vsel %vm3421, %v3373, 0
    %v3474 = vsel %vm3421, %v3374, 0
    %v3477 = vsel %vm3421, %v3375, 0
    %v3480 = vsel %vm3421, %v3376, 0
    %v3483 = vsel %vm3421, %v3377, 0
    %v3486 = vsel %vm3421, %v3378, 0
    %v3489 = vsel %vm3421, %v3379, 0
    %v3492 = vsel %vm3421, %v3380, 0
    %v3495 = vsel %vm3421, %v3381, 0
    %v3498 = vsel %vm3421, %v3382, 0
    %v3501 = vsel %vm3421, %v3383, 0
    %v3504 = vsel %vm3421, %v3384, 0
    %v3507 = vsel %vm3421, %v3385, 0
    %v3510 = vsel %vm3421, %v3386, 0
    %v3513 = vsel %vm3421, %v3387, 0
    %v3516 = vsel %vm3421, %v3388, 0
    %v3519 = vsel %vm3421, %v3389, 0
    %v3522 = vsel %vm3421, %v3390, 0
    %v3525 = vsel %vm3421, %v3391, 0
    %v3528 = vsel %vm3421, %v3392, 0
    %v3531 = vsel %vm3421, %v3393, 0
    %v3534 = vsel %vm3421, %v3394, 0
    %v3537 = vsel %vm3421, %v3395, 0
    %v3540 = vsel %vm3421, %v3396, 0
    %v3543 = vsel %vm3421, %v3397, 0
    %v3546 = vsel %vm3421, %v3398, 0
    %v3549 = vsel %vm3421, %v3399, 0
    %v3552 = vsel %vm3421, %v3400, 0
    %v3555 = vsel %vm3421, %v3401, 0
    %v3558 = vsel %vm3421, %v3402, 0
    %v3561 = vsel %vm3421, %v3403, 0
    %v3564 = vsel %vm3421, %v3404, 0
    %v3567 = vsel %vm3421, %v3405, 0
    %v3570 = vsel %vm3421, %v3406, 0
    %v3573 = vsel %vm3421, %v3407, 0
    %v3576 = vsel %vm3421, %v3408, 0
    %v3579 = vsel %vm3421, %v3409, 0
    %v3582 = vsel %vm3421, %v3410, 0
    %v3585 = vsel %vm3421, %v3411, 0
    %v3588 = vsel %vm3421, %v3412, 0
    %v3591 = vsel %vm3421, %v3413, 0
    %v3594 = vsel %vm3421, %v3414, 0
    %v3597 = vsel %vm3421, %v3415, 0
    %v3600 = vsel %vm3421, %v3416, 0
    %v3603 = vsel %vm3421, %v3417, 0
    %v3606 = vsel %vm3421, %v3418, 0
    %v3609 = vsel %vm3421, %v3419, 0
    %v3612 = vsel %vm3421, %v3420, 0
    %3614 = vmatprep.subr.mxu0 0.0
    %3615 = vmatpush1.msra.mxu0 %v266
    %3616 = vmatprep.subr.mxu0 0.0
    %3617 = vmatpush1.msra.mxu0 %v267
    %3618 = vmatprep.subr.mxu0 0.0
    %3619 = vmatpush1.msra.mxu0 %v268
    %3620 = vmatprep.subr.mxu0 0.0
    %3621 = vmatpush1.msra.mxu0 %v269
    %3622 = vmatprep.subr.mxu0 0.0
    %3623 = vmatpush1.msra.mxu0 %v270
    %3624 = vmatprep.subr.mxu0 0.0
    %3625 = vmatpush1.msra.mxu0 %v271
    %3626 = vmatprep.subr.mxu0 0.0
    %3627 = vmatpush1.msra.mxu0 %v272
    %3628 = vmatprep.subr.mxu0 0.0
    %3629 = vmatpush1.msra.mxu0 %v273
    %3630 = vmatprep.subr.mxu0 0.0
    %3631 = vmatpush1.msra.mxu0 %v274
    %3632 = vmatprep.subr.mxu0 0.0
    %3633 = vmatpush1.msra.mxu0 0.0
    %3634 = vmatprep.subr.mxu0 0.0
    %3635 = vmatpush1.msra.mxu0 0.0
    %3636 = vmatprep.subr.mxu0 0.0
    %3637 = vmatpush1.msra.mxu0 0.0
    %3638 = vmatprep.subr.mxu0 0.0
    %3639 = vmatpush1.msra.mxu0 0.0
    %3640 = vmatprep.subr.mxu0 0.0
    %3641 = vmatpush1.msra.mxu0 0.0
    %3642 = vmatprep.subr.mxu0 0.0
    %3643 = vmatpush1.msra.mxu0 0.0
    %3644 = vmatprep.subr.mxu0 0.0
    %3645 = vmatpush1.msra.mxu0 0.0
    %3646 = vmatprep.subr.mxu0 0.0
    %3647 = vmatpush1.msra.mxu0 0.0
    %3648 = vmatprep.subr.mxu0 0.0
    %3649 = vmatpush1.msra.mxu0 0.0
    %3650 = vmatprep.subr.mxu0 0.0
    %3651 = vmatpush1.msra.mxu0 0.0
    %3652 = vmatprep.subr.mxu0 0.0
    %3653 = vmatpush1.msra.mxu0 0.0
    %3654 = vmatprep.subr.mxu0 0.0
    %3655 = vmatpush1.msra.mxu0 0.0
    %3656 = vmatprep.subr.mxu0 0.0
    %3657 = vmatpush1.msra.mxu0 0.0
    %3658 = vmatprep.subr.mxu0 0.0
    %3659 = vmatpush1.msra.mxu0 0.0
    %3660 = vmatprep.subr.mxu0 0.0
    %3661 = vmatpush1.msra.mxu0 0.0
    %3662 = vmatprep.subr.mxu0 0.0
    %3663 = vmatpush1.msra.mxu0 0.0
    %3664 = vmatprep.subr.mxu0 0.0
    %3665 = vmatpush1.msra.mxu0 0.0
    %3666 = vmatprep.subr.mxu0 0.0
    %3667 = vmatpush1.msra.mxu0 0.0
    %3668 = vmatprep.subr.mxu0 0.0
    %3669 = vmatpush1.msra.mxu0 0.0
    %3670 = vmatprep.subr.mxu0 0.0
    %3671 = vmatpush1.msra.mxu0 0.0
    %3672 = vmatprep.subr.mxu0 0.0
    %3673 = vmatpush1.msra.mxu0 0.0
    %3674 = vmatprep.subr.mxu0 0.0
    %3675 = vmatpush1.msra.mxu0 0.0
    %3676 = vmatprep.subr.mxu0 0.0
    %3677 = vmatpush1.msra.mxu0 0.0
    %3678 = vmatprep.mubr.f32.mxu0 0.0
    %3679 = vmatmul.mubr.f32.gmra.mrb[0].mxu0 %v3423
    %v3680 = vpop.f32.mrb[0].mxu0
    %v3681 = vadd.f32 0.0, %v3680
    %v3682 = vpop.f32.mrb[0].mxu0
    %3683 = vmatprep.mubr.f32.mxu0 0.0
    %3684 = vmatmul.mubr.f32.gmra.mrb[0].mxu0 %v3426
    %v3685 = vpop.f32.mrb[0].mxu0
    %v3686 = vadd.f32 0.0, %v3685
    %v3687 = vpop.f32.mrb[0].mxu0
    %3688 = vmatprep.mubr.f32.mxu0 0.0
    %3689 = vmatmul.mubr.f32.gmra.mrb[0].mxu0 %v3429
    %v3690 = vpop.f32.mrb[0].mxu0
    %v3691 = vadd.f32 0.0, %v3690
    %v3692 = vpop.f32.mrb[0].mxu0
    %3693 = vmatprep.mubr.f32.mxu0 0.0
    %3694 = vmatmul.mubr.f32.gmra.mrb[0].mxu0 %v3432
    %v3695 = vpop.f32.mrb[0].mxu0
    %v3696 = vadd.f32 0.0, %v3695
    %v3697 = vpop.f32.mrb[0].mxu0
    %3698 = vmatprep.mubr.f32.mxu0 0.0
    %3699 = vmatmul.mubr.f32.gmra.mrb[0].mxu0 %v3435
    %v3700 = vpop.f32.mrb[0].mxu0
    %v3701 = vadd.f32 0.0, %v3700
    %v3702 = vpop.f32.mrb[0].mxu0
    %3703 = vmatprep.mubr.f32.mxu0 0.0
    %3704 = vmatmul.mubr.f32.gmra.mrb[0].mxu0 %v3438
    %v3705 = vpop.f32.mrb[0].mxu0
    %v3706 = vadd.f32 0.0, %v3705
    %v3707 = vpop.f32.mrb[0].mxu0
    %3708 = vmatprep.mubr.f32.mxu0 0.0
    %3709 = vmatmul.mubr.f32.gmra.mrb[0].mxu0 %v3441
    %v3710 = vpop.f32.mrb[0].mxu0
    %v3711 = vadd.f32 0.0, %v3710
    %v3712 = vpop.f32.mrb[0].mxu0
    %3713 = vmatprep.mubr.f32.mxu0 0.0
    %3714 = vmatmul.mubr.f32.gmra.mrb[0].mxu0 %v3444
    %v3715 = vpop.f32.mrb[0].mxu0
    %v3716 = vadd.f32 0.0, %v3715
    %v3717 = vpop.f32.mrb[0].mxu0
    %3718 = vmatprep.mubr.f32.mxu0 0.0
    %3719 = vmatmul.mubr.f32.gmra.mrb[0].mxu0 %v3447
    %v3720 = vpop.f32.mrb[0].mxu0
    %v3721 = vadd.f32 0.0, %v3720
    %v3722 = vpop.f32.mrb[0].mxu0
    %3723 = vmatprep.mubr.f32.mxu0 0.0
    %3724 = vmatmul.mubr.f32.gmra.mrb[0].mxu0 %v3450
    %v3725 = vpop.f32.mrb[0].mxu0
    %v3726 = vadd.f32 0.0, %v3725
    %v3727 = vpop.f32.mrb[0].mxu0
    %3728 = vmatprep.mubr.f32.mxu0 0.0
    %3729 = vmatmul.mubr.f32.gmra.mrb[0].mxu0 %v3453
    %v3730 = vpop.f32.mrb[0].mxu0
    %v3731 = vadd.f32 0.0, %v3730
    %v3732 = vpop.f32.mrb[0].mxu0
    %3733 = vmatprep.mubr.f32.mxu0 0.0
    %3734 = vmatmul.mubr.f32.gmra.mrb[0].mxu0 %v3456
    %v3735 = vpop.f32.mrb[0].mxu0
    %v3736 = vadd.f32 0.0, %v3735
    %v3737 = vpop.f32.mrb[0].mxu0
    %3738 = vmatprep.mubr.f32.mxu0 0.0
    %3739 = vmatmul.mubr.f32.gmra.mrb[0].mxu0 %v3459
    %v3740 = vpop.f32.mrb[0].mxu0
    %v3741 = vadd.f32 0.0, %v3740
    %v3742 = vpop.f32.mrb[0].mxu0
    %3743 = vmatprep.mubr.f32.mxu0 0.0
    %3744 = vmatmul.mubr.f32.gmra.mrb[0].mxu0 %v3462
    %v3745 = vpop.f32.mrb[0].mxu0
    %v3746 = vadd.f32 0.0, %v3745
    %v3747 = vpop.f32.mrb[0].mxu0
    %3748 = vmatprep.mubr.f32.mxu0 0.0
    %3749 = vmatmul.mubr.f32.gmra.mrb[0].mxu0 %v3465
    %v3750 = vpop.f32.mrb[0].mxu0
    %v3751 = vadd.f32 0.0, %v3750
    %v3752 = vpop.f32.mrb[0].mxu0
    %3753 = vmatprep.mubr.f32.mxu0 0.0
    %3754 = vmatmul.mubr.f32.gmra.mrb[0].mxu0 %v3468
    %v3755 = vpop.f32.mrb[0].mxu0
    %v3756 = vadd.f32 0.0, %v3755
    %v3757 = vpop.f32.mrb[0].mxu0
    %3758 = vmatprep.mubr.f32.mxu0 0.0
    %3759 = vmatmul.mubr.f32.gmra.mrb[0].mxu0 %v3471
    %v3760 = vpop.f32.mrb[0].mxu0
    %v3761 = vadd.f32 0.0, %v3760
    %v3762 = vpop.f32.mrb[0].mxu0
    %3763 = vmatprep.mubr.f32.mxu0 0.0
    %3764 = vmatmul.mubr.f32.gmra.mrb[0].mxu0 %v3474
    %v3765 = vpop.f32.mrb[0].mxu0
    %v3766 = vadd.f32 0.0, %v3765
    %v3767 = vpop.f32.mrb[0].mxu0
    %3768 = vmatprep.mubr.f32.mxu0 0.0
    %3769 = vmatmul.mubr.f32.gmra.mrb[0].mxu0 %v3477
    %v3770 = vpop.f32.mrb[0].mxu0
    %v3771 = vadd.f32 0.0, %v3770
    %v3772 = vpop.f32.mrb[0].mxu0
    %3773 = vmatprep.mubr.f32.mxu0 0.0
    %3774 = vmatmul.mubr.f32.gmra.mrb[0].mxu0 %v3480
    %v3775 = vpop.f32.mrb[0].mxu0
    %v3776 = vadd.f32 0.0, %v3775
    %v3777 = vpop.f32.mrb[0].mxu0
    %3778 = vmatprep.mubr.f32.mxu0 0.0
    %3779 = vmatmul.mubr.f32.gmra.mrb[0].mxu0 %v3483
    %v3780 = vpop.f32.mrb[0].mxu0
    %v3781 = vadd.f32 0.0, %v3780
    %v3782 = vpop.f32.mrb[0].mxu0
    %3783 = vmatprep.mubr.f32.mxu0 0.0
    %3784 = vmatmul.mubr.f32.gmra.mrb[0].mxu0 %v3486
    %v3785 = vpop.f32.mrb[0].mxu0
    %v3786 = vadd.f32 0.0, %v3785
    %v3787 = vpop.f32.mrb[0].mxu0
    %3788 = vmatprep.mubr.f32.mxu0 0.0
    %3789 = vmatmul.mubr.f32.gmra.mrb[0].mxu0 %v3489
    %v3790 = vpop.f32.mrb[0].mxu0
    %v3791 = vadd.f32 0.0, %v3790
    %v3792 = vpop.f32.mrb[0].mxu0
    %3793 = vmatprep.mubr.f32.mxu0 0.0
    %3794 = vmatmul.mubr.f32.gmra.mrb[0].mxu0 %v3492
    %v3795 = vpop.f32.mrb[0].mxu0
    %v3796 = vadd.f32 0.0, %v3795
    %v3797 = vpop.f32.mrb[0].mxu0
    %3798 = vmatprep.mubr.f32.mxu0 0.0
    %3799 = vmatmul.mubr.f32.gmra.mrb[0].mxu0 %v3495
    %v3800 = vpop.f32.mrb[0].mxu0
    %v3801 = vadd.f32 0.0, %v3800
    %v3802 = vpop.f32.mrb[0].mxu0
    %3803 = vmatprep.mubr.f32.mxu0 0.0
    %3804 = vmatmul.mubr.f32.gmra.mrb[0].mxu0 %v3498
    %v3805 = vpop.f32.mrb[0].mxu0
    %v3806 = vadd.f32 0.0, %v3805
    %v3807 = vpop.f32.mrb[0].mxu0
    %3808 = vmatprep.mubr.f32.mxu0 0.0
    %3809 = vmatmul.mubr.f32.gmra.mrb[0].mxu0 %v3501
    %v3810 = vpop.f32.mrb[0].mxu0
    %v3811 = vadd.f32 0.0, %v3810
    %v3812 = vpop.f32.mrb[0].mxu0
    %3813 = vmatprep.mubr.f32.mxu0 0.0
    %3814 = vmatmul.mubr.f32.gmra.mrb[0].mxu0 %v3504
    %v3815 = vpop.f32.mrb[0].mxu0
    %v3816 = vadd.f32 0.0, %v3815
    %v3817 = vpop.f32.mrb[0].mxu0
    %3818 = vmatprep.mubr.f32.mxu0 0.0
    %3819 = vmatmul.mubr.f32.gmra.mrb[0].mxu0 %v3507
    %v3820 = vpop.f32.mrb[0].mxu0
    %v3821 = vadd.f32 0.0, %v3820
    %v3822 = vpop.f32.mrb[0].mxu0
    %3823 = vmatprep.mubr.f32.mxu0 0.0
    %3824 = vmatmul.mubr.f32.gmra.mrb[0].mxu0 %v3510
    %v3825 = vpop.f32.mrb[0].mxu0
    %v3826 = vadd.f32 0.0, %v3825
    %v3827 = vpop.f32.mrb[0].mxu0
    %3828 = vmatprep.mubr.f32.mxu0 0.0
    %3829 = vmatmul.mubr.f32.gmra.mrb[0].mxu0 %v3513
    %v3830 = vpop.f32.mrb[0].mxu0
    %v3831 = vadd.f32 0.0, %v3830
    %v3832 = vpop.f32.mrb[0].mxu0
    %3833 = vmatprep.mubr.f32.mxu0 0.0
    %3834 = vmatmul.mubr.f32.gmra.mrb[0].mxu0 %v3516
    %v3835 = vpop.f32.mrb[0].mxu0
    %v3836 = vadd.f32 0.0, %v3835
    %v3837 = vpop.f32.mrb[0].mxu0
    %3838 = vmatprep.mubr.f32.mxu0 0.0
    %3839 = vmatmul.mubr.f32.gmra.mrb[0].mxu0 %v3519
    %v3840 = vpop.f32.mrb[0].mxu0
    %v3841 = vadd.f32 0.0, %v3840
    %v3842 = vpop.f32.mrb[0].mxu0
    %3843 = vmatprep.mubr.f32.mxu0 0.0
    %3844 = vmatmul.mubr.f32.gmra.mrb[0].mxu0 %v3522
    %v3845 = vpop.f32.mrb[0].mxu0
    %v3846 = vadd.f32 0.0, %v3845
    %v3847 = vpop.f32.mrb[0].mxu0
    %3848 = vmatprep.mubr.f32.mxu0 0.0
    %3849 = vmatmul.mubr.f32.gmra.mrb[0].mxu0 %v3525
    %v3850 = vpop.f32.mrb[0].mxu0
    %v3851 = vadd.f32 0.0, %v3850
    %v3852 = vpop.f32.mrb[0].mxu0
    %3853 = vmatprep.mubr.f32.mxu0 0.0
    %3854 = vmatmul.mubr.f32.gmra.mrb[0].mxu0 %v3528
    %v3855 = vpop.f32.mrb[0].mxu0
    %v3856 = vadd.f32 0.0, %v3855
    %v3857 = vpop.f32.mrb[0].mxu0
    %3858 = vmatprep.mubr.f32.mxu0 0.0
    %3859 = vmatmul.mubr.f32.gmra.mrb[0].mxu0 %v3531
    %v3860 = vpop.f32.mrb[0].mxu0
    %v3861 = vadd.f32 0.0, %v3860
    %v3862 = vpop.f32.mrb[0].mxu0
    %3863 = vmatprep.mubr.f32.mxu0 0.0
    %3864 = vmatmul.mubr.f32.gmra.mrb[0].mxu0 %v3534
    %v3865 = vpop.f32.mrb[0].mxu0
    %v3866 = vadd.f32 0.0, %v3865
    %v3867 = vpop.f32.mrb[0].mxu0
    %3868 = vmatprep.mubr.f32.mxu0 0.0
    %3869 = vmatmul.mubr.f32.gmra.mrb[0].mxu0 %v3537
    %v3870 = vpop.f32.mrb[0].mxu0
    %v3871 = vadd.f32 0.0, %v3870
    %v3872 = vpop.f32.mrb[0].mxu0
    %3873 = vmatprep.mubr.f32.mxu0 0.0
    %3874 = vmatmul.mubr.f32.gmra.mrb[0].mxu0 %v3540
    %v3875 = vpop.f32.mrb[0].mxu0
    %v3876 = vadd.f32 0.0, %v3875
    %v3877 = vpop.f32.mrb[0].mxu0
    %3878 = vmatprep.mubr.f32.mxu0 0.0
    %3879 = vmatmul.mubr.f32.gmra.mrb[0].mxu0 %v3543
    %v3880 = vpop.f32.mrb[0].mxu0
    %v3881 = vadd.f32 0.0, %v3880
    %v3882 = vpop.f32.mrb[0].mxu0
    %3883 = vmatprep.mubr.f32.mxu0 0.0
    %3884 = vmatmul.mubr.f32.gmra.mrb[0].mxu0 %v3546
    %v3885 = vpop.f32.mrb[0].mxu0
    %v3886 = vadd.f32 0.0, %v3885
    %v3887 = vpop.f32.mrb[0].mxu0
    %3888 = vmatprep.mubr.f32.mxu0 0.0
    %3889 = vmatmul.mubr.f32.gmra.mrb[0].mxu0 %v3549
    %v3890 = vpop.f32.mrb[0].mxu0
    %v3891 = vadd.f32 0.0, %v3890
    %v3892 = vpop.f32.mrb[0].mxu0
    %3893 = vmatprep.mubr.f32.mxu0 0.0
    %3894 = vmatmul.mubr.f32.gmra.mrb[0].mxu0 %v3552
    %v3895 = vpop.f32.mrb[0].mxu0
    %v3896 = vadd.f32 0.0, %v3895
    %v3897 = vpop.f32.mrb[0].mxu0
    %3898 = vmatprep.mubr.f32.mxu0 0.0
    %3899 = vmatmul.mubr.f32.gmra.mrb[0].mxu0 %v3555
    %v3900 = vpop.f32.mrb[0].mxu0
    %v3901 = vadd.f32 0.0, %v3900
    %v3902 = vpop.f32.mrb[0].mxu0
    %3903 = vmatprep.mubr.f32.mxu0 0.0
    %3904 = vmatmul.mubr.f32.gmra.mrb[0].mxu0 %v3558
    %v3905 = vpop.f32.mrb[0].mxu0
    %v3906 = vadd.f32 0.0, %v3905
    %v3907 = vpop.f32.mrb[0].mxu0
    %3908 = vmatprep.mubr.f32.mxu0 0.0
    %3909 = vmatmul.mubr.f32.gmra.mrb[0].mxu0 %v3561
    %v3910 = vpop.f32.mrb[0].mxu0
    %v3911 = vadd.f32 0.0, %v3910
    %v3912 = vpop.f32.mrb[0].mxu0
    %3913 = vmatprep.mubr.f32.mxu0 0.0
    %3914 = vmatmul.mubr.f32.gmra.mrb[0].mxu0 %v3564
    %v3915 = vpop.f32.mrb[0].mxu0
    %v3916 = vadd.f32 0.0, %v3915
    %v3917 = vpop.f32.mrb[0].mxu0
    %3918 = vmatprep.mubr.f32.mxu0 0.0
    %3919 = vmatmul.mubr.f32.gmra.mrb[0].mxu0 %v3567
    %v3920 = vpop.f32.mrb[0].mxu0
    %v3921 = vadd.f32 0.0, %v3920
    %v3922 = vpop.f32.mrb[0].mxu0
    %3923 = vmatprep.mubr.f32.mxu0 0.0
    %3924 = vmatmul.mubr.f32.gmra.mrb[0].mxu0 %v3570
    %v3925 = vpop.f32.mrb[0].mxu0
    %v3926 = vadd.f32 0.0, %v3925
    %v3927 = vpop.f32.mrb[0].mxu0
    %3928 = vmatprep.mubr.f32.mxu0 0.0
    %3929 = vmatmul.mubr.f32.gmra.mrb[0].mxu0 %v3573
    %v3930 = vpop.f32.mrb[0].mxu0
    %v3931 = vadd.f32 0.0, %v3930
    %v3932 = vpop.f32.mrb[0].mxu0
    %3933 = vmatprep.mubr.f32.mxu0 0.0
    %3934 = vmatmul.mubr.f32.gmra.mrb[0].mxu0 %v3576
    %v3935 = vpop.f32.mrb[0].mxu0
    %v3936 = vadd.f32 0.0, %v3935
    %v3937 = vpop.f32.mrb[0].mxu0
    %3938 = vmatprep.mubr.f32.mxu0 0.0
    %3939 = vmatmul.mubr.f32.gmra.mrb[0].mxu0 %v3579
    %v3940 = vpop.f32.mrb[0].mxu0
    %v3941 = vadd.f32 0.0, %v3940
    %v3942 = vpop.f32.mrb[0].mxu0
    %3943 = vmatprep.mubr.f32.mxu0 0.0
    %3944 = vmatmul.mubr.f32.gmra.mrb[0].mxu0 %v3582
    %v3945 = vpop.f32.mrb[0].mxu0
    %v3946 = vadd.f32 0.0, %v3945
    %v3947 = vpop.f32.mrb[0].mxu0
    %3948 = vmatprep.mubr.f32.mxu0 0.0
    %3949 = vmatmul.mubr.f32.gmra.mrb[0].mxu0 %v3585
    %v3950 = vpop.f32.mrb[0].mxu0
    %v3951 = vadd.f32 0.0, %v3950
    %v3952 = vpop.f32.mrb[0].mxu0
    %3953 = vmatprep.mubr.f32.mxu0 0.0
    %3954 = vmatmul.mubr.f32.gmra.mrb[0].mxu0 %v3588
    %v3955 = vpop.f32.mrb[0].mxu0
    %v3956 = vadd.f32 0.0, %v3955
    %v3957 = vpop.f32.mrb[0].mxu0
    %3958 = vmatprep.mubr.f32.mxu0 0.0
    %3959 = vmatmul.mubr.f32.gmra.mrb[0].mxu0 %v3591
    %v3960 = vpop.f32.mrb[0].mxu0
    %v3961 = vadd.f32 0.0, %v3960
    %v3962 = vpop.f32.mrb[0].mxu0
    %3963 = vmatprep.mubr.f32.mxu0 0.0
    %3964 = vmatmul.mubr.f32.gmra.mrb[0].mxu0 %v3594
    %v3965 = vpop.f32.mrb[0].mxu0
    %v3966 = vadd.f32 0.0, %v3965
    %v3967 = vpop.f32.mrb[0].mxu0
    %3968 = vmatprep.mubr.f32.mxu0 0.0
    %3969 = vmatmul.mubr.f32.gmra.mrb[0].mxu0 %v3597
    %v3970 = vpop.f32.mrb[0].mxu0
    %v3971 = vadd.f32 0.0, %v3970
    %v3972 = vpop.f32.mrb[0].mxu0
    %3973 = vmatprep.mubr.f32.mxu0 0.0
    %3974 = vmatmul.mubr.f32.gmra.mrb[0].mxu0 %v3600
    %v3975 = vpop.f32.mrb[0].mxu0
    %v3976 = vadd.f32 0.0, %v3975
    %v3977 = vpop.f32.mrb[0].mxu0
    %3978 = vmatprep.mubr.f32.mxu0 0.0
    %3979 = vmatmul.mubr.f32.gmra.mrb[0].mxu0 %v3603
    %v3980 = vpop.f32.mrb[0].mxu0
    %v3981 = vadd.f32 0.0, %v3980
    %v3982 = vpop.f32.mrb[0].mxu0
    %3983 = vmatprep.mubr.f32.mxu0 0.0
    %3984 = vmatmul.mubr.f32.gmra.mrb[0].mxu0 %v3606
    %v3985 = vpop.f32.mrb[0].mxu0
    %v3986 = vadd.f32 0.0, %v3985
    %v3987 = vpop.f32.mrb[0].mxu0
    %3988 = vmatprep.mubr.f32.mxu0 0.0
    %3989 = vmatmul.mubr.f32.gmra.mrb[0].mxu0 %v3609
    %v3990 = vpop.f32.mrb[0].mxu0
    %v3991 = vadd.f32 0.0, %v3990
    %v3992 = vpop.f32.mrb[0].mxu0
    %3993 = vmatprep.mubr.f32.mxu0 0.0
    %3994 = vmatmul.mubr.f32.gmra.mrb[0].mxu0 %v3612
    %v3995 = vpop.f32.mrb[0].mxu0
    %v3996 = vadd.f32 0.0, %v3995
    %v3997 = vpop.f32.mrb[0].mxu0
    %3998 = vdwg.mxu0
    %v3999 = vsel %vm91, %v3681, 0.0
    %v4000 = vsel %vm91, %v3686, 0.0
    %v4001 = vadd.f32 %v3999, %v4000
    %v4002 = vsel %vm91, %v3691, 0.0
    %v4003 = vadd.f32 %v4001, %v4002
    %v4004 = vsel %vm91, %v3696, 0.0
    %v4005 = vadd.f32 %v4003, %v4004
    %v4006 = vsel %vm91, %v3701, 0.0
    %v4007 = vadd.f32 %v4005, %v4006
    %v4008 = vsel %vm91, %v3706, 0.0
    %v4009 = vadd.f32 %v4007, %v4008
    %v4010 = vsel %vm91, %v3711, 0.0
    %v4011 = vadd.f32 %v4009, %v4010
    %v4012 = vsel %vm91, %v3716, 0.0
    %v4013 = vadd.f32 %v4011, %v4012
    %v4014 = vsel %vm91, %v3721, 0.0
    %v4015 = vadd.f32 %v4013, %v4014
    %v4016 = vsel %vm91, %v3726, 0.0
    %v4017 = vadd.f32 %v4015, %v4016
    %v4018 = vsel %vm91, %v3731, 0.0
    %v4019 = vadd.f32 %v4017, %v4018
    %v4020 = vsel %vm91, %v3736, 0.0
    %v4021 = vadd.f32 %v4019, %v4020
    %v4022 = vsel %vm91, %v3741, 0.0
    %v4023 = vadd.f32 %v4021, %v4022
    %v4024 = vsel %vm91, %v3746, 0.0
    %v4025 = vadd.f32 %v4023, %v4024
    %v4026 = vsel %vm91, %v3751, 0.0
    %v4027 = vadd.f32 %v4025, %v4026
    %v4028 = vsel %vm91, %v3756, 0.0
    %v4029 = vadd.f32 %v4027, %v4028
    %v4030 = vsel %vm91, %v3761, 0.0
    %v4031 = vadd.f32 %v4029, %v4030
    %v4032 = vsel %vm91, %v3766, 0.0
    %v4033 = vadd.f32 %v4031, %v4032
    %v4034 = vsel %vm91, %v3771, 0.0
    %v4035 = vadd.f32 %v4033, %v4034
    %v4036 = vsel %vm91, %v3776, 0.0
    %v4037 = vadd.f32 %v4035, %v4036
    %v4038 = vsel %vm91, %v3781, 0.0
    %v4039 = vadd.f32 %v4037, %v4038
    %v4040 = vsel %vm91, %v3786, 0.0
    %v4041 = vadd.f32 %v4039, %v4040
    %v4042 = vsel %vm91, %v3791, 0.0
    %v4043 = vadd.f32 %v4041, %v4042
    %v4044 = vsel %vm91, %v3796, 0.0
    %v4045 = vadd.f32 %v4043, %v4044
    %v4046 = vsel %vm91, %v3801, 0.0
    %v4047 = vadd.f32 %v4045, %v4046
    %v4048 = vsel %vm91, %v3806, 0.0
    %v4049 = vadd.f32 %v4047, %v4048
    %v4050 = vsel %vm91, %v3811, 0.0
    %v4051 = vadd.f32 %v4049, %v4050
    %v4052 = vsel %vm91, %v3816, 0.0
    %v4053 = vadd.f32 %v4051, %v4052
    %v4054 = vsel %vm91, %v3821, 0.0
    %v4055 = vadd.f32 %v4053, %v4054
    %v4056 = vsel %vm91, %v3826, 0.0
    %v4057 = vadd.f32 %v4055, %v4056
    %v4058 = vsel %vm91, %v3831, 0.0
    %v4059 = vadd.f32 %v4057, %v4058
    %v4060 = vsel %vm91, %v3836, 0.0
    %v4061 = vadd.f32 %v4059, %v4060
    %v4062 = vsel %vm91, %v3841, 0.0
    %v4063 = vadd.f32 %v4061, %v4062
    %v4064 = vsel %vm91, %v3846, 0.0
    %v4065 = vadd.f32 %v4063, %v4064
    %v4066 = vsel %vm91, %v3851, 0.0
    %v4067 = vadd.f32 %v4065, %v4066
    %v4068 = vsel %vm91, %v3856, 0.0
    %v4069 = vadd.f32 %v4067, %v4068
    %v4070 = vsel %vm91, %v3861, 0.0
    %v4071 = vadd.f32 %v4069, %v4070
    %v4072 = vsel %vm91, %v3866, 0.0
    %v4073 = vadd.f32 %v4071, %v4072
    %v4074 = vsel %vm91, %v3871, 0.0
    %v4075 = vadd.f32 %v4073, %v4074
    %v4076 = vsel %vm91, %v3876, 0.0
    %v4077 = vadd.f32 %v4075, %v4076
    %v4078 = vsel %vm91, %v3881, 0.0
    %v4079 = vadd.f32 %v4077, %v4078
    %v4080 = vsel %vm91, %v3886, 0.0
    %v4081 = vadd.f32 %v4079, %v4080
    %v4082 = vsel %vm91, %v3891, 0.0
    %v4083 = vadd.f32 %v4081, %v4082
    %v4084 = vsel %vm91, %v3896, 0.0
    %v4085 = vadd.f32 %v4083, %v4084
    %v4086 = vsel %vm91, %v3901, 0.0
    %v4087 = vadd.f32 %v4085, %v4086
    %v4088 = vsel %vm91, %v3906, 0.0
    %v4089 = vadd.f32 %v4087, %v4088
    %v4090 = vsel %vm91, %v3911, 0.0
    %v4091 = vadd.f32 %v4089, %v4090
    %v4092 = vsel %vm91, %v3916, 0.0
    %v4093 = vadd.f32 %v4091, %v4092
    %v4094 = vsel %vm91, %v3921, 0.0
    %v4095 = vadd.f32 %v4093, %v4094
    %v4096 = vsel %vm91, %v3926, 0.0
    %v4097 = vadd.f32 %v4095, %v4096
    %v4098 = vsel %vm91, %v3931, 0.0
    %v4099 = vadd.f32 %v4097, %v4098
    %v4100 = vsel %vm91, %v3936, 0.0
    %v4101 = vadd.f32 %v4099, %v4100
    %v4102 = vsel %vm91, %v3941, 0.0
    %v4103 = vadd.f32 %v4101, %v4102
    %v4104 = vsel %vm91, %v3946, 0.0
    %v4105 = vadd.f32 %v4103, %v4104
    %v4106 = vsel %vm91, %v3951, 0.0
    %v4107 = vadd.f32 %v4105, %v4106
    %v4108 = vsel %vm91, %v3956, 0.0
    %v4109 = vadd.f32 %v4107, %v4108
    %v4110 = vsel %vm91, %v3961, 0.0
    %v4111 = vadd.f32 %v4109, %v4110
    %v4112 = vsel %vm91, %v3966, 0.0
    %v4113 = vadd.f32 %v4111, %v4112
    %v4114 = vsel %vm91, %v3971, 0.0
    %v4115 = vadd.f32 %v4113, %v4114
    %v4116 = vsel %vm91, %v3976, 0.0
    %v4117 = vadd.f32 %v4115, %v4116
    %v4118 = vsel %vm91, %v3981, 0.0
    %v4119 = vadd.f32 %v4117, %v4118
    %v4120 = vsel %vm91, %v3986, 0.0
    %v4121 = vadd.f32 %v4119, %v4120
    %v4122 = vsel %vm91, %v3991, 0.0
    %v4123 = vadd.f32 %v4121, %v4122
    %v4124 = vsel %vm91, %v3996, 0.0
    %v4125 = vadd.f32 %v4123, %v4124
    %v4126 = vrot.slane %v4125, 4
    %v4127 = vadd.f32 %v4125, %v4126
    %v4128 = vrot.slane %v4127, 2
    %v4129 = vadd.f32 %v4127, %v4128
    %v4130 = vrot.slane %v4129, 1
    %v4131 = vadd.f32 %v4129, %v4130
    %v4132 = vmul.f32 %v3681, %v3681
    %v4133 = vmul.f32 %v3686, %v3686
    %v4134 = vmul.f32 %v3691, %v3691
    %v4135 = vmul.f32 %v3696, %v3696
    %v4136 = vmul.f32 %v3701, %v3701
    %v4137 = vmul.f32 %v3706, %v3706
    %v4138 = vmul.f32 %v3711, %v3711
    %v4139 = vmul.f32 %v3716, %v3716
    %v4140 = vmul.f32 %v3721, %v3721
    %v4141 = vmul.f32 %v3726, %v3726
    %v4142 = vmul.f32 %v3731, %v3731
    %v4143 = vmul.f32 %v3736, %v3736
    %v4144 = vmul.f32 %v3741, %v3741
    %v4145 = vmul.f32 %v3746, %v3746
    %v4146 = vmul.f32 %v3751, %v3751
    %v4147 = vmul.f32 %v3756, %v3756
    %v4148 = vmul.f32 %v3761, %v3761
    %v4149 = vmul.f32 %v3766, %v3766
    %v4150 = vmul.f32 %v3771, %v3771
    %v4151 = vmul.f32 %v3776, %v3776
    %v4152 = vmul.f32 %v3781, %v3781
    %v4153 = vmul.f32 %v3786, %v3786
    %v4154 = vmul.f32 %v3791, %v3791
    %v4155 = vmul.f32 %v3796, %v3796
    %v4156 = vmul.f32 %v3801, %v3801
    %v4157 = vmul.f32 %v3806, %v3806
    %v4158 = vmul.f32 %v3811, %v3811
    %v4159 = vmul.f32 %v3816, %v3816
    %v4160 = vmul.f32 %v3821, %v3821
    %v4161 = vmul.f32 %v3826, %v3826
    %v4162 = vmul.f32 %v3831, %v3831
    %v4163 = vmul.f32 %v3836, %v3836
    %v4164 = vmul.f32 %v3841, %v3841
    %v4165 = vmul.f32 %v3846, %v3846
    %v4166 = vmul.f32 %v3851, %v3851
    %v4167 = vmul.f32 %v3856, %v3856
    %v4168 = vmul.f32 %v3861, %v3861
    %v4169 = vmul.f32 %v3866, %v3866
    %v4170 = vmul.f32 %v3871, %v3871
    %v4171 = vmul.f32 %v3876, %v3876
    %v4172 = vmul.f32 %v3881, %v3881
    %v4173 = vmul.f32 %v3886, %v3886
    %v4174 = vmul.f32 %v3891, %v3891
    %v4175 = vmul.f32 %v3896, %v3896
    %v4176 = vmul.f32 %v3901, %v3901
    %v4177 = vmul.f32 %v3906, %v3906
    %v4178 = vmul.f32 %v3911, %v3911
    %v4179 = vmul.f32 %v3916, %v3916
    %v4180 = vmul.f32 %v3921, %v3921
    %v4181 = vmul.f32 %v3926, %v3926
    %v4182 = vmul.f32 %v3931, %v3931
    %v4183 = vmul.f32 %v3936, %v3936
    %v4184 = vmul.f32 %v3941, %v3941
    %v4185 = vmul.f32 %v3946, %v3946
    %v4186 = vmul.f32 %v3951, %v3951
    %v4187 = vmul.f32 %v3956, %v3956
    %v4188 = vmul.f32 %v3961, %v3961
    %v4189 = vmul.f32 %v3966, %v3966
    %v4190 = vmul.f32 %v3971, %v3971
    %v4191 = vmul.f32 %v3976, %v3976
    %v4192 = vmul.f32 %v3981, %v3981
    %v4193 = vmul.f32 %v3986, %v3986
    %v4194 = vmul.f32 %v3991, %v3991
    %v4195 = vmul.f32 %v3996, %v3996
    %v4196 = vsel %vm91, %v4132, 0.0
    %v4197 = vsel %vm91, %v4133, 0.0
    %v4198 = vadd.f32 %v4196, %v4197
    %v4199 = vsel %vm91, %v4134, 0.0
    %v4200 = vadd.f32 %v4198, %v4199
    %v4201 = vsel %vm91, %v4135, 0.0
    %v4202 = vadd.f32 %v4200, %v4201
    %v4203 = vsel %vm91, %v4136, 0.0
    %v4204 = vadd.f32 %v4202, %v4203
    %v4205 = vsel %vm91, %v4137, 0.0
    %v4206 = vadd.f32 %v4204, %v4205
    %v4207 = vsel %vm91, %v4138, 0.0
    %v4208 = vadd.f32 %v4206, %v4207
    %v4209 = vsel %vm91, %v4139, 0.0
    %v4210 = vadd.f32 %v4208, %v4209
    %v4211 = vsel %vm91, %v4140, 0.0
    %v4212 = vadd.f32 %v4210, %v4211
    %v4213 = vsel %vm91, %v4141, 0.0
    %v4214 = vadd.f32 %v4212, %v4213
    %v4215 = vsel %vm91, %v4142, 0.0
    %v4216 = vadd.f32 %v4214, %v4215
    %v4217 = vsel %vm91, %v4143, 0.0
    %v4218 = vadd.f32 %v4216, %v4217
    %v4219 = vsel %vm91, %v4144, 0.0
    %v4220 = vadd.f32 %v4218, %v4219
    %v4221 = vsel %vm91, %v4145, 0.0
    %v4222 = vadd.f32 %v4220, %v4221
    %v4223 = vsel %vm91, %v4146, 0.0
    %v4224 = vadd.f32 %v4222, %v4223
    %v4225 = vsel %vm91, %v4147, 0.0
    %v4226 = vadd.f32 %v4224, %v4225
    %v4227 = vsel %vm91, %v4148, 0.0
    %v4228 = vadd.f32 %v4226, %v4227
    %v4229 = vsel %vm91, %v4149, 0.0
    %v4230 = vadd.f32 %v4228, %v4229
    %v4231 = vsel %vm91, %v4150, 0.0
    %v4232 = vadd.f32 %v4230, %v4231
    %v4233 = vsel %vm91, %v4151, 0.0
    %v4234 = vadd.f32 %v4232, %v4233
    %v4235 = vsel %vm91, %v4152, 0.0
    %v4236 = vadd.f32 %v4234, %v4235
    %v4237 = vsel %vm91, %v4153, 0.0
    %v4238 = vadd.f32 %v4236, %v4237
    %v4239 = vsel %vm91, %v4154, 0.0
    %v4240 = vadd.f32 %v4238, %v4239
    %v4241 = vsel %vm91, %v4155, 0.0
    %v4242 = vadd.f32 %v4240, %v4241
    %v4243 = vsel %vm91, %v4156, 0.0
    %v4244 = vadd.f32 %v4242, %v4243
    %v4245 = vsel %vm91, %v4157, 0.0
    %v4246 = vadd.f32 %v4244, %v4245
    %v4247 = vsel %vm91, %v4158, 0.0
    %v4248 = vadd.f32 %v4246, %v4247
    %v4249 = vsel %vm91, %v4159, 0.0
    %v4250 = vadd.f32 %v4248, %v4249
    %v4251 = vsel %vm91, %v4160, 0.0
    %v4252 = vadd.f32 %v4250, %v4251
    %v4253 = vsel %vm91, %v4161, 0.0
    %v4254 = vadd.f32 %v4252, %v4253
    %v4255 = vsel %vm91, %v4162, 0.0
    %v4256 = vadd.f32 %v4254, %v4255
    %v4257 = vsel %vm91, %v4163, 0.0
    %v4258 = vadd.f32 %v4256, %v4257
    %v4259 = vsel %vm91, %v4164, 0.0
    %v4260 = vadd.f32 %v4258, %v4259
    %v4261 = vsel %vm91, %v4165, 0.0
    %v4262 = vadd.f32 %v4260, %v4261
    %v4263 = vsel %vm91, %v4166, 0.0
    %v4264 = vadd.f32 %v4262, %v4263
    %v4265 = vsel %vm91, %v4167, 0.0
    %v4266 = vadd.f32 %v4264, %v4265
    %v4267 = vsel %vm91, %v4168, 0.0
    %v4268 = vadd.f32 %v4266, %v4267
    %v4269 = vsel %vm91, %v4169, 0.0
    %v4270 = vadd.f32 %v4268, %v4269
    %v4271 = vsel %vm91, %v4170, 0.0
    %v4272 = vadd.f32 %v4270, %v4271
    %v4273 = vsel %vm91, %v4171, 0.0
    %v4274 = vadd.f32 %v4272, %v4273
    %v4275 = vsel %vm91, %v4172, 0.0
    %v4276 = vadd.f32 %v4274, %v4275
    %v4277 = vsel %vm91, %v4173, 0.0
    %v4278 = vadd.f32 %v4276, %v4277
    %v4279 = vsel %vm91, %v4174, 0.0
    %v4280 = vadd.f32 %v4278, %v4279
    %v4281 = vsel %vm91, %v4175, 0.0
    %v4282 = vadd.f32 %v4280, %v4281
    %v4283 = vsel %vm91, %v4176, 0.0
    %v4284 = vadd.f32 %v4282, %v4283
    %v4285 = vsel %vm91, %v4177, 0.0
    %v4286 = vadd.f32 %v4284, %v4285
    %v4287 = vsel %vm91, %v4178, 0.0
    %v4288 = vadd.f32 %v4286, %v4287
    %v4289 = vsel %vm91, %v4179, 0.0
    %v4290 = vadd.f32 %v4288, %v4289
    %v4291 = vsel %vm91, %v4180, 0.0
    %v4292 = vadd.f32 %v4290, %v4291
    %v4293 = vsel %vm91, %v4181, 0.0
    %v4294 = vadd.f32 %v4292, %v4293
    %v4295 = vsel %vm91, %v4182, 0.0
    %v4296 = vadd.f32 %v4294, %v4295
    %v4297 = vsel %vm91, %v4183, 0.0
    %v4298 = vadd.f32 %v4296, %v4297
    %v4299 = vsel %vm91, %v4184, 0.0
    %v4300 = vadd.f32 %v4298, %v4299
    %v4301 = vsel %vm91, %v4185, 0.0
    %v4302 = vadd.f32 %v4300, %v4301
    %v4303 = vsel %vm91, %v4186, 0.0
    %v4304 = vadd.f32 %v4302, %v4303
    %v4305 = vsel %vm91, %v4187, 0.0
    %v4306 = vadd.f32 %v4304, %v4305
    %v4307 = vsel %vm91, %v4188, 0.0
    %v4308 = vadd.f32 %v4306, %v4307
    %v4309 = vsel %vm91, %v4189, 0.0
    %v4310 = vadd.f32 %v4308, %v4309
    %v4311 = vsel %vm91, %v4190, 0.0
    %v4312 = vadd.f32 %v4310, %v4311
    %v4313 = vsel %vm91, %v4191, 0.0
    %v4314 = vadd.f32 %v4312, %v4313
    %v4315 = vsel %vm91, %v4192, 0.0
    %v4316 = vadd.f32 %v4314, %v4315
    %v4317 = vsel %vm91, %v4193, 0.0
    %v4318 = vadd.f32 %v4316, %v4317
    %v4319 = vsel %vm91, %v4194, 0.0
    %v4320 = vadd.f32 %v4318, %v4319
    %v4321 = vsel %vm91, %v4195, 0.0
    %v4322 = vadd.f32 %v4320, %v4321
    %v4323 = vrot.slane %v4322, 4
    %v4324 = vadd.f32 %v4322, %v4323
    %v4325 = vrot.slane %v4324, 2
    %v4326 = vadd.f32 %v4324, %v4325
    %v4327 = vrot.slane %v4326, 1
    %v4328 = vadd.f32 %v4326, %v4327
    %v4329 = vmul.f32 %v4131, 0.001953125
    %v4330 = vmul.f32 %v4328, 0.001953125
    %v4331 = vmul.f32 %v4329, %v4329
    %v4332 = vsub.f32 %v4330, %v4331
    %v4333 = vsub.f32 %v3681, %v4329
    %v4334 = vsub.f32 %v3686, %v4329
    %v4335 = vsub.f32 %v3691, %v4329
    %v4336 = vsub.f32 %v3696, %v4329
    %v4337 = vsub.f32 %v3701, %v4329
    %v4338 = vsub.f32 %v3706, %v4329
    %v4339 = vsub.f32 %v3711, %v4329
    %v4340 = vsub.f32 %v3716, %v4329
    %v4341 = vsub.f32 %v3721, %v4329
    %v4342 = vsub.f32 %v3726, %v4329
    %v4343 = vsub.f32 %v3731, %v4329
    %v4344 = vsub.f32 %v3736, %v4329
    %v4345 = vsub.f32 %v3741, %v4329
    %v4346 = vsub.f32 %v3746, %v4329
    %v4347 = vsub.f32 %v3751, %v4329
    %v4348 = vsub.f32 %v3756, %v4329
    %v4349 = vsub.f32 %v3761, %v4329
    %v4350 = vsub.f32 %v3766, %v4329
    %v4351 = vsub.f32 %v3771, %v4329
    %v4352 = vsub.f32 %v3776, %v4329
    %v4353 = vsub.f32 %v3781, %v4329
    %v4354 = vsub.f32 %v3786, %v4329
    %v4355 = vsub.f32 %v3791, %v4329
    %v4356 = vsub.f32 %v3796, %v4329
    %v4357 = vsub.f32 %v3801, %v4329
    %v4358 = vsub.f32 %v3806, %v4329
    %v4359 = vsub.f32 %v3811, %v4329
    %v4360 = vsub.f32 %v3816, %v4329
    %v4361 = vsub.f32 %v3821, %v4329
    %v4362 = vsub.f32 %v3826, %v4329
    %v4363 = vsub.f32 %v3831, %v4329
    %v4364 = vsub.f32 %v3836, %v4329
    %v4365 = vsub.f32 %v3841, %v4329
    %v4366 = vsub.f32 %v3846, %v4329
    %v4367 = vsub.f32 %v3851, %v4329
    %v4368 = vsub.f32 %v3856, %v4329
    %v4369 = vsub.f32 %v3861, %v4329
    %v4370 = vsub.f32 %v3866, %v4329
    %v4371 = vsub.f32 %v3871, %v4329
    %v4372 = vsub.f32 %v3876, %v4329
    %v4373 = vsub.f32 %v3881, %v4329
    %v4374 = vsub.f32 %v3886, %v4329
    %v4375 = vsub.f32 %v3891, %v4329
    %v4376 = vsub.f32 %v3896, %v4329
    %v4377 = vsub.f32 %v3901, %v4329
    %v4378 = vsub.f32 %v3906, %v4329
    %v4379 = vsub.f32 %v3911, %v4329
    %v4380 = vsub.f32 %v3916, %v4329
    %v4381 = vsub.f32 %v3921, %v4329
    %v4382 = vsub.f32 %v3926, %v4329
    %v4383 = vsub.f32 %v3931, %v4329
    %v4384 = vsub.f32 %v3936, %v4329
    %v4385 = vsub.f32 %v3941, %v4329
    %v4386 = vsub.f32 %v3946, %v4329
    %v4387 = vsub.f32 %v3951, %v4329
    %v4388 = vsub.f32 %v3956, %v4329
    %v4389 = vsub.f32 %v3961, %v4329
    %v4390 = vsub.f32 %v3966, %v4329
    %v4391 = vsub.f32 %v3971, %v4329
    %v4392 = vsub.f32 %v3976, %v4329
    %v4393 = vsub.f32 %v3981, %v4329
    %v4394 = vsub.f32 %v3986, %v4329
    %v4395 = vsub.f32 %v3991, %v4329
    %v4396 = vsub.f32 %v3996, %v4329
    %v4398 = vlaneseq
    %v4399 = vshrl.u32 %v4398, 7
    %v4400 = vsub.s32 0, %v4399
    %v4401 = vrot.slane %v275, %v4400
    %v4403 = vmul.f32 %v4401, %v4333
    %v4404 = vmul.f32 %v4401, %v4334
    %v4405 = vmul.f32 %v4401, %v4335
    %v4406 = vmul.f32 %v4401, %v4336
    %v4407 = vmul.f32 %v4401, %v4337
    %v4408 = vmul.f32 %v4401, %v4338
    %v4409 = vmul.f32 %v4401, %v4339
    %v4410 = vmul.f32 %v4401, %v4340
    %v4411 = vmul.f32 %v4401, %v4341
    %v4412 = vmul.f32 %v4401, %v4342
    %v4413 = vmul.f32 %v4401, %v4343
    %v4414 = vmul.f32 %v4401, %v4344
    %v4415 = vmul.f32 %v4401, %v4345
    %v4416 = vmul.f32 %v4401, %v4346
    %v4417 = vmul.f32 %v4401, %v4347
    %v4418 = vmul.f32 %v4401, %v4348
    %v4419 = vmul.f32 %v4401, %v4349
    %v4420 = vmul.f32 %v4401, %v4350
    %v4421 = vmul.f32 %v4401, %v4351
    %v4422 = vmul.f32 %v4401, %v4352
    %v4423 = vmul.f32 %v4401, %v4353
    %v4424 = vmul.f32 %v4401, %v4354
    %v4425 = vmul.f32 %v4401, %v4355
    %v4426 = vmul.f32 %v4401, %v4356
    %v4427 = vmul.f32 %v4401, %v4357
    %v4428 = vmul.f32 %v4401, %v4358
    %v4429 = vmul.f32 %v4401, %v4359
    %v4430 = vmul.f32 %v4401, %v4360
    %v4431 = vmul.f32 %v4401, %v4361
    %v4432 = vmul.f32 %v4401, %v4362
    %v4433 = vmul.f32 %v4401, %v4363
    %v4434 = vmul.f32 %v4401, %v4364
    %v4435 = vmul.f32 %v4401, %v4365
    %v4436 = vmul.f32 %v4401, %v4366
    %v4437 = vmul.f32 %v4401, %v4367
    %v4438 = vmul.f32 %v4401, %v4368
    %v4439 = vmul.f32 %v4401, %v4369
    %v4440 = vmul.f32 %v4401, %v4370
    %v4441 = vmul.f32 %v4401, %v4371
    %v4442 = vmul.f32 %v4401, %v4372
    %v4443 = vmul.f32 %v4401, %v4373
    %v4444 = vmul.f32 %v4401, %v4374
    %v4445 = vmul.f32 %v4401, %v4375
    %v4446 = vmul.f32 %v4401, %v4376
    %v4447 = vmul.f32 %v4401, %v4377
    %v4448 = vmul.f32 %v4401, %v4378
    %v4449 = vmul.f32 %v4401, %v4379
    %v4450 = vmul.f32 %v4401, %v4380
    %v4451 = vmul.f32 %v4401, %v4381
    %v4452 = vmul.f32 %v4401, %v4382
    %v4453 = vmul.f32 %v4401, %v4383
    %v4454 = vmul.f32 %v4401, %v4384
    %v4455 = vmul.f32 %v4401, %v4385
    %v4456 = vmul.f32 %v4401, %v4386
    %v4457 = vmul.f32 %v4401, %v4387
    %v4458 = vmul.f32 %v4401, %v4388
    %v4459 = vmul.f32 %v4401, %v4389
    %v4460 = vmul.f32 %v4401, %v4390
    %v4461 = vmul.f32 %v4401, %v4391
    %v4462 = vmul.f32 %v4401, %v4392
    %v4463 = vmul.f32 %v4401, %v4393
    %v4464 = vmul.f32 %v4401, %v4394
    %v4465 = vmul.f32 %v4401, %v4395
    %v4466 = vmul.f32 %v4401, %v4396
    %v4467 = vadd.f32 %v4332, 1e-05
    %v4468 = vrsqrt.pop %v4467
    %v4469 = vmul.f32 %v4403, %v4468
    %v4470 = vmul.f32 %v4404, %v4468
    %v4471 = vmul.f32 %v4405, %v4468
    %v4472 = vmul.f32 %v4406, %v4468
    %v4473 = vmul.f32 %v4407, %v4468
    %v4474 = vmul.f32 %v4408, %v4468
    %v4475 = vmul.f32 %v4409, %v4468
    %v4476 = vmul.f32 %v4410, %v4468
    %v4477 = vmul.f32 %v4411, %v4468
    %v4478 = vmul.f32 %v4412, %v4468
    %v4479 = vmul.f32 %v4413, %v4468
    %v4480 = vmul.f32 %v4414, %v4468
    %v4481 = vmul.f32 %v4415, %v4468
    %v4482 = vmul.f32 %v4416, %v4468
    %v4483 = vmul.f32 %v4417, %v4468
    %v4484 = vmul.f32 %v4418, %v4468
    %v4485 = vmul.f32 %v4419, %v4468
    %v4486 = vmul.f32 %v4420, %v4468
    %v4487 = vmul.f32 %v4421, %v4468
    %v4488 = vmul.f32 %v4422, %v4468
    %v4489 = vmul.f32 %v4423, %v4468
    %v4490 = vmul.f32 %v4424, %v4468
    %v4491 = vmul.f32 %v4425, %v4468
    %v4492 = vmul.f32 %v4426, %v4468
    %v4493 = vmul.f32 %v4427, %v4468
    %v4494 = vmul.f32 %v4428, %v4468
    %v4495 = vmul.f32 %v4429, %v4468
    %v4496 = vmul.f32 %v4430, %v4468
    %v4497 = vmul.f32 %v4431, %v4468
    %v4498 = vmul.f32 %v4432, %v4468
    %v4499 = vmul.f32 %v4433, %v4468
    %v4500 = vmul.f32 %v4434, %v4468
    %v4501 = vmul.f32 %v4435, %v4468
    %v4502 = vmul.f32 %v4436, %v4468
    %v4503 = vmul.f32 %v4437, %v4468
    %v4504 = vmul.f32 %v4438, %v4468
    %v4505 = vmul.f32 %v4439, %v4468
    %v4506 = vmul.f32 %v4440, %v4468
    %v4507 = vmul.f32 %v4441, %v4468
    %v4508 = vmul.f32 %v4442, %v4468
    %v4509 = vmul.f32 %v4443, %v4468
    %v4510 = vmul.f32 %v4444, %v4468
    %v4511 = vmul.f32 %v4445, %v4468
    %v4512 = vmul.f32 %v4446, %v4468
    %v4513 = vmul.f32 %v4447, %v4468
    %v4514 = vmul.f32 %v4448, %v4468
    %v4515 = vmul.f32 %v4449, %v4468
    %v4516 = vmul.f32 %v4450, %v4468
    %v4517 = vmul.f32 %v4451, %v4468
    %v4518 = vmul.f32 %v4452, %v4468
    %v4519 = vmul.f32 %v4453, %v4468
    %v4520 = vmul.f32 %v4454, %v4468
    %v4521 = vmul.f32 %v4455, %v4468
    %v4522 = vmul.f32 %v4456, %v4468
    %v4523 = vmul.f32 %v4457, %v4468
    %v4524 = vmul.f32 %v4458, %v4468
    %v4525 = vmul.f32 %v4459, %v4468
    %v4526 = vmul.f32 %v4460, %v4468
    %v4527 = vmul.f32 %v4461, %v4468
    %v4528 = vmul.f32 %v4462, %v4468
    %v4529 = vmul.f32 %v4463, %v4468
    %v4530 = vmul.f32 %v4464, %v4468
    %v4531 = vmul.f32 %v4465, %v4468
    %v4532 = vmul.f32 %v4466, %v4468
    %v4534 = vlaneseq
    %v4535 = vshrl.u32 %v4534, 7
    %v4536 = vsub.s32 0, %v4535
    %v4537 = vrot.slane %v276, %v4536
    %v4539 = vadd.f32 %v4469, %v4537
    %v4540 = vadd.f32 %v4470, %v4537
    %v4541 = vadd.f32 %v4471, %v4537
    %v4542 = vadd.f32 %v4472, %v4537
    %v4543 = vadd.f32 %v4473, %v4537
    %v4544 = vadd.f32 %v4474, %v4537
    %v4545 = vadd.f32 %v4475, %v4537
    %v4546 = vadd.f32 %v4476, %v4537
    %v4547 = vadd.f32 %v4477, %v4537
    %v4548 = vadd.f32 %v4478, %v4537
    %v4549 = vadd.f32 %v4479, %v4537
    %v4550 = vadd.f32 %v4480, %v4537
    %v4551 = vadd.f32 %v4481, %v4537
    %v4552 = vadd.f32 %v4482, %v4537
    %v4553 = vadd.f32 %v4483, %v4537
    %v4554 = vadd.f32 %v4484, %v4537
    %v4555 = vadd.f32 %v4485, %v4537
    %v4556 = vadd.f32 %v4486, %v4537
    %v4557 = vadd.f32 %v4487, %v4537
    %v4558 = vadd.f32 %v4488, %v4537
    %v4559 = vadd.f32 %v4489, %v4537
    %v4560 = vadd.f32 %v4490, %v4537
    %v4561 = vadd.f32 %v4491, %v4537
    %v4562 = vadd.f32 %v4492, %v4537
    %v4563 = vadd.f32 %v4493, %v4537
    %v4564 = vadd.f32 %v4494, %v4537
    %v4565 = vadd.f32 %v4495, %v4537
    %v4566 = vadd.f32 %v4496, %v4537
    %v4567 = vadd.f32 %v4497, %v4537
    %v4568 = vadd.f32 %v4498, %v4537
    %v4569 = vadd.f32 %v4499, %v4537
    %v4570 = vadd.f32 %v4500, %v4537
    %v4571 = vadd.f32 %v4501, %v4537
    %v4572 = vadd.f32 %v4502, %v4537
    %v4573 = vadd.f32 %v4503, %v4537
    %v4574 = vadd.f32 %v4504, %v4537
    %v4575 = vadd.f32 %v4505, %v4537
    %v4576 = vadd.f32 %v4506, %v4537
    %v4577 = vadd.f32 %v4507, %v4537
    %v4578 = vadd.f32 %v4508, %v4537
    %v4579 = vadd.f32 %v4509, %v4537
    %v4580 = vadd.f32 %v4510, %v4537
    %v4581 = vadd.f32 %v4511, %v4537
    %v4582 = vadd.f32 %v4512, %v4537
    %v4583 = vadd.f32 %v4513, %v4537
    %v4584 = vadd.f32 %v4514, %v4537
    %v4585 = vadd.f32 %v4515, %v4537
    %v4586 = vadd.f32 %v4516, %v4537
    %v4587 = vadd.f32 %v4517, %v4537
    %v4588 = vadd.f32 %v4518, %v4537
    %v4589 = vadd.f32 %v4519, %v4537
    %v4590 = vadd.f32 %v4520, %v4537
    %v4591 = vadd.f32 %v4521, %v4537
    %v4592 = vadd.f32 %v4522, %v4537
    %v4593 = vadd.f32 %v4523, %v4537
    %v4594 = vadd.f32 %v4524, %v4537
    %v4595 = vadd.f32 %v4525, %v4537
    %v4596 = vadd.f32 %v4526, %v4537
    %v4597 = vadd.f32 %v4527, %v4537
    %v4598 = vadd.f32 %v4528, %v4537
    %v4599 = vadd.f32 %v4529, %v4537
    %v4600 = vadd.f32 %v4530, %v4537
    %v4601 = vadd.f32 %v4531, %v4537
    %v4602 = vadd.f32 %v4532, %v4537
    %vm4603 = vcmp.gt.f32.partialorder %v4539, 0.0
    %vm4604 = vcmp.gt.f32.partialorder %v4540, 0.0
    %vm4605 = vcmp.gt.f32.partialorder %v4541, 0.0
    %vm4606 = vcmp.gt.f32.partialorder %v4542, 0.0
    %vm4607 = vcmp.gt.f32.partialorder %v4543, 0.0
    %vm4608 = vcmp.gt.f32.partialorder %v4544, 0.0
    %vm4609 = vcmp.gt.f32.partialorder %v4545, 0.0
    %vm4610 = vcmp.gt.f32.partialorder %v4546, 0.0
    %vm4611 = vcmp.gt.f32.partialorder %v4547, 0.0
    %vm4612 = vcmp.gt.f32.partialorder %v4548, 0.0
    %vm4613 = vcmp.gt.f32.partialorder %v4549, 0.0
    %vm4614 = vcmp.gt.f32.partialorder %v4550, 0.0
    %vm4615 = vcmp.gt.f32.partialorder %v4551, 0.0
    %vm4616 = vcmp.gt.f32.partialorder %v4552, 0.0
    %vm4617 = vcmp.gt.f32.partialorder %v4553, 0.0
    %vm4618 = vcmp.gt.f32.partialorder %v4554, 0.0
    %vm4619 = vcmp.gt.f32.partialorder %v4555, 0.0
    %vm4620 = vcmp.gt.f32.partialorder %v4556, 0.0
    %vm4621 = vcmp.gt.f32.partialorder %v4557, 0.0
    %vm4622 = vcmp.gt.f32.partialorder %v4558, 0.0
    %vm4623 = vcmp.gt.f32.partialorder %v4559, 0.0
    %vm4624 = vcmp.gt.f32.partialorder %v4560, 0.0
    %vm4625 = vcmp.gt.f32.partialorder %v4561, 0.0
    %vm4626 = vcmp.gt.f32.partialorder %v4562, 0.0
    %vm4627 = vcmp.gt.f32.partialorder %v4563, 0.0
    %vm4628 = vcmp.gt.f32.partialorder %v4564, 0.0
    %vm4629 = vcmp.gt.f32.partialorder %v4565, 0.0
    %vm4630 = vcmp.gt.f32.partialorder %v4566, 0.0
    %vm4631 = vcmp.gt.f32.partialorder %v4567, 0.0
    %vm4632 = vcmp.gt.f32.partialorder %v4568, 0.0
    %vm4633 = vcmp.gt.f32.partialorder %v4569, 0.0
    %vm4634 = vcmp.gt.f32.partialorder %v4570, 0.0
    %vm4635 = vcmp.gt.f32.partialorder %v4571, 0.0
    %vm4636 = vcmp.gt.f32.partialorder %v4572, 0.0
    %vm4637 = vcmp.gt.f32.partialorder %v4573, 0.0
    %vm4638 = vcmp.gt.f32.partialorder %v4574, 0.0
    %vm4639 = vcmp.gt.f32.partialorder %v4575, 0.0
    %vm4640 = vcmp.gt.f32.partialorder %v4576, 0.0
    %vm4641 = vcmp.gt.f32.partialorder %v4577, 0.0
    %vm4642 = vcmp.gt.f32.partialorder %v4578, 0.0
    %vm4643 = vcmp.gt.f32.partialorder %v4579, 0.0
    %vm4644 = vcmp.gt.f32.partialorder %v4580, 0.0
    %vm4645 = vcmp.gt.f32.partialorder %v4581, 0.0
    %vm4646 = vcmp.gt.f32.partialorder %v4582, 0.0
    %vm4647 = vcmp.gt.f32.partialorder %v4583, 0.0
    %vm4648 = vcmp.gt.f32.partialorder %v4584, 0.0
    %vm4649 = vcmp.gt.f32.partialorder %v4585, 0.0
    %vm4650 = vcmp.gt.f32.partialorder %v4586, 0.0
    %vm4651 = vcmp.gt.f32.partialorder %v4587, 0.0
    %vm4652 = vcmp.gt.f32.partialorder %v4588, 0.0
    %vm4653 = vcmp.gt.f32.partialorder %v4589, 0.0
    %vm4654 = vcmp.gt.f32.partialorder %v4590, 0.0
    %vm4655 = vcmp.gt.f32.partialorder %v4591, 0.0
    %vm4656 = vcmp.gt.f32.partialorder %v4592, 0.0
    %vm4657 = vcmp.gt.f32.partialorder %v4593, 0.0
    %vm4658 = vcmp.gt.f32.partialorder %v4594, 0.0
    %vm4659 = vcmp.gt.f32.partialorder %v4595, 0.0
    %vm4660 = vcmp.gt.f32.partialorder %v4596, 0.0
    %vm4661 = vcmp.gt.f32.partialorder %v4597, 0.0
    %vm4662 = vcmp.gt.f32.partialorder %v4598, 0.0
    %vm4663 = vcmp.gt.f32.partialorder %v4599, 0.0
    %vm4664 = vcmp.gt.f32.partialorder %v4600, 0.0
    %vm4665 = vcmp.gt.f32.partialorder %v4601, 0.0
    %vm4666 = vcmp.gt.f32.partialorder %v4602, 0.0
    %v4667 = vmul.f32 %v4539, 0.2
    %v4668 = vmul.f32 %v4540, 0.2
    %v4669 = vmul.f32 %v4541, 0.2
    %v4670 = vmul.f32 %v4542, 0.2
    %v4671 = vmul.f32 %v4543, 0.2
    %v4672 = vmul.f32 %v4544, 0.2
    %v4673 = vmul.f32 %v4545, 0.2
    %v4674 = vmul.f32 %v4546, 0.2
    %v4675 = vmul.f32 %v4547, 0.2
    %v4676 = vmul.f32 %v4548, 0.2
    %v4677 = vmul.f32 %v4549, 0.2
    %v4678 = vmul.f32 %v4550, 0.2
    %v4679 = vmul.f32 %v4551, 0.2
    %v4680 = vmul.f32 %v4552, 0.2
    %v4681 = vmul.f32 %v4553, 0.2
    %v4682 = vmul.f32 %v4554, 0.2
    %v4683 = vmul.f32 %v4555, 0.2
    %v4684 = vmul.f32 %v4556, 0.2
    %v4685 = vmul.f32 %v4557, 0.2
    %v4686 = vmul.f32 %v4558, 0.2
    %v4687 = vmul.f32 %v4559, 0.2
    %v4688 = vmul.f32 %v4560, 0.2
    %v4689 = vmul.f32 %v4561, 0.2
    %v4690 = vmul.f32 %v4562, 0.2
    %v4691 = vmul.f32 %v4563, 0.2
    %v4692 = vmul.f32 %v4564, 0.2
    %v4693 = vmul.f32 %v4565, 0.2
    %v4694 = vmul.f32 %v4566, 0.2
    %v4695 = vmul.f32 %v4567, 0.2
    %v4696 = vmul.f32 %v4568, 0.2
    %v4697 = vmul.f32 %v4569, 0.2
    %v4698 = vmul.f32 %v4570, 0.2
    %v4699 = vmul.f32 %v4571, 0.2
    %v4700 = vmul.f32 %v4572, 0.2
    %v4701 = vmul.f32 %v4573, 0.2
    %v4702 = vmul.f32 %v4574, 0.2
    %v4703 = vmul.f32 %v4575, 0.2
    %v4704 = vmul.f32 %v4576, 0.2
    %v4705 = vmul.f32 %v4577, 0.2
    %v4706 = vmul.f32 %v4578, 0.2
    %v4707 = vmul.f32 %v4579, 0.2
    %v4708 = vmul.f32 %v4580, 0.2
    %v4709 = vmul.f32 %v4581, 0.2
    %v4710 = vmul.f32 %v4582, 0.2
    %v4711 = vmul.f32 %v4583, 0.2
    %v4712 = vmul.f32 %v4584, 0.2
    %v4713 = vmul.f32 %v4585, 0.2
    %v4714 = vmul.f32 %v4586, 0.2
    %v4715 = vmul.f32 %v4587, 0.2
    %v4716 = vmul.f32 %v4588, 0.2
    %v4717 = vmul.f32 %v4589, 0.2
    %v4718 = vmul.f32 %v4590, 0.2
    %v4719 = vmul.f32 %v4591, 0.2
    %v4720 = vmul.f32 %v4592, 0.2
    %v4721 = vmul.f32 %v4593, 0.2
    %v4722 = vmul.f32 %v4594, 0.2
    %v4723 = vmul.f32 %v4595, 0.2
    %v4724 = vmul.f32 %v4596, 0.2
    %v4725 = vmul.f32 %v4597, 0.2
    %v4726 = vmul.f32 %v4598, 0.2
    %v4727 = vmul.f32 %v4599, 0.2
    %v4728 = vmul.f32 %v4600, 0.2
    %v4729 = vmul.f32 %v4601, 0.2
    %v4730 = vmul.f32 %v4602, 0.2
    %v4731 = vsel %vm4603, %v4539, %v4667
    %v4732 = vsel %vm4604, %v4540, %v4668
    %v4733 = vsel %vm4605, %v4541, %v4669
    %v4734 = vsel %vm4606, %v4542, %v4670
    %v4735 = vsel %vm4607, %v4543, %v4671
    %v4736 = vsel %vm4608, %v4544, %v4672
    %v4737 = vsel %vm4609, %v4545, %v4673
    %v4738 = vsel %vm4610, %v4546, %v4674
    %v4739 = vsel %vm4611, %v4547, %v4675
    %v4740 = vsel %vm4612, %v4548, %v4676
    %v4741 = vsel %vm4613, %v4549, %v4677
    %v4742 = vsel %vm4614, %v4550, %v4678
    %v4743 = vsel %vm4615, %v4551, %v4679
    %v4744 = vsel %vm4616, %v4552, %v4680
    %v4745 = vsel %vm4617, %v4553, %v4681
    %v4746 = vsel %vm4618, %v4554, %v4682
    %v4747 = vsel %vm4619, %v4555, %v4683
    %v4748 = vsel %vm4620, %v4556, %v4684
    %v4749 = vsel %vm4621, %v4557, %v4685
    %v4750 = vsel %vm4622, %v4558, %v4686
    %v4751 = vsel %vm4623, %v4559, %v4687
    %v4752 = vsel %vm4624, %v4560, %v4688
    %v4753 = vsel %vm4625, %v4561, %v4689
    %v4754 = vsel %vm4626, %v4562, %v4690
    %v4755 = vsel %vm4627, %v4563, %v4691
    %v4756 = vsel %vm4628, %v4564, %v4692
    %v4757 = vsel %vm4629, %v4565, %v4693
    %v4758 = vsel %vm4630, %v4566, %v4694
    %v4759 = vsel %vm4631, %v4567, %v4695
    %v4760 = vsel %vm4632, %v4568, %v4696
    %v4761 = vsel %vm4633, %v4569, %v4697
    %v4762 = vsel %vm4634, %v4570, %v4698
    %v4763 = vsel %vm4635, %v4571, %v4699
    %v4764 = vsel %vm4636, %v4572, %v4700
    %v4765 = vsel %vm4637, %v4573, %v4701
    %v4766 = vsel %vm4638, %v4574, %v4702
    %v4767 = vsel %vm4639, %v4575, %v4703
    %v4768 = vsel %vm4640, %v4576, %v4704
    %v4769 = vsel %vm4641, %v4577, %v4705
    %v4770 = vsel %vm4642, %v4578, %v4706
    %v4771 = vsel %vm4643, %v4579, %v4707
    %v4772 = vsel %vm4644, %v4580, %v4708
    %v4773 = vsel %vm4645, %v4581, %v4709
    %v4774 = vsel %vm4646, %v4582, %v4710
    %v4775 = vsel %vm4647, %v4583, %v4711
    %v4776 = vsel %vm4648, %v4584, %v4712
    %v4777 = vsel %vm4649, %v4585, %v4713
    %v4778 = vsel %vm4650, %v4586, %v4714
    %v4779 = vsel %vm4651, %v4587, %v4715
    %v4780 = vsel %vm4652, %v4588, %v4716
    %v4781 = vsel %vm4653, %v4589, %v4717
    %v4782 = vsel %vm4654, %v4590, %v4718
    %v4783 = vsel %vm4655, %v4591, %v4719
    %v4784 = vsel %vm4656, %v4592, %v4720
    %v4785 = vsel %vm4657, %v4593, %v4721
    %v4786 = vsel %vm4658, %v4594, %v4722
    %v4787 = vsel %vm4659, %v4595, %v4723
    %v4788 = vsel %vm4660, %v4596, %v4724
    %v4789 = vsel %vm4661, %v4597, %v4725
    %v4790 = vsel %vm4662, %v4598, %v4726
    %v4791 = vsel %vm4663, %v4599, %v4727
    %v4792 = vsel %vm4664, %v4600, %v4728
    %v4793 = vsel %vm4665, %v4601, %v4729
    %v4794 = vsel %vm4666, %v4602, %v4730
    %4795 = vst.msk [vmem:[%s201 + $0x1] sm:$0xff] %vm91, %v4731
    %4796 = vst.msk [vmem:[%s201 + $0x9] sm:$0xff] %vm91, %v4732
    %4797 = vst.msk [vmem:[%s201 + $0x19] sm:$0xff] %vm91, %v4733
    %4798 = vst.msk [vmem:[%s201 + $0x21] sm:$0xff] %vm91, %v4734
    %4799 = vst.msk [vmem:[%s201 + $0x31] sm:$0xff] %vm91, %v4735
    %4800 = vst.msk [vmem:[%s201 + $0x39] sm:$0xff] %vm91, %v4736
    %4801 = vst.msk [vmem:[%s201 + $0x49] sm:$0xff] %vm91, %v4737
    %4802 = vst.msk [vmem:[%s201 + $0x51] sm:$0xff] %vm91, %v4738
    %4803 = vst.msk [vmem:[%s201 + $0x61] sm:$0xff] %vm91, %v4739
    %4804 = vst.msk [vmem:[%s201 + $0x69] sm:$0xff] %vm91, %v4740
    %4805 = vst.msk [vmem:[%s201 + $0x79] sm:$0xff] %vm91, %v4741
    %4806 = vst.msk [vmem:[%s201 + $0x81] sm:$0xff] %vm91, %v4742
    %4807 = vst.msk [vmem:[%s201 + $0x91] sm:$0xff] %vm91, %v4743
    %4808 = vst.msk [vmem:[%s201 + $0x99] sm:$0xff] %vm91, %v4744
    %4809 = vst.msk [vmem:[%s201 + $0xa9] sm:$0xff] %vm91, %v4745
    %4810 = vst.msk [vmem:[%s201 + $0xb1] sm:$0xff] %vm91, %v4746
    %4811 = vst.msk [vmem:[%s201 + $0xc1] sm:$0xff] %vm91, %v4747
    %4812 = vst.msk [vmem:[%s201 + $0xc9] sm:$0xff] %vm91, %v4748
    %4813 = vst.msk [vmem:[%s201 + $0xd9] sm:$0xff] %vm91, %v4749
    %4814 = vst.msk [vmem:[%s201 + $0xe1] sm:$0xff] %vm91, %v4750
    %4815 = vst.msk [vmem:[%s201 + $0xf1] sm:$0xff] %vm91, %v4751
    %4816 = vst.msk [vmem:[%s201 + $0xf9] sm:$0xff] %vm91, %v4752
    %4817 = vst.msk [vmem:[%s201 + $0x109] sm:$0xff] %vm91, %v4753
    %4818 = vst.msk [vmem:[%s201 + $0x111] sm:$0xff] %vm91, %v4754
    %4819 = vst.msk [vmem:[%s201 + $0x121] sm:$0xff] %vm91, %v4755
    %4820 = vst.msk [vmem:[%s201 + $0x129] sm:$0xff] %vm91, %v4756
    %4821 = vst.msk [vmem:[%s201 + $0x139] sm:$0xff] %vm91, %v4757
    %4822 = vst.msk [vmem:[%s201 + $0x141] sm:$0xff] %vm91, %v4758
    %4823 = vst.msk [vmem:[%s201 + $0x151] sm:$0xff] %vm91, %v4759
    %4824 = vst.msk [vmem:[%s201 + $0x159] sm:$0xff] %vm91, %v4760
    %4825 = vst.msk [vmem:[%s201 + $0x169] sm:$0xff] %vm91, %v4761
    %4826 = vst.msk [vmem:[%s201 + $0x171] sm:$0xff] %vm91, %v4762
    %4827 = vst.msk [vmem:[%s201 + $0x1b1] sm:$0xff] %vm91, %v4763
    %4828 = vst.msk [vmem:[%s201 + $0x1b9] sm:$0xff] %vm91, %v4764
    %4829 = vst.msk [vmem:[%s201 + $0x1c9] sm:$0xff] %vm91, %v4765
    %4830 = vst.msk [vmem:[%s201 + $0x1d1] sm:$0xff] %vm91, %v4766
    %4831 = vst.msk [vmem:[%s201 + $0x1e1] sm:$0xff] %vm91, %v4767
    %4832 = vst.msk [vmem:[%s201 + $0x1e9] sm:$0xff] %vm91, %v4768
    %4833 = vst.msk [vmem:[%s201 + $0x1f9] sm:$0xff] %vm91, %v4769
    %4834 = vst.msk [vmem:[%s201 + $0x201] sm:$0xff] %vm91, %v4770
    %4835 = vst.msk [vmem:[%s201 + $0x211] sm:$0xff] %vm91, %v4771
    %4836 = vst.msk [vmem:[%s201 + $0x219] sm:$0xff] %vm91, %v4772
    %4837 = vst.msk [vmem:[%s201 + $0x229] sm:$0xff] %vm91, %v4773
    %4838 = vst.msk [vmem:[%s201 + $0x231] sm:$0xff] %vm91, %v4774
    %4839 = vst.msk [vmem:[%s201 + $0x241] sm:$0xff] %vm91, %v4775
    %4840 = vst.msk [vmem:[%s201 + $0x249] sm:$0xff] %vm91, %v4776
    %4841 = vst.msk [vmem:[%s201 + $0x259] sm:$0xff] %vm91, %v4777
    %4842 = vst.msk [vmem:[%s201 + $0x261] sm:$0xff] %vm91, %v4778
    %4843 = vst.msk [vmem:[%s201 + $0x271] sm:$0xff] %vm91, %v4779
    %4844 = vst.msk [vmem:[%s201 + $0x279] sm:$0xff] %vm91, %v4780
    %4845 = vst.msk [vmem:[%s201 + $0x289] sm:$0xff] %vm91, %v4781
    %4846 = vst.msk [vmem:[%s201 + $0x291] sm:$0xff] %vm91, %v4782
    %4847 = vst.msk [vmem:[%s201 + $0x2a1] sm:$0xff] %vm91, %v4783
    %4848 = vst.msk [vmem:[%s201 + $0x2a9] sm:$0xff] %vm91, %v4784
    %4849 = vst.msk [vmem:[%s201 + $0x2b9] sm:$0xff] %vm91, %v4785
    %4850 = vst.msk [vmem:[%s201 + $0x2c1] sm:$0xff] %vm91, %v4786
    %4851 = vst.msk [vmem:[%s201 + $0x2d1] sm:$0xff] %vm91, %v4787
    %4852 = vst.msk [vmem:[%s201 + $0x2d9] sm:$0xff] %vm91, %v4788
    %4853 = vst.msk [vmem:[%s201 + $0x2e9] sm:$0xff] %vm91, %v4789
    %4854 = vst.msk [vmem:[%s201 + $0x2f1] sm:$0xff] %vm91, %v4790
    %4855 = vst.msk [vmem:[%s201 + $0x301] sm:$0xff] %vm91, %v4791
    %4856 = vst.msk [vmem:[%s201 + $0x309] sm:$0xff] %vm91, %v4792
    %4857 = vst.msk [vmem:[%s201 + $0x319] sm:$0xff] %vm91, %v4793
    %4858 = vst.msk [vmem:[%s201 + $0x321] sm:$0xff] %vm91, %v4794
    %v4859 = vld [vmem:[%s4] sm:$0xff]
    %v4860 = vld [vmem:[%s4 + $0x8] sm:$0xff]
    %v4861 = vld [vmem:[%s4 + $0x10] sm:$0xff]
    %v4862 = vld [vmem:[%s4 + $0x18] sm:$0xff]
    %v4863 = vld [vmem:[%s4 + $0x20] sm:$0xff]
    %v4864 = vld [vmem:[%s4 + $0x28] sm:$0xff]
    %v4865 = vld [vmem:[%s4 + $0x30] sm:$0xff]
    %v4866 = vld [vmem:[%s4 + $0x38] sm:$0xff]
    %v4867 = vld [vmem:[%s4 + $0x40] sm:$0xff]
    %v4868 = vld [vmem:[%s5] sm:$0x1]
    %v4869 = vld [vmem:[%s6] sm:$0x1]
    %v4870 = vld [vmem:[#allocation2] sm:$0xff]
    %v4871 = vld [vmem:[#allocation2 + $0x8] sm:$0xff]
    %v4872 = vld [vmem:[#allocation2 + $0x18] sm:$0xff]
    %v4873 = vld [vmem:[#allocation2 + $0x20] sm:$0xff]
    %v4874 = vld [vmem:[#allocation2 + $0x30] sm:$0xff]
    %v4875 = vld [vmem:[#allocation2 + $0x38] sm:$0xff]
    %v4876 = vld [vmem:[#allocation2 + $0x48] sm:$0xff]
    %v4877 = vld [vmem:[#allocation2 + $0x50] sm:$0xff]
    %v4878 = vld [vmem:[#allocation2 + $0x60] sm:$0xff]
    %v4879 = vld [vmem:[#allocation2 + $0x68] sm:$0xff]
    %v4880 = vld [vmem:[#allocation2 + $0x78] sm:$0xff]
    %v4881 = vld [vmem:[#allocation2 + $0x80] sm:$0xff]
    %v4882 = vld [vmem:[#allocation2 + $0x90] sm:$0xff]
    %v4883 = vld [vmem:[#allocation2 + $0x98] sm:$0xff]
    %v4884 = vld [vmem:[#allocation2 + $0xa8] sm:$0xff]
    %v4885 = vld [vmem:[#allocation2 + $0xb0] sm:$0xff]
    %v4886 = vld [vmem:[#allocation2 + $0xc0] sm:$0xff]
    %v4887 = vld [vmem:[#allocation2 + $0xc8] sm:$0xff]
    %v4888 = vld [vmem:[#allocation2 + $0xd8] sm:$0xff]
    %v4889 = vld [vmem:[#allocation2 + $0xe0] sm:$0xff]
    %v4890 = vld [vmem:[#allocation2 + $0xf0] sm:$0xff]
    %v4891 = vld [vmem:[#allocation2 + $0xf8] sm:$0xff]
    %v4892 = vld [vmem:[#allocation2 + $0x108] sm:$0xff]
    %v4893 = vld [vmem:[#allocation2 + $0x110] sm:$0xff]
    %v4894 = vld [vmem:[#allocation2 + $0x120] sm:$0xff]
    %v4895 = vld [vmem:[#allocation2 + $0x128] sm:$0xff]
    %v4896 = vld [vmem:[#allocation2 + $0x138] sm:$0xff]
    %v4897 = vld [vmem:[#allocation2 + $0x140] sm:$0xff]
    %v4898 = vld [vmem:[#allocation2 + $0x150] sm:$0xff]
    %v4899 = vld [vmem:[#allocation2 + $0x158] sm:$0xff]
    %v4900 = vld [vmem:[#allocation2 + $0x168] sm:$0xff]
    %v4901 = vld [vmem:[#allocation2 + $0x170] sm:$0xff]
    %v4902 = vld [vmem:[#allocation2 + $0x1b0] sm:$0xff]
    %v4903 = vld [vmem:[#allocation2 + $0x1b8] sm:$0xff]
    %v4904 = vld [vmem:[#allocation2 + $0x1c8] sm:$0xff]
    %v4905 = vld [vmem:[#allocation2 + $0x1d0] sm:$0xff]
    %v4906 = vld [vmem:[#allocation2 + $0x1e0] sm:$0xff]
    %v4907 = vld [vmem:[#allocation2 + $0x1e8] sm:$0xff]
    %v4908 = vld [vmem:[#allocation2 + $0x1f8] sm:$0xff]
    %v4909 = vld [vmem:[#allocation2 + $0x200] sm:$0xff]
    %v4910 = vld [vmem:[#allocation2 + $0x210] sm:$0xff]
    %v4911 = vld [vmem:[#allocation2 + $0x218] sm:$0xff]
    %v4912 = vld [vmem:[#allocation2 + $0x228] sm:$0xff]
    %v4913 = vld [vmem:[#allocation2 + $0x230] sm:$0xff]
    %v4914 = vld [vmem:[#allocation2 + $0x240] sm:$0xff]
    %v4915 = vld [vmem:[#allocation2 + $0x248] sm:$0xff]
    %v4916 = vld [vmem:[#allocation2 + $0x258] sm:$0xff]
    %v4917 = vld [vmem:[#allocation2 + $0x260] sm:$0xff]
    %v4918 = vld [vmem:[#allocation2 + $0x270] sm:$0xff]
    %v4919 = vld [vmem:[#allocation2 + $0x278] sm:$0xff]
    %v4920 = vld [vmem:[#allocation2 + $0x288] sm:$0xff]
    %v4921 = vld [vmem:[#allocation2 + $0x290] sm:$0xff]
    %v4922 = vld [vmem:[#allocation2 + $0x2a0] sm:$0xff]
    %v4923 = vld [vmem:[#allocation2 + $0x2a8] sm:$0xff]
    %v4924 = vld [vmem:[#allocation2 + $0x2b8] sm:$0xff]
    %v4925 = vld [vmem:[#allocation2 + $0x2c0] sm:$0xff]
    %v4926 = vld [vmem:[#allocation2 + $0x2d0] sm:$0xff]
    %v4927 = vld [vmem:[#allocation2 + $0x2d8] sm:$0xff]
    %v4928 = vld [vmem:[#allocation2 + $0x2e8] sm:$0xff]
    %v4929 = vld [vmem:[#allocation2 + $0x2f0] sm:$0xff]
    %v4930 = vld [vmem:[#allocation2 + $0x300] sm:$0xff]
    %v4931 = vld [vmem:[#allocation2 + $0x308] sm:$0xff]
    %v4932 = vld [vmem:[#allocation2 + $0x318] sm:$0xff]
    %v4933 = vld [vmem:[#allocation2 + $0x320] sm:$0xff]
    %v4934 = vld [vmem:[#allocation2 + $0x1] sm:$0xff]
    %v4935 = vld [vmem:[#allocation2 + $0x9] sm:$0xff]
    %v4936 = vld [vmem:[#allocation2 + $0x19] sm:$0xff]
    %v4937 = vld [vmem:[#allocation2 + $0x21] sm:$0xff]
    %v4938 = vld [vmem:[#allocation2 + $0x31] sm:$0xff]
    %v4939 = vld [vmem:[#allocation2 + $0x39] sm:$0xff]
    %v4940 = vld [vmem:[#allocation2 + $0x49] sm:$0xff]
    %v4941 = vld [vmem:[#allocation2 + $0x51] sm:$0xff]
    %v4942 = vld [vmem:[#allocation2 + $0x61] sm:$0xff]
    %v4943 = vld [vmem:[#allocation2 + $0x69] sm:$0xff]
    %v4944 = vld [vmem:[#allocation2 + $0x79] sm:$0xff]
    %v4945 = vld [vmem:[#allocation2 + $0x81] sm:$0xff]
    %v4946 = vld [vmem:[#allocation2 + $0x91] sm:$0xff]
    %v4947 = vld [vmem:[#allocation2 + $0x99] sm:$0xff]
    %v4948 = vld [vmem:[#allocation2 + $0xa9] sm:$0xff]
    %v4949 = vld [vmem:[#allocation2 + $0xb1] sm:$0xff]
    %v4950 = vld [vmem:[#allocation2 + $0xc1] sm:$0xff]
    %v4951 = vld [vmem:[#allocation2 + $0xc9] sm:$0xff]
    %v4952 = vld [vmem:[#allocation2 + $0xd9] sm:$0xff]
    %v4953 = vld [vmem:[#allocation2 + $0xe1] sm:$0xff]
    %v4954 = vld [vmem:[#allocation2 + $0xf1] sm:$0xff]
    %v4955 = vld [vmem:[#allocation2 + $0xf9] sm:$0xff]
    %v4956 = vld [vmem:[#allocation2 + $0x109] sm:$0xff]
    %v4957 = vld [vmem:[#allocation2 + $0x111] sm:$0xff]
    %v4958 = vld [vmem:[#allocation2 + $0x121] sm:$0xff]
    %v4959 = vld [vmem:[#allocation2 + $0x129] sm:$0xff]
    %v4960 = vld [vmem:[#allocation2 + $0x139] sm:$0xff]
    %v4961 = vld [vmem:[#allocation2 + $0x141] sm:$0xff]
    %v4962 = vld [vmem:[#allocation2 + $0x151] sm:$0xff]
    %v4963 = vld [vmem:[#allocation2 + $0x159] sm:$0xff]
    %v4964 = vld [vmem:[#allocation2 + $0x169] sm:$0xff]
    %v4965 = vld [vmem:[#allocation2 + $0x171] sm:$0xff]
    %v4966 = vld [vmem:[#allocation2 + $0x1b1] sm:$0xff]
    %v4967 = vld [vmem:[#allocation2 + $0x1b9] sm:$0xff]
    %v4968 = vld [vmem:[#allocation2 + $0x1c9] sm:$0xff]
    %v4969 = vld [vmem:[#allocation2 + $0x1d1] sm:$0xff]
    %v4970 = vld [vmem:[#allocation2 + $0x1e1] sm:$0xff]
    %v4971 = vld [vmem:[#allocation2 + $0x1e9] sm:$0xff]
    %v4972 = vld [vmem:[#allocation2 + $0x1f9] sm:$0xff]
    %v4973 = vld [vmem:[#allocation2 + $0x201] sm:$0xff]
    %v4974 = vld [vmem:[#allocation2 + $0x211] sm:$0xff]
    %v4975 = vld [vmem:[#allocation2 + $0x219] sm:$0xff]
    %v4976 = vld [vmem:[#allocation2 + $0x229] sm:$0xff]
    %v4977 = vld [vmem:[#allocation2 + $0x231] sm:$0xff]
    %v4978 = vld [vmem:[#allocation2 + $0x241] sm:$0xff]
    %v4979 = vld [vmem:[#allocation2 + $0x249] sm:$0xff]
    %v4980 = vld [vmem:[#allocation2 + $0x259] sm:$0xff]
    %v4981 = vld [vmem:[#allocation2 + $0x261] sm:$0xff]
    %v4982 = vld [vmem:[#allocation2 + $0x271] sm:$0xff]
    %v4983 = vld [vmem:[#allocation2 + $0x279] sm:$0xff]
    %v4984 = vld [vmem:[#allocation2 + $0x289] sm:$0xff]
    %v4985 = vld [vmem:[#allocation2 + $0x291] sm:$0xff]
    %v4986 = vld [vmem:[#allocation2 + $0x2a1] sm:$0xff]
    %v4987 = vld [vmem:[#allocation2 + $0x2a9] sm:$0xff]
    %v4988 = vld [vmem:[#allocation2 + $0x2b9] sm:$0xff]
    %v4989 = vld [vmem:[#allocation2 + $0x2c1] sm:$0xff]
    %v4990 = vld [vmem:[#allocation2 + $0x2d1] sm:$0xff]
    %v4991 = vld [vmem:[#allocation2 + $0x2d9] sm:$0xff]
    %v4992 = vld [vmem:[#allocation2 + $0x2e9] sm:$0xff]
    %v4993 = vld [vmem:[#allocation2 + $0x2f1] sm:$0xff]
    %v4994 = vld [vmem:[#allocation2 + $0x301] sm:$0xff]
    %v4995 = vld [vmem:[#allocation2 + $0x309] sm:$0xff]
    %v4996 = vld [vmem:[#allocation2 + $0x319] sm:$0xff]
    %v4997 = vld [vmem:[#allocation2 + $0x321] sm:$0xff]
    %v4998 = vld [vmem:[#allocation2 + $0x2] sm:$0xff]
    %v4999 = vld [vmem:[#allocation2 + $0xa] sm:$0xff]
    %v5000 = vld [vmem:[#allocation2 + $0x1a] sm:$0xff]
    %v5001 = vld [vmem:[#allocation2 + $0x22] sm:$0xff]
    %v5002 = vld [vmem:[#allocation2 + $0x32] sm:$0xff]
    %v5003 = vld [vmem:[#allocation2 + $0x3a] sm:$0xff]
    %v5004 = vld [vmem:[#allocation2 + $0x4a] sm:$0xff]
    %v5005 = vld [vmem:[#allocation2 + $0x52] sm:$0xff]
    %v5006 = vld [vmem:[#allocation2 + $0x62] sm:$0xff]
    %v5007 = vld [vmem:[#allocation2 + $0x6a] sm:$0xff]
    %v5008 = vld [vmem:[#allocation2 + $0x7a] sm:$0xff]
    %v5009 = vld [vmem:[#allocation2 + $0x82] sm:$0xff]
    %v5010 = vld [vmem:[#allocation2 + $0x92] sm:$0xff]
    %v5011 = vld [vmem:[#allocation2 + $0x9a] sm:$0xff]
    %v5012 = vld [vmem:[#allocation2 + $0xaa] sm:$0xff]
    %v5013 = vld [vmem:[#allocation2 + $0xb2] sm:$0xff]
    %v5014 = vld [vmem:[#allocation2 + $0xc2] sm:$0xff]
    %v5015 = vld [vmem:[#allocation2 + $0xca] sm:$0xff]
    %v5016 = vld [vmem:[#allocation2 + $0xda] sm:$0xff]
    %v5017 = vld [vmem:[#allocation2 + $0xe2] sm:$0xff]
    %v5018 = vld [vmem:[#allocation2 + $0xf2] sm:$0xff]
    %v5019 = vld [vmem:[#allocation2 + $0xfa] sm:$0xff]
    %v5020 = vld [vmem:[#allocation2 + $0x10a] sm:$0xff]
    %v5021 = vld [vmem:[#allocation2 + $0x112] sm:$0xff]
    %v5022 = vld [vmem:[#allocation2 + $0x122] sm:$0xff]
    %v5023 = vld [vmem:[#allocation2 + $0x12a] sm:$0xff]
    %v5024 = vld [vmem:[#allocation2 + $0x13a] sm:$0xff]
    %v5025 = vld [vmem:[#allocation2 + $0x142] sm:$0xff]
    %v5026 = vld [vmem:[#allocation2 + $0x152] sm:$0xff]
    %v5027 = vld [vmem:[#allocation2 + $0x15a] sm:$0xff]
    %v5028 = vld [vmem:[#allocation2 + $0x16a] sm:$0xff]
    %v5029 = vld [vmem:[#allocation2 + $0x172] sm:$0xff]
    %v5030 = vld [vmem:[#allocation2 + $0x1b2] sm:$0xff]
    %v5031 = vld [vmem:[#allocation2 + $0x1ba] sm:$0xff]
    %v5032 = vld [vmem:[#allocation2 + $0x1ca] sm:$0xff]
    %v5033 = vld [vmem:[#allocation2 + $0x1d2] sm:$0xff]
    %v5034 = vld [vmem:[#allocation2 + $0x1e2] sm:$0xff]
    %v5035 = vld [vmem:[#allocation2 + $0x1ea] sm:$0xff]
    %v5036 = vld [vmem:[#allocation2 + $0x1fa] sm:$0xff]
    %v5037 = vld [vmem:[#allocation2 + $0x202] sm:$0xff]
    %v5038 = vld [vmem:[#allocation2 + $0x212] sm:$0xff]
    %v5039 = vld [vmem:[#allocation2 + $0x21a] sm:$0xff]
    %v5040 = vld [vmem:[#allocation2 + $0x22a] sm:$0xff]
    %v5041 = vld [vmem:[#allocation2 + $0x232] sm:$0xff]
    %v5042 = vld [vmem:[#allocation2 + $0x242] sm:$0xff]
    %v5043 = vld [vmem:[#allocation2 + $0x24a] sm:$0xff]
    %v5044 = vld [vmem:[#allocation2 + $0x25a] sm:$0xff]
    %v5045 = vld [vmem:[#allocation2 + $0x262] sm:$0xff]
    %v5046 = vld [vmem:[#allocation2 + $0x272] sm:$0xff]
    %v5047 = vld [vmem:[#allocation2 + $0x27a] sm:$0xff]
    %v5048 = vld [vmem:[#allocation2 + $0x28a] sm:$0xff]
    %v5049 = vld [vmem:[#allocation2 + $0x292] sm:$0xff]
    %v5050 = vld [vmem:[#allocation2 + $0x2a2] sm:$0xff]
    %v5051 = vld [vmem:[#allocation2 + $0x2aa] sm:$0xff]
    %v5052 = vld [vmem:[#allocation2 + $0x2ba] sm:$0xff]
    %v5053 = vld [vmem:[#allocation2 + $0x2c2] sm:$0xff]
    %v5054 = vld [vmem:[#allocation2 + $0x2d2] sm:$0xff]
    %v5055 = vld [vmem:[#allocation2 + $0x2da] sm:$0xff]
    %v5056 = vld [vmem:[#allocation2 + $0x2ea] sm:$0xff]
    %v5057 = vld [vmem:[#allocation2 + $0x2f2] sm:$0xff]
    %v5058 = vld [vmem:[#allocation2 + $0x302] sm:$0xff]
    %v5059 = vld [vmem:[#allocation2 + $0x30a] sm:$0xff]
    %v5060 = vld [vmem:[#allocation2 + $0x31a] sm:$0xff]
    %v5061 = vld [vmem:[#allocation2 + $0x322] sm:$0xff]
    %v5062 = vld [vmem:[%s201] sm:$0xff]
    %v5063 = vld [vmem:[%s201 + $0x8] sm:$0xff]
    %v5064 = vld [vmem:[%s201 + $0x18] sm:$0xff]
    %v5065 = vld [vmem:[%s201 + $0x20] sm:$0xff]
    %v5066 = vld [vmem:[%s201 + $0x30] sm:$0xff]
    %v5067 = vld [vmem:[%s201 + $0x38] sm:$0xff]
    %v5068 = vld [vmem:[%s201 + $0x48] sm:$0xff]
    %v5069 = vld [vmem:[%s201 + $0x50] sm:$0xff]
    %v5070 = vld [vmem:[%s201 + $0x60] sm:$0xff]
    %v5071 = vld [vmem:[%s201 + $0x68] sm:$0xff]
    %v5072 = vld [vmem:[%s201 + $0x78] sm:$0xff]
    %v5073 = vld [vmem:[%s201 + $0x80] sm:$0xff]
    %v5074 = vld [vmem:[%s201 + $0x90] sm:$0xff]
    %v5075 = vld [vmem:[%s201 + $0x98] sm:$0xff]
    %v5076 = vld [vmem:[%s201 + $0xa8] sm:$0xff]
    %v5077 = vld [vmem:[%s201 + $0xb0] sm:$0xff]
    %v5078 = vld [vmem:[%s201 + $0xc0] sm:$0xff]
    %v5079 = vld [vmem:[%s201 + $0xc8] sm:$0xff]
    %v5080 = vld [vmem:[%s201 + $0xd8] sm:$0xff]
    %v5081 = vld [vmem:[%s201 + $0xe0] sm:$0xff]
    %v5082 = vld [vmem:[%s201 + $0xf0] sm:$0xff]
    %v5083 = vld [vmem:[%s201 + $0xf8] sm:$0xff]
    %v5084 = vld [vmem:[%s201 + $0x108] sm:$0xff]
    %v5085 = vld [vmem:[%s201 + $0x110] sm:$0xff]
    %v5086 = vld [vmem:[%s201 + $0x120] sm:$0xff]
    %v5087 = vld [vmem:[%s201 + $0x128] sm:$0xff]
    %v5088 = vld [vmem:[%s201 + $0x138] sm:$0xff]
    %v5089 = vld [vmem:[%s201 + $0x140] sm:$0xff]
    %v5090 = vld [vmem:[%s201 + $0x150] sm:$0xff]
    %v5091 = vld [vmem:[%s201 + $0x158] sm:$0xff]
    %v5092 = vld [vmem:[%s201 + $0x168] sm:$0xff]
    %v5093 = vld [vmem:[%s201 + $0x170] sm:$0xff]
    %v5094 = vld [vmem:[%s201 + $0x1b0] sm:$0xff]
    %v5095 = vld [vmem:[%s201 + $0x1b8] sm:$0xff]
    %v5096 = vld [vmem:[%s201 + $0x1c8] sm:$0xff]
    %v5097 = vld [vmem:[%s201 + $0x1d0] sm:$0xff]
    %v5098 = vld [vmem:[%s201 + $0x1e0] sm:$0xff]
    %v5099 = vld [vmem:[%s201 + $0x1e8] sm:$0xff]
    %v5100 = vld [vmem:[%s201 + $0x1f8] sm:$0xff]
    %v5101 = vld [vmem:[%s201 + $0x200] sm:$0xff]
    %v5102 = vld [vmem:[%s201 + $0x210] sm:$0xff]
    %v5103 = vld [vmem:[%s201 + $0x218] sm:$0xff]
    %v5104 = vld [vmem:[%s201 + $0x228] sm:$0xff]
    %v5105 = vld [vmem:[%s201 + $0x230] sm:$0xff]
    %v5106 = vld [vmem:[%s201 + $0x240] sm:$0xff]
    %v5107 = vld [vmem:[%s201 + $0x248] sm:$0xff]
    %v5108 = vld [vmem:[%s201 + $0x258] sm:$0xff]
    %v5109 = vld [vmem:[%s201 + $0x260] sm:$0xff]
    %v5110 = vld [vmem:[%s201 + $0x270] sm:$0xff]
    %v5111 = vld [vmem:[%s201 + $0x278] sm:$0xff]
    %v5112 = vld [vmem:[%s201 + $0x288] sm:$0xff]
    %v5113 = vld [vmem:[%s201 + $0x290] sm:$0xff]
    %v5114 = vld [vmem:[%s201 + $0x2a0] sm:$0xff]
    %v5115 = vld [vmem:[%s201 + $0x2a8] sm:$0xff]
    %v5116 = vld [vmem:[%s201 + $0x2b8] sm:$0xff]
    %v5117 = vld [vmem:[%s201 + $0x2c0] sm:$0xff]
    %v5118 = vld [vmem:[%s201 + $0x2d0] sm:$0xff]
    %v5119 = vld [vmem:[%s201 + $0x2d8] sm:$0xff]
    %v5120 = vld [vmem:[%s201 + $0x2e8] sm:$0xff]
    %v5121 = vld [vmem:[%s201 + $0x2f0] sm:$0xff]
    %v5122 = vld [vmem:[%s201 + $0x300] sm:$0xff]
    %v5123 = vld [vmem:[%s201 + $0x308] sm:$0xff]
    %v5124 = vld [vmem:[%s201 + $0x318] sm:$0xff]
    %v5125 = vld [vmem:[%s201 + $0x320] sm:$0xff]
    %v5126 = vld [vmem:[%s201 + $0x1] sm:$0xff]
    %v5127 = vld [vmem:[%s201 + $0x9] sm:$0xff]
    %v5128 = vld [vmem:[%s201 + $0x19] sm:$0xff]
    %v5129 = vld [vmem:[%s201 + $0x21] sm:$0xff]
    %v5130 = vld [vmem:[%s201 + $0x31] sm:$0xff]
    %v5131 = vld [vmem:[%s201 + $0x39] sm:$0xff]
    %v5132 = vld [vmem:[%s201 + $0x49] sm:$0xff]
    %v5133 = vld [vmem:[%s201 + $0x51] sm:$0xff]
    %v5134 = vld [vmem:[%s201 + $0x61] sm:$0xff]
    %v5135 = vld [vmem:[%s201 + $0x69] sm:$0xff]
    %v5136 = vld [vmem:[%s201 + $0x79] sm:$0xff]
    %v5137 = vld [vmem:[%s201 + $0x81] sm:$0xff]
    %v5138 = vld [vmem:[%s201 + $0x91] sm:$0xff]
    %v5139 = vld [vmem:[%s201 + $0x99] sm:$0xff]
    %v5140 = vld [vmem:[%s201 + $0xa9] sm:$0xff]
    %v5141 = vld [vmem:[%s201 + $0xb1] sm:$0xff]
    %v5142 = vld [vmem:[%s201 + $0xc1] sm:$0xff]
    %v5143 = vld [vmem:[%s201 + $0xc9] sm:$0xff]
    %v5144 = vld [vmem:[%s201 + $0xd9] sm:$0xff]
    %v5145 = vld [vmem:[%s201 + $0xe1] sm:$0xff]
    %v5146 = vld [vmem:[%s201 + $0xf1] sm:$0xff]
    %v5147 = vld [vmem:[%s201 + $0xf9] sm:$0xff]
    %v5148 = vld [vmem:[%s201 + $0x109] sm:$0xff]
    %v5149 = vld [vmem:[%s201 + $0x111] sm:$0xff]
    %v5150 = vld [vmem:[%s201 + $0x121] sm:$0xff]
    %v5151 = vld [vmem:[%s201 + $0x129] sm:$0xff]
    %v5152 = vld [vmem:[%s201 + $0x139] sm:$0xff]
    %v5153 = vld [vmem:[%s201 + $0x141] sm:$0xff]
    %v5154 = vld [vmem:[%s201 + $0x151] sm:$0xff]
    %v5155 = vld [vmem:[%s201 + $0x159] sm:$0xff]
    %v5156 = vld [vmem:[%s201 + $0x169] sm:$0xff]
    %v5157 = vld [vmem:[%s201 + $0x171] sm:$0xff]
    %v5158 = vld [vmem:[%s201 + $0x1b1] sm:$0xff]
    %v5159 = vld [vmem:[%s201 + $0x1b9] sm:$0xff]
    %v5160 = vld [vmem:[%s201 + $0x1c9] sm:$0xff]
    %v5161 = vld [vmem:[%s201 + $0x1d1] sm:$0xff]
    %v5162 = vld [vmem:[%s201 + $0x1e1] sm:$0xff]
    %v5163 = vld [vmem:[%s201 + $0x1e9] sm:$0xff]
    %v5164 = vld [vmem:[%s201 + $0x1f9] sm:$0xff]
    %v5165 = vld [vmem:[%s201 + $0x201] sm:$0xff]
    %v5166 = vld [vmem:[%s201 + $0x211] sm:$0xff]
    %v5167 = vld [vmem:[%s201 + $0x219] sm:$0xff]
    %v5168 = vld [vmem:[%s201 + $0x229] sm:$0xff]
    %v5169 = vld [vmem:[%s201 + $0x231] sm:$0xff]
    %v5170 = vld [vmem:[%s201 + $0x241] sm:$0xff]
    %v5171 = vld [vmem:[%s201 + $0x249] sm:$0xff]
    %v5172 = vld [vmem:[%s201 + $0x259] sm:$0xff]
    %v5173 = vld [vmem:[%s201 + $0x261] sm:$0xff]
    %v5174 = vld [vmem:[%s201 + $0x271] sm:$0xff]
    %v5175 = vld [vmem:[%s201 + $0x279] sm:$0xff]
    %v5176 = vld [vmem:[%s201 + $0x289] sm:$0xff]
    %v5177 = vld [vmem:[%s201 + $0x291] sm:$0xff]
    %v5178 = vld [vmem:[%s201 + $0x2a1] sm:$0xff]
    %v5179 = vld [vmem:[%s201 + $0x2a9] sm:$0xff]
    %v5180 = vld [vmem:[%s201 + $0x2b9] sm:$0xff]
    %v5181 = vld [vmem:[%s201 + $0x2c1] sm:$0xff]
    %v5182 = vld [vmem:[%s201 + $0x2d1] sm:$0xff]
    %v5183 = vld [vmem:[%s201 + $0x2d9] sm:$0xff]
    %v5184 = vld [vmem:[%s201 + $0x2e9] sm:$0xff]
    %v5185 = vld [vmem:[%s201 + $0x2f1] sm:$0xff]
    %v5186 = vld [vmem:[%s201 + $0x301] sm:$0xff]
    %v5187 = vld [vmem:[%s201 + $0x309] sm:$0xff]
    %v5188 = vld [vmem:[%s201 + $0x319] sm:$0xff]
    %v5189 = vld [vmem:[%s201 + $0x321] sm:$0xff]
    %v5190 = vld [vmem:[%s201 + $0x2] sm:$0xff]
    %v5191 = vld [vmem:[%s201 + $0xa] sm:$0xff]
    %v5192 = vld [vmem:[%s201 + $0x1a] sm:$0xff]
    %v5193 = vld [vmem:[%s201 + $0x22] sm:$0xff]
    %v5194 = vld [vmem:[%s201 + $0x32] sm:$0xff]
    %v5195 = vld [vmem:[%s201 + $0x3a] sm:$0xff]
    %v5196 = vld [vmem:[%s201 + $0x4a] sm:$0xff]
    %v5197 = vld [vmem:[%s201 + $0x52] sm:$0xff]
    %v5198 = vld [vmem:[%s201 + $0x62] sm:$0xff]
    %v5199 = vld [vmem:[%s201 + $0x6a] sm:$0xff]
    %v5200 = vld [vmem:[%s201 + $0x7a] sm:$0xff]
    %v5201 = vld [vmem:[%s201 + $0x82] sm:$0xff]
    %v5202 = vld [vmem:[%s201 + $0x92] sm:$0xff]
    %v5203 = vld [vmem:[%s201 + $0x9a] sm:$0xff]
    %v5204 = vld [vmem:[%s201 + $0xaa] sm:$0xff]
    %v5205 = vld [vmem:[%s201 + $0xb2] sm:$0xff]
    %v5206 = vld [vmem:[%s201 + $0xc2] sm:$0xff]
    %v5207 = vld [vmem:[%s201 + $0xca] sm:$0xff]
    %v5208 = vld [vmem:[%s201 + $0xda] sm:$0xff]
    %v5209 = vld [vmem:[%s201 + $0xe2] sm:$0xff]
    %v5210 = vld [vmem:[%s201 + $0xf2] sm:$0xff]
    %v5211 = vld [vmem:[%s201 + $0xfa] sm:$0xff]
    %v5212 = vld [vmem:[%s201 + $0x10a] sm:$0xff]
    %v5213 = vld [vmem:[%s201 + $0x112] sm:$0xff]
    %v5214 = vld [vmem:[%s201 + $0x122] sm:$0xff]
    %v5215 = vld [vmem:[%s201 + $0x12a] sm:$0xff]
    %v5216 = vld [vmem:[%s201 + $0x13a] sm:$0xff]
    %v5217 = vld [vmem:[%s201 + $0x142] sm:$0xff]
    %v5218 = vld [vmem:[%s201 + $0x152] sm:$0xff]
    %v5219 = vld [vmem:[%s201 + $0x15a] sm:$0xff]
    %v5220 = vld [vmem:[%s201 + $0x16a] sm:$0xff]
    %v5221 = vld [vmem:[%s201 + $0x172] sm:$0xff]
    %v5222 = vld [vmem:[%s201 + $0x1b2] sm:$0xff]
    %v5223 = vld [vmem:[%s201 + $0x1ba] sm:$0xff]
    %v5224 = vld [vmem:[%s201 + $0x1ca] sm:$0xff]
    %v5225 = vld [vmem:[%s201 + $0x1d2] sm:$0xff]
    %v5226 = vld [vmem:[%s201 + $0x1e2] sm:$0xff]
    %v5227 = vld [vmem:[%s201 + $0x1ea] sm:$0xff]
    %v5228 = vld [vmem:[%s201 + $0x1fa] sm:$0xff]
    %v5229 = vld [vmem:[%s201 + $0x202] sm:$0xff]
    %v5230 = vld [vmem:[%s201 + $0x212] sm:$0xff]
    %v5231 = vld [vmem:[%s201 + $0x21a] sm:$0xff]
    %v5232 = vld [vmem:[%s201 + $0x22a] sm:$0xff]
    %v5233 = vld [vmem:[%s201 + $0x232] sm:$0xff]
    %v5234 = vld [vmem:[%s201 + $0x242] sm:$0xff]
    %v5235 = vld [vmem:[%s201 + $0x24a] sm:$0xff]
    %v5236 = vld [vmem:[%s201 + $0x25a] sm:$0xff]
    %v5237 = vld [vmem:[%s201 + $0x262] sm:$0xff]
    %v5238 = vld [vmem:[%s201 + $0x272] sm:$0xff]
    %v5239 = vld [vmem:[%s201 + $0x27a] sm:$0xff]
    %v5240 = vld [vmem:[%s201 + $0x28a] sm:$0xff]
    %v5241 = vld [vmem:[%s201 + $0x292] sm:$0xff]
    %v5242 = vld [vmem:[%s201 + $0x2a2] sm:$0xff]
    %v5243 = vld [vmem:[%s201 + $0x2aa] sm:$0xff]
    %v5244 = vld [vmem:[%s201 + $0x2ba] sm:$0xff]
    %v5245 = vld [vmem:[%s201 + $0x2c2] sm:$0xff]
    %v5246 = vld [vmem:[%s201 + $0x2d2] sm:$0xff]
    %v5247 = vld [vmem:[%s201 + $0x2da] sm:$0xff]
    %v5248 = vld [vmem:[%s201 + $0x2ea] sm:$0xff]
    %v5249 = vld [vmem:[%s201 + $0x2f2] sm:$0xff]
    %v5250 = vld [vmem:[%s201 + $0x302] sm:$0xff]
    %v5251 = vld [vmem:[%s201 + $0x30a] sm:$0xff]
    %v5252 = vld [vmem:[%s201 + $0x31a] sm:$0xff]
    %v5253 = vld [vmem:[%s201 + $0x322] sm:$0xff]
    %v5254 = vld [vmem:[%s661] sm:$0xff]
    %v5255 = vld [vmem:[%s661 + $0x8] sm:$0xff]
    %v5256 = vld [vmem:[%s661 + $0x18] sm:$0xff]
    %v5257 = vld [vmem:[%s661 + $0x20] sm:$0xff]
    %v5258 = vld [vmem:[%s661 + $0x30] sm:$0xff]
    %v5259 = vld [vmem:[%s661 + $0x38] sm:$0xff]
    %v5260 = vld [vmem:[%s661 + $0x48] sm:$0xff]
    %v5261 = vld [vmem:[%s661 + $0x50] sm:$0xff]
    %v5262 = vld [vmem:[%s661 + $0x60] sm:$0xff]
    %v5263 = vld [vmem:[%s661 + $0x68] sm:$0xff]
    %v5264 = vld [vmem:[%s661 + $0x78] sm:$0xff]
    %v5265 = vld [vmem:[%s661 + $0x80] sm:$0xff]
    %v5266 = vld [vmem:[%s661 + $0x90] sm:$0xff]
    %v5267 = vld [vmem:[%s661 + $0x98] sm:$0xff]
    %v5268 = vld [vmem:[%s661 + $0xa8] sm:$0xff]
    %v5269 = vld [vmem:[%s661 + $0xb0] sm:$0xff]
    %v5270 = vld [vmem:[%s661 + $0xc0] sm:$0xff]
    %v5271 = vld [vmem:[%s661 + $0xc8] sm:$0xff]
    %v5272 = vld [vmem:[%s661 + $0xd8] sm:$0xff]
    %v5273 = vld [vmem:[%s661 + $0xe0] sm:$0xff]
    %v5274 = vld [vmem:[%s661 + $0xf0] sm:$0xff]
    %v5275 = vld [vmem:[%s661 + $0xf8] sm:$0xff]
    %v5276 = vld [vmem:[%s661 + $0x108] sm:$0xff]
    %v5277 = vld [vmem:[%s661 + $0x110] sm:$0xff]
    %v5278 = vld [vmem:[%s661 + $0x120] sm:$0xff]
    %v5279 = vld [vmem:[%s661 + $0x128] sm:$0xff]
    %v5280 = vld [vmem:[%s661 + $0x138] sm:$0xff]
    %v5281 = vld [vmem:[%s661 + $0x140] sm:$0xff]
    %v5282 = vld [vmem:[%s661 + $0x150] sm:$0xff]
    %v5283 = vld [vmem:[%s661 + $0x158] sm:$0xff]
    %v5284 = vld [vmem:[%s661 + $0x168] sm:$0xff]
    %v5285 = vld [vmem:[%s661 + $0x170] sm:$0xff]
    %v5286 = vld [vmem:[%s661 + $0x1b0] sm:$0xff]
    %v5287 = vld [vmem:[%s661 + $0x1b8] sm:$0xff]
    %v5288 = vld [vmem:[%s661 + $0x1c8] sm:$0xff]
    %v5289 = vld [vmem:[%s661 + $0x1d0] sm:$0xff]
    %v5290 = vld [vmem:[%s661 + $0x1e0] sm:$0xff]
    %v5291 = vld [vmem:[%s661 + $0x1e8] sm:$0xff]
    %v5292 = vld [vmem:[%s661 + $0x1f8] sm:$0xff]
    %v5293 = vld [vmem:[%s661 + $0x200] sm:$0xff]
    %v5294 = vld [vmem:[%s661 + $0x210] sm:$0xff]
    %v5295 = vld [vmem:[%s661 + $0x218] sm:$0xff]
    %v5296 = vld [vmem:[%s661 + $0x228] sm:$0xff]
    %v5297 = vld [vmem:[%s661 + $0x230] sm:$0xff]
    %v5298 = vld [vmem:[%s661 + $0x240] sm:$0xff]
    %v5299 = vld [vmem:[%s661 + $0x248] sm:$0xff]
    %v5300 = vld [vmem:[%s661 + $0x258] sm:$0xff]
    %v5301 = vld [vmem:[%s661 + $0x260] sm:$0xff]
    %v5302 = vld [vmem:[%s661 + $0x270] sm:$0xff]
    %v5303 = vld [vmem:[%s661 + $0x278] sm:$0xff]
    %v5304 = vld [vmem:[%s661 + $0x288] sm:$0xff]
    %v5305 = vld [vmem:[%s661 + $0x290] sm:$0xff]
    %v5306 = vld [vmem:[%s661 + $0x2a0] sm:$0xff]
    %v5307 = vld [vmem:[%s661 + $0x2a8] sm:$0xff]
    %v5308 = vld [vmem:[%s661 + $0x2b8] sm:$0xff]
    %v5309 = vld [vmem:[%s661 + $0x2c0] sm:$0xff]
    %v5310 = vld [vmem:[%s661 + $0x2d0] sm:$0xff]
    %v5311 = vld [vmem:[%s661 + $0x2d8] sm:$0xff]
    %v5312 = vld [vmem:[%s661 + $0x2e8] sm:$0xff]
    %v5313 = vld [vmem:[%s661 + $0x2f0] sm:$0xff]
    %v5314 = vld [vmem:[%s661 + $0x300] sm:$0xff]
    %v5315 = vld [vmem:[%s661 + $0x308] sm:$0xff]
    %v5316 = vld [vmem:[%s661 + $0x318] sm:$0xff]
    %v5317 = vld [vmem:[%s661 + $0x320] sm:$0xff]
    %v5318 = vld [vmem:[%s661 + $0x1] sm:$0xff]
    %v5319 = vld [vmem:[%s661 + $0x9] sm:$0xff]
    %v5320 = vld [vmem:[%s661 + $0x19] sm:$0xff]
    %v5321 = vld [vmem:[%s661 + $0x21] sm:$0xff]
    %v5322 = vld [vmem:[%s661 + $0x31] sm:$0xff]
    %v5323 = vld [vmem:[%s661 + $0x39] sm:$0xff]
    %v5324 = vld [vmem:[%s661 + $0x49] sm:$0xff]
    %v5325 = vld [vmem:[%s661 + $0x51] sm:$0xff]
    %v5326 = vld [vmem:[%s661 + $0x61] sm:$0xff]
    %v5327 = vld [vmem:[%s661 + $0x69] sm:$0xff]
    %v5328 = vld [vmem:[%s661 + $0x79] sm:$0xff]
    %v5329 = vld [vmem:[%s661 + $0x81] sm:$0xff]
    %v5330 = vld [vmem:[%s661 + $0x91] sm:$0xff]
    %v5331 = vld [vmem:[%s661 + $0x99] sm:$0xff]
    %v5332 = vld [vmem:[%s661 + $0xa9] sm:$0xff]
    %v5333 = vld [vmem:[%s661 + $0xb1] sm:$0xff]
    %v5334 = vld [vmem:[%s661 + $0xc1] sm:$0xff]
    %v5335 = vld [vmem:[%s661 + $0xc9] sm:$0xff]
    %v5336 = vld [vmem:[%s661 + $0xd9] sm:$0xff]
    %v5337 = vld [vmem:[%s661 + $0xe1] sm:$0xff]
    %v5338 = vld [vmem:[%s661 + $0xf1] sm:$0xff]
    %v5339 = vld [vmem:[%s661 + $0xf9] sm:$0xff]
    %v5340 = vld [vmem:[%s661 + $0x109] sm:$0xff]
    %v5341 = vld [vmem:[%s661 + $0x111] sm:$0xff]
    %v5342 = vld [vmem:[%s661 + $0x121] sm:$0xff]
    %v5343 = vld [vmem:[%s661 + $0x129] sm:$0xff]
    %v5344 = vld [vmem:[%s661 + $0x139] sm:$0xff]
    %v5345 = vld [vmem:[%s661 + $0x141] sm:$0xff]
    %v5346 = vld [vmem:[%s661 + $0x151] sm:$0xff]
    %v5347 = vld [vmem:[%s661 + $0x159] sm:$0xff]
    %v5348 = vld [vmem:[%s661 + $0x169] sm:$0xff]
    %v5349 = vld [vmem:[%s661 + $0x171] sm:$0xff]
    %v5350 = vld [vmem:[%s661 + $0x1b1] sm:$0xff]
    %v5351 = vld [vmem:[%s661 + $0x1b9] sm:$0xff]
    %v5352 = vld [vmem:[%s661 + $0x1c9] sm:$0xff]
    %v5353 = vld [vmem:[%s661 + $0x1d1] sm:$0xff]
    %v5354 = vld [vmem:[%s661 + $0x1e1] sm:$0xff]
    %v5355 = vld [vmem:[%s661 + $0x1e9] sm:$0xff]
    %v5356 = vld [vmem:[%s661 + $0x1f9] sm:$0xff]
    %v5357 = vld [vmem:[%s661 + $0x201] sm:$0xff]
    %v5358 = vld [vmem:[%s661 + $0x211] sm:$0xff]
    %v5359 = vld [vmem:[%s661 + $0x219] sm:$0xff]
    %v5360 = vld [vmem:[%s661 + $0x229] sm:$0xff]
    %v5361 = vld [vmem:[%s661 + $0x231] sm:$0xff]
    %v5362 = vld [vmem:[%s661 + $0x241] sm:$0xff]
    %v5363 = vld [vmem:[%s661 + $0x249] sm:$0xff]
    %v5364 = vld [vmem:[%s661 + $0x259] sm:$0xff]
    %v5365 = vld [vmem:[%s661 + $0x261] sm:$0xff]
    %v5366 = vld [vmem:[%s661 + $0x271] sm:$0xff]
    %v5367 = vld [vmem:[%s661 + $0x279] sm:$0xff]
    %v5368 = vld [vmem:[%s661 + $0x289] sm:$0xff]
    %v5369 = vld [vmem:[%s661 + $0x291] sm:$0xff]
    %v5370 = vld [vmem:[%s661 + $0x2a1] sm:$0xff]
    %v5371 = vld [vmem:[%s661 + $0x2a9] sm:$0xff]
    %v5372 = vld [vmem:[%s661 + $0x2b9] sm:$0xff]
    %v5373 = vld [vmem:[%s661 + $0x2c1] sm:$0xff]
    %v5374 = vld [vmem:[%s661 + $0x2d1] sm:$0xff]
    %v5375 = vld [vmem:[%s661 + $0x2d9] sm:$0xff]
    %v5376 = vld [vmem:[%s661 + $0x2e9] sm:$0xff]
    %v5377 = vld [vmem:[%s661 + $0x2f1] sm:$0xff]
    %v5378 = vld [vmem:[%s661 + $0x301] sm:$0xff]
    %v5379 = vld [vmem:[%s661 + $0x309] sm:$0xff]
    %v5380 = vld [vmem:[%s661 + $0x319] sm:$0xff]
    %v5381 = vld [vmem:[%s661 + $0x321] sm:$0xff]
    %v5382 = vld [vmem:[%s661 + $0x2] sm:$0xff]
    %v5383 = vld [vmem:[%s661 + $0xa] sm:$0xff]
    %v5384 = vld [vmem:[%s661 + $0x1a] sm:$0xff]
    %v5385 = vld [vmem:[%s661 + $0x22] sm:$0xff]
    %v5386 = vld [vmem:[%s661 + $0x32] sm:$0xff]
    %v5387 = vld [vmem:[%s661 + $0x3a] sm:$0xff]
    %v5388 = vld [vmem:[%s661 + $0x4a] sm:$0xff]
    %v5389 = vld [vmem:[%s661 + $0x52] sm:$0xff]
    %v5390 = vld [vmem:[%s661 + $0x62] sm:$0xff]
    %v5391 = vld [vmem:[%s661 + $0x6a] sm:$0xff]
    %v5392 = vld [vmem:[%s661 + $0x7a] sm:$0xff]
    %v5393 = vld [vmem:[%s661 + $0x82] sm:$0xff]
    %v5394 = vld [vmem:[%s661 + $0x92] sm:$0xff]
    %v5395 = vld [vmem:[%s661 + $0x9a] sm:$0xff]
    %v5396 = vld [vmem:[%s661 + $0xaa] sm:$0xff]
    %v5397 = vld [vmem:[%s661 + $0xb2] sm:$0xff]
    %v5398 = vld [vmem:[%s661 + $0xc2] sm:$0xff]
    %v5399 = vld [vmem:[%s661 + $0xca] sm:$0xff]
    %v5400 = vld [vmem:[%s661 + $0xda] sm:$0xff]
    %v5401 = vld [vmem:[%s661 + $0xe2] sm:$0xff]
    %v5402 = vld [vmem:[%s661 + $0xf2] sm:$0xff]
    %v5403 = vld [vmem:[%s661 + $0xfa] sm:$0xff]
    %v5404 = vld [vmem:[%s661 + $0x10a] sm:$0xff]
    %v5405 = vld [vmem:[%s661 + $0x112] sm:$0xff]
    %v5406 = vld [vmem:[%s661 + $0x122] sm:$0xff]
    %v5407 = vld [vmem:[%s661 + $0x12a] sm:$0xff]
    %v5408 = vld [vmem:[%s661 + $0x13a] sm:$0xff]
    %v5409 = vld [vmem:[%s661 + $0x142] sm:$0xff]
    %v5410 = vld [vmem:[%s661 + $0x152] sm:$0xff]
    %v5411 = vld [vmem:[%s661 + $0x15a] sm:$0xff]
    %v5412 = vld [vmem:[%s661 + $0x16a] sm:$0xff]
    %v5413 = vld [vmem:[%s661 + $0x172] sm:$0xff]
    %v5414 = vld [vmem:[%s661 + $0x1b2] sm:$0xff]
    %v5415 = vld [vmem:[%s661 + $0x1ba] sm:$0xff]
    %v5416 = vld [vmem:[%s661 + $0x1ca] sm:$0xff]
    %v5417 = vld [vmem:[%s661 + $0x1d2] sm:$0xff]
    %v5418 = vld [vmem:[%s661 + $0x1e2] sm:$0xff]
    %v5419 = vld [vmem:[%s661 + $0x1ea] sm:$0xff]
    %v5420 = vld [vmem:[%s661 + $0x1fa] sm:$0xff]
    %v5421 = vld [vmem:[%s661 + $0x202] sm:$0xff]
    %v5422 = vld [vmem:[%s661 + $0x212] sm:$0xff]
    %v5423 = vld [vmem:[%s661 + $0x21a] sm:$0xff]
    %v5424 = vld [vmem:[%s661 + $0x22a] sm:$0xff]
    %v5425 = vld [vmem:[%s661 + $0x232] sm:$0xff]
    %v5426 = vld [vmem:[%s661 + $0x242] sm:$0xff]
    %v5427 = vld [vmem:[%s661 + $0x24a] sm:$0xff]
    %v5428 = vld [vmem:[%s661 + $0x25a] sm:$0xff]
    %v5429 = vld [vmem:[%s661 + $0x262] sm:$0xff]
    %v5430 = vld [vmem:[%s661 + $0x272] sm:$0xff]
    %v5431 = vld [vmem:[%s661 + $0x27a] sm:$0xff]
    %v5432 = vld [vmem:[%s661 + $0x28a] sm:$0xff]
    %v5433 = vld [vmem:[%s661 + $0x292] sm:$0xff]
    %v5434 = vld [vmem:[%s661 + $0x2a2] sm:$0xff]
    %v5435 = vld [vmem:[%s661 + $0x2aa] sm:$0xff]
    %v5436 = vld [vmem:[%s661 + $0x2ba] sm:$0xff]
    %v5437 = vld [vmem:[%s661 + $0x2c2] sm:$0xff]
    %v5438 = vld [vmem:[%s661 + $0x2d2] sm:$0xff]
    %v5439 = vld [vmem:[%s661 + $0x2da] sm:$0xff]
    %v5440 = vld [vmem:[%s661 + $0x2ea] sm:$0xff]
    %v5441 = vld [vmem:[%s661 + $0x2f2] sm:$0xff]
    %v5442 = vld [vmem:[%s661 + $0x302] sm:$0xff]
    %v5443 = vld [vmem:[%s661 + $0x30a] sm:$0xff]
    %v5444 = vld [vmem:[%s661 + $0x31a] sm:$0xff]
    %v5445 = vld [vmem:[%s661 + $0x322] sm:$0xff]
    %5510 = vrot.lane.b32.xlu0 %v4934, 8
    %v5511 = vpop.permute.xlu0 %5510
    %5512 = vrot.lane.b32.xlu0 %v4935, 8
    %v5513 = vpop.permute.xlu0 %5512
    %5514 = vrot.lane.b32.xlu0 %v4936, 8
    %v5515 = vpop.permute.xlu0 %5514
    %5516 = vrot.lane.b32.xlu0 %v4937, 8
    %v5517 = vpop.permute.xlu0 %5516
    %5518 = vrot.lane.b32.xlu0 %v4938, 8
    %v5519 = vpop.permute.xlu0 %5518
    %5520 = vrot.lane.b32.xlu0 %v4939, 8
    %v5521 = vpop.permute.xlu0 %5520
    %5522 = vrot.lane.b32.xlu0 %v4940, 8
    %v5523 = vpop.permute.xlu0 %5522
    %5524 = vrot.lane.b32.xlu0 %v4941, 8
    %v5525 = vpop.permute.xlu0 %5524
    %5526 = vrot.lane.b32.xlu0 %v4942, 8
    %v5527 = vpop.permute.xlu0 %5526
    %5528 = vrot.lane.b32.xlu0 %v4943, 8
    %v5529 = vpop.permute.xlu0 %5528
    %5530 = vrot.lane.b32.xlu0 %v4944, 8
    %v5531 = vpop.permute.xlu0 %5530
    %5532 = vrot.lane.b32.xlu0 %v4945, 8
    %v5533 = vpop.permute.xlu0 %5532
    %5534 = vrot.lane.b32.xlu0 %v4946, 8
    %v5535 = vpop.permute.xlu0 %5534
    %5536 = vrot.lane.b32.xlu0 %v4947, 8
    %v5537 = vpop.permute.xlu0 %5536
    %5538 = vrot.lane.b32.xlu0 %v4948, 8
    %v5539 = vpop.permute.xlu0 %5538
    %5540 = vrot.lane.b32.xlu0 %v4949, 8
    %v5541 = vpop.permute.xlu0 %5540
    %5542 = vrot.lane.b32.xlu0 %v4950, 8
    %v5543 = vpop.permute.xlu0 %5542
    %5544 = vrot.lane.b32.xlu0 %v4951, 8
    %v5545 = vpop.permute.xlu0 %5544
    %5546 = vrot.lane.b32.xlu0 %v4952, 8
    %v5547 = vpop.permute.xlu0 %5546
    %5548 = vrot.lane.b32.xlu0 %v4953, 8
    %v5549 = vpop.permute.xlu0 %5548
    %5550 = vrot.lane.b32.xlu0 %v4954, 8
    %v5551 = vpop.permute.xlu0 %5550
    %5552 = vrot.lane.b32.xlu0 %v4955, 8
    %v5553 = vpop.permute.xlu0 %5552
    %5554 = vrot.lane.b32.xlu0 %v4956, 8
    %v5555 = vpop.permute.xlu0 %5554
    %5556 = vrot.lane.b32.xlu0 %v4957, 8
    %v5557 = vpop.permute.xlu0 %5556
    %5558 = vrot.lane.b32.xlu0 %v4958, 8
    %v5559 = vpop.permute.xlu0 %5558
    %5560 = vrot.lane.b32.xlu0 %v4959, 8
    %v5561 = vpop.permute.xlu0 %5560
    %5562 = vrot.lane.b32.xlu0 %v4960, 8
    %v5563 = vpop.permute.xlu0 %5562
    %5564 = vrot.lane.b32.xlu0 %v4961, 8
    %v5565 = vpop.permute.xlu0 %5564
    %5566 = vrot.lane.b32.xlu0 %v4962, 8
    %v5567 = vpop.permute.xlu0 %5566
    %5568 = vrot.lane.b32.xlu0 %v4963, 8
    %v5569 = vpop.permute.xlu0 %5568
    %5570 = vrot.lane.b32.xlu0 %v4964, 8
    %v5571 = vpop.permute.xlu0 %5570
    %5572 = vrot.lane.b32.xlu0 %v4965, 8
    %v5573 = vpop.permute.xlu0 %5572
    %5574 = vrot.lane.b32.xlu0 %v4966, 8
    %v5575 = vpop.permute.xlu0 %5574
    %5576 = vrot.lane.b32.xlu0 %v4967, 8
    %v5577 = vpop.permute.xlu0 %5576
    %5578 = vrot.lane.b32.xlu0 %v4968, 8
    %v5579 = vpop.permute.xlu0 %5578
    %5580 = vrot.lane.b32.xlu0 %v4969, 8
    %v5581 = vpop.permute.xlu0 %5580
    %5582 = vrot.lane.b32.xlu0 %v4970, 8
    %v5583 = vpop.permute.xlu0 %5582
    %5584 = vrot.lane.b32.xlu0 %v4971, 8
    %v5585 = vpop.permute.xlu0 %5584
    %5586 = vrot.lane.b32.xlu0 %v4972, 8
    %v5587 = vpop.permute.xlu0 %5586
    %5588 = vrot.lane.b32.xlu0 %v4973, 8
    %v5589 = vpop.permute.xlu0 %5588
    %5590 = vrot.lane.b32.xlu0 %v4974, 8
    %v5591 = vpop.permute.xlu0 %5590
    %5592 = vrot.lane.b32.xlu0 %v4975, 8
    %v5593 = vpop.permute.xlu0 %5592
    %5594 = vrot.lane.b32.xlu0 %v4976, 8
    %v5595 = vpop.permute.xlu0 %5594
    %5596 = vrot.lane.b32.xlu0 %v4977, 8
    %v5597 = vpop.permute.xlu0 %5596
    %5598 = vrot.lane.b32.xlu0 %v4978, 8
    %v5599 = vpop.permute.xlu0 %5598
    %5600 = vrot.lane.b32.xlu0 %v4979, 8
    %v5601 = vpop.permute.xlu0 %5600
    %5602 = vrot.lane.b32.xlu0 %v4980, 8
    %v5603 = vpop.permute.xlu0 %5602
    %5604 = vrot.lane.b32.xlu0 %v4981, 8
    %v5605 = vpop.permute.xlu0 %5604
    %5606 = vrot.lane.b32.xlu0 %v4982, 8
    %v5607 = vpop.permute.xlu0 %5606
    %5608 = vrot.lane.b32.xlu0 %v4983, 8
    %v5609 = vpop.permute.xlu0 %5608
    %5610 = vrot.lane.b32.xlu0 %v4984, 8
    %v5611 = vpop.permute.xlu0 %5610
    %5612 = vrot.lane.b32.xlu0 %v4985, 8
    %v5613 = vpop.permute.xlu0 %5612
    %5614 = vrot.lane.b32.xlu0 %v4986, 8
    %v5615 = vpop.permute.xlu0 %5614
    %5616 = vrot.lane.b32.xlu0 %v4987, 8
    %v5617 = vpop.permute.xlu0 %5616
    %5618 = vrot.lane.b32.xlu0 %v4988, 8
    %v5619 = vpop.permute.xlu0 %5618
    %5620 = vrot.lane.b32.xlu0 %v4989, 8
    %v5621 = vpop.permute.xlu0 %5620
    %5622 = vrot.lane.b32.xlu0 %v4990, 8
    %v5623 = vpop.permute.xlu0 %5622
    %5624 = vrot.lane.b32.xlu0 %v4991, 8
    %v5625 = vpop.permute.xlu0 %5624
    %5626 = vrot.lane.b32.xlu0 %v4992, 8
    %v5627 = vpop.permute.xlu0 %5626
    %5628 = vrot.lane.b32.xlu0 %v4993, 8
    %v5629 = vpop.permute.xlu0 %5628
    %5630 = vrot.lane.b32.xlu0 %v4994, 8
    %v5631 = vpop.permute.xlu0 %5630
    %5632 = vrot.lane.b32.xlu0 %v4995, 8
    %v5633 = vpop.permute.xlu0 %5632
    %5634 = vrot.lane.b32.xlu0 %v4996, 8
    %v5635 = vpop.permute.xlu0 %5634
    %5636 = vrot.lane.b32.xlu0 %v4997, 8
    %v5637 = vpop.permute.xlu0 %5636
    %5766 = vrot.lane.b32.xlu0 %v4998, 16
    %v5767 = vpop.permute.xlu0 %5766
    %5768 = vrot.lane.b32.xlu0 %v4999, 16
    %v5769 = vpop.permute.xlu0 %5768
    %5770 = vrot.lane.b32.xlu0 %v5000, 16
    %v5771 = vpop.permute.xlu0 %5770
    %5772 = vrot.lane.b32.xlu0 %v5001, 16
    %v5773 = vpop.permute.xlu0 %5772
    %5774 = vrot.lane.b32.xlu0 %v5002, 16
    %v5775 = vpop.permute.xlu0 %5774
    %5776 = vrot.lane.b32.xlu0 %v5003, 16
    %v5777 = vpop.permute.xlu0 %5776
    %5778 = vrot.lane.b32.xlu0 %v5004, 16
    %v5779 = vpop.permute.xlu0 %5778
    %5780 = vrot.lane.b32.xlu0 %v5005, 16
    %v5781 = vpop.permute.xlu0 %5780
    %5782 = vrot.lane.b32.xlu0 %v5006, 16
    %v5783 = vpop.permute.xlu0 %5782
    %5784 = vrot.lane.b32.xlu0 %v5007, 16
    %v5785 = vpop.permute.xlu0 %5784
    %5786 = vrot.lane.b32.xlu0 %v5008, 16
    %v5787 = vpop.permute.xlu0 %5786
    %5788 = vrot.lane.b32.xlu0 %v5009, 16
    %v5789 = vpop.permute.xlu0 %5788
    %5790 = vrot.lane.b32.xlu0 %v5010, 16
    %v5791 = vpop.permute.xlu0 %5790
    %5792 = vrot.lane.b32.xlu0 %v5011, 16
    %v5793 = vpop.permute.xlu0 %5792
    %5794 = vrot.lane.b32.xlu0 %v5012, 16
    %v5795 = vpop.permute.xlu0 %5794
    %5796 = vrot.lane.b32.xlu0 %v5013, 16
    %v5797 = vpop.permute.xlu0 %5796
    %5798 = vrot.lane.b32.xlu0 %v5014, 16
    %v5799 = vpop.permute.xlu0 %5798
    %5800 = vrot.lane.b32.xlu0 %v5015, 16
    %v5801 = vpop.permute.xlu0 %5800
    %5802 = vrot.lane.b32.xlu0 %v5016, 16
    %v5803 = vpop.permute.xlu0 %5802
    %5804 = vrot.lane.b32.xlu0 %v5017, 16
    %v5805 = vpop.permute.xlu0 %5804
    %5806 = vrot.lane.b32.xlu0 %v5018, 16
    %v5807 = vpop.permute.xlu0 %5806
    %5808 = vrot.lane.b32.xlu0 %v5019, 16
    %v5809 = vpop.permute.xlu0 %5808
    %5810 = vrot.lane.b32.xlu0 %v5020, 16
    %v5811 = vpop.permute.xlu0 %5810
    %5812 = vrot.lane.b32.xlu0 %v5021, 16
    %v5813 = vpop.permute.xlu0 %5812
    %5814 = vrot.lane.b32.xlu0 %v5022, 16
    %v5815 = vpop.permute.xlu0 %5814
    %5816 = vrot.lane.b32.xlu0 %v5023, 16
    %v5817 = vpop.permute.xlu0 %5816
    %5818 = vrot.lane.b32.xlu0 %v5024, 16
    %v5819 = vpop.permute.xlu0 %5818
    %5820 = vrot.lane.b32.xlu0 %v5025, 16
    %v5821 = vpop.permute.xlu0 %5820
    %5822 = vrot.lane.b32.xlu0 %v5026, 16
    %v5823 = vpop.permute.xlu0 %5822
    %5824 = vrot.lane.b32.xlu0 %v5027, 16
    %v5825 = vpop.permute.xlu0 %5824
    %5826 = vrot.lane.b32.xlu0 %v5028, 16
    %v5827 = vpop.permute.xlu0 %5826
    %5828 = vrot.lane.b32.xlu0 %v5029, 16
    %v5829 = vpop.permute.xlu0 %5828
    %5830 = vrot.lane.b32.xlu0 %v5030, 16
    %v5831 = vpop.permute.xlu0 %5830
    %5832 = vrot.lane.b32.xlu0 %v5031, 16
    %v5833 = vpop.permute.xlu0 %5832
    %5834 = vrot.lane.b32.xlu0 %v5032, 16
    %v5835 = vpop.permute.xlu0 %5834
    %5836 = vrot.lane.b32.xlu0 %v5033, 16
    %v5837 = vpop.permute.xlu0 %5836
    %5838 = vrot.lane.b32.xlu0 %v5034, 16
    %v5839 = vpop.permute.xlu0 %5838
    %5840 = vrot.lane.b32.xlu0 %v5035, 16
    %v5841 = vpop.permute.xlu0 %5840
    %5842 = vrot.lane.b32.xlu0 %v5036, 16
    %v5843 = vpop.permute.xlu0 %5842
    %5844 = vrot.lane.b32.xlu0 %v5037, 16
    %v5845 = vpop.permute.xlu0 %5844
    %5846 = vrot.lane.b32.xlu0 %v5038, 16
    %v5847 = vpop.permute.xlu0 %5846
    %5848 = vrot.lane.b32.xlu0 %v5039, 16
    %v5849 = vpop.permute.xlu0 %5848
    %5850 = vrot.lane.b32.xlu0 %v5040, 16
    %v5851 = vpop.permute.xlu0 %5850
    %5852 = vrot.lane.b32.xlu0 %v5041, 16
    %v5853 = vpop.permute.xlu0 %5852
    %5854 = vrot.lane.b32.xlu0 %v5042, 16
    %v5855 = vpop.permute.xlu0 %5854
    %5856 = vrot.lane.b32.xlu0 %v5043, 16
    %v5857 = vpop.permute.xlu0 %5856
    %5858 = vrot.lane.b32.xlu0 %v5044, 16
    %v5859 = vpop.permute.xlu0 %5858
    %5860 = vrot.lane.b32.xlu0 %v5045, 16
    %v5861 = vpop.permute.xlu0 %5860
    %5862 = vrot.lane.b32.xlu0 %v5046, 16
    %v5863 = vpop.permute.xlu0 %5862
    %5864 = vrot.lane.b32.xlu0 %v5047, 16
    %v5865 = vpop.permute.xlu0 %5864
    %5866 = vrot.lane.b32.xlu0 %v5048, 16
    %v5867 = vpop.permute.xlu0 %5866
    %5868 = vrot.lane.b32.xlu0 %v5049, 16
    %v5869 = vpop.permute.xlu0 %5868
    %5870 = vrot.lane.b32.xlu0 %v5050, 16
    %v5871 = vpop.permute.xlu0 %5870
    %5872 = vrot.lane.b32.xlu0 %v5051, 16
    %v5873 = vpop.permute.xlu0 %5872
    %5874 = vrot.lane.b32.xlu0 %v5052, 16
    %v5875 = vpop.permute.xlu0 %5874
    %5876 = vrot.lane.b32.xlu0 %v5053, 16
    %v5877 = vpop.permute.xlu0 %5876
    %5878 = vrot.lane.b32.xlu0 %v5054, 16
    %v5879 = vpop.permute.xlu0 %5878
    %5880 = vrot.lane.b32.xlu0 %v5055, 16
    %v5881 = vpop.permute.xlu0 %5880
    %5882 = vrot.lane.b32.xlu0 %v5056, 16
    %v5883 = vpop.permute.xlu0 %5882
    %5884 = vrot.lane.b32.xlu0 %v5057, 16
    %v5885 = vpop.permute.xlu0 %5884
    %5886 = vrot.lane.b32.xlu0 %v5058, 16
    %v5887 = vpop.permute.xlu0 %5886
    %5888 = vrot.lane.b32.xlu0 %v5059, 16
    %v5889 = vpop.permute.xlu0 %5888
    %5890 = vrot.lane.b32.xlu0 %v5060, 16
    %v5891 = vpop.permute.xlu0 %5890
    %5892 = vrot.lane.b32.xlu0 %v5061, 16
    %v5893 = vpop.permute.xlu0 %5892
    %6022 = vrot.lane.b32.xlu0 %v5062, 24
    %v6023 = vpop.permute.xlu0 %6022
    %6024 = vrot.lane.b32.xlu0 %v5063, 24
    %v6025 = vpop.permute.xlu0 %6024
    %6026 = vrot.lane.b32.xlu0 %v5064, 24
    %v6027 = vpop.permute.xlu0 %6026
    %6028 = vrot.lane.b32.xlu0 %v5065, 24
    %v6029 = vpop.permute.xlu0 %6028
    %6030 = vrot.lane.b32.xlu0 %v5066, 24
    %v6031 = vpop.permute.xlu0 %6030
    %6032 = vrot.lane.b32.xlu0 %v5067, 24
    %v6033 = vpop.permute.xlu0 %6032
    %6034 = vrot.lane.b32.xlu0 %v5068, 24
    %v6035 = vpop.permute.xlu0 %6034
    %6036 = vrot.lane.b32.xlu0 %v5069, 24
    %v6037 = vpop.permute.xlu0 %6036
    %6038 = vrot.lane.b32.xlu0 %v5070, 24
    %v6039 = vpop.permute.xlu0 %6038
    %6040 = vrot.lane.b32.xlu0 %v5071, 24
    %v6041 = vpop.permute.xlu0 %6040
    %6042 = vrot.lane.b32.xlu0 %v5072, 24
    %v6043 = vpop.permute.xlu0 %6042
    %6044 = vrot.lane.b32.xlu0 %v5073, 24
    %v6045 = vpop.permute.xlu0 %6044
    %6046 = vrot.lane.b32.xlu0 %v5074, 24
    %v6047 = vpop.permute.xlu0 %6046
    %6048 = vrot.lane.b32.xlu0 %v5075, 24
    %v6049 = vpop.permute.xlu0 %6048
    %6050 = vrot.lane.b32.xlu0 %v5076, 24
    %v6051 = vpop.permute.xlu0 %6050
    %6052 = vrot.lane.b32.xlu0 %v5077, 24
    %v6053 = vpop.permute.xlu0 %6052
    %6054 = vrot.lane.b32.xlu0 %v5078, 24
    %v6055 = vpop.permute.xlu0 %6054
    %6056 = vrot.lane.b32.xlu0 %v5079, 24
    %v6057 = vpop.permute.xlu0 %6056
    %6058 = vrot.lane.b32.xlu0 %v5080, 24
    %v6059 = vpop.permute.xlu0 %6058
    %6060 = vrot.lane.b32.xlu0 %v5081, 24
    %v6061 = vpop.permute.xlu0 %6060
    %6062 = vrot.lane.b32.xlu0 %v5082, 24
    %v6063 = vpop.permute.xlu0 %6062
    %6064 = vrot.lane.b32.xlu0 %v5083, 24
    %v6065 = vpop.permute.xlu0 %6064
    %6066 = vrot.lane.b32.xlu0 %v5084, 24
    %v6067 = vpop.permute.xlu0 %6066
    %6068 = vrot.lane.b32.xlu0 %v5085, 24
    %v6069 = vpop.permute.xlu0 %6068
    %6070 = vrot.lane.b32.xlu0 %v5086, 24
    %v6071 = vpop.permute.xlu0 %6070
    %6072 = vrot.lane.b32.xlu0 %v5087, 24
    %v6073 = vpop.permute.xlu0 %6072
    %6074 = vrot.lane.b32.xlu0 %v5088, 24
    %v6075 = vpop.permute.xlu0 %6074
    %6076 = vrot.lane.b32.xlu0 %v5089, 24
    %v6077 = vpop.permute.xlu0 %6076
    %6078 = vrot.lane.b32.xlu0 %v5090, 24
    %v6079 = vpop.permute.xlu0 %6078
    %6080 = vrot.lane.b32.xlu0 %v5091, 24
    %v6081 = vpop.permute.xlu0 %6080
    %6082 = vrot.lane.b32.xlu0 %v5092, 24
    %v6083 = vpop.permute.xlu0 %6082
    %6084 = vrot.lane.b32.xlu0 %v5093, 24
    %v6085 = vpop.permute.xlu0 %6084
    %6086 = vrot.lane.b32.xlu0 %v5094, 24
    %v6087 = vpop.permute.xlu0 %6086
    %6088 = vrot.lane.b32.xlu0 %v5095, 24
    %v6089 = vpop.permute.xlu0 %6088
    %6090 = vrot.lane.b32.xlu0 %v5096, 24
    %v6091 = vpop.permute.xlu0 %6090
    %6092 = vrot.lane.b32.xlu0 %v5097, 24
    %v6093 = vpop.permute.xlu0 %6092
    %6094 = vrot.lane.b32.xlu0 %v5098, 24
    %v6095 = vpop.permute.xlu0 %6094
    %6096 = vrot.lane.b32.xlu0 %v5099, 24
    %v6097 = vpop.permute.xlu0 %6096
    %6098 = vrot.lane.b32.xlu0 %v5100, 24
    %v6099 = vpop.permute.xlu0 %6098
    %6100 = vrot.lane.b32.xlu0 %v5101, 24
    %v6101 = vpop.permute.xlu0 %6100
    %6102 = vrot.lane.b32.xlu0 %v5102, 24
    %v6103 = vpop.permute.xlu0 %6102
    %6104 = vrot.lane.b32.xlu0 %v5103, 24
    %v6105 = vpop.permute.xlu0 %6104
    %6106 = vrot.lane.b32.xlu0 %v5104, 24
    %v6107 = vpop.permute.xlu0 %6106
    %6108 = vrot.lane.b32.xlu0 %v5105, 24
    %v6109 = vpop.permute.xlu0 %6108
    %6110 = vrot.lane.b32.xlu0 %v5106, 24
    %v6111 = vpop.permute.xlu0 %6110
    %6112 = vrot.lane.b32.xlu0 %v5107, 24
    %v6113 = vpop.permute.xlu0 %6112
    %6114 = vrot.lane.b32.xlu0 %v5108, 24
    %v6115 = vpop.permute.xlu0 %6114
    %6116 = vrot.lane.b32.xlu0 %v5109, 24
    %v6117 = vpop.permute.xlu0 %6116
    %6118 = vrot.lane.b32.xlu0 %v5110, 24
    %v6119 = vpop.permute.xlu0 %6118
    %6120 = vrot.lane.b32.xlu0 %v5111, 24
    %v6121 = vpop.permute.xlu0 %6120
    %6122 = vrot.lane.b32.xlu0 %v5112, 24
    %v6123 = vpop.permute.xlu0 %6122
    %6124 = vrot.lane.b32.xlu0 %v5113, 24
    %v6125 = vpop.permute.xlu0 %6124
    %6126 = vrot.lane.b32.xlu0 %v5114, 24
    %v6127 = vpop.permute.xlu0 %6126
    %6128 = vrot.lane.b32.xlu0 %v5115, 24
    %v6129 = vpop.permute.xlu0 %6128
    %6130 = vrot.lane.b32.xlu0 %v5116, 24
    %v6131 = vpop.permute.xlu0 %6130
    %6132 = vrot.lane.b32.xlu0 %v5117, 24
    %v6133 = vpop.permute.xlu0 %6132
    %6134 = vrot.lane.b32.xlu0 %v5118, 24
    %v6135 = vpop.permute.xlu0 %6134
    %6136 = vrot.lane.b32.xlu0 %v5119, 24
    %v6137 = vpop.permute.xlu0 %6136
    %6138 = vrot.lane.b32.xlu0 %v5120, 24
    %v6139 = vpop.permute.xlu0 %6138
    %6140 = vrot.lane.b32.xlu0 %v5121, 24
    %v6141 = vpop.permute.xlu0 %6140
    %6142 = vrot.lane.b32.xlu0 %v5122, 24
    %v6143 = vpop.permute.xlu0 %6142
    %6144 = vrot.lane.b32.xlu0 %v5123, 24
    %v6145 = vpop.permute.xlu0 %6144
    %6146 = vrot.lane.b32.xlu0 %v5124, 24
    %v6147 = vpop.permute.xlu0 %6146
    %6148 = vrot.lane.b32.xlu0 %v5125, 24
    %v6149 = vpop.permute.xlu0 %6148
    %6278 = vrot.lane.b32.xlu0 %v5126, 32
    %v6279 = vpop.permute.xlu0 %6278
    %6280 = vrot.lane.b32.xlu0 %v5127, 32
    %v6281 = vpop.permute.xlu0 %6280
    %6282 = vrot.lane.b32.xlu0 %v5128, 32
    %v6283 = vpop.permute.xlu0 %6282
    %6284 = vrot.lane.b32.xlu0 %v5129, 32
    %v6285 = vpop.permute.xlu0 %6284
    %6286 = vrot.lane.b32.xlu0 %v5130, 32
    %v6287 = vpop.permute.xlu0 %6286
    %6288 = vrot.lane.b32.xlu0 %v5131, 32
    %v6289 = vpop.permute.xlu0 %6288
    %6290 = vrot.lane.b32.xlu0 %v5132, 32
    %v6291 = vpop.permute.xlu0 %6290
    %6292 = vrot.lane.b32.xlu0 %v5133, 32
    %v6293 = vpop.permute.xlu0 %6292
    %6294 = vrot.lane.b32.xlu0 %v5134, 32
    %v6295 = vpop.permute.xlu0 %6294
    %6296 = vrot.lane.b32.xlu0 %v5135, 32
    %v6297 = vpop.permute.xlu0 %6296
    %6298 = vrot.lane.b32.xlu0 %v5136, 32
    %v6299 = vpop.permute.xlu0 %6298
    %6300 = vrot.lane.b32.xlu0 %v5137, 32
    %v6301 = vpop.permute.xlu0 %6300
    %6302 = vrot.lane.b32.xlu0 %v5138, 32
    %v6303 = vpop.permute.xlu0 %6302
    %6304 = vrot.lane.b32.xlu0 %v5139, 32
    %v6305 = vpop.permute.xlu0 %6304
    %6306 = vrot.lane.b32.xlu0 %v5140, 32
    %v6307 = vpop.permute.xlu0 %6306
    %6308 = vrot.lane.b32.xlu0 %v5141, 32
    %v6309 = vpop.permute.xlu0 %6308
    %6310 = vrot.lane.b32.xlu0 %v5142, 32
    %v6311 = vpop.permute.xlu0 %6310
    %6312 = vrot.lane.b32.xlu0 %v5143, 32
    %v6313 = vpop.permute.xlu0 %6312
    %6314 = vrot.lane.b32.xlu0 %v5144, 32
    %v6315 = vpop.permute.xlu0 %6314
    %6316 = vrot.lane.b32.xlu0 %v5145, 32
    %v6317 = vpop.permute.xlu0 %6316
    %6318 = vrot.lane.b32.xlu0 %v5146, 32
    %v6319 = vpop.permute.xlu0 %6318
    %6320 = vrot.lane.b32.xlu0 %v5147, 32
    %v6321 = vpop.permute.xlu0 %6320
    %6322 = vrot.lane.b32.xlu0 %v5148, 32
    %v6323 = vpop.permute.xlu0 %6322
    %6324 = vrot.lane.b32.xlu0 %v5149, 32
    %v6325 = vpop.permute.xlu0 %6324
    %6326 = vrot.lane.b32.xlu0 %v5150, 32
    %v6327 = vpop.permute.xlu0 %6326
    %6328 = vrot.lane.b32.xlu0 %v5151, 32
    %v6329 = vpop.permute.xlu0 %6328
    %6330 = vrot.lane.b32.xlu0 %v5152, 32
    %v6331 = vpop.permute.xlu0 %6330
    %6332 = vrot.lane.b32.xlu0 %v5153, 32
    %v6333 = vpop.permute.xlu0 %6332
    %6334 = vrot.lane.b32.xlu0 %v5154, 32
    %v6335 = vpop.permute.xlu0 %6334
    %6336 = vrot.lane.b32.xlu0 %v5155, 32
    %v6337 = vpop.permute.xlu0 %6336
    %6338 = vrot.lane.b32.xlu0 %v5156, 32
    %v6339 = vpop.permute.xlu0 %6338
    %6340 = vrot.lane.b32.xlu0 %v5157, 32
    %v6341 = vpop.permute.xlu0 %6340
    %6342 = vrot.lane.b32.xlu0 %v5158, 32
    %v6343 = vpop.permute.xlu0 %6342
    %6344 = vrot.lane.b32.xlu0 %v5159, 32
    %v6345 = vpop.permute.xlu0 %6344
    %6346 = vrot.lane.b32.xlu0 %v5160, 32
    %v6347 = vpop.permute.xlu0 %6346
    %6348 = vrot.lane.b32.xlu0 %v5161, 32
    %v6349 = vpop.permute.xlu0 %6348
    %6350 = vrot.lane.b32.xlu0 %v5162, 32
    %v6351 = vpop.permute.xlu0 %6350
    %6352 = vrot.lane.b32.xlu0 %v5163, 32
    %v6353 = vpop.permute.xlu0 %6352
    %6354 = vrot.lane.b32.xlu0 %v5164, 32
    %v6355 = vpop.permute.xlu0 %6354
    %6356 = vrot.lane.b32.xlu0 %v5165, 32
    %v6357 = vpop.permute.xlu0 %6356
    %6358 = vrot.lane.b32.xlu0 %v5166, 32
    %v6359 = vpop.permute.xlu0 %6358
    %6360 = vrot.lane.b32.xlu0 %v5167, 32
    %v6361 = vpop.permute.xlu0 %6360
    %6362 = vrot.lane.b32.xlu0 %v5168, 32
    %v6363 = vpop.permute.xlu0 %6362
    %6364 = vrot.lane.b32.xlu0 %v5169, 32
    %v6365 = vpop.permute.xlu0 %6364
    %6366 = vrot.lane.b32.xlu0 %v5170, 32
    %v6367 = vpop.permute.xlu0 %6366
    %6368 = vrot.lane.b32.xlu0 %v5171, 32
    %v6369 = vpop.permute.xlu0 %6368
    %6370 = vrot.lane.b32.xlu0 %v5172, 32
    %v6371 = vpop.permute.xlu0 %6370
    %6372 = vrot.lane.b32.xlu0 %v5173, 32
    %v6373 = vpop.permute.xlu0 %6372
    %6374 = vrot.lane.b32.xlu0 %v5174, 32
    %v6375 = vpop.permute.xlu0 %6374
    %6376 = vrot.lane.b32.xlu0 %v5175, 32
    %v6377 = vpop.permute.xlu0 %6376
    %6378 = vrot.lane.b32.xlu0 %v5176, 32
    %v6379 = vpop.permute.xlu0 %6378
    %6380 = vrot.lane.b32.xlu0 %v5177, 32
    %v6381 = vpop.permute.xlu0 %6380
    %6382 = vrot.lane.b32.xlu0 %v5178, 32
    %v6383 = vpop.permute.xlu0 %6382
    %6384 = vrot.lane.b32.xlu0 %v5179, 32
    %v6385 = vpop.permute.xlu0 %6384
    %6386 = vrot.lane.b32.xlu0 %v5180, 32
    %v6387 = vpop.permute.xlu0 %6386
    %6388 = vrot.lane.b32.xlu0 %v5181, 32
    %v6389 = vpop.permute.xlu0 %6388
    %6390 = vrot.lane.b32.xlu0 %v5182, 32
    %v6391 = vpop.permute.xlu0 %6390
    %6392 = vrot.lane.b32.xlu0 %v5183, 32
    %v6393 = vpop.permute.xlu0 %6392
    %6394 = vrot.lane.b32.xlu0 %v5184, 32
    %v6395 = vpop.permute.xlu0 %6394
    %6396 = vrot.lane.b32.xlu0 %v5185, 32
    %v6397 = vpop.permute.xlu0 %6396
    %6398 = vrot.lane.b32.xlu0 %v5186, 32
    %v6399 = vpop.permute.xlu0 %6398
    %6400 = vrot.lane.b32.xlu0 %v5187, 32
    %v6401 = vpop.permute.xlu0 %6400
    %6402 = vrot.lane.b32.xlu0 %v5188, 32
    %v6403 = vpop.permute.xlu0 %6402
    %6404 = vrot.lane.b32.xlu0 %v5189, 32
    %v6405 = vpop.permute.xlu0 %6404
    %6534 = vrot.lane.b32.xlu0 %v5190, 40
    %v6535 = vpop.permute.xlu0 %6534
    %6536 = vrot.lane.b32.xlu0 %v5191, 40
    %v6537 = vpop.permute.xlu0 %6536
    %6538 = vrot.lane.b32.xlu0 %v5192, 40
    %v6539 = vpop.permute.xlu0 %6538
    %6540 = vrot.lane.b32.xlu0 %v5193, 40
    %v6541 = vpop.permute.xlu0 %6540
    %6542 = vrot.lane.b32.xlu0 %v5194, 40
    %v6543 = vpop.permute.xlu0 %6542
    %6544 = vrot.lane.b32.xlu0 %v5195, 40
    %v6545 = vpop.permute.xlu0 %6544
    %6546 = vrot.lane.b32.xlu0 %v5196, 40
    %v6547 = vpop.permute.xlu0 %6546
    %6548 = vrot.lane.b32.xlu0 %v5197, 40
    %v6549 = vpop.permute.xlu0 %6548
    %6550 = vrot.lane.b32.xlu0 %v5198, 40
    %v6551 = vpop.permute.xlu0 %6550
    %6552 = vrot.lane.b32.xlu0 %v5199, 40
    %v6553 = vpop.permute.xlu0 %6552
    %6554 = vrot.lane.b32.xlu0 %v5200, 40
    %v6555 = vpop.permute.xlu0 %6554
    %6556 = vrot.lane.b32.xlu0 %v5201, 40
    %v6557 = vpop.permute.xlu0 %6556
    %6558 = vrot.lane.b32.xlu0 %v5202, 40
    %v6559 = vpop.permute.xlu0 %6558
    %6560 = vrot.lane.b32.xlu0 %v5203, 40
    %v6561 = vpop.permute.xlu0 %6560
    %6562 = vrot.lane.b32.xlu0 %v5204, 40
    %v6563 = vpop.permute.xlu0 %6562
    %6564 = vrot.lane.b32.xlu0 %v5205, 40
    %v6565 = vpop.permute.xlu0 %6564
    %6566 = vrot.lane.b32.xlu0 %v5206, 40
    %v6567 = vpop.permute.xlu0 %6566
    %6568 = vrot.lane.b32.xlu0 %v5207, 40
    %v6569 = vpop.permute.xlu0 %6568
    %6570 = vrot.lane.b32.xlu0 %v5208, 40
    %v6571 = vpop.permute.xlu0 %6570
    %6572 = vrot.lane.b32.xlu0 %v5209, 40
    %v6573 = vpop.permute.xlu0 %6572
    %6574 = vrot.lane.b32.xlu0 %v5210, 40
    %v6575 = vpop.permute.xlu0 %6574
    %6576 = vrot.lane.b32.xlu0 %v5211, 40
    %v6577 = vpop.permute.xlu0 %6576
    %6578 = vrot.lane.b32.xlu0 %v5212, 40
    %v6579 = vpop.permute.xlu0 %6578
    %6580 = vrot.lane.b32.xlu0 %v5213, 40
    %v6581 = vpop.permute.xlu0 %6580
    %6582 = vrot.lane.b32.xlu0 %v5214, 40
    %v6583 = vpop.permute.xlu0 %6582
    %6584 = vrot.lane.b32.xlu0 %v5215, 40
    %v6585 = vpop.permute.xlu0 %6584
    %6586 = vrot.lane.b32.xlu0 %v5216, 40
    %v6587 = vpop.permute.xlu0 %6586
    %6588 = vrot.lane.b32.xlu0 %v5217, 40
    %v6589 = vpop.permute.xlu0 %6588
    %6590 = vrot.lane.b32.xlu0 %v5218, 40
    %v6591 = vpop.permute.xlu0 %6590
    %6592 = vrot.lane.b32.xlu0 %v5219, 40
    %v6593 = vpop.permute.xlu0 %6592
    %6594 = vrot.lane.b32.xlu0 %v5220, 40
    %v6595 = vpop.permute.xlu0 %6594
    %6596 = vrot.lane.b32.xlu0 %v5221, 40
    %v6597 = vpop.permute.xlu0 %6596
    %6598 = vrot.lane.b32.xlu0 %v5222, 40
    %v6599 = vpop.permute.xlu0 %6598
    %6600 = vrot.lane.b32.xlu0 %v5223, 40
    %v6601 = vpop.permute.xlu0 %6600
    %6602 = vrot.lane.b32.xlu0 %v5224, 40
    %v6603 = vpop.permute.xlu0 %6602
    %6604 = vrot.lane.b32.xlu0 %v5225, 40
    %v6605 = vpop.permute.xlu0 %6604
    %6606 = vrot.lane.b32.xlu0 %v5226, 40
    %v6607 = vpop.permute.xlu0 %6606
    %6608 = vrot.lane.b32.xlu0 %v5227, 40
    %v6609 = vpop.permute.xlu0 %6608
    %6610 = vrot.lane.b32.xlu0 %v5228, 40
    %v6611 = vpop.permute.xlu0 %6610
    %6612 = vrot.lane.b32.xlu0 %v5229, 40
    %v6613 = vpop.permute.xlu0 %6612
    %6614 = vrot.lane.b32.xlu0 %v5230, 40
    %v6615 = vpop.permute.xlu0 %6614
    %6616 = vrot.lane.b32.xlu0 %v5231, 40
    %v6617 = vpop.permute.xlu0 %6616
    %6618 = vrot.lane.b32.xlu0 %v5232, 40
    %v6619 = vpop.permute.xlu0 %6618
    %6620 = vrot.lane.b32.xlu0 %v5233, 40
    %v6621 = vpop.permute.xlu0 %6620
    %6622 = vrot.lane.b32.xlu0 %v5234, 40
    %v6623 = vpop.permute.xlu0 %6622
    %6624 = vrot.lane.b32.xlu0 %v5235, 40
    %v6625 = vpop.permute.xlu0 %6624
    %6626 = vrot.lane.b32.xlu0 %v5236, 40
    %v6627 = vpop.permute.xlu0 %6626
    %6628 = vrot.lane.b32.xlu0 %v5237, 40
    %v6629 = vpop.permute.xlu0 %6628
    %6630 = vrot.lane.b32.xlu0 %v5238, 40
    %v6631 = vpop.permute.xlu0 %6630
    %6632 = vrot.lane.b32.xlu0 %v5239, 40
    %v6633 = vpop.permute.xlu0 %6632
    %6634 = vrot.lane.b32.xlu0 %v5240, 40
    %v6635 = vpop.permute.xlu0 %6634
    %6636 = vrot.lane.b32.xlu0 %v5241, 40
    %v6637 = vpop.permute.xlu0 %6636
    %6638 = vrot.lane.b32.xlu0 %v5242, 40
    %v6639 = vpop.permute.xlu0 %6638
    %6640 = vrot.lane.b32.xlu0 %v5243, 40
    %v6641 = vpop.permute.xlu0 %6640
    %6642 = vrot.lane.b32.xlu0 %v5244, 40
    %v6643 = vpop.permute.xlu0 %6642
    %6644 = vrot.lane.b32.xlu0 %v5245, 40
    %v6645 = vpop.permute.xlu0 %6644
    %6646 = vrot.lane.b32.xlu0 %v5246, 40
    %v6647 = vpop.permute.xlu0 %6646
    %6648 = vrot.lane.b32.xlu0 %v5247, 40
    %v6649 = vpop.permute.xlu0 %6648
    %6650 = vrot.lane.b32.xlu0 %v5248, 40
    %v6651 = vpop.permute.xlu0 %6650
    %6652 = vrot.lane.b32.xlu0 %v5249, 40
    %v6653 = vpop.permute.xlu0 %6652
    %6654 = vrot.lane.b32.xlu0 %v5250, 40
    %v6655 = vpop.permute.xlu0 %6654
    %6656 = vrot.lane.b32.xlu0 %v5251, 40
    %v6657 = vpop.permute.xlu0 %6656
    %6658 = vrot.lane.b32.xlu0 %v5252, 40
    %v6659 = vpop.permute.xlu0 %6658
    %6660 = vrot.lane.b32.xlu0 %v5253, 40
    %v6661 = vpop.permute.xlu0 %6660
    %6790 = vrot.lane.b32.xlu0 %v5254, 48
    %v6791 = vpop.permute.xlu0 %6790
    %6792 = vrot.lane.b32.xlu0 %v5255, 48
    %v6793 = vpop.permute.xlu0 %6792
    %6794 = vrot.lane.b32.xlu0 %v5256, 48
    %v6795 = vpop.permute.xlu0 %6794
    %6796 = vrot.lane.b32.xlu0 %v5257, 48
    %v6797 = vpop.permute.xlu0 %6796
    %6798 = vrot.lane.b32.xlu0 %v5258, 48
    %v6799 = vpop.permute.xlu0 %6798
    %6800 = vrot.lane.b32.xlu0 %v5259, 48
    %v6801 = vpop.permute.xlu0 %6800
    %6802 = vrot.lane.b32.xlu0 %v5260, 48
    %v6803 = vpop.permute.xlu0 %6802
    %6804 = vrot.lane.b32.xlu0 %v5261, 48
    %v6805 = vpop.permute.xlu0 %6804
    %6806 = vrot.lane.b32.xlu0 %v5262, 48
    %v6807 = vpop.permute.xlu0 %6806
    %6808 = vrot.lane.b32.xlu0 %v5263, 48
    %v6809 = vpop.permute.xlu0 %6808
    %6810 = vrot.lane.b32.xlu0 %v5264, 48
    %v6811 = vpop.permute.xlu0 %6810
    %6812 = vrot.lane.b32.xlu0 %v5265, 48
    %v6813 = vpop.permute.xlu0 %6812
    %6814 = vrot.lane.b32.xlu0 %v5266, 48
    %v6815 = vpop.permute.xlu0 %6814
    %6816 = vrot.lane.b32.xlu0 %v5267, 48
    %v6817 = vpop.permute.xlu0 %6816
    %6818 = vrot.lane.b32.xlu0 %v5268, 48
    %v6819 = vpop.permute.xlu0 %6818
    %6820 = vrot.lane.b32.xlu0 %v5269, 48
    %v6821 = vpop.permute.xlu0 %6820
    %6822 = vrot.lane.b32.xlu0 %v5270, 48
    %v6823 = vpop.permute.xlu0 %6822
    %6824 = vrot.lane.b32.xlu0 %v5271, 48
    %v6825 = vpop.permute.xlu0 %6824
    %6826 = vrot.lane.b32.xlu0 %v5272, 48
    %v6827 = vpop.permute.xlu0 %6826
    %6828 = vrot.lane.b32.xlu0 %v5273, 48
    %v6829 = vpop.permute.xlu0 %6828
    %6830 = vrot.lane.b32.xlu0 %v5274, 48
    %v6831 = vpop.permute.xlu0 %6830
    %6832 = vrot.lane.b32.xlu0 %v5275, 48
    %v6833 = vpop.permute.xlu0 %6832
    %6834 = vrot.lane.b32.xlu0 %v5276, 48
    %v6835 = vpop.permute.xlu0 %6834
    %6836 = vrot.lane.b32.xlu0 %v5277, 48
    %v6837 = vpop.permute.xlu0 %6836
    %6838 = vrot.lane.b32.xlu0 %v5278, 48
    %v6839 = vpop.permute.xlu0 %6838
    %6840 = vrot.lane.b32.xlu0 %v5279, 48
    %v6841 = vpop.permute.xlu0 %6840
    %6842 = vrot.lane.b32.xlu0 %v5280, 48
    %v6843 = vpop.permute.xlu0 %6842
    %6844 = vrot.lane.b32.xlu0 %v5281, 48
    %v6845 = vpop.permute.xlu0 %6844
    %6846 = vrot.lane.b32.xlu0 %v5282, 48
    %v6847 = vpop.permute.xlu0 %6846
    %6848 = vrot.lane.b32.xlu0 %v5283, 48
    %v6849 = vpop.permute.xlu0 %6848
    %6850 = vrot.lane.b32.xlu0 %v5284, 48
    %v6851 = vpop.permute.xlu0 %6850
    %6852 = vrot.lane.b32.xlu0 %v5285, 48
    %v6853 = vpop.permute.xlu0 %6852
    %6854 = vrot.lane.b32.xlu0 %v5286, 48
    %v6855 = vpop.permute.xlu0 %6854
    %6856 = vrot.lane.b32.xlu0 %v5287, 48
    %v6857 = vpop.permute.xlu0 %6856
    %6858 = vrot.lane.b32.xlu0 %v5288, 48
    %v6859 = vpop.permute.xlu0 %6858
    %6860 = vrot.lane.b32.xlu0 %v5289, 48
    %v6861 = vpop.permute.xlu0 %6860
    %6862 = vrot.lane.b32.xlu0 %v5290, 48
    %v6863 = vpop.permute.xlu0 %6862
    %6864 = vrot.lane.b32.xlu0 %v5291, 48
    %v6865 = vpop.permute.xlu0 %6864
    %6866 = vrot.lane.b32.xlu0 %v5292, 48
    %v6867 = vpop.permute.xlu0 %6866
    %6868 = vrot.lane.b32.xlu0 %v5293, 48
    %v6869 = vpop.permute.xlu0 %6868
    %6870 = vrot.lane.b32.xlu0 %v5294, 48
    %v6871 = vpop.permute.xlu0 %6870
    %6872 = vrot.lane.b32.xlu0 %v5295, 48
    %v6873 = vpop.permute.xlu0 %6872
    %6874 = vrot.lane.b32.xlu0 %v5296, 48
    %v6875 = vpop.permute.xlu0 %6874
    %6876 = vrot.lane.b32.xlu0 %v5297, 48
    %v6877 = vpop.permute.xlu0 %6876
    %6878 = vrot.lane.b32.xlu0 %v5298, 48
    %v6879 = vpop.permute.xlu0 %6878
    %6880 = vrot.lane.b32.xlu0 %v5299, 48
    %v6881 = vpop.permute.xlu0 %6880
    %6882 = vrot.lane.b32.xlu0 %v5300, 48
    %v6883 = vpop.permute.xlu0 %6882
    %6884 = vrot.lane.b32.xlu0 %v5301, 48
    %v6885 = vpop.permute.xlu0 %6884
    %6886 = vrot.lane.b32.xlu0 %v5302, 48
    %v6887 = vpop.permute.xlu0 %6886
    %6888 = vrot.lane.b32.xlu0 %v5303, 48
    %v6889 = vpop.permute.xlu0 %6888
    %6890 = vrot.lane.b32.xlu0 %v5304, 48
    %v6891 = vpop.permute.xlu0 %6890
    %6892 = vrot.lane.b32.xlu0 %v5305, 48
    %v6893 = vpop.permute.xlu0 %6892
    %6894 = vrot.lane.b32.xlu0 %v5306, 48
    %v6895 = vpop.permute.xlu0 %6894
    %6896 = vrot.lane.b32.xlu0 %v5307, 48
    %v6897 = vpop.permute.xlu0 %6896
    %6898 = vrot.lane.b32.xlu0 %v5308, 48
    %v6899 = vpop.permute.xlu0 %6898
    %6900 = vrot.lane.b32.xlu0 %v5309, 48
    %v6901 = vpop.permute.xlu0 %6900
    %6902 = vrot.lane.b32.xlu0 %v5310, 48
    %v6903 = vpop.permute.xlu0 %6902
    %6904 = vrot.lane.b32.xlu0 %v5311, 48
    %v6905 = vpop.permute.xlu0 %6904
    %6906 = vrot.lane.b32.xlu0 %v5312, 48
    %v6907 = vpop.permute.xlu0 %6906
    %6908 = vrot.lane.b32.xlu0 %v5313, 48
    %v6909 = vpop.permute.xlu0 %6908
    %6910 = vrot.lane.b32.xlu0 %v5314, 48
    %v6911 = vpop.permute.xlu0 %6910
    %6912 = vrot.lane.b32.xlu0 %v5315, 48
    %v6913 = vpop.permute.xlu0 %6912
    %6914 = vrot.lane.b32.xlu0 %v5316, 48
    %v6915 = vpop.permute.xlu0 %6914
    %6916 = vrot.lane.b32.xlu0 %v5317, 48
    %v6917 = vpop.permute.xlu0 %6916
    %7046 = vrot.lane.b32.xlu0 %v5318, 56
    %v7047 = vpop.permute.xlu0 %7046
    %7048 = vrot.lane.b32.xlu0 %v5319, 56
    %v7049 = vpop.permute.xlu0 %7048
    %7050 = vrot.lane.b32.xlu0 %v5320, 56
    %v7051 = vpop.permute.xlu0 %7050
    %7052 = vrot.lane.b32.xlu0 %v5321, 56
    %v7053 = vpop.permute.xlu0 %7052
    %7054 = vrot.lane.b32.xlu0 %v5322, 56
    %v7055 = vpop.permute.xlu0 %7054
    %7056 = vrot.lane.b32.xlu0 %v5323, 56
    %v7057 = vpop.permute.xlu0 %7056
    %7058 = vrot.lane.b32.xlu0 %v5324, 56
    %v7059 = vpop.permute.xlu0 %7058
    %7060 = vrot.lane.b32.xlu0 %v5325, 56
    %v7061 = vpop.permute.xlu0 %7060
    %7062 = vrot.lane.b32.xlu0 %v5326, 56
    %v7063 = vpop.permute.xlu0 %7062
    %7064 = vrot.lane.b32.xlu0 %v5327, 56
    %v7065 = vpop.permute.xlu0 %7064
    %7066 = vrot.lane.b32.xlu0 %v5328, 56
    %v7067 = vpop.permute.xlu0 %7066
    %7068 = vrot.lane.b32.xlu0 %v5329, 56
    %v7069 = vpop.permute.xlu0 %7068
    %7070 = vrot.lane.b32.xlu0 %v5330, 56
    %v7071 = vpop.permute.xlu0 %7070
    %7072 = vrot.lane.b32.xlu0 %v5331, 56
    %v7073 = vpop.permute.xlu0 %7072
    %7074 = vrot.lane.b32.xlu0 %v5332, 56
    %v7075 = vpop.permute.xlu0 %7074
    %7076 = vrot.lane.b32.xlu0 %v5333, 56
    %v7077 = vpop.permute.xlu0 %7076
    %7078 = vrot.lane.b32.xlu0 %v5334, 56
    %v7079 = vpop.permute.xlu0 %7078
    %7080 = vrot.lane.b32.xlu0 %v5335, 56
    %v7081 = vpop.permute.xlu0 %7080
    %7082 = vrot.lane.b32.xlu0 %v5336, 56
    %v7083 = vpop.permute.xlu0 %7082
    %7084 = vrot.lane.b32.xlu0 %v5337, 56
    %v7085 = vpop.permute.xlu0 %7084
    %7086 = vrot.lane.b32.xlu0 %v5338, 56
    %v7087 = vpop.permute.xlu0 %7086
    %7088 = vrot.lane.b32.xlu0 %v5339, 56
    %v7089 = vpop.permute.xlu0 %7088
    %7090 = vrot.lane.b32.xlu0 %v5340, 56
    %v7091 = vpop.permute.xlu0 %7090
    %7092 = vrot.lane.b32.xlu0 %v5341, 56
    %v7093 = vpop.permute.xlu0 %7092
    %7094 = vrot.lane.b32.xlu0 %v5342, 56
    %v7095 = vpop.permute.xlu0 %7094
    %7096 = vrot.lane.b32.xlu0 %v5343, 56
    %v7097 = vpop.permute.xlu0 %7096
    %7098 = vrot.lane.b32.xlu0 %v5344, 56
    %v7099 = vpop.permute.xlu0 %7098
    %7100 = vrot.lane.b32.xlu0 %v5345, 56
    %v7101 = vpop.permute.xlu0 %7100
    %7102 = vrot.lane.b32.xlu0 %v5346, 56
    %v7103 = vpop.permute.xlu0 %7102
    %7104 = vrot.lane.b32.xlu0 %v5347, 56
    %v7105 = vpop.permute.xlu0 %7104
    %7106 = vrot.lane.b32.xlu0 %v5348, 56
    %v7107 = vpop.permute.xlu0 %7106
    %7108 = vrot.lane.b32.xlu0 %v5349, 56
    %v7109 = vpop.permute.xlu0 %7108
    %7110 = vrot.lane.b32.xlu0 %v5350, 56
    %v7111 = vpop.permute.xlu0 %7110
    %7112 = vrot.lane.b32.xlu0 %v5351, 56
    %v7113 = vpop.permute.xlu0 %7112
    %7114 = vrot.lane.b32.xlu0 %v5352, 56
    %v7115 = vpop.permute.xlu0 %7114
    %7116 = vrot.lane.b32.xlu0 %v5353, 56
    %v7117 = vpop.permute.xlu0 %7116
    %7118 = vrot.lane.b32.xlu0 %v5354, 56
    %v7119 = vpop.permute.xlu0 %7118
    %7120 = vrot.lane.b32.xlu0 %v5355, 56
    %v7121 = vpop.permute.xlu0 %7120
    %7122 = vrot.lane.b32.xlu0 %v5356, 56
    %v7123 = vpop.permute.xlu0 %7122
    %7124 = vrot.lane.b32.xlu0 %v5357, 56
    %v7125 = vpop.permute.xlu0 %7124
    %7126 = vrot.lane.b32.xlu0 %v5358, 56
    %v7127 = vpop.permute.xlu0 %7126
    %7128 = vrot.lane.b32.xlu0 %v5359, 56
    %v7129 = vpop.permute.xlu0 %7128
    %7130 = vrot.lane.b32.xlu0 %v5360, 56
    %v7131 = vpop.permute.xlu0 %7130
    %7132 = vrot.lane.b32.xlu0 %v5361, 56
    %v7133 = vpop.permute.xlu0 %7132
    %7134 = vrot.lane.b32.xlu0 %v5362, 56
    %v7135 = vpop.permute.xlu0 %7134
    %7136 = vrot.lane.b32.xlu0 %v5363, 56
    %v7137 = vpop.permute.xlu0 %7136
    %7138 = vrot.lane.b32.xlu0 %v5364, 56
    %v7139 = vpop.permute.xlu0 %7138
    %7140 = vrot.lane.b32.xlu0 %v5365, 56
    %v7141 = vpop.permute.xlu0 %7140
    %7142 = vrot.lane.b32.xlu0 %v5366, 56
    %v7143 = vpop.permute.xlu0 %7142
    %7144 = vrot.lane.b32.xlu0 %v5367, 56
    %v7145 = vpop.permute.xlu0 %7144
    %7146 = vrot.lane.b32.xlu0 %v5368, 56
    %v7147 = vpop.permute.xlu0 %7146
    %7148 = vrot.lane.b32.xlu0 %v5369, 56
    %v7149 = vpop.permute.xlu0 %7148
    %7150 = vrot.lane.b32.xlu0 %v5370, 56
    %v7151 = vpop.permute.xlu0 %7150
    %7152 = vrot.lane.b32.xlu0 %v5371, 56
    %v7153 = vpop.permute.xlu0 %7152
    %7154 = vrot.lane.b32.xlu0 %v5372, 56
    %v7155 = vpop.permute.xlu0 %7154
    %7156 = vrot.lane.b32.xlu0 %v5373, 56
    %v7157 = vpop.permute.xlu0 %7156
    %7158 = vrot.lane.b32.xlu0 %v5374, 56
    %v7159 = vpop.permute.xlu0 %7158
    %7160 = vrot.lane.b32.xlu0 %v5375, 56
    %v7161 = vpop.permute.xlu0 %7160
    %7162 = vrot.lane.b32.xlu0 %v5376, 56
    %v7163 = vpop.permute.xlu0 %7162
    %7164 = vrot.lane.b32.xlu0 %v5377, 56
    %v7165 = vpop.permute.xlu0 %7164
    %7166 = vrot.lane.b32.xlu0 %v5378, 56
    %v7167 = vpop.permute.xlu0 %7166
    %7168 = vrot.lane.b32.xlu0 %v5379, 56
    %v7169 = vpop.permute.xlu0 %7168
    %7170 = vrot.lane.b32.xlu0 %v5380, 56
    %v7171 = vpop.permute.xlu0 %7170
    %7172 = vrot.lane.b32.xlu0 %v5381, 56
    %v7173 = vpop.permute.xlu0 %7172
    %7302 = vrot.lane.b32.xlu0 %v5382, 64
    %v7303 = vpop.permute.xlu0 %7302
    %7304 = vrot.lane.b32.xlu0 %v5383, 64
    %v7305 = vpop.permute.xlu0 %7304
    %7306 = vrot.lane.b32.xlu0 %v5384, 64
    %v7307 = vpop.permute.xlu0 %7306
    %7308 = vrot.lane.b32.xlu0 %v5385, 64
    %v7309 = vpop.permute.xlu0 %7308
    %7310 = vrot.lane.b32.xlu0 %v5386, 64
    %v7311 = vpop.permute.xlu0 %7310
    %7312 = vrot.lane.b32.xlu0 %v5387, 64
    %v7313 = vpop.permute.xlu0 %7312
    %7314 = vrot.lane.b32.xlu0 %v5388, 64
    %v7315 = vpop.permute.xlu0 %7314
    %7316 = vrot.lane.b32.xlu0 %v5389, 64
    %v7317 = vpop.permute.xlu0 %7316
    %7318 = vrot.lane.b32.xlu0 %v5390, 64
    %v7319 = vpop.permute.xlu0 %7318
    %7320 = vrot.lane.b32.xlu0 %v5391, 64
    %v7321 = vpop.permute.xlu0 %7320
    %7322 = vrot.lane.b32.xlu0 %v5392, 64
    %v7323 = vpop.permute.xlu0 %7322
    %7324 = vrot.lane.b32.xlu0 %v5393, 64
    %v7325 = vpop.permute.xlu0 %7324
    %7326 = vrot.lane.b32.xlu0 %v5394, 64
    %v7327 = vpop.permute.xlu0 %7326
    %7328 = vrot.lane.b32.xlu0 %v5395, 64
    %v7329 = vpop.permute.xlu0 %7328
    %7330 = vrot.lane.b32.xlu0 %v5396, 64
    %v7331 = vpop.permute.xlu0 %7330
    %7332 = vrot.lane.b32.xlu0 %v5397, 64
    %v7333 = vpop.permute.xlu0 %7332
    %7334 = vrot.lane.b32.xlu0 %v5398, 64
    %v7335 = vpop.permute.xlu0 %7334
    %7336 = vrot.lane.b32.xlu0 %v5399, 64
    %v7337 = vpop.permute.xlu0 %7336
    %7338 = vrot.lane.b32.xlu0 %v5400, 64
    %v7339 = vpop.permute.xlu0 %7338
    %7340 = vrot.lane.b32.xlu0 %v5401, 64
    %v7341 = vpop.permute.xlu0 %7340
    %7342 = vrot.lane.b32.xlu0 %v5402, 64
    %v7343 = vpop.permute.xlu0 %7342
    %7344 = vrot.lane.b32.xlu0 %v5403, 64
    %v7345 = vpop.permute.xlu0 %7344
    %7346 = vrot.lane.b32.xlu0 %v5404, 64
    %v7347 = vpop.permute.xlu0 %7346
    %7348 = vrot.lane.b32.xlu0 %v5405, 64
    %v7349 = vpop.permute.xlu0 %7348
    %7350 = vrot.lane.b32.xlu0 %v5406, 64
    %v7351 = vpop.permute.xlu0 %7350
    %7352 = vrot.lane.b32.xlu0 %v5407, 64
    %v7353 = vpop.permute.xlu0 %7352
    %7354 = vrot.lane.b32.xlu0 %v5408, 64
    %v7355 = vpop.permute.xlu0 %7354
    %7356 = vrot.lane.b32.xlu0 %v5409, 64
    %v7357 = vpop.permute.xlu0 %7356
    %7358 = vrot.lane.b32.xlu0 %v5410, 64
    %v7359 = vpop.permute.xlu0 %7358
    %7360 = vrot.lane.b32.xlu0 %v5411, 64
    %v7361 = vpop.permute.xlu0 %7360
    %7362 = vrot.lane.b32.xlu0 %v5412, 64
    %v7363 = vpop.permute.xlu0 %7362
    %7364 = vrot.lane.b32.xlu0 %v5413, 64
    %v7365 = vpop.permute.xlu0 %7364
    %7366 = vrot.lane.b32.xlu0 %v5414, 64
    %v7367 = vpop.permute.xlu0 %7366
    %7368 = vrot.lane.b32.xlu0 %v5415, 64
    %v7369 = vpop.permute.xlu0 %7368
    %7370 = vrot.lane.b32.xlu0 %v5416, 64
    %v7371 = vpop.permute.xlu0 %7370
    %7372 = vrot.lane.b32.xlu0 %v5417, 64
    %v7373 = vpop.permute.xlu0 %7372
    %7374 = vrot.lane.b32.xlu0 %v5418, 64
    %v7375 = vpop.permute.xlu0 %7374
    %7376 = vrot.lane.b32.xlu0 %v5419, 64
    %v7377 = vpop.permute.xlu0 %7376
    %7378 = vrot.lane.b32.xlu0 %v5420, 64
    %v7379 = vpop.permute.xlu0 %7378
    %7380 = vrot.lane.b32.xlu0 %v5421, 64
    %v7381 = vpop.permute.xlu0 %7380
    %7382 = vrot.lane.b32.xlu0 %v5422, 64
    %v7383 = vpop.permute.xlu0 %7382
    %7384 = vrot.lane.b32.xlu0 %v5423, 64
    %v7385 = vpop.permute.xlu0 %7384
    %7386 = vrot.lane.b32.xlu0 %v5424, 64
    %v7387 = vpop.permute.xlu0 %7386
    %7388 = vrot.lane.b32.xlu0 %v5425, 64
    %v7389 = vpop.permute.xlu0 %7388
    %7390 = vrot.lane.b32.xlu0 %v5426, 64
    %v7391 = vpop.permute.xlu0 %7390
    %7392 = vrot.lane.b32.xlu0 %v5427, 64
    %v7393 = vpop.permute.xlu0 %7392
    %7394 = vrot.lane.b32.xlu0 %v5428, 64
    %v7395 = vpop.permute.xlu0 %7394
    %7396 = vrot.lane.b32.xlu0 %v5429, 64
    %v7397 = vpop.permute.xlu0 %7396
    %7398 = vrot.lane.b32.xlu0 %v5430, 64
    %v7399 = vpop.permute.xlu0 %7398
    %7400 = vrot.lane.b32.xlu0 %v5431, 64
    %v7401 = vpop.permute.xlu0 %7400
    %7402 = vrot.lane.b32.xlu0 %v5432, 64
    %v7403 = vpop.permute.xlu0 %7402
    %7404 = vrot.lane.b32.xlu0 %v5433, 64
    %v7405 = vpop.permute.xlu0 %7404
    %7406 = vrot.lane.b32.xlu0 %v5434, 64
    %v7407 = vpop.permute.xlu0 %7406
    %7408 = vrot.lane.b32.xlu0 %v5435, 64
    %v7409 = vpop.permute.xlu0 %7408
    %7410 = vrot.lane.b32.xlu0 %v5436, 64
    %v7411 = vpop.permute.xlu0 %7410
    %7412 = vrot.lane.b32.xlu0 %v5437, 64
    %v7413 = vpop.permute.xlu0 %7412
    %7414 = vrot.lane.b32.xlu0 %v5438, 64
    %v7415 = vpop.permute.xlu0 %7414
    %7416 = vrot.lane.b32.xlu0 %v5439, 64
    %v7417 = vpop.permute.xlu0 %7416
    %7418 = vrot.lane.b32.xlu0 %v5440, 64
    %v7419 = vpop.permute.xlu0 %7418
    %7420 = vrot.lane.b32.xlu0 %v5441, 64
    %v7421 = vpop.permute.xlu0 %7420
    %7422 = vrot.lane.b32.xlu0 %v5442, 64
    %v7423 = vpop.permute.xlu0 %7422
    %7424 = vrot.lane.b32.xlu0 %v5443, 64
    %v7425 = vpop.permute.xlu0 %7424
    %7426 = vrot.lane.b32.xlu0 %v5444, 64
    %v7427 = vpop.permute.xlu0 %7426
    %7428 = vrot.lane.b32.xlu0 %v5445, 64
    %v7429 = vpop.permute.xlu0 %7428
    %v7494 = vsel %vm91, %v4870, %v5511
    %v7495 = vsel %vm91, %v4871, %v5513
    %v7496 = vsel %vm91, %v4872, %v5515
    %v7497 = vsel %vm91, %v4873, %v5517
    %v7498 = vsel %vm91, %v4874, %v5519
    %v7499 = vsel %vm91, %v4875, %v5521
    %v7500 = vsel %vm91, %v4876, %v5523
    %v7501 = vsel %vm91, %v4877, %v5525
    %v7502 = vsel %vm91, %v4878, %v5527
    %v7503 = vsel %vm91, %v4879, %v5529
    %v7504 = vsel %vm91, %v4880, %v5531
    %v7505 = vsel %vm91, %v4881, %v5533
    %v7506 = vsel %vm91, %v4882, %v5535
    %v7507 = vsel %vm91, %v4883, %v5537
    %v7508 = vsel %vm91, %v4884, %v5539
    %v7509 = vsel %vm91, %v4885, %v5541
    %v7510 = vsel %vm91, %v4886, %v5543
    %v7511 = vsel %vm91, %v4887, %v5545
    %v7512 = vsel %vm91, %v4888, %v5547
    %v7513 = vsel %vm91, %v4889, %v5549
    %v7514 = vsel %vm91, %v4890, %v5551
    %v7515 = vsel %vm91, %v4891, %v5553
    %v7516 = vsel %vm91, %v4892, %v5555
    %v7517 = vsel %vm91, %v4893, %v5557
    %v7518 = vsel %vm91, %v4894, %v5559
    %v7519 = vsel %vm91, %v4895, %v5561
    %v7520 = vsel %vm91, %v4896, %v5563
    %v7521 = vsel %vm91, %v4897, %v5565
    %v7522 = vsel %vm91, %v4898, %v5567
    %v7523 = vsel %vm91, %v4899, %v5569
    %v7524 = vsel %vm91, %v4900, %v5571
    %v7525 = vsel %vm91, %v4901, %v5573
    %v7526 = vsel %vm91, %v4902, %v5575
    %v7527 = vsel %vm91, %v4903, %v5577
    %v7528 = vsel %vm91, %v4904, %v5579
    %v7529 = vsel %vm91, %v4905, %v5581
    %v7530 = vsel %vm91, %v4906, %v5583
    %v7531 = vsel %vm91, %v4907, %v5585
    %v7532 = vsel %vm91, %v4908, %v5587
    %v7533 = vsel %vm91, %v4909, %v5589
    %v7534 = vsel %vm91, %v4910, %v5591
    %v7535 = vsel %vm91, %v4911, %v5593
    %v7536 = vsel %vm91, %v4912, %v5595
    %v7537 = vsel %vm91, %v4913, %v5597
    %v7538 = vsel %vm91, %v4914, %v5599
    %v7539 = vsel %vm91, %v4915, %v5601
    %v7540 = vsel %vm91, %v4916, %v5603
    %v7541 = vsel %vm91, %v4917, %v5605
    %v7542 = vsel %vm91, %v4918, %v5607
    %v7543 = vsel %vm91, %v4919, %v5609
    %v7544 = vsel %vm91, %v4920, %v5611
    %v7545 = vsel %vm91, %v4921, %v5613
    %v7546 = vsel %vm91, %v4922, %v5615
    %v7547 = vsel %vm91, %v4923, %v5617
    %v7548 = vsel %vm91, %v4924, %v5619
    %v7549 = vsel %vm91, %v4925, %v5621
    %v7550 = vsel %vm91, %v4926, %v5623
    %v7551 = vsel %vm91, %v4927, %v5625
    %v7552 = vsel %vm91, %v4928, %v5627
    %v7553 = vsel %vm91, %v4929, %v5629
    %v7554 = vsel %vm91, %v4930, %v5631
    %v7555 = vsel %vm91, %v4931, %v5633
    %v7556 = vsel %vm91, %v4932, %v5635
    %v7557 = vsel %vm91, %v4933, %v5637
    %v7558 = vsel %vm2966, %v7494, %v5767
    %v7559 = vsel %vm2966, %v7495, %v5769
    %v7560 = vsel %vm2966, %v7496, %v5771
    %v7561 = vsel %vm2966, %v7497, %v5773
    %v7562 = vsel %vm2966, %v7498, %v5775
    %v7563 = vsel %vm2966, %v7499, %v5777
    %v7564 = vsel %vm2966, %v7500, %v5779
    %v7565 = vsel %vm2966, %v7501, %v5781
    %v7566 = vsel %vm2966, %v7502, %v5783
    %v7567 = vsel %vm2966, %v7503, %v5785
    %v7568 = vsel %vm2966, %v7504, %v5787
    %v7569 = vsel %vm2966, %v7505, %v5789
    %v7570 = vsel %vm2966, %v7506, %v5791
    %v7571 = vsel %vm2966, %v7507, %v5793
    %v7572 = vsel %vm2966, %v7508, %v5795
    %v7573 = vsel %vm2966, %v7509, %v5797
    %v7574 = vsel %vm2966, %v7510, %v5799
    %v7575 = vsel %vm2966, %v7511, %v5801
    %v7576 = vsel %vm2966, %v7512, %v5803
    %v7577 = vsel %vm2966, %v7513, %v5805
    %v7578 = vsel %vm2966, %v7514, %v5807
    %v7579 = vsel %vm2966, %v7515, %v5809
    %v7580 = vsel %vm2966, %v7516, %v5811
    %v7581 = vsel %vm2966, %v7517, %v5813
    %v7582 = vsel %vm2966, %v7518, %v5815
    %v7583 = vsel %vm2966, %v7519, %v5817
    %v7584 = vsel %vm2966, %v7520, %v5819
    %v7585 = vsel %vm2966, %v7521, %v5821
    %v7586 = vsel %vm2966, %v7522, %v5823
    %v7587 = vsel %vm2966, %v7523, %v5825
    %v7588 = vsel %vm2966, %v7524, %v5827
    %v7589 = vsel %vm2966, %v7525, %v5829
    %v7590 = vsel %vm2966, %v7526, %v5831
    %v7591 = vsel %vm2966, %v7527, %v5833
    %v7592 = vsel %vm2966, %v7528, %v5835
    %v7593 = vsel %vm2966, %v7529, %v5837
    %v7594 = vsel %vm2966, %v7530, %v5839
    %v7595 = vsel %vm2966, %v7531, %v5841
    %v7596 = vsel %vm2966, %v7532, %v5843
    %v7597 = vsel %vm2966, %v7533, %v5845
    %v7598 = vsel %vm2966, %v7534, %v5847
    %v7599 = vsel %vm2966, %v7535, %v5849
    %v7600 = vsel %vm2966, %v7536, %v5851
    %v7601 = vsel %vm2966, %v7537, %v5853
    %v7602 = vsel %vm2966, %v7538, %v5855
    %v7603 = vsel %vm2966, %v7539, %v5857
    %v7604 = vsel %vm2966, %v7540, %v5859
    %v7605 = vsel %vm2966, %v7541, %v5861
    %v7606 = vsel %vm2966, %v7542, %v5863
    %v7607 = vsel %vm2966, %v7543, %v5865
    %v7608 = vsel %vm2966, %v7544, %v5867
    %v7609 = vsel %vm2966, %v7545, %v5869
    %v7610 = vsel %vm2966, %v7546, %v5871
    %v7611 = vsel %vm2966, %v7547, %v5873
    %v7612 = vsel %vm2966, %v7548, %v5875
    %v7613 = vsel %vm2966, %v7549, %v5877
    %v7614 = vsel %vm2966, %v7550, %v5879
    %v7615 = vsel %vm2966, %v7551, %v5881
    %v7616 = vsel %vm2966, %v7552, %v5883
    %v7617 = vsel %vm2966, %v7553, %v5885
    %v7618 = vsel %vm2966, %v7554, %v5887
    %v7619 = vsel %vm2966, %v7555, %v5889
    %v7620 = vsel %vm2966, %v7556, %v5891
    %v7621 = vsel %vm2966, %v7557, %v5893
    %v7622 = vsel %vm3031, %v7558, %v6023
    %v7623 = vsel %vm3031, %v7559, %v6025
    %v7624 = vsel %vm3031, %v7560, %v6027
    %v7625 = vsel %vm3031, %v7561, %v6029
    %v7626 = vsel %vm3031, %v7562, %v6031
    %v7627 = vsel %vm3031, %v7563, %v6033
    %v7628 = vsel %vm3031, %v7564, %v6035
    %v7629 = vsel %vm3031, %v7565, %v6037
    %v7630 = vsel %vm3031, %v7566, %v6039
    %v7631 = vsel %vm3031, %v7567, %v6041
    %v7632 = vsel %vm3031, %v7568, %v6043
    %v7633 = vsel %vm3031, %v7569, %v6045
    %v7634 = vsel %vm3031, %v7570, %v6047
    %v7635 = vsel %vm3031, %v7571, %v6049
    %v7636 = vsel %vm3031, %v7572, %v6051
    %v7637 = vsel %vm3031, %v7573, %v6053
    %v7638 = vsel %vm3031, %v7574, %v6055
    %v7639 = vsel %vm3031, %v7575, %v6057
    %v7640 = vsel %vm3031, %v7576, %v6059
    %v7641 = vsel %vm3031, %v7577, %v6061
    %v7642 = vsel %vm3031, %v7578, %v6063
    %v7643 = vsel %vm3031, %v7579, %v6065
    %v7644 = vsel %vm3031, %v7580, %v6067
    %v7645 = vsel %vm3031, %v7581, %v6069
    %v7646 = vsel %vm3031, %v7582, %v6071
    %v7647 = vsel %vm3031, %v7583, %v6073
    %v7648 = vsel %vm3031, %v7584, %v6075
    %v7649 = vsel %vm3031, %v7585, %v6077
    %v7650 = vsel %vm3031, %v7586, %v6079
    %v7651 = vsel %vm3031, %v7587, %v6081
    %v7652 = vsel %vm3031, %v7588, %v6083
    %v7653 = vsel %vm3031, %v7589, %v6085
    %v7654 = vsel %vm3031, %v7590, %v6087
    %v7655 = vsel %vm3031, %v7591, %v6089
    %v7656 = vsel %vm3031, %v7592, %v6091
    %v7657 = vsel %vm3031, %v7593, %v6093
    %v7658 = vsel %vm3031, %v7594, %v6095
    %v7659 = vsel %vm3031, %v7595, %v6097
    %v7660 = vsel %vm3031, %v7596, %v6099
    %v7661 = vsel %vm3031, %v7597, %v6101
    %v7662 = vsel %vm3031, %v7598, %v6103
    %v7663 = vsel %vm3031, %v7599, %v6105
    %v7664 = vsel %vm3031, %v7600, %v6107
    %v7665 = vsel %vm3031, %v7601, %v6109
    %v7666 = vsel %vm3031, %v7602, %v6111
    %v7667 = vsel %vm3031, %v7603, %v6113
    %v7668 = vsel %vm3031, %v7604, %v6115
    %v7669 = vsel %vm3031, %v7605, %v6117
    %v7670 = vsel %vm3031, %v7606, %v6119
    %v7671 = vsel %vm3031, %v7607, %v6121
    %v7672 = vsel %vm3031, %v7608, %v6123
    %v7673 = vsel %vm3031, %v7609, %v6125
    %v7674 = vsel %vm3031, %v7610, %v6127
    %v7675 = vsel %vm3031, %v7611, %v6129
    %v7676 = vsel %vm3031, %v7612, %v6131
    %v7677 = vsel %vm3031, %v7613, %v6133
    %v7678 = vsel %vm3031, %v7614, %v6135
    %v7679 = vsel %vm3031, %v7615, %v6137
    %v7680 = vsel %vm3031, %v7616, %v6139
    %v7681 = vsel %vm3031, %v7617, %v6141
    %v7682 = vsel %vm3031, %v7618, %v6143
    %v7683 = vsel %vm3031, %v7619, %v6145
    %v7684 = vsel %vm3031, %v7620, %v6147
    %v7685 = vsel %vm3031, %v7621, %v6149
    %v7686 = vsel %vm3096, %v7622, %v6279
    %v7687 = vsel %vm3096, %v7623, %v6281
    %v7688 = vsel %vm3096, %v7624, %v6283
    %v7689 = vsel %vm3096, %v7625, %v6285
    %v7690 = vsel %vm3096, %v7626, %v6287
    %v7691 = vsel %vm3096, %v7627, %v6289
    %v7692 = vsel %vm3096, %v7628, %v6291
    %v7693 = vsel %vm3096, %v7629, %v6293
    %v7694 = vsel %vm3096, %v7630, %v6295
    %v7695 = vsel %vm3096, %v7631, %v6297
    %v7696 = vsel %vm3096, %v7632, %v6299
    %v7697 = vsel %vm3096, %v7633, %v6301
    %v7698 = vsel %vm3096, %v7634, %v6303
    %v7699 = vsel %vm3096, %v7635, %v6305
    %v7700 = vsel %vm3096, %v7636, %v6307
    %v7701 = vsel %vm3096, %v7637, %v6309
    %v7702 = vsel %vm3096, %v7638, %v6311
    %v7703 = vsel %vm3096, %v7639, %v6313
    %v7704 = vsel %vm3096, %v7640, %v6315
    %v7705 = vsel %vm3096, %v7641, %v6317
    %v7706 = vsel %vm3096, %v7642, %v6319
    %v7707 = vsel %vm3096, %v7643, %v6321
    %v7708 = vsel %vm3096, %v7644, %v6323
    %v7709 = vsel %vm3096, %v7645, %v6325
    %v7710 = vsel %vm3096, %v7646, %v6327
    %v7711 = vsel %vm3096, %v7647, %v6329
    %v7712 = vsel %vm3096, %v7648, %v6331
    %v7713 = vsel %vm3096, %v7649, %v6333
    %v7714 = vsel %vm3096, %v7650, %v6335
    %v7715 = vsel %vm3096, %v7651, %v6337
    %v7716 = vsel %vm3096, %v7652, %v6339
    %v7717 = vsel %vm3096, %v7653, %v6341
    %v7718 = vsel %vm3096, %v7654, %v6343
    %v7719 = vsel %vm3096, %v7655, %v6345
    %v7720 = vsel %vm3096, %v7656, %v6347
    %v7721 = vsel %vm3096, %v7657, %v6349
    %v7722 = vsel %vm3096, %v7658, %v6351
    %v7723 = vsel %vm3096, %v7659, %v6353
    %v7724 = vsel %vm3096, %v7660, %v6355
    %v7725 = vsel %vm3096, %v7661, %v6357
    %v7726 = vsel %vm3096, %v7662, %v6359
    %v7727 = vsel %vm3096, %v7663, %v6361
    %v7728 = vsel %vm3096, %v7664, %v6363
    %v7729 = vsel %vm3096, %v7665, %v6365
    %v7730 = vsel %vm3096, %v7666, %v6367
    %v7731 = vsel %vm3096, %v7667, %v6369
    %v7732 = vsel %vm3096, %v7668, %v6371
    %v7733 = vsel %vm3096, %v7669, %v6373
    %v7734 = vsel %vm3096, %v7670, %v6375
    %v7735 = vsel %vm3096, %v7671, %v6377
    %v7736 = vsel %vm3096, %v7672, %v6379
    %v7737 = vsel %vm3096, %v7673, %v6381
    %v7738 = vsel %vm3096, %v7674, %v6383
    %v7739 = vsel %vm3096, %v7675, %v6385
    %v7740 = vsel %vm3096, %v7676, %v6387
    %v7741 = vsel %vm3096, %v7677, %v6389
    %v7742 = vsel %vm3096, %v7678, %v6391
    %v7743 = vsel %vm3096, %v7679, %v6393
    %v7744 = vsel %vm3096, %v7680, %v6395
    %v7745 = vsel %vm3096, %v7681, %v6397
    %v7746 = vsel %vm3096, %v7682, %v6399
    %v7747 = vsel %vm3096, %v7683, %v6401
    %v7748 = vsel %vm3096, %v7684, %v6403
    %v7749 = vsel %vm3096, %v7685, %v6405
    %v7750 = vsel %vm3161, %v7686, %v6535
    %v7751 = vsel %vm3161, %v7687, %v6537
    %v7752 = vsel %vm3161, %v7688, %v6539
    %v7753 = vsel %vm3161, %v7689, %v6541
    %v7754 = vsel %vm3161, %v7690, %v6543
    %v7755 = vsel %vm3161, %v7691, %v6545
    %v7756 = vsel %vm3161, %v7692, %v6547
    %v7757 = vsel %vm3161, %v7693, %v6549
    %v7758 = vsel %vm3161, %v7694, %v6551
    %v7759 = vsel %vm3161, %v7695, %v6553
    %v7760 = vsel %vm3161, %v7696, %v6555
    %v7761 = vsel %vm3161, %v7697, %v6557
    %v7762 = vsel %vm3161, %v7698, %v6559
    %v7763 = vsel %vm3161, %v7699, %v6561
    %v7764 = vsel %vm3161, %v7700, %v6563
    %v7765 = vsel %vm3161, %v7701, %v6565
    %v7766 = vsel %vm3161, %v7702, %v6567
    %v7767 = vsel %vm3161, %v7703, %v6569
    %v7768 = vsel %vm3161, %v7704, %v6571
    %v7769 = vsel %vm3161, %v7705, %v6573
    %v7770 = vsel %vm3161, %v7706, %v6575
    %v7771 = vsel %vm3161, %v7707, %v6577
    %v7772 = vsel %vm3161, %v7708, %v6579
    %v7773 = vsel %vm3161, %v7709, %v6581
    %v7774 = vsel %vm3161, %v7710, %v6583
    %v7775 = vsel %vm3161, %v7711, %v6585
    %v7776 = vsel %vm3161, %v7712, %v6587
    %v7777 = vsel %vm3161, %v7713, %v6589
    %v7778 = vsel %vm3161, %v7714, %v6591
    %v7779 = vsel %vm3161, %v7715, %v6593
    %v7780 = vsel %vm3161, %v7716, %v6595
    %v7781 = vsel %vm3161, %v7717, %v6597
    %v7782 = vsel %vm3161, %v7718, %v6599
    %v7783 = vsel %vm3161, %v7719, %v6601
    %v7784 = vsel %vm3161, %v7720, %v6603
    %v7785 = vsel %vm3161, %v7721, %v6605
    %v7786 = vsel %vm3161, %v7722, %v6607
    %v7787 = vsel %vm3161, %v7723, %v6609
    %v7788 = vsel %vm3161, %v7724, %v6611
    %v7789 = vsel %vm3161, %v7725, %v6613
    %v7790 = vsel %vm3161, %v7726, %v6615
    %v7791 = vsel %vm3161, %v7727, %v6617
    %v7792 = vsel %vm3161, %v7728, %v6619
    %v7793 = vsel %vm3161, %v7729, %v6621
    %v7794 = vsel %vm3161, %v7730, %v6623
    %v7795 = vsel %vm3161, %v7731, %v6625
    %v7796 = vsel %vm3161, %v7732, %v6627
    %v7797 = vsel %vm3161, %v7733, %v6629
    %v7798 = vsel %vm3161, %v7734, %v6631
    %v7799 = vsel %vm3161, %v7735, %v6633
    %v7800 = vsel %vm3161, %v7736, %v6635
    %v7801 = vsel %vm3161, %v7737, %v6637
    %v7802 = vsel %vm3161, %v7738, %v6639
    %v7803 = vsel %vm3161, %v7739, %v6641
    %v7804 = vsel %vm3161, %v7740, %v6643
    %v7805 = vsel %vm3161, %v7741, %v6645
    %v7806 = vsel %vm3161, %v7742, %v6647
    %v7807 = vsel %vm3161, %v7743, %v6649
    %v7808 = vsel %vm3161, %v7744, %v6651
    %v7809 = vsel %vm3161, %v7745, %v6653
    %v7810 = vsel %vm3161, %v7746, %v6655
    %v7811 = vsel %vm3161, %v7747, %v6657
    %v7812 = vsel %vm3161, %v7748, %v6659
    %v7813 = vsel %vm3161, %v7749, %v6661
    %v7814 = vsel %vm3226, %v7750, %v6791
    %v7815 = vsel %vm3226, %v7751, %v6793
    %v7816 = vsel %vm3226, %v7752, %v6795
    %v7817 = vsel %vm3226, %v7753, %v6797
    %v7818 = vsel %vm3226, %v7754, %v6799
    %v7819 = vsel %vm3226, %v7755, %v6801
    %v7820 = vsel %vm3226, %v7756, %v6803
    %v7821 = vsel %vm3226, %v7757, %v6805
    %v7822 = vsel %vm3226, %v7758, %v6807
    %v7823 = vsel %vm3226, %v7759, %v6809
    %v7824 = vsel %vm3226, %v7760, %v6811
    %v7825 = vsel %vm3226, %v7761, %v6813
    %v7826 = vsel %vm3226, %v7762, %v6815
    %v7827 = vsel %vm3226, %v7763, %v6817
    %v7828 = vsel %vm3226, %v7764, %v6819
    %v7829 = vsel %vm3226, %v7765, %v6821
    %v7830 = vsel %vm3226, %v7766, %v6823
    %v7831 = vsel %vm3226, %v7767, %v6825
    %v7832 = vsel %vm3226, %v7768, %v6827
    %v7833 = vsel %vm3226, %v7769, %v6829
    %v7834 = vsel %vm3226, %v7770, %v6831
    %v7835 = vsel %vm3226, %v7771, %v6833
    %v7836 = vsel %vm3226, %v7772, %v6835
    %v7837 = vsel %vm3226, %v7773, %v6837
    %v7838 = vsel %vm3226, %v7774, %v6839
    %v7839 = vsel %vm3226, %v7775, %v6841
    %v7840 = vsel %vm3226, %v7776, %v6843
    %v7841 = vsel %vm3226, %v7777, %v6845
    %v7842 = vsel %vm3226, %v7778, %v6847
    %v7843 = vsel %vm3226, %v7779, %v6849
    %v7844 = vsel %vm3226, %v7780, %v6851
    %v7845 = vsel %vm3226, %v7781, %v6853
    %v7846 = vsel %vm3226, %v7782, %v6855
    %v7847 = vsel %vm3226, %v7783, %v6857
    %v7848 = vsel %vm3226, %v7784, %v6859
    %v7849 = vsel %vm3226, %v7785, %v6861
    %v7850 = vsel %vm3226, %v7786, %v6863
    %v7851 = vsel %vm3226, %v7787, %v6865
    %v7852 = vsel %vm3226, %v7788, %v6867
    %v7853 = vsel %vm3226, %v7789, %v6869
    %v7854 = vsel %vm3226, %v7790, %v6871
    %v7855 = vsel %vm3226, %v7791, %v6873
    %v7856 = vsel %vm3226, %v7792, %v6875
    %v7857 = vsel %vm3226, %v7793, %v6877
    %v7858 = vsel %vm3226, %v7794, %v6879
    %v7859 = vsel %vm3226, %v7795, %v6881
    %v7860 = vsel %vm3226, %v7796, %v6883
    %v7861 = vsel %vm3226, %v7797, %v6885
    %v7862 = vsel %vm3226, %v7798, %v6887
    %v7863 = vsel %vm3226, %v7799, %v6889
    %v7864 = vsel %vm3226, %v7800, %v6891
    %v7865 = vsel %vm3226, %v7801, %v6893
    %v7866 = vsel %vm3226, %v7802, %v6895
    %v7867 = vsel %vm3226, %v7803, %v6897
    %v7868 = vsel %vm3226, %v7804, %v6899
    %v7869 = vsel %vm3226, %v7805, %v6901
    %v7870 = vsel %vm3226, %v7806, %v6903
    %v7871 = vsel %vm3226, %v7807, %v6905
    %v7872 = vsel %vm3226, %v7808, %v6907
    %v7873 = vsel %vm3226, %v7809, %v6909
    %v7874 = vsel %vm3226, %v7810, %v6911
    %v7875 = vsel %vm3226, %v7811, %v6913
    %v7876 = vsel %vm3226, %v7812, %v6915
    %v7877 = vsel %vm3226, %v7813, %v6917
    %v7878 = vsel %vm3291, %v7814, %v7047
    %v7879 = vsel %vm3291, %v7815, %v7049
    %v7880 = vsel %vm3291, %v7816, %v7051
    %v7881 = vsel %vm3291, %v7817, %v7053
    %v7882 = vsel %vm3291, %v7818, %v7055
    %v7883 = vsel %vm3291, %v7819, %v7057
    %v7884 = vsel %vm3291, %v7820, %v7059
    %v7885 = vsel %vm3291, %v7821, %v7061
    %v7886 = vsel %vm3291, %v7822, %v7063
    %v7887 = vsel %vm3291, %v7823, %v7065
    %v7888 = vsel %vm3291, %v7824, %v7067
    %v7889 = vsel %vm3291, %v7825, %v7069
    %v7890 = vsel %vm3291, %v7826, %v7071
    %v7891 = vsel %vm3291, %v7827, %v7073
    %v7892 = vsel %vm3291, %v7828, %v7075
    %v7893 = vsel %vm3291, %v7829, %v7077
    %v7894 = vsel %vm3291, %v7830, %v7079
    %v7895 = vsel %vm3291, %v7831, %v7081
    %v7896 = vsel %vm3291, %v7832, %v7083
    %v7897 = vsel %vm3291, %v7833, %v7085
    %v7898 = vsel %vm3291, %v7834, %v7087
    %v7899 = vsel %vm3291, %v7835, %v7089
    %v7900 = vsel %vm3291, %v7836, %v7091
    %v7901 = vsel %vm3291, %v7837, %v7093
    %v7902 = vsel %vm3291, %v7838, %v7095
    %v7903 = vsel %vm3291, %v7839, %v7097
    %v7904 = vsel %vm3291, %v7840, %v7099
    %v7905 = vsel %vm3291, %v7841, %v7101
    %v7906 = vsel %vm3291, %v7842, %v7103
    %v7907 = vsel %vm3291, %v7843, %v7105
    %v7908 = vsel %vm3291, %v7844, %v7107
    %v7909 = vsel %vm3291, %v7845, %v7109
    %v7910 = vsel %vm3291, %v7846, %v7111
    %v7911 = vsel %vm3291, %v7847, %v7113
    %v7912 = vsel %vm3291, %v7848, %v7115
    %v7913 = vsel %vm3291, %v7849, %v7117
    %v7914 = vsel %vm3291, %v7850, %v7119
    %v7915 = vsel %vm3291, %v7851, %v7121
    %v7916 = vsel %vm3291, %v7852, %v7123
    %v7917 = vsel %vm3291, %v7853, %v7125
    %v7918 = vsel %vm3291, %v7854, %v7127
    %v7919 = vsel %vm3291, %v7855, %v7129
    %v7920 = vsel %vm3291, %v7856, %v7131
    %v7921 = vsel %vm3291, %v7857, %v7133
    %v7922 = vsel %vm3291, %v7858, %v7135
    %v7923 = vsel %vm3291, %v7859, %v7137
    %v7924 = vsel %vm3291, %v7860, %v7139
    %v7925 = vsel %vm3291, %v7861, %v7141
    %v7926 = vsel %vm3291, %v7862, %v7143
    %v7927 = vsel %vm3291, %v7863, %v7145
    %v7928 = vsel %vm3291, %v7864, %v7147
    %v7929 = vsel %vm3291, %v7865, %v7149
    %v7930 = vsel %vm3291, %v7866, %v7151
    %v7931 = vsel %vm3291, %v7867, %v7153
    %v7932 = vsel %vm3291, %v7868, %v7155
    %v7933 = vsel %vm3291, %v7869, %v7157
    %v7934 = vsel %vm3291, %v7870, %v7159
    %v7935 = vsel %vm3291, %v7871, %v7161
    %v7936 = vsel %vm3291, %v7872, %v7163
    %v7937 = vsel %vm3291, %v7873, %v7165
    %v7938 = vsel %vm3291, %v7874, %v7167
    %v7939 = vsel %vm3291, %v7875, %v7169
    %v7940 = vsel %vm3291, %v7876, %v7171
    %v7941 = vsel %vm3291, %v7877, %v7173
    %v7942 = vsel %vm3356, %v7878, %v7303
    %v7943 = vsel %vm3356, %v7879, %v7305
    %v7944 = vsel %vm3356, %v7880, %v7307
    %v7945 = vsel %vm3356, %v7881, %v7309
    %v7946 = vsel %vm3356, %v7882, %v7311
    %v7947 = vsel %vm3356, %v7883, %v7313
    %v7948 = vsel %vm3356, %v7884, %v7315
    %v7949 = vsel %vm3356, %v7885, %v7317
    %v7950 = vsel %vm3356, %v7886, %v7319
    %v7951 = vsel %vm3356, %v7887, %v7321
    %v7952 = vsel %vm3356, %v7888, %v7323
    %v7953 = vsel %vm3356, %v7889, %v7325
    %v7954 = vsel %vm3356, %v7890, %v7327
    %v7955 = vsel %vm3356, %v7891, %v7329
    %v7956 = vsel %vm3356, %v7892, %v7331
    %v7957 = vsel %vm3356, %v7893, %v7333
    %v7958 = vsel %vm3356, %v7894, %v7335
    %v7959 = vsel %vm3356, %v7895, %v7337
    %v7960 = vsel %vm3356, %v7896, %v7339
    %v7961 = vsel %vm3356, %v7897, %v7341
    %v7962 = vsel %vm3356, %v7898, %v7343
    %v7963 = vsel %vm3356, %v7899, %v7345
    %v7964 = vsel %vm3356, %v7900, %v7347
    %v7965 = vsel %vm3356, %v7901, %v7349
    %v7966 = vsel %vm3356, %v7902, %v7351
    %v7967 = vsel %vm3356, %v7903, %v7353
    %v7968 = vsel %vm3356, %v7904, %v7355
    %v7969 = vsel %vm3356, %v7905, %v7357
    %v7970 = vsel %vm3356, %v7906, %v7359
    %v7971 = vsel %vm3356, %v7907, %v7361
    %v7972 = vsel %vm3356, %v7908, %v7363
    %v7973 = vsel %vm3356, %v7909, %v7365
    %v7974 = vsel %vm3356, %v7910, %v7367
    %v7975 = vsel %vm3356, %v7911, %v7369
    %v7976 = vsel %vm3356, %v7912, %v7371
    %v7977 = vsel %vm3356, %v7913, %v7373
    %v7978 = vsel %vm3356, %v7914, %v7375
    %v7979 = vsel %vm3356, %v7915, %v7377
    %v7980 = vsel %vm3356, %v7916, %v7379
    %v7981 = vsel %vm3356, %v7917, %v7381
    %v7982 = vsel %vm3356, %v7918, %v7383
    %v7983 = vsel %vm3356, %v7919, %v7385
    %v7984 = vsel %vm3356, %v7920, %v7387
    %v7985 = vsel %vm3356, %v7921, %v7389
    %v7986 = vsel %vm3356, %v7922, %v7391
    %v7987 = vsel %vm3356, %v7923, %v7393
    %v7988 = vsel %vm3356, %v7924, %v7395
    %v7989 = vsel %vm3356, %v7925, %v7397
    %v7990 = vsel %vm3356, %v7926, %v7399
    %v7991 = vsel %vm3356, %v7927, %v7401
    %v7992 = vsel %vm3356, %v7928, %v7403
    %v7993 = vsel %vm3356, %v7929, %v7405
    %v7994 = vsel %vm3356, %v7930, %v7407
    %v7995 = vsel %vm3356, %v7931, %v7409
    %v7996 = vsel %vm3356, %v7932, %v7411
    %v7997 = vsel %vm3356, %v7933, %v7413
    %v7998 = vsel %vm3356, %v7934, %v7415
    %v7999 = vsel %vm3356, %v7935, %v7417
    %v8000 = vsel %vm3356, %v7936, %v7419
    %v8001 = vsel %vm3356, %v7937, %v7421
    %v8002 = vsel %vm3356, %v7938, %v7423
    %v8003 = vsel %vm3356, %v7939, %v7425
    %v8004 = vsel %vm3356, %v7940, %v7427
    %v8005 = vsel %vm3356, %v7941, %v7429
    %v8007 = vsel %vm3421, %v7942, 0
    %v8010 = vsel %vm3421, %v7943, 0
    %v8013 = vsel %vm3421, %v7944, 0
    %v8016 = vsel %vm3421, %v7945, 0
    %v8019 = vsel %vm3421, %v7946, 0
    %v8022 = vsel %vm3421, %v7947, 0
    %v8025 = vsel %vm3421, %v7948, 0
    %v8028 = vsel %vm3421, %v7949, 0
    %v8031 = vsel %vm3421, %v7950, 0
    %v8034 = vsel %vm3421, %v7951, 0
    %v8037 = vsel %vm3421, %v7952, 0
    %v8040 = vsel %vm3421, %v7953, 0
    %v8043 = vsel %vm3421, %v7954, 0
    %v8046 = vsel %vm3421, %v7955, 0
    %v8049 = vsel %vm3421, %v7956, 0
    %v8052 = vsel %vm3421, %v7957, 0
    %v8055 = vsel %vm3421, %v7958, 0
    %v8058 = vsel %vm3421, %v7959, 0
    %v8061 = vsel %vm3421, %v7960, 0
    %v8064 = vsel %vm3421, %v7961, 0
    %v8067 = vsel %vm3421, %v7962, 0
    %v8070 = vsel %vm3421, %v7963, 0
    %v8073 = vsel %vm3421, %v7964, 0
    %v8076 = vsel %vm3421, %v7965, 0
    %v8079 = vsel %vm3421, %v7966, 0
    %v8082 = vsel %vm3421, %v7967, 0
    %v8085 = vsel %vm3421, %v7968, 0
    %v8088 = vsel %vm3421, %v7969, 0
    %v8091 = vsel %vm3421, %v7970, 0
    %v8094 = vsel %vm3421, %v7971, 0
    %v8097 = vsel %vm3421, %v7972, 0
    %v8100 = vsel %vm3421, %v7973, 0
    %v8103 = vsel %vm3421, %v7974, 0
    %v8106 = vsel %vm3421, %v7975, 0
    %v8109 = vsel %vm3421, %v7976, 0
    %v8112 = vsel %vm3421, %v7977, 0
    %v8115 = vsel %vm3421, %v7978, 0
    %v8118 = vsel %vm3421, %v7979, 0
    %v8121 = vsel %vm3421, %v7980, 0
    %v8124 = vsel %vm3421, %v7981, 0
    %v8127 = vsel %vm3421, %v7982, 0
    %v8130 = vsel %vm3421, %v7983, 0
    %v8133 = vsel %vm3421, %v7984, 0
    %v8136 = vsel %vm3421, %v7985, 0
    %v8139 = vsel %vm3421, %v7986, 0
    %v8142 = vsel %vm3421, %v7987, 0
    %v8145 = vsel %vm3421, %v7988, 0
    %v8148 = vsel %vm3421, %v7989, 0
    %v8151 = vsel %vm3421, %v7990, 0
    %v8154 = vsel %vm3421, %v7991, 0
    %v8157 = vsel %vm3421, %v7992, 0
    %v8160 = vsel %vm3421, %v7993, 0
    %v8163 = vsel %vm3421, %v7994, 0
    %v8166 = vsel %vm3421, %v7995, 0
    %v8169 = vsel %vm3421, %v7996, 0
    %v8172 = vsel %vm3421, %v7997, 0
    %v8175 = vsel %vm3421, %v7998, 0
    %v8178 = vsel %vm3421, %v7999, 0
    %v8181 = vsel %vm3421, %v8000, 0
    %v8184 = vsel %vm3421, %v8001, 0
    %v8187 = vsel %vm3421, %v8002, 0
    %v8190 = vsel %vm3421, %v8003, 0
    %v8193 = vsel %vm3421, %v8004, 0
    %v8196 = vsel %vm3421, %v8005, 0
    %8198 = vmatprep.subr.mxu0 0.0
    %8199 = vmatpush1.msra.mxu0 %v4859
    %8200 = vmatprep.subr.mxu0 0.0
    %8201 = vmatpush1.msra.mxu0 %v4860
    %8202 = vmatprep.subr.mxu0 0.0
    %8203 = vmatpush1.msra.mxu0 %v4861
    %8204 = vmatprep.subr.mxu0 0.0
    %8205 = vmatpush1.msra.mxu0 %v4862
    %8206 = vmatprep.subr.mxu0 0.0
    %8207 = vmatpush1.msra.mxu0 %v4863
    %8208 = vmatprep.subr.mxu0 0.0
    %8209 = vmatpush1.msra.mxu0 %v4864
    %8210 = vmatprep.subr.mxu0 0.0
    %8211 = vmatpush1.msra.mxu0 %v4865
    %8212 = vmatprep.subr.mxu0 0.0
    %8213 = vmatpush1.msra.mxu0 %v4866
    %8214 = vmatprep.subr.mxu0 0.0
    %8215 = vmatpush1.msra.mxu0 %v4867
    %8216 = vmatprep.subr.mxu0 0.0
    %8217 = vmatpush1.msra.mxu0 0.0
    %8218 = vmatprep.subr.mxu0 0.0
    %8219 = vmatpush1.msra.mxu0 0.0
    %8220 = vmatprep.subr.mxu0 0.0
    %8221 = vmatpush1.msra.mxu0 0.0
    %8222 = vmatprep.subr.mxu0 0.0
    %8223 = vmatpush1.msra.mxu0 0.0
    %8224 = vmatprep.subr.mxu0 0.0
    %8225 = vmatpush1.msra.mxu0 0.0
    %8226 = vmatprep.subr.mxu0 0.0
    %8227 = vmatpush1.msra.mxu0 0.0
    %8228 = vmatprep.subr.mxu0 0.0
    %8229 = vmatpush1.msra.mxu0 0.0
    %8230 = vmatprep.subr.mxu0 0.0
    %8231 = vmatpush1.msra.mxu0 0.0
    %8232 = vmatprep.subr.mxu0 0.0
    %8233 = vmatpush1.msra.mxu0 0.0
    %8234 = vmatprep.subr.mxu0 0.0
    %8235 = vmatpush1.msra.mxu0 0.0
    %8236 = vmatprep.subr.mxu0 0.0
    %8237 = vmatpush1.msra.mxu0 0.0
    %8238 = vmatprep.subr.mxu0 0.0
    %8239 = vmatpush1.msra.mxu0 0.0
    %8240 = vmatprep.subr.mxu0 0.0
    %8241 = vmatpush1.msra.mxu0 0.0
    %8242 = vmatprep.subr.mxu0 0.0
    %8243 = vmatpush1.msra.mxu0 0.0
    %8244 = vmatprep.subr.mxu0 0.0
    %8245 = vmatpush1.msra.mxu0 0.0
    %8246 = vmatprep.subr.mxu0 0.0
    %8247 = vmatpush1.msra.mxu0 0.0
    %8248 = vmatprep.subr.mxu0 0.0
    %8249 = vmatpush1.msra.mxu0 0.0
    %8250 = vmatprep.subr.mxu0 0.0
    %8251 = vmatpush1.msra.mxu0 0.0
    %8252 = vmatprep.subr.mxu0 0.0
    %8253 = vmatpush1.msra.mxu0 0.0
    %8254 = vmatprep.subr.mxu0 0.0
    %8255 = vmatpush1.msra.mxu0 0.0
    %8256 = vmatprep.subr.mxu0 0.0
    %8257 = vmatpush1.msra.mxu0 0.0
    %8258 = vmatprep.subr.mxu0 0.0
    %8259 = vmatpush1.msra.mxu0 0.0
    %8260 = vmatprep.subr.mxu0 0.0
    %8261 = vmatpush1.msra.mxu0 0.0
    %8262 = vmatprep.mubr.f32.mxu0 0.0
    %8263 = vmatmul.mubr.f32.gmra.mrb[0].mxu0 %v8007
    %v8264 = vpop.f32.mrb[0].mxu0
    %v8265 = vadd.f32 0.0, %v8264
    %v8266 = vpop.f32.mrb[0].mxu0
    %8267 = vmatprep.mubr.f32.mxu0 0.0
    %8268 = vmatmul.mubr.f32.gmra.mrb[0].mxu0 %v8010
    %v8269 = vpop.f32.mrb[0].mxu0
    %v8270 = vadd.f32 0.0, %v8269
    %v8271 = vpop.f32.mrb[0].mxu0
    %8272 = vmatprep.mubr.f32.mxu0 0.0
    %8273 = vmatmul.mubr.f32.gmra.mrb[0].mxu0 %v8013
    %v8274 = vpop.f32.mrb[0].mxu0
    %v8275 = vadd.f32 0.0, %v8274
    %v8276 = vpop.f32.mrb[0].mxu0
    %8277 = vmatprep.mubr.f32.mxu0 0.0
    %8278 = vmatmul.mubr.f32.gmra.mrb[0].mxu0 %v8016
    %v8279 = vpop.f32.mrb[0].mxu0
    %v8280 = vadd.f32 0.0, %v8279
    %v8281 = vpop.f32.mrb[0].mxu0
    %8282 = vmatprep.mubr.f32.mxu0 0.0
    %8283 = vmatmul.mubr.f32.gmra.mrb[0].mxu0 %v8019
    %v8284 = vpop.f32.mrb[0].mxu0
    %v8285 = vadd.f32 0.0, %v8284
    %v8286 = vpop.f32.mrb[0].mxu0
    %8287 = vmatprep.mubr.f32.mxu0 0.0
    %8288 = vmatmul.mubr.f32.gmra.mrb[0].mxu0 %v8022
    %v8289 = vpop.f32.mrb[0].mxu0
    %v8290 = vadd.f32 0.0, %v8289
    %v8291 = vpop.f32.mrb[0].mxu0
    %8292 = vmatprep.mubr.f32.mxu0 0.0
    %8293 = vmatmul.mubr.f32.gmra.mrb[0].mxu0 %v8025
    %v8294 = vpop.f32.mrb[0].mxu0
    %v8295 = vadd.f32 0.0, %v8294
    %v8296 = vpop.f32.mrb[0].mxu0
    %8297 = vmatprep.mubr.f32.mxu0 0.0
    %8298 = vmatmul.mubr.f32.gmra.mrb[0].mxu0 %v8028
    %v8299 = vpop.f32.mrb[0].mxu0
    %v8300 = vadd.f32 0.0, %v8299
    %v8301 = vpop.f32.mrb[0].mxu0
    %8302 = vmatprep.mubr.f32.mxu0 0.0
    %8303 = vmatmul.mubr.f32.gmra.mrb[0].mxu0 %v8031
    %v8304 = vpop.f32.mrb[0].mxu0
    %v8305 = vadd.f32 0.0, %v8304
    %v8306 = vpop.f32.mrb[0].mxu0
    %8307 = vmatprep.mubr.f32.mxu0 0.0
    %8308 = vmatmul.mubr.f32.gmra.mrb[0].mxu0 %v8034
    %v8309 = vpop.f32.mrb[0].mxu0
    %v8310 = vadd.f32 0.0, %v8309
    %v8311 = vpop.f32.mrb[0].mxu0
    %8312 = vmatprep.mubr.f32.mxu0 0.0
    %8313 = vmatmul.mubr.f32.gmra.mrb[0].mxu0 %v8037
    %v8314 = vpop.f32.mrb[0].mxu0
    %v8315 = vadd.f32 0.0, %v8314
    %v8316 = vpop.f32.mrb[0].mxu0
    %8317 = vmatprep.mubr.f32.mxu0 0.0
    %8318 = vmatmul.mubr.f32.gmra.mrb[0].mxu0 %v8040
    %v8319 = vpop.f32.mrb[0].mxu0
    %v8320 = vadd.f32 0.0, %v8319
    %v8321 = vpop.f32.mrb[0].mxu0
    %8322 = vmatprep.mubr.f32.mxu0 0.0
    %8323 = vmatmul.mubr.f32.gmra.mrb[0].mxu0 %v8043
    %v8324 = vpop.f32.mrb[0].mxu0
    %v8325 = vadd.f32 0.0, %v8324
    %v8326 = vpop.f32.mrb[0].mxu0
    %8327 = vmatprep.mubr.f32.mxu0 0.0
    %8328 = vmatmul.mubr.f32.gmra.mrb[0].mxu0 %v8046
    %v8329 = vpop.f32.mrb[0].mxu0
    %v8330 = vadd.f32 0.0, %v8329
    %v8331 = vpop.f32.mrb[0].mxu0
    %8332 = vmatprep.mubr.f32.mxu0 0.0
    %8333 = vmatmul.mubr.f32.gmra.mrb[0].mxu0 %v8049
    %v8334 = vpop.f32.mrb[0].mxu0
    %v8335 = vadd.f32 0.0, %v8334
    %v8336 = vpop.f32.mrb[0].mxu0
    %8337 = vmatprep.mubr.f32.mxu0 0.0
    %8338 = vmatmul.mubr.f32.gmra.mrb[0].mxu0 %v8052
    %v8339 = vpop.f32.mrb[0].mxu0
    %v8340 = vadd.f32 0.0, %v8339
    %v8341 = vpop.f32.mrb[0].mxu0
    %8342 = vmatprep.mubr.f32.mxu0 0.0
    %8343 = vmatmul.mubr.f32.gmra.mrb[0].mxu0 %v8055
    %v8344 = vpop.f32.mrb[0].mxu0
    %v8345 = vadd.f32 0.0, %v8344
    %v8346 = vpop.f32.mrb[0].mxu0
    %8347 = vmatprep.mubr.f32.mxu0 0.0
    %8348 = vmatmul.mubr.f32.gmra.mrb[0].mxu0 %v8058
    %v8349 = vpop.f32.mrb[0].mxu0
    %v8350 = vadd.f32 0.0, %v8349
    %v8351 = vpop.f32.mrb[0].mxu0
    %8352 = vmatprep.mubr.f32.mxu0 0.0
    %8353 = vmatmul.mubr.f32.gmra.mrb[0].mxu0 %v8061
    %v8354 = vpop.f32.mrb[0].mxu0
    %v8355 = vadd.f32 0.0, %v8354
    %v8356 = vpop.f32.mrb[0].mxu0
    %8357 = vmatprep.mubr.f32.mxu0 0.0
    %8358 = vmatmul.mubr.f32.gmra.mrb[0].mxu0 %v8064
    %v8359 = vpop.f32.mrb[0].mxu0
    %v8360 = vadd.f32 0.0, %v8359
    %v8361 = vpop.f32.mrb[0].mxu0
    %8362 = vmatprep.mubr.f32.mxu0 0.0
    %8363 = vmatmul.mubr.f32.gmra.mrb[0].mxu0 %v8067
    %v8364 = vpop.f32.mrb[0].mxu0
    %v8365 = vadd.f32 0.0, %v8364
    %v8366 = vpop.f32.mrb[0].mxu0
    %8367 = vmatprep.mubr.f32.mxu0 0.0
    %8368 = vmatmul.mubr.f32.gmra.mrb[0].mxu0 %v8070
    %v8369 = vpop.f32.mrb[0].mxu0
    %v8370 = vadd.f32 0.0, %v8369
    %v8371 = vpop.f32.mrb[0].mxu0
    %8372 = vmatprep.mubr.f32.mxu0 0.0
    %8373 = vmatmul.mubr.f32.gmra.mrb[0].mxu0 %v8073
    %v8374 = vpop.f32.mrb[0].mxu0
    %v8375 = vadd.f32 0.0, %v8374
    %v8376 = vpop.f32.mrb[0].mxu0
    %8377 = vmatprep.mubr.f32.mxu0 0.0
    %8378 = vmatmul.mubr.f32.gmra.mrb[0].mxu0 %v8076
    %v8379 = vpop.f32.mrb[0].mxu0
    %v8380 = vadd.f32 0.0, %v8379
    %v8381 = vpop.f32.mrb[0].mxu0
    %8382 = vmatprep.mubr.f32.mxu0 0.0
    %8383 = vmatmul.mubr.f32.gmra.mrb[0].mxu0 %v8079
    %v8384 = vpop.f32.mrb[0].mxu0
    %v8385 = vadd.f32 0.0, %v8384
    %v8386 = vpop.f32.mrb[0].mxu0
    %8387 = vmatprep.mubr.f32.mxu0 0.0
    %8388 = vmatmul.mubr.f32.gmra.mrb[0].mxu0 %v8082
    %v8389 = vpop.f32.mrb[0].mxu0
    %v8390 = vadd.f32 0.0, %v8389
    %v8391 = vpop.f32.mrb[0].mxu0
    %8392 = vmatprep.mubr.f32.mxu0 0.0
    %8393 = vmatmul.mubr.f32.gmra.mrb[0].mxu0 %v8085
    %v8394 = vpop.f32.mrb[0].mxu0
    %v8395 = vadd.f32 0.0, %v8394
    %v8396 = vpop.f32.mrb[0].mxu0
    %8397 = vmatprep.mubr.f32.mxu0 0.0
    %8398 = vmatmul.mubr.f32.gmra.mrb[0].mxu0 %v8088
    %v8399 = vpop.f32.mrb[0].mxu0
    %v8400 = vadd.f32 0.0, %v8399
    %v8401 = vpop.f32.mrb[0].mxu0
    %8402 = vmatprep.mubr.f32.mxu0 0.0
    %8403 = vmatmul.mubr.f32.gmra.mrb[0].mxu0 %v8091
    %v8404 = vpop.f32.mrb[0].mxu0
    %v8405 = vadd.f32 0.0, %v8404
    %v8406 = vpop.f32.mrb[0].mxu0
    %8407 = vmatprep.mubr.f32.mxu0 0.0
    %8408 = vmatmul.mubr.f32.gmra.mrb[0].mxu0 %v8094
    %v8409 = vpop.f32.mrb[0].mxu0
    %v8410 = vadd.f32 0.0, %v8409
    %v8411 = vpop.f32.mrb[0].mxu0
    %8412 = vmatprep.mubr.f32.mxu0 0.0
    %8413 = vmatmul.mubr.f32.gmra.mrb[0].mxu0 %v8097
    %v8414 = vpop.f32.mrb[0].mxu0
    %v8415 = vadd.f32 0.0, %v8414
    %v8416 = vpop.f32.mrb[0].mxu0
    %8417 = vmatprep.mubr.f32.mxu0 0.0
    %8418 = vmatmul.mubr.f32.gmra.mrb[0].mxu0 %v8100
    %v8419 = vpop.f32.mrb[0].mxu0
    %v8420 = vadd.f32 0.0, %v8419
    %v8421 = vpop.f32.mrb[0].mxu0
    %8422 = vmatprep.mubr.f32.mxu0 0.0
    %8423 = vmatmul.mubr.f32.gmra.mrb[0].mxu0 %v8103
    %v8424 = vpop.f32.mrb[0].mxu0
    %v8425 = vadd.f32 0.0, %v8424
    %v8426 = vpop.f32.mrb[0].mxu0
    %8427 = vmatprep.mubr.f32.mxu0 0.0
    %8428 = vmatmul.mubr.f32.gmra.mrb[0].mxu0 %v8106
    %v8429 = vpop.f32.mrb[0].mxu0
    %v8430 = vadd.f32 0.0, %v8429
    %v8431 = vpop.f32.mrb[0].mxu0
    %8432 = vmatprep.mubr.f32.mxu0 0.0
    %8433 = vmatmul.mubr.f32.gmra.mrb[0].mxu0 %v8109
    %v8434 = vpop.f32.mrb[0].mxu0
    %v8435 = vadd.f32 0.0, %v8434
    %v8436 = vpop.f32.mrb[0].mxu0
    %8437 = vmatprep.mubr.f32.mxu0 0.0
    %8438 = vmatmul.mubr.f32.gmra.mrb[0].mxu0 %v8112
    %v8439 = vpop.f32.mrb[0].mxu0
    %v8440 = vadd.f32 0.0, %v8439
    %v8441 = vpop.f32.mrb[0].mxu0
    %8442 = vmatprep.mubr.f32.mxu0 0.0
    %8443 = vmatmul.mubr.f32.gmra.mrb[0].mxu0 %v8115
    %v8444 = vpop.f32.mrb[0].mxu0
    %v8445 = vadd.f32 0.0, %v8444
    %v8446 = vpop.f32.mrb[0].mxu0
    %8447 = vmatprep.mubr.f32.mxu0 0.0
    %8448 = vmatmul.mubr.f32.gmra.mrb[0].mxu0 %v8118
    %v8449 = vpop.f32.mrb[0].mxu0
    %v8450 = vadd.f32 0.0, %v8449
    %v8451 = vpop.f32.mrb[0].mxu0
    %8452 = vmatprep.mubr.f32.mxu0 0.0
    %8453 = vmatmul.mubr.f32.gmra.mrb[0].mxu0 %v8121
    %v8454 = vpop.f32.mrb[0].mxu0
    %v8455 = vadd.f32 0.0, %v8454
    %v8456 = vpop.f32.mrb[0].mxu0
    %8457 = vmatprep.mubr.f32.mxu0 0.0
    %8458 = vmatmul.mubr.f32.gmra.mrb[0].mxu0 %v8124
    %v8459 = vpop.f32.mrb[0].mxu0
    %v8460 = vadd.f32 0.0, %v8459
    %v8461 = vpop.f32.mrb[0].mxu0
    %8462 = vmatprep.mubr.f32.mxu0 0.0
    %8463 = vmatmul.mubr.f32.gmra.mrb[0].mxu0 %v8127
    %v8464 = vpop.f32.mrb[0].mxu0
    %v8465 = vadd.f32 0.0, %v8464
    %v8466 = vpop.f32.mrb[0].mxu0
    %8467 = vmatprep.mubr.f32.mxu0 0.0
    %8468 = vmatmul.mubr.f32.gmra.mrb[0].mxu0 %v8130
    %v8469 = vpop.f32.mrb[0].mxu0
    %v8470 = vadd.f32 0.0, %v8469
    %v8471 = vpop.f32.mrb[0].mxu0
    %8472 = vmatprep.mubr.f32.mxu0 0.0
    %8473 = vmatmul.mubr.f32.gmra.mrb[0].mxu0 %v8133
    %v8474 = vpop.f32.mrb[0].mxu0
    %v8475 = vadd.f32 0.0, %v8474
    %v8476 = vpop.f32.mrb[0].mxu0
    %8477 = vmatprep.mubr.f32.mxu0 0.0
    %8478 = vmatmul.mubr.f32.gmra.mrb[0].mxu0 %v8136
    %v8479 = vpop.f32.mrb[0].mxu0
    %v8480 = vadd.f32 0.0, %v8479
    %v8481 = vpop.f32.mrb[0].mxu0
    %8482 = vmatprep.mubr.f32.mxu0 0.0
    %8483 = vmatmul.mubr.f32.gmra.mrb[0].mxu0 %v8139
    %v8484 = vpop.f32.mrb[0].mxu0
    %v8485 = vadd.f32 0.0, %v8484
    %v8486 = vpop.f32.mrb[0].mxu0
    %8487 = vmatprep.mubr.f32.mxu0 0.0
    %8488 = vmatmul.mubr.f32.gmra.mrb[0].mxu0 %v8142
    %v8489 = vpop.f32.mrb[0].mxu0
    %v8490 = vadd.f32 0.0, %v8489
    %v8491 = vpop.f32.mrb[0].mxu0
    %8492 = vmatprep.mubr.f32.mxu0 0.0
    %8493 = vmatmul.mubr.f32.gmra.mrb[0].mxu0 %v8145
    %v8494 = vpop.f32.mrb[0].mxu0
    %v8495 = vadd.f32 0.0, %v8494
    %v8496 = vpop.f32.mrb[0].mxu0
    %8497 = vmatprep.mubr.f32.mxu0 0.0
    %8498 = vmatmul.mubr.f32.gmra.mrb[0].mxu0 %v8148
    %v8499 = vpop.f32.mrb[0].mxu0
    %v8500 = vadd.f32 0.0, %v8499
    %v8501 = vpop.f32.mrb[0].mxu0
    %8502 = vmatprep.mubr.f32.mxu0 0.0
    %8503 = vmatmul.mubr.f32.gmra.mrb[0].mxu0 %v8151
    %v8504 = vpop.f32.mrb[0].mxu0
    %v8505 = vadd.f32 0.0, %v8504
    %v8506 = vpop.f32.mrb[0].mxu0
    %8507 = vmatprep.mubr.f32.mxu0 0.0
    %8508 = vmatmul.mubr.f32.gmra.mrb[0].mxu0 %v8154
    %v8509 = vpop.f32.mrb[0].mxu0
    %v8510 = vadd.f32 0.0, %v8509
    %v8511 = vpop.f32.mrb[0].mxu0
    %8512 = vmatprep.mubr.f32.mxu0 0.0
    %8513 = vmatmul.mubr.f32.gmra.mrb[0].mxu0 %v8157
    %v8514 = vpop.f32.mrb[0].mxu0
    %v8515 = vadd.f32 0.0, %v8514
    %v8516 = vpop.f32.mrb[0].mxu0
    %8517 = vmatprep.mubr.f32.mxu0 0.0
    %8518 = vmatmul.mubr.f32.gmra.mrb[0].mxu0 %v8160
    %v8519 = vpop.f32.mrb[0].mxu0
    %v8520 = vadd.f32 0.0, %v8519
    %v8521 = vpop.f32.mrb[0].mxu0
    %8522 = vmatprep.mubr.f32.mxu0 0.0
    %8523 = vmatmul.mubr.f32.gmra.mrb[0].mxu0 %v8163
    %v8524 = vpop.f32.mrb[0].mxu0
    %v8525 = vadd.f32 0.0, %v8524
    %v8526 = vpop.f32.mrb[0].mxu0
    %8527 = vmatprep.mubr.f32.mxu0 0.0
    %8528 = vmatmul.mubr.f32.gmra.mrb[0].mxu0 %v8166
    %v8529 = vpop.f32.mrb[0].mxu0
    %v8530 = vadd.f32 0.0, %v8529
    %v8531 = vpop.f32.mrb[0].mxu0
    %8532 = vmatprep.mubr.f32.mxu0 0.0
    %8533 = vmatmul.mubr.f32.gmra.mrb[0].mxu0 %v8169
    %v8534 = vpop.f32.mrb[0].mxu0
    %v8535 = vadd.f32 0.0, %v8534
    %v8536 = vpop.f32.mrb[0].mxu0
    %8537 = vmatprep.mubr.f32.mxu0 0.0
    %8538 = vmatmul.mubr.f32.gmra.mrb[0].mxu0 %v8172
    %v8539 = vpop.f32.mrb[0].mxu0
    %v8540 = vadd.f32 0.0, %v8539
    %v8541 = vpop.f32.mrb[0].mxu0
    %8542 = vmatprep.mubr.f32.mxu0 0.0
    %8543 = vmatmul.mubr.f32.gmra.mrb[0].mxu0 %v8175
    %v8544 = vpop.f32.mrb[0].mxu0
    %v8545 = vadd.f32 0.0, %v8544
    %v8546 = vpop.f32.mrb[0].mxu0
    %8547 = vmatprep.mubr.f32.mxu0 0.0
    %8548 = vmatmul.mubr.f32.gmra.mrb[0].mxu0 %v8178
    %v8549 = vpop.f32.mrb[0].mxu0
    %v8550 = vadd.f32 0.0, %v8549
    %v8551 = vpop.f32.mrb[0].mxu0
    %8552 = vmatprep.mubr.f32.mxu0 0.0
    %8553 = vmatmul.mubr.f32.gmra.mrb[0].mxu0 %v8181
    %v8554 = vpop.f32.mrb[0].mxu0
    %v8555 = vadd.f32 0.0, %v8554
    %v8556 = vpop.f32.mrb[0].mxu0
    %8557 = vmatprep.mubr.f32.mxu0 0.0
    %8558 = vmatmul.mubr.f32.gmra.mrb[0].mxu0 %v8184
    %v8559 = vpop.f32.mrb[0].mxu0
    %v8560 = vadd.f32 0.0, %v8559
    %v8561 = vpop.f32.mrb[0].mxu0
    %8562 = vmatprep.mubr.f32.mxu0 0.0
    %8563 = vmatmul.mubr.f32.gmra.mrb[0].mxu0 %v8187
    %v8564 = vpop.f32.mrb[0].mxu0
    %v8565 = vadd.f32 0.0, %v8564
    %v8566 = vpop.f32.mrb[0].mxu0
    %8567 = vmatprep.mubr.f32.mxu0 0.0
    %8568 = vmatmul.mubr.f32.gmra.mrb[0].mxu0 %v8190
    %v8569 = vpop.f32.mrb[0].mxu0
    %v8570 = vadd.f32 0.0, %v8569
    %v8571 = vpop.f32.mrb[0].mxu0
    %8572 = vmatprep.mubr.f32.mxu0 0.0
    %8573 = vmatmul.mubr.f32.gmra.mrb[0].mxu0 %v8193
    %v8574 = vpop.f32.mrb[0].mxu0
    %v8575 = vadd.f32 0.0, %v8574
    %v8576 = vpop.f32.mrb[0].mxu0
    %8577 = vmatprep.mubr.f32.mxu0 0.0
    %8578 = vmatmul.mubr.f32.gmra.mrb[0].mxu0 %v8196
    %v8579 = vpop.f32.mrb[0].mxu0
    %v8580 = vadd.f32 0.0, %v8579
    %v8581 = vpop.f32.mrb[0].mxu0
    %8582 = vdwg.mxu0
    %v8583 = vsel %vm91, %v8265, 0.0
    %v8584 = vsel %vm91, %v8270, 0.0
    %v8585 = vadd.f32 %v8583, %v8584
    %v8586 = vsel %vm91, %v8275, 0.0
    %v8587 = vadd.f32 %v8585, %v8586
    %v8588 = vsel %vm91, %v8280, 0.0
    %v8589 = vadd.f32 %v8587, %v8588
    %v8590 = vsel %vm91, %v8285, 0.0
    %v8591 = vadd.f32 %v8589, %v8590
    %v8592 = vsel %vm91, %v8290, 0.0
    %v8593 = vadd.f32 %v8591, %v8592
    %v8594 = vsel %vm91, %v8295, 0.0
    %v8595 = vadd.f32 %v8593, %v8594
    %v8596 = vsel %vm91, %v8300, 0.0
    %v8597 = vadd.f32 %v8595, %v8596
    %v8598 = vsel %vm91, %v8305, 0.0
    %v8599 = vadd.f32 %v8597, %v8598
    %v8600 = vsel %vm91, %v8310, 0.0
    %v8601 = vadd.f32 %v8599, %v8600
    %v8602 = vsel %vm91, %v8315, 0.0
    %v8603 = vadd.f32 %v8601, %v8602
    %v8604 = vsel %vm91, %v8320, 0.0
    %v8605 = vadd.f32 %v8603, %v8604
    %v8606 = vsel %vm91, %v8325, 0.0
    %v8607 = vadd.f32 %v8605, %v8606
    %v8608 = vsel %vm91, %v8330, 0.0
    %v8609 = vadd.f32 %v8607, %v8608
    %v8610 = vsel %vm91, %v8335, 0.0
    %v8611 = vadd.f32 %v8609, %v8610
    %v8612 = vsel %vm91, %v8340, 0.0
    %v8613 = vadd.f32 %v8611, %v8612
    %v8614 = vsel %vm91, %v8345, 0.0
    %v8615 = vadd.f32 %v8613, %v8614
    %v8616 = vsel %vm91, %v8350, 0.0
    %v8617 = vadd.f32 %v8615, %v8616
    %v8618 = vsel %vm91, %v8355, 0.0
    %v8619 = vadd.f32 %v8617, %v8618
    %v8620 = vsel %vm91, %v8360, 0.0
    %v8621 = vadd.f32 %v8619, %v8620
    %v8622 = vsel %vm91, %v8365, 0.0
    %v8623 = vadd.f32 %v8621, %v8622
    %v8624 = vsel %vm91, %v8370, 0.0
    %v8625 = vadd.f32 %v8623, %v8624
    %v8626 = vsel %vm91, %v8375, 0.0
    %v8627 = vadd.f32 %v8625, %v8626
    %v8628 = vsel %vm91, %v8380, 0.0
    %v8629 = vadd.f32 %v8627, %v8628
    %v8630 = vsel %vm91, %v8385, 0.0
    %v8631 = vadd.f32 %v8629, %v8630
    %v8632 = vsel %vm91, %v8390, 0.0
    %v8633 = vadd.f32 %v8631, %v8632
    %v8634 = vsel %vm91, %v8395, 0.0
    %v8635 = vadd.f32 %v8633, %v8634
    %v8636 = vsel %vm91, %v8400, 0.0
    %v8637 = vadd.f32 %v8635, %v8636
    %v8638 = vsel %vm91, %v8405, 0.0
    %v8639 = vadd.f32 %v8637, %v8638
    %v8640 = vsel %vm91, %v8410, 0.0
    %v8641 = vadd.f32 %v8639, %v8640
    %v8642 = vsel %vm91, %v8415, 0.0
    %v8643 = vadd.f32 %v8641, %v8642
    %v8644 = vsel %vm91, %v8420, 0.0
    %v8645 = vadd.f32 %v8643, %v8644
    %v8646 = vsel %vm91, %v8425, 0.0
    %v8647 = vadd.f32 %v8645, %v8646
    %v8648 = vsel %vm91, %v8430, 0.0
    %v8649 = vadd.f32 %v8647, %v8648
    %v8650 = vsel %vm91, %v8435, 0.0
    %v8651 = vadd.f32 %v8649, %v8650
    %v8652 = vsel %vm91, %v8440, 0.0
    %v8653 = vadd.f32 %v8651, %v8652
    %v8654 = vsel %vm91, %v8445, 0.0
    %v8655 = vadd.f32 %v8653, %v8654
    %v8656 = vsel %vm91, %v8450, 0.0
    %v8657 = vadd.f32 %v8655, %v8656
    %v8658 = vsel %vm91, %v8455, 0.0
    %v8659 = vadd.f32 %v8657, %v8658
    %v8660 = vsel %vm91, %v8460, 0.0
    %v8661 = vadd.f32 %v8659, %v8660
    %v8662 = vsel %vm91, %v8465, 0.0
    %v8663 = vadd.f32 %v8661, %v8662
    %v8664 = vsel %vm91, %v8470, 0.0
    %v8665 = vadd.f32 %v8663, %v8664
    %v8666 = vsel %vm91, %v8475, 0.0
    %v8667 = vadd.f32 %v8665, %v8666
    %v8668 = vsel %vm91, %v8480, 0.0
    %v8669 = vadd.f32 %v8667, %v8668
    %v8670 = vsel %vm91, %v8485, 0.0
    %v8671 = vadd.f32 %v8669, %v8670
    %v8672 = vsel %vm91, %v8490, 0.0
    %v8673 = vadd.f32 %v8671, %v8672
    %v8674 = vsel %vm91, %v8495, 0.0
    %v8675 = vadd.f32 %v8673, %v8674
    %v8676 = vsel %vm91, %v8500, 0.0
    %v8677 = vadd.f32 %v8675, %v8676
    %v8678 = vsel %vm91, %v8505, 0.0
    %v8679 = vadd.f32 %v8677, %v8678
    %v8680 = vsel %vm91, %v8510, 0.0
    %v8681 = vadd.f32 %v8679, %v8680
    %v8682 = vsel %vm91, %v8515, 0.0
    %v8683 = vadd.f32 %v8681, %v8682
    %v8684 = vsel %vm91, %v8520, 0.0
    %v8685 = vadd.f32 %v8683, %v8684
    %v8686 = vsel %vm91, %v8525, 0.0
    %v8687 = vadd.f32 %v8685, %v8686
    %v8688 = vsel %vm91, %v8530, 0.0
    %v8689 = vadd.f32 %v8687, %v8688
    %v8690 = vsel %vm91, %v8535, 0.0
    %v8691 = vadd.f32 %v8689, %v8690
    %v8692 = vsel %vm91, %v8540, 0.0
    %v8693 = vadd.f32 %v8691, %v8692
    %v8694 = vsel %vm91, %v8545, 0.0
    %v8695 = vadd.f32 %v8693, %v8694
    %v8696 = vsel %vm91, %v8550, 0.0
    %v8697 = vadd.f32 %v8695, %v8696
    %v8698 = vsel %vm91, %v8555, 0.0
    %v8699 = vadd.f32 %v8697, %v8698
    %v8700 = vsel %vm91, %v8560, 0.0
    %v8701 = vadd.f32 %v8699, %v8700
    %v8702 = vsel %vm91, %v8565, 0.0
    %v8703 = vadd.f32 %v8701, %v8702
    %v8704 = vsel %vm91, %v8570, 0.0
    %v8705 = vadd.f32 %v8703, %v8704
    %v8706 = vsel %vm91, %v8575, 0.0
    %v8707 = vadd.f32 %v8705, %v8706
    %v8708 = vsel %vm91, %v8580, 0.0
    %v8709 = vadd.f32 %v8707, %v8708
    %v8710 = vrot.slane %v8709, 4
    %v8711 = vadd.f32 %v8709, %v8710
    %v8712 = vrot.slane %v8711, 2
    %v8713 = vadd.f32 %v8711, %v8712
    %v8714 = vrot.slane %v8713, 1
    %v8715 = vadd.f32 %v8713, %v8714
    %v8716 = vmul.f32 %v8265, %v8265
    %v8717 = vmul.f32 %v8270, %v8270
    %v8718 = vmul.f32 %v8275, %v8275
    %v8719 = vmul.f32 %v8280, %v8280
    %v8720 = vmul.f32 %v8285, %v8285
    %v8721 = vmul.f32 %v8290, %v8290
    %v8722 = vmul.f32 %v8295, %v8295
    %v8723 = vmul.f32 %v8300, %v8300
    %v8724 = vmul.f32 %v8305, %v8305
    %v8725 = vmul.f32 %v8310, %v8310
    %v8726 = vmul.f32 %v8315, %v8315
    %v8727 = vmul.f32 %v8320, %v8320
    %v8728 = vmul.f32 %v8325, %v8325
    %v8729 = vmul.f32 %v8330, %v8330
    %v8730 = vmul.f32 %v8335, %v8335
    %v8731 = vmul.f32 %v8340, %v8340
    %v8732 = vmul.f32 %v8345, %v8345
    %v8733 = vmul.f32 %v8350, %v8350
    %v8734 = vmul.f32 %v8355, %v8355
    %v8735 = vmul.f32 %v8360, %v8360
    %v8736 = vmul.f32 %v8365, %v8365
    %v8737 = vmul.f32 %v8370, %v8370
    %v8738 = vmul.f32 %v8375, %v8375
    %v8739 = vmul.f32 %v8380, %v8380
    %v8740 = vmul.f32 %v8385, %v8385
    %v8741 = vmul.f32 %v8390, %v8390
    %v8742 = vmul.f32 %v8395, %v8395
    %v8743 = vmul.f32 %v8400, %v8400
    %v8744 = vmul.f32 %v8405, %v8405
    %v8745 = vmul.f32 %v8410, %v8410
    %v8746 = vmul.f32 %v8415, %v8415
    %v8747 = vmul.f32 %v8420, %v8420
    %v8748 = vmul.f32 %v8425, %v8425
    %v8749 = vmul.f32 %v8430, %v8430
    %v8750 = vmul.f32 %v8435, %v8435
    %v8751 = vmul.f32 %v8440, %v8440
    %v8752 = vmul.f32 %v8445, %v8445
    %v8753 = vmul.f32 %v8450, %v8450
    %v8754 = vmul.f32 %v8455, %v8455
    %v8755 = vmul.f32 %v8460, %v8460
    %v8756 = vmul.f32 %v8465, %v8465
    %v8757 = vmul.f32 %v8470, %v8470
    %v8758 = vmul.f32 %v8475, %v8475
    %v8759 = vmul.f32 %v8480, %v8480
    %v8760 = vmul.f32 %v8485, %v8485
    %v8761 = vmul.f32 %v8490, %v8490
    %v8762 = vmul.f32 %v8495, %v8495
    %v8763 = vmul.f32 %v8500, %v8500
    %v8764 = vmul.f32 %v8505, %v8505
    %v8765 = vmul.f32 %v8510, %v8510
    %v8766 = vmul.f32 %v8515, %v8515
    %v8767 = vmul.f32 %v8520, %v8520
    %v8768 = vmul.f32 %v8525, %v8525
    %v8769 = vmul.f32 %v8530, %v8530
    %v8770 = vmul.f32 %v8535, %v8535
    %v8771 = vmul.f32 %v8540, %v8540
    %v8772 = vmul.f32 %v8545, %v8545
    %v8773 = vmul.f32 %v8550, %v8550
    %v8774 = vmul.f32 %v8555, %v8555
    %v8775 = vmul.f32 %v8560, %v8560
    %v8776 = vmul.f32 %v8565, %v8565
    %v8777 = vmul.f32 %v8570, %v8570
    %v8778 = vmul.f32 %v8575, %v8575
    %v8779 = vmul.f32 %v8580, %v8580
    %v8780 = vsel %vm91, %v8716, 0.0
    %v8781 = vsel %vm91, %v8717, 0.0
    %v8782 = vadd.f32 %v8780, %v8781
    %v8783 = vsel %vm91, %v8718, 0.0
    %v8784 = vadd.f32 %v8782, %v8783
    %v8785 = vsel %vm91, %v8719, 0.0
    %v8786 = vadd.f32 %v8784, %v8785
    %v8787 = vsel %vm91, %v8720, 0.0
    %v8788 = vadd.f32 %v8786, %v8787
    %v8789 = vsel %vm91, %v8721, 0.0
    %v8790 = vadd.f32 %v8788, %v8789
    %v8791 = vsel %vm91, %v8722, 0.0
    %v8792 = vadd.f32 %v8790, %v8791
    %v8793 = vsel %vm91, %v8723, 0.0
    %v8794 = vadd.f32 %v8792, %v8793
    %v8795 = vsel %vm91, %v8724, 0.0
    %v8796 = vadd.f32 %v8794, %v8795
    %v8797 = vsel %vm91, %v8725, 0.0
    %v8798 = vadd.f32 %v8796, %v8797
    %v8799 = vsel %vm91, %v8726, 0.0
    %v8800 = vadd.f32 %v8798, %v8799
    %v8801 = vsel %vm91, %v8727, 0.0
    %v8802 = vadd.f32 %v8800, %v8801
    %v8803 = vsel %vm91, %v8728, 0.0
    %v8804 = vadd.f32 %v8802, %v8803
    %v8805 = vsel %vm91, %v8729, 0.0
    %v8806 = vadd.f32 %v8804, %v8805
    %v8807 = vsel %vm91, %v8730, 0.0
    %v8808 = vadd.f32 %v8806, %v8807
    %v8809 = vsel %vm91, %v8731, 0.0
    %v8810 = vadd.f32 %v8808, %v8809
    %v8811 = vsel %vm91, %v8732, 0.0
    %v8812 = vadd.f32 %v8810, %v8811
    %v8813 = vsel %vm91, %v8733, 0.0
    %v8814 = vadd.f32 %v8812, %v8813
    %v8815 = vsel %vm91, %v8734, 0.0
    %v8816 = vadd.f32 %v8814, %v8815
    %v8817 = vsel %vm91, %v8735, 0.0
    %v8818 = vadd.f32 %v8816, %v8817
    %v8819 = vsel %vm91, %v8736, 0.0
    %v8820 = vadd.f32 %v8818, %v8819
    %v8821 = vsel %vm91, %v8737, 0.0
    %v8822 = vadd.f32 %v8820, %v8821
    %v8823 = vsel %vm91, %v8738, 0.0
    %v8824 = vadd.f32 %v8822, %v8823
    %v8825 = vsel %vm91, %v8739, 0.0
    %v8826 = vadd.f32 %v8824, %v8825
    %v8827 = vsel %vm91, %v8740, 0.0
    %v8828 = vadd.f32 %v8826, %v8827
    %v8829 = vsel %vm91, %v8741, 0.0
    %v8830 = vadd.f32 %v8828, %v8829
    %v8831 = vsel %vm91, %v8742, 0.0
    %v8832 = vadd.f32 %v8830, %v8831
    %v8833 = vsel %vm91, %v8743, 0.0
    %v8834 = vadd.f32 %v8832, %v8833
    %v8835 = vsel %vm91, %v8744, 0.0
    %v8836 = vadd.f32 %v8834, %v8835
    %v8837 = vsel %vm91, %v8745, 0.0
    %v8838 = vadd.f32 %v8836, %v8837
    %v8839 = vsel %vm91, %v8746, 0.0
    %v8840 = vadd.f32 %v8838, %v8839
    %v8841 = vsel %vm91, %v8747, 0.0
    %v8842 = vadd.f32 %v8840, %v8841
    %v8843 = vsel %vm91, %v8748, 0.0
    %v8844 = vadd.f32 %v8842, %v8843
    %v8845 = vsel %vm91, %v8749, 0.0
    %v8846 = vadd.f32 %v8844, %v8845
    %v8847 = vsel %vm91, %v8750, 0.0
    %v8848 = vadd.f32 %v8846, %v8847
    %v8849 = vsel %vm91, %v8751, 0.0
    %v8850 = vadd.f32 %v8848, %v8849
    %v8851 = vsel %vm91, %v8752, 0.0
    %v8852 = vadd.f32 %v8850, %v8851
    %v8853 = vsel %vm91, %v8753, 0.0
    %v8854 = vadd.f32 %v8852, %v8853
    %v8855 = vsel %vm91, %v8754, 0.0
    %v8856 = vadd.f32 %v8854, %v8855
    %v8857 = vsel %vm91, %v8755, 0.0
    %v8858 = vadd.f32 %v8856, %v8857
    %v8859 = vsel %vm91, %v8756, 0.0
    %v8860 = vadd.f32 %v8858, %v8859
    %v8861 = vsel %vm91, %v8757, 0.0
    %v8862 = vadd.f32 %v8860, %v8861
    %v8863 = vsel %vm91, %v8758, 0.0
    %v8864 = vadd.f32 %v8862, %v8863
    %v8865 = vsel %vm91, %v8759, 0.0
    %v8866 = vadd.f32 %v8864, %v8865
    %v8867 = vsel %vm91, %v8760, 0.0
    %v8868 = vadd.f32 %v8866, %v8867
    %v8869 = vsel %vm91, %v8761, 0.0
    %v8870 = vadd.f32 %v8868, %v8869
    %v8871 = vsel %vm91, %v8762, 0.0
    %v8872 = vadd.f32 %v8870, %v8871
    %v8873 = vsel %vm91, %v8763, 0.0
    %v8874 = vadd.f32 %v8872, %v8873
    %v8875 = vsel %vm91, %v8764, 0.0
    %v8876 = vadd.f32 %v8874, %v8875
    %v8877 = vsel %vm91, %v8765, 0.0
    %v8878 = vadd.f32 %v8876, %v8877
    %v8879 = vsel %vm91, %v8766, 0.0
    %v8880 = vadd.f32 %v8878, %v8879
    %v8881 = vsel %vm91, %v8767, 0.0
    %v8882 = vadd.f32 %v8880, %v8881
    %v8883 = vsel %vm91, %v8768, 0.0
    %v8884 = vadd.f32 %v8882, %v8883
    %v8885 = vsel %vm91, %v8769, 0.0
    %v8886 = vadd.f32 %v8884, %v8885
    %v8887 = vsel %vm91, %v8770, 0.0
    %v8888 = vadd.f32 %v8886, %v8887
    %v8889 = vsel %vm91, %v8771, 0.0
    %v8890 = vadd.f32 %v8888, %v8889
    %v8891 = vsel %vm91, %v8772, 0.0
    %v8892 = vadd.f32 %v8890, %v8891
    %v8893 = vsel %vm91, %v8773, 0.0
    %v8894 = vadd.f32 %v8892, %v8893
    %v8895 = vsel %vm91, %v8774, 0.0
    %v8896 = vadd.f32 %v8894, %v8895
    %v8897 = vsel %vm91, %v8775, 0.0
    %v8898 = vadd.f32 %v8896, %v8897
    %v8899 = vsel %vm91, %v8776, 0.0
    %v8900 = vadd.f32 %v8898, %v8899
    %v8901 = vsel %vm91, %v8777, 0.0
    %v8902 = vadd.f32 %v8900, %v8901
    %v8903 = vsel %vm91, %v8778, 0.0
    %v8904 = vadd.f32 %v8902, %v8903
    %v8905 = vsel %vm91, %v8779, 0.0
    %v8906 = vadd.f32 %v8904, %v8905
    %v8907 = vrot.slane %v8906, 4
    %v8908 = vadd.f32 %v8906, %v8907
    %v8909 = vrot.slane %v8908, 2
    %v8910 = vadd.f32 %v8908, %v8909
    %v8911 = vrot.slane %v8910, 1
    %v8912 = vadd.f32 %v8910, %v8911
    %v8913 = vmul.f32 %v8715, 0.001953125
    %v8914 = vmul.f32 %v8912, 0.001953125
    %v8915 = vmul.f32 %v8913, %v8913
    %v8916 = vsub.f32 %v8914, %v8915
    %v8917 = vsub.f32 %v8265, %v8913
    %v8918 = vsub.f32 %v8270, %v8913
    %v8919 = vsub.f32 %v8275, %v8913
    %v8920 = vsub.f32 %v8280, %v8913
    %v8921 = vsub.f32 %v8285, %v8913
    %v8922 = vsub.f32 %v8290, %v8913
    %v8923 = vsub.f32 %v8295, %v8913
    %v8924 = vsub.f32 %v8300, %v8913
    %v8925 = vsub.f32 %v8305, %v8913
    %v8926 = vsub.f32 %v8310, %v8913
    %v8927 = vsub.f32 %v8315, %v8913
    %v8928 = vsub.f32 %v8320, %v8913
    %v8929 = vsub.f32 %v8325, %v8913
    %v8930 = vsub.f32 %v8330, %v8913
    %v8931 = vsub.f32 %v8335, %v8913
    %v8932 = vsub.f32 %v8340, %v8913
    %v8933 = vsub.f32 %v8345, %v8913
    %v8934 = vsub.f32 %v8350, %v8913
    %v8935 = vsub.f32 %v8355, %v8913
    %v8936 = vsub.f32 %v8360, %v8913
    %v8937 = vsub.f32 %v8365, %v8913
    %v8938 = vsub.f32 %v8370, %v8913
    %v8939 = vsub.f32 %v8375, %v8913
    %v8940 = vsub.f32 %v8380, %v8913
    %v8941 = vsub.f32 %v8385, %v8913
    %v8942 = vsub.f32 %v8390, %v8913
    %v8943 = vsub.f32 %v8395, %v8913
    %v8944 = vsub.f32 %v8400, %v8913
    %v8945 = vsub.f32 %v8405, %v8913
    %v8946 = vsub.f32 %v8410, %v8913
    %v8947 = vsub.f32 %v8415, %v8913
    %v8948 = vsub.f32 %v8420, %v8913
    %v8949 = vsub.f32 %v8425, %v8913
    %v8950 = vsub.f32 %v8430, %v8913
    %v8951 = vsub.f32 %v8435, %v8913
    %v8952 = vsub.f32 %v8440, %v8913
    %v8953 = vsub.f32 %v8445, %v8913
    %v8954 = vsub.f32 %v8450, %v8913
    %v8955 = vsub.f32 %v8455, %v8913
    %v8956 = vsub.f32 %v8460, %v8913
    %v8957 = vsub.f32 %v8465, %v8913
    %v8958 = vsub.f32 %v8470, %v8913
    %v8959 = vsub.f32 %v8475, %v8913
    %v8960 = vsub.f32 %v8480, %v8913
    %v8961 = vsub.f32 %v8485, %v8913
    %v8962 = vsub.f32 %v8490, %v8913
    %v8963 = vsub.f32 %v8495, %v8913
    %v8964 = vsub.f32 %v8500, %v8913
    %v8965 = vsub.f32 %v8505, %v8913
    %v8966 = vsub.f32 %v8510, %v8913
    %v8967 = vsub.f32 %v8515, %v8913
    %v8968 = vsub.f32 %v8520, %v8913
    %v8969 = vsub.f32 %v8525, %v8913
    %v8970 = vsub.f32 %v8530, %v8913
    %v8971 = vsub.f32 %v8535, %v8913
    %v8972 = vsub.f32 %v8540, %v8913
    %v8973 = vsub.f32 %v8545, %v8913
    %v8974 = vsub.f32 %v8550, %v8913
    %v8975 = vsub.f32 %v8555, %v8913
    %v8976 = vsub.f32 %v8560, %v8913
    %v8977 = vsub.f32 %v8565, %v8913
    %v8978 = vsub.f32 %v8570, %v8913
    %v8979 = vsub.f32 %v8575, %v8913
    %v8980 = vsub.f32 %v8580, %v8913
    %v8982 = vlaneseq
    %v8983 = vshrl.u32 %v8982, 7
    %v8984 = vsub.s32 0, %v8983
    %v8985 = vrot.slane %v4868, %v8984
    %v8987 = vmul.f32 %v8985, %v8917
    %v8988 = vmul.f32 %v8985, %v8918
    %v8989 = vmul.f32 %v8985, %v8919
    %v8990 = vmul.f32 %v8985, %v8920
    %v8991 = vmul.f32 %v8985, %v8921
    %v8992 = vmul.f32 %v8985, %v8922
    %v8993 = vmul.f32 %v8985, %v8923
    %v8994 = vmul.f32 %v8985, %v8924
    %v8995 = vmul.f32 %v8985, %v8925
    %v8996 = vmul.f32 %v8985, %v8926
    %v8997 = vmul.f32 %v8985, %v8927
    %v8998 = vmul.f32 %v8985, %v8928
    %v8999 = vmul.f32 %v8985, %v8929
    %v9000 = vmul.f32 %v8985, %v8930
    %v9001 = vmul.f32 %v8985, %v8931
    %v9002 = vmul.f32 %v8985, %v8932
    %v9003 = vmul.f32 %v8985, %v8933
    %v9004 = vmul.f32 %v8985, %v8934
    %v9005 = vmul.f32 %v8985, %v8935
    %v9006 = vmul.f32 %v8985, %v8936
    %v9007 = vmul.f32 %v8985, %v8937
    %v9008 = vmul.f32 %v8985, %v8938
    %v9009 = vmul.f32 %v8985, %v8939
    %v9010 = vmul.f32 %v8985, %v8940
    %v9011 = vmul.f32 %v8985, %v8941
    %v9012 = vmul.f32 %v8985, %v8942
    %v9013 = vmul.f32 %v8985, %v8943
    %v9014 = vmul.f32 %v8985, %v8944
    %v9015 = vmul.f32 %v8985, %v8945
    %v9016 = vmul.f32 %v8985, %v8946
    %v9017 = vmul.f32 %v8985, %v8947
    %v9018 = vmul.f32 %v8985, %v8948
    %v9019 = vmul.f32 %v8985, %v8949
    %v9020 = vmul.f32 %v8985, %v8950
    %v9021 = vmul.f32 %v8985, %v8951
    %v9022 = vmul.f32 %v8985, %v8952
    %v9023 = vmul.f32 %v8985, %v8953
    %v9024 = vmul.f32 %v8985, %v8954
    %v9025 = vmul.f32 %v8985, %v8955
    %v9026 = vmul.f32 %v8985, %v8956
    %v9027 = vmul.f32 %v8985, %v8957
    %v9028 = vmul.f32 %v8985, %v8958
    %v9029 = vmul.f32 %v8985, %v8959
    %v9030 = vmul.f32 %v8985, %v8960
    %v9031 = vmul.f32 %v8985, %v8961
    %v9032 = vmul.f32 %v8985, %v8962
    %v9033 = vmul.f32 %v8985, %v8963
    %v9034 = vmul.f32 %v8985, %v8964
    %v9035 = vmul.f32 %v8985, %v8965
    %v9036 = vmul.f32 %v8985, %v8966
    %v9037 = vmul.f32 %v8985, %v8967
    %v9038 = vmul.f32 %v8985, %v8968
    %v9039 = vmul.f32 %v8985, %v8969
    %v9040 = vmul.f32 %v8985, %v8970
    %v9041 = vmul.f32 %v8985, %v8971
    %v9042 = vmul.f32 %v8985, %v8972
    %v9043 = vmul.f32 %v8985, %v8973
    %v9044 = vmul.f32 %v8985, %v8974
    %v9045 = vmul.f32 %v8985, %v8975
    %v9046 = vmul.f32 %v8985, %v8976
    %v9047 = vmul.f32 %v8985, %v8977
    %v9048 = vmul.f32 %v8985, %v8978
    %v9049 = vmul.f32 %v8985, %v8979
    %v9050 = vmul.f32 %v8985, %v8980
    %v9051 = vadd.f32 %v8916, 1e-05
    %v9052 = vrsqrt.pop %v9051
    %v9053 = vmul.f32 %v8987, %v9052
    %v9054 = vmul.f32 %v8988, %v9052
    %v9055 = vmul.f32 %v8989, %v9052
    %v9056 = vmul.f32 %v8990, %v9052
    %v9057 = vmul.f32 %v8991, %v9052
    %v9058 = vmul.f32 %v8992, %v9052
    %v9059 = vmul.f32 %v8993, %v9052
    %v9060 = vmul.f32 %v8994, %v9052
    %v9061 = vmul.f32 %v8995, %v9052
    %v9062 = vmul.f32 %v8996, %v9052
    %v9063 = vmul.f32 %v8997, %v9052
    %v9064 = vmul.f32 %v8998, %v9052
    %v9065 = vmul.f32 %v8999, %v9052
    %v9066 = vmul.f32 %v9000, %v9052
    %v9067 = vmul.f32 %v9001, %v9052
    %v9068 = vmul.f32 %v9002, %v9052
    %v9069 = vmul.f32 %v9003, %v9052
    %v9070 = vmul.f32 %v9004, %v9052
    %v9071 = vmul.f32 %v9005, %v9052
    %v9072 = vmul.f32 %v9006, %v9052
    %v9073 = vmul.f32 %v9007, %v9052
    %v9074 = vmul.f32 %v9008, %v9052
    %v9075 = vmul.f32 %v9009, %v9052
    %v9076 = vmul.f32 %v9010, %v9052
    %v9077 = vmul.f32 %v9011, %v9052
    %v9078 = vmul.f32 %v9012, %v9052
    %v9079 = vmul.f32 %v9013, %v9052
    %v9080 = vmul.f32 %v9014, %v9052
    %v9081 = vmul.f32 %v9015, %v9052
    %v9082 = vmul.f32 %v9016, %v9052
    %v9083 = vmul.f32 %v9017, %v9052
    %v9084 = vmul.f32 %v9018, %v9052
    %v9085 = vmul.f32 %v9019, %v9052
    %v9086 = vmul.f32 %v9020, %v9052
    %v9087 = vmul.f32 %v9021, %v9052
    %v9088 = vmul.f32 %v9022, %v9052
    %v9089 = vmul.f32 %v9023, %v9052
    %v9090 = vmul.f32 %v9024, %v9052
    %v9091 = vmul.f32 %v9025, %v9052
    %v9092 = vmul.f32 %v9026, %v9052
    %v9093 = vmul.f32 %v9027, %v9052
    %v9094 = vmul.f32 %v9028, %v9052
    %v9095 = vmul.f32 %v9029, %v9052
    %v9096 = vmul.f32 %v9030, %v9052
    %v9097 = vmul.f32 %v9031, %v9052
    %v9098 = vmul.f32 %v9032, %v9052
    %v9099 = vmul.f32 %v9033, %v9052
    %v9100 = vmul.f32 %v9034, %v9052
    %v9101 = vmul.f32 %v9035, %v9052
    %v9102 = vmul.f32 %v9036, %v9052
    %v9103 = vmul.f32 %v9037, %v9052
    %v9104 = vmul.f32 %v9038, %v9052
    %v9105 = vmul.f32 %v9039, %v9052
    %v9106 = vmul.f32 %v9040, %v9052
    %v9107 = vmul.f32 %v9041, %v9052
    %v9108 = vmul.f32 %v9042, %v9052
    %v9109 = vmul.f32 %v9043, %v9052
    %v9110 = vmul.f32 %v9044, %v9052
    %v9111 = vmul.f32 %v9045, %v9052
    %v9112 = vmul.f32 %v9046, %v9052
    %v9113 = vmul.f32 %v9047, %v9052
    %v9114 = vmul.f32 %v9048, %v9052
    %v9115 = vmul.f32 %v9049, %v9052
    %v9116 = vmul.f32 %v9050, %v9052
    %v9118 = vlaneseq
    %v9119 = vshrl.u32 %v9118, 7
    %v9120 = vsub.s32 0, %v9119
    %v9121 = vrot.slane %v4869, %v9120
    %v9123 = vadd.f32 %v9053, %v9121
    %v9124 = vadd.f32 %v9054, %v9121
    %v9125 = vadd.f32 %v9055, %v9121
    %v9126 = vadd.f32 %v9056, %v9121
    %v9127 = vadd.f32 %v9057, %v9121
    %v9128 = vadd.f32 %v9058, %v9121
    %v9129 = vadd.f32 %v9059, %v9121
    %v9130 = vadd.f32 %v9060, %v9121
    %v9131 = vadd.f32 %v9061, %v9121
    %v9132 = vadd.f32 %v9062, %v9121
    %v9133 = vadd.f32 %v9063, %v9121
    %v9134 = vadd.f32 %v9064, %v9121
    %v9135 = vadd.f32 %v9065, %v9121
    %v9136 = vadd.f32 %v9066, %v9121
    %v9137 = vadd.f32 %v9067, %v9121
    %v9138 = vadd.f32 %v9068, %v9121
    %v9139 = vadd.f32 %v9069, %v9121
    %v9140 = vadd.f32 %v9070, %v9121
    %v9141 = vadd.f32 %v9071, %v9121
    %v9142 = vadd.f32 %v9072, %v9121
    %v9143 = vadd.f32 %v9073, %v9121
    %v9144 = vadd.f32 %v9074, %v9121
    %v9145 = vadd.f32 %v9075, %v9121
    %v9146 = vadd.f32 %v9076, %v9121
    %v9147 = vadd.f32 %v9077, %v9121
    %v9148 = vadd.f32 %v9078, %v9121
    %v9149 = vadd.f32 %v9079, %v9121
    %v9150 = vadd.f32 %v9080, %v9121
    %v9151 = vadd.f32 %v9081, %v9121
    %v9152 = vadd.f32 %v9082, %v9121
    %v9153 = vadd.f32 %v9083, %v9121
    %v9154 = vadd.f32 %v9084, %v9121
    %v9155 = vadd.f32 %v9085, %v9121
    %v9156 = vadd.f32 %v9086, %v9121
    %v9157 = vadd.f32 %v9087, %v9121
    %v9158 = vadd.f32 %v9088, %v9121
    %v9159 = vadd.f32 %v9089, %v9121
    %v9160 = vadd.f32 %v9090, %v9121
    %v9161 = vadd.f32 %v9091, %v9121
    %v9162 = vadd.f32 %v9092, %v9121
    %v9163 = vadd.f32 %v9093, %v9121
    %v9164 = vadd.f32 %v9094, %v9121
    %v9165 = vadd.f32 %v9095, %v9121
    %v9166 = vadd.f32 %v9096, %v9121
    %v9167 = vadd.f32 %v9097, %v9121
    %v9168 = vadd.f32 %v9098, %v9121
    %v9169 = vadd.f32 %v9099, %v9121
    %v9170 = vadd.f32 %v9100, %v9121
    %v9171 = vadd.f32 %v9101, %v9121
    %v9172 = vadd.f32 %v9102, %v9121
    %v9173 = vadd.f32 %v9103, %v9121
    %v9174 = vadd.f32 %v9104, %v9121
    %v9175 = vadd.f32 %v9105, %v9121
    %v9176 = vadd.f32 %v9106, %v9121
    %v9177 = vadd.f32 %v9107, %v9121
    %v9178 = vadd.f32 %v9108, %v9121
    %v9179 = vadd.f32 %v9109, %v9121
    %v9180 = vadd.f32 %v9110, %v9121
    %v9181 = vadd.f32 %v9111, %v9121
    %v9182 = vadd.f32 %v9112, %v9121
    %v9183 = vadd.f32 %v9113, %v9121
    %v9184 = vadd.f32 %v9114, %v9121
    %v9185 = vadd.f32 %v9115, %v9121
    %v9186 = vadd.f32 %v9116, %v9121
    %v9187 = vmul.f32 %v27, 0.75
    %v9188 = vmul.f32 %v28, 0.75
    %v9189 = vmul.f32 %v29, 0.75
    %v9190 = vmul.f32 %v30, 0.75
    %v9191 = vmul.f32 %v31, 0.75
    %v9192 = vmul.f32 %v32, 0.75
    %v9193 = vmul.f32 %v33, 0.75
    %v9194 = vmul.f32 %v34, 0.75
    %v9195 = vmul.f32 %v35, 0.75
    %v9196 = vmul.f32 %v36, 0.75
    %v9197 = vmul.f32 %v37, 0.75
    %v9198 = vmul.f32 %v38, 0.75
    %v9199 = vmul.f32 %v39, 0.75
    %v9200 = vmul.f32 %v40, 0.75
    %v9201 = vmul.f32 %v41, 0.75
    %v9202 = vmul.f32 %v42, 0.75
    %v9203 = vmul.f32 %v43, 0.75
    %v9204 = vmul.f32 %v44, 0.75
    %v9205 = vmul.f32 %v45, 0.75
    %v9206 = vmul.f32 %v46, 0.75
    %v9207 = vmul.f32 %v47, 0.75
    %v9208 = vmul.f32 %v48, 0.75
    %v9209 = vmul.f32 %v49, 0.75
    %v9210 = vmul.f32 %v50, 0.75
    %v9211 = vmul.f32 %v51, 0.75
    %v9212 = vmul.f32 %v52, 0.75
    %v9213 = vmul.f32 %v53, 0.75
    %v9214 = vmul.f32 %v54, 0.75
    %v9215 = vmul.f32 %v55, 0.75
    %v9216 = vmul.f32 %v56, 0.75
    %v9217 = vmul.f32 %v57, 0.75
    %v9218 = vmul.f32 %v58, 0.75
    %v9219 = vmul.f32 %v59, 0.75
    %v9220 = vmul.f32 %v60, 0.75
    %v9221 = vmul.f32 %v61, 0.75
    %v9222 = vmul.f32 %v62, 0.75
    %v9223 = vmul.f32 %v63, 0.75
    %v9224 = vmul.f32 %v64, 0.75
    %v9225 = vmul.f32 %v65, 0.75
    %v9226 = vmul.f32 %v66, 0.75
    %v9227 = vmul.f32 %v67, 0.75
    %v9228 = vmul.f32 %v68, 0.75
    %v9229 = vmul.f32 %v69, 0.75
    %v9230 = vmul.f32 %v70, 0.75
    %v9231 = vmul.f32 %v71, 0.75
    %v9232 = vmul.f32 %v72, 0.75
    %v9233 = vmul.f32 %v73, 0.75
    %v9234 = vmul.f32 %v74, 0.75
    %v9235 = vmul.f32 %v75, 0.75
    %v9236 = vmul.f32 %v76, 0.75
    %v9237 = vmul.f32 %v77, 0.75
    %v9238 = vmul.f32 %v78, 0.75
    %v9239 = vmul.f32 %v79, 0.75
    %v9240 = vmul.f32 %v80, 0.75
    %v9241 = vmul.f32 %v81, 0.75
    %v9242 = vmul.f32 %v82, 0.75
    %v9243 = vmul.f32 %v83, 0.75
    %v9244 = vmul.f32 %v84, 0.75
    %v9245 = vmul.f32 %v85, 0.75
    %v9246 = vmul.f32 %v86, 0.75
    %v9247 = vmul.f32 %v87, 0.75
    %v9248 = vmul.f32 %v88, 0.75
    %v9249 = vmul.f32 %v89, 0.75
    %v9250 = vmul.f32 %v90, 0.75
    %v9251 = vadd.f32 %v9123, %v9187
    %v9252 = vadd.f32 %v9124, %v9188
    %v9253 = vadd.f32 %v9125, %v9189
    %v9254 = vadd.f32 %v9126, %v9190
    %v9255 = vadd.f32 %v9127, %v9191
    %v9256 = vadd.f32 %v9128, %v9192
    %v9257 = vadd.f32 %v9129, %v9193
    %v9258 = vadd.f32 %v9130, %v9194
    %v9259 = vadd.f32 %v9131, %v9195
    %v9260 = vadd.f32 %v9132, %v9196
    %v9261 = vadd.f32 %v9133, %v9197
    %v9262 = vadd.f32 %v9134, %v9198
    %v9263 = vadd.f32 %v9135, %v9199
    %v9264 = vadd.f32 %v9136, %v9200
    %v9265 = vadd.f32 %v9137, %v9201
    %v9266 = vadd.f32 %v9138, %v9202
    %v9267 = vadd.f32 %v9139, %v9203
    %v9268 = vadd.f32 %v9140, %v9204
    %v9269 = vadd.f32 %v9141, %v9205
    %v9270 = vadd.f32 %v9142, %v9206
    %v9271 = vadd.f32 %v9143, %v9207
    %v9272 = vadd.f32 %v9144, %v9208
    %v9273 = vadd.f32 %v9145, %v9209
    %v9274 = vadd.f32 %v9146, %v9210
    %v9275 = vadd.f32 %v9147, %v9211
    %v9276 = vadd.f32 %v9148, %v9212
    %v9277 = vadd.f32 %v9149, %v9213
    %v9278 = vadd.f32 %v9150, %v9214
    %v9279 = vadd.f32 %v9151, %v9215
    %v9280 = vadd.f32 %v9152, %v9216
    %v9281 = vadd.f32 %v9153, %v9217
    %v9282 = vadd.f32 %v9154, %v9218
    %v9283 = vadd.f32 %v9155, %v9219
    %v9284 = vadd.f32 %v9156, %v9220
    %v9285 = vadd.f32 %v9157, %v9221
    %v9286 = vadd.f32 %v9158, %v9222
    %v9287 = vadd.f32 %v9159, %v9223
    %v9288 = vadd.f32 %v9160, %v9224
    %v9289 = vadd.f32 %v9161, %v9225
    %v9290 = vadd.f32 %v9162, %v9226
    %v9291 = vadd.f32 %v9163, %v9227
    %v9292 = vadd.f32 %v9164, %v9228
    %v9293 = vadd.f32 %v9165, %v9229
    %v9294 = vadd.f32 %v9166, %v9230
    %v9295 = vadd.f32 %v9167, %v9231
    %v9296 = vadd.f32 %v9168, %v9232
    %v9297 = vadd.f32 %v9169, %v9233
    %v9298 = vadd.f32 %v9170, %v9234
    %v9299 = vadd.f32 %v9171, %v9235
    %v9300 = vadd.f32 %v9172, %v9236
    %v9301 = vadd.f32 %v9173, %v9237
    %v9302 = vadd.f32 %v9174, %v9238
    %v9303 = vadd.f32 %v9175, %v9239
    %v9304 = vadd.f32 %v9176, %v9240
    %v9305 = vadd.f32 %v9177, %v9241
    %v9306 = vadd.f32 %v9178, %v9242
    %v9307 = vadd.f32 %v9179, %v9243
    %v9308 = vadd.f32 %v9180, %v9244
    %v9309 = vadd.f32 %v9181, %v9245
    %v9310 = vadd.f32 %v9182, %v9246
    %v9311 = vadd.f32 %v9183, %v9247
    %v9312 = vadd.f32 %v9184, %v9248
    %v9313 = vadd.f32 %v9185, %v9249
    %v9314 = vadd.f32 %v9186, %v9250
    %v9347 = vrot.slane %v9253, 7
    %vm9348 = vcmask 1041409
    %v9349 = vsel %vm9348, %v9347, %v9251
    %v9350 = vrot.slane %v9255, 6
    %vm9351 = vcmask 1042434
    %v9352 = vsel %vm9351, %v9350, %v9349
    %v9353 = vrot.slane %v9257, 5
    %vm9354 = vcmask 1043459
    %v9355 = vsel %vm9354, %v9353, %v9352
    %v9356 = vrot.slane %v9259, 4
    %vm9357 = vcmask 1044484
    %v9358 = vsel %vm9357, %v9356, %v9355
    %v9359 = vrot.slane %v9261, 3
    %vm9360 = vcmask 1045509
    %v9361 = vsel %vm9360, %v9359, %v9358
    %v9362 = vrot.slane %v9263, 2
    %vm9363 = vcmask 1046534
    %v9364 = vsel %vm9363, %v9362, %v9361
    %v9365 = vrot.slane %v9265, 1
    %vm9366 = vcmask 1047559
    %v9367 = vsel %vm9366, %v9365, %v9364
    %v9368 = vrot.slane %v9269, 7
    %v9369 = vsel %vm9348, %v9368, %v9267
    %v9370 = vrot.slane %v9271, 6
    %v9371 = vsel %vm9351, %v9370, %v9369
    %v9372 = vrot.slane %v9273, 5
    %v9373 = vsel %vm9354, %v9372, %v9371
    %v9374 = vrot.slane %v9275, 4
    %v9375 = vsel %vm9357, %v9374, %v9373
    %v9376 = vrot.slane %v9277, 3
    %v9377 = vsel %vm9360, %v9376, %v9375
    %v9378 = vrot.slane %v9279, 2
    %v9379 = vsel %vm9363, %v9378, %v9377
    %v9380 = vrot.slane %v9281, 1
    %v9381 = vsel %vm9366, %v9380, %v9379
    %v9382 = vrot.slane %v9285, 7
    %v9383 = vsel %vm9348, %v9382, %v9283
    %v9384 = vrot.slane %v9287, 6
    %v9385 = vsel %vm9351, %v9384, %v9383
    %v9386 = vrot.slane %v9289, 5
    %v9387 = vsel %vm9354, %v9386, %v9385
    %v9388 = vrot.slane %v9291, 4
    %v9389 = vsel %vm9357, %v9388, %v9387
    %v9390 = vrot.slane %v9293, 3
    %v9391 = vsel %vm9360, %v9390, %v9389
    %v9392 = vrot.slane %v9295, 2
    %v9393 = vsel %vm9363, %v9392, %v9391
    %v9394 = vrot.slane %v9297, 1
    %v9395 = vsel %vm9366, %v9394, %v9393
    %v9396 = vrot.slane %v9301, 7
    %v9397 = vsel %vm9348, %v9396, %v9299
    %v9398 = vrot.slane %v9303, 6
    %v9399 = vsel %vm9351, %v9398, %v9397
    %v9400 = vrot.slane %v9305, 5
    %v9401 = vsel %vm9354, %v9400, %v9399
    %v9402 = vrot.slane %v9307, 4
    %v9403 = vsel %vm9357, %v9402, %v9401
    %v9404 = vrot.slane %v9309, 3
    %v9405 = vsel %vm9360, %v9404, %v9403
    %v9406 = vrot.slane %v9311, 2
    %v9407 = vsel %vm9363, %v9406, %v9405
    %v9408 = vrot.slane %v9313, 1
    %v9409 = vsel %vm9366, %v9408, %v9407
    %9414 = vst.msk [vmem:[#allocation3] sm:$0xff] %vm91, %v9367
    %9415 = vst.msk [vmem:[#allocation3 + $0x8] sm:$0xff] %vm91, %v9381
    %9416 = vst.msk [vmem:[#allocation3 + $0x10] sm:$0xff] %vm91, %v9395
    %9417 = vst.msk [vmem:[#allocation3 + $0x18] sm:$0xff] %vm91, %v9409
    %v9418 = vsel %vm9351, %v9347, %v9251
    %v9419 = vsel %vm9354, %v9350, %v9418
    %v9420 = vsel %vm9357, %v9353, %v9419
    %v9421 = vsel %vm9360, %v9356, %v9420
    %v9422 = vsel %vm9363, %v9359, %v9421
    %v9423 = vsel %vm9366, %v9362, %v9422
    %v9424 = vsel %vm9348, %v9267, %v9365
    %v9425 = vsel %vm9351, %v9368, %v9424
    %v9426 = vsel %vm9354, %v9370, %v9425
    %v9427 = vsel %vm9357, %v9372, %v9426
    %v9428 = vsel %vm9360, %v9374, %v9427
    %v9429 = vsel %vm9363, %v9376, %v9428
    %v9430 = vsel %vm9366, %v9378, %v9429
    %v9431 = vsel %vm9348, %v9283, %v9380
    %v9432 = vsel %vm9351, %v9382, %v9431
    %v9433 = vsel %vm9354, %v9384, %v9432
    %v9434 = vsel %vm9357, %v9386, %v9433
    %v9435 = vsel %vm9360, %v9388, %v9434
    %v9436 = vsel %vm9363, %v9390, %v9435
    %v9437 = vsel %vm9366, %v9392, %v9436
    %v9438 = vsel %vm9348, %v9299, %v9394
    %v9439 = vsel %vm9351, %v9396, %v9438
    %v9440 = vsel %vm9354, %v9398, %v9439
    %v9441 = vsel %vm9357, %v9400, %v9440
    %v9442 = vsel %vm9360, %v9402, %v9441
    %v9443 = vsel %vm9363, %v9404, %v9442
    %v9444 = vsel %vm9366, %v9406, %v9443
    %9445 = vrot.lane.b32.xlu0 %v9423, 8
    %v9446 = vpop.permute.xlu0 %9445
    %9447 = vrot.lane.b32.xlu0 %v9430, 8
    %v9448 = vpop.permute.xlu0 %9447
    %9449 = vrot.lane.b32.xlu0 %v9437, 8
    %v9450 = vpop.permute.xlu0 %9449
    %9451 = vrot.lane.b32.xlu0 %v9444, 8
    %v9452 = vpop.permute.xlu0 %9451
    %9453 = vrot.lane.b32.xlu0 %v9408, 8
    %v9454 = vpop.permute.xlu0 %9453
    %vm9460 = vcmask 130113
    %9461 = vst.msk [vmem:[#allocation3 - $0x1] sm:$0xfe] %vm9460, %v9446
    %vm9462 = vcmask 130112
    %9463 = vst.msk [vmem:[#allocation3 + $0x7] sm:$0xff] %vm9462, %v9448
    %9464 = vst.msk [vmem:[#allocation3 + $0xf] sm:$0xff] %vm9462, %v9450
    %9465 = vst.msk [vmem:[#allocation3 + $0x17] sm:$0xff] %vm9462, %v9452
    %vm9466 = vcmask 122944
    %9467 = vst.msk [vmem:[#allocation3 + $0x1f] sm:$0x1] %vm9466, %v9454
    %v9468 = vsel %vm9354, %v9347, %v9251
    %v9469 = vsel %vm9357, %v9350, %v9468
    %v9470 = vsel %vm9360, %v9353, %v9469
    %v9471 = vsel %vm9363, %v9356, %v9470
    %v9472 = vsel %vm9366, %v9359, %v9471
    %v9473 = vsel %vm9348, %v9365, %v9362
    %v9474 = vsel %vm9351, %v9267, %v9473
    %v9475 = vsel %vm9354, %v9368, %v9474
    %v9476 = vsel %vm9357, %v9370, %v9475
    %v9477 = vsel %vm9360, %v9372, %v9476
    %v9478 = vsel %vm9363, %v9374, %v9477
    %v9479 = vsel %vm9366, %v9376, %v9478
    %v9480 = vsel %vm9348, %v9380, %v9378
    %v9481 = vsel %vm9351, %v9283, %v9480
    %v9482 = vsel %vm9354, %v9382, %v9481
    %v9483 = vsel %vm9357, %v9384, %v9482
    %v9484 = vsel %vm9360, %v9386, %v9483
    %v9485 = vsel %vm9363, %v9388, %v9484
    %v9486 = vsel %vm9366, %v9390, %v9485
    %v9487 = vsel %vm9348, %v9394, %v9392
    %v9488 = vsel %vm9351, %v9299, %v9487
    %v9489 = vsel %vm9354, %v9396, %v9488
    %v9490 = vsel %vm9357, %v9398, %v9489
    %v9491 = vsel %vm9360, %v9400, %v9490
    %v9492 = vsel %vm9363, %v9402, %v9491
    %v9493 = vsel %vm9366, %v9404, %v9492
    %v9494 = vsel %vm9348, %v9408, %v9406
    %9495 = vrot.lane.b32.xlu0 %v9472, 16
    %v9496 = vpop.permute.xlu0 %9495
    %9497 = vrot.lane.b32.xlu0 %v9479, 16
    %v9498 = vpop.permute.xlu0 %9497
    %9499 = vrot.lane.b32.xlu0 %v9486, 16
    %v9500 = vpop.permute.xlu0 %9499
    %9501 = vrot.lane.b32.xlu0 %v9493, 16
    %v9502 = vpop.permute.xlu0 %9501
    %9503 = vrot.lane.b32.xlu0 %v9494, 16
    %v9504 = vpop.permute.xlu0 %9503
    %vm9510 = vcmask 195714
    %9511 = vst.msk [vmem:[#allocation3 - $0x2] sm:$0xfc] %vm9510, %v9496
    %vm9512 = vcmask 195712
    %9513 = vst.msk [vmem:[#allocation3 + $0x6] sm:$0xff] %vm9512, %v9498
    %9514 = vst.msk [vmem:[#allocation3 + $0xe] sm:$0xff] %vm9512, %v9500
    %9515 = vst.msk [vmem:[#allocation3 + $0x16] sm:$0xff] %vm9512, %v9502
    %vm9516 = vcmask 189568
    %9517 = vst.msk [vmem:[#allocation3 + $0x1e] sm:$0x3] %vm9516, %v9504
    %v9518 = vsel %vm9357, %v9347, %v9251
    %v9519 = vsel %vm9360, %v9350, %v9518
    %v9520 = vsel %vm9363, %v9353, %v9519
    %v9521 = vsel %vm9366, %v9356, %v9520
    %v9522 = vsel %vm9348, %v9362, %v9359
    %v9523 = vsel %vm9351, %v9365, %v9522
    %v9524 = vsel %vm9354, %v9267, %v9523
    %v9525 = vsel %vm9357, %v9368, %v9524
    %v9526 = vsel %vm9360, %v9370, %v9525
    %v9527 = vsel %vm9363, %v9372, %v9526
    %v9528 = vsel %vm9366, %v9374, %v9527
    %v9529 = vsel %vm9348, %v9378, %v9376
    %v9530 = vsel %vm9351, %v9380, %v9529
    %v9531 = vsel %vm9354, %v9283, %v9530
    %v9532 = vsel %vm9357, %v9382, %v9531
    %v9533 = vsel %vm9360, %v9384, %v9532
    %v9534 = vsel %vm9363, %v9386, %v9533
    %v9535 = vsel %vm9366, %v9388, %v9534
    %v9536 = vsel %vm9348, %v9392, %v9390
    %v9537 = vsel %vm9351, %v9394, %v9536
    %v9538 = vsel %vm9354, %v9299, %v9537
    %v9539 = vsel %vm9357, %v9396, %v9538
    %v9540 = vsel %vm9360, %v9398, %v9539
    %v9541 = vsel %vm9363, %v9400, %v9540
    %v9542 = vsel %vm9366, %v9402, %v9541
    %v9543 = vsel %vm9348, %v9406, %v9404
    %v9544 = vsel %vm9351, %v9408, %v9543
    %9545 = vrot.lane.b32.xlu0 %v9521, 24
    %v9546 = vpop.permute.xlu0 %9545
    %9547 = vrot.lane.b32.xlu0 %v9528, 24
    %v9548 = vpop.permute.xlu0 %9547
    %9549 = vrot.lane.b32.xlu0 %v9535, 24
    %v9550 = vpop.permute.xlu0 %9549
    %9551 = vrot.lane.b32.xlu0 %v9542, 24
    %v9552 = vpop.permute.xlu0 %9551
    %9553 = vrot.lane.b32.xlu0 %v9544, 24
    %v9554 = vpop.permute.xlu0 %9553
    %vm9560 = vcmask 261315
    %9561 = vst.msk [vmem:[#allocation3 - $0x3] sm:$0xf8] %vm9560, %v9546
    %vm9562 = vcmask 261312
    %9563 = vst.msk [vmem:[#allocation3 + $0x5] sm:$0xff] %vm9562, %v9548
    %9564 = vst.msk [vmem:[#allocation3 + $0xd] sm:$0xff] %vm9562, %v9550
    %9565 = vst.msk [vmem:[#allocation3 + $0x15] sm:$0xff] %vm9562, %v9552
    %vm9566 = vcmask 256192
    %9567 = vst.msk [vmem:[#allocation3 + $0x1d] sm:$0x7] %vm9566, %v9554
    %v9568 = vsel %vm9360, %v9347, %v9251
    %v9569 = vsel %vm9363, %v9350, %v9568
    %v9570 = vsel %vm9366, %v9353, %v9569
    %v9571 = vsel %vm9348, %v9359, %v9356
    %v9572 = vsel %vm9351, %v9362, %v9571
    %v9573 = vsel %vm9354, %v9365, %v9572
    %v9574 = vsel %vm9357, %v9267, %v9573
    %v9575 = vsel %vm9360, %v9368, %v9574
    %v9576 = vsel %vm9363, %v9370, %v9575
    %v9577 = vsel %vm9366, %v9372, %v9576
    %v9578 = vsel %vm9348, %v9376, %v9374
    %v9579 = vsel %vm9351, %v9378, %v9578
    %v9580 = vsel %vm9354, %v9380, %v9579
    %v9581 = vsel %vm9357, %v9283, %v9580
    %v9582 = vsel %vm9360, %v9382, %v9581
    %v9583 = vsel %vm9363, %v9384, %v9582
    %v9584 = vsel %vm9366, %v9386, %v9583
    %v9585 = vsel %vm9348, %v9390, %v9388
    %v9586 = vsel %vm9351, %v9392, %v9585
    %v9587 = vsel %vm9354, %v9394, %v9586
    %v9588 = vsel %vm9357, %v9299, %v9587
    %v9589 = vsel %vm9360, %v9396, %v9588
    %v9590 = vsel %vm9363, %v9398, %v9589
    %v9591 = vsel %vm9366, %v9400, %v9590
    %v9592 = vsel %vm9348, %v9404, %v9402
    %v9593 = vsel %vm9351, %v9406, %v9592
    %v9594 = vsel %vm9354, %v9408, %v9593
    %9595 = vrot.lane.b32.xlu0 %v9570, 32
    %v9596 = vpop.permute.xlu0 %9595
    %9597 = vrot.lane.b32.xlu0 %v9577, 32
    %v9598 = vpop.permute.xlu0 %9597
    %9599 = vrot.lane.b32.xlu0 %v9584, 32
    %v9600 = vpop.permute.xlu0 %9599
    %9601 = vrot.lane.b32.xlu0 %v9591, 32
    %v9602 = vpop.permute.xlu0 %9601
    %9603 = vrot.lane.b32.xlu0 %v9594, 32
    %v9604 = vpop.permute.xlu0 %9603
    %vm9610 = vcmask 326916
    %9611 = vst.msk [vmem:[#allocation3 - $0x4] sm:$0xf0] %vm9610, %v9596
    %vm9612 = vcmask 326912
    %9613 = vst.msk [vmem:[#allocation3 + $0x4] sm:$0xff] %vm9612, %v9598
    %9614 = vst.msk [vmem:[#allocation3 + $0xc] sm:$0xff] %vm9612, %v9600
    %9615 = vst.msk [vmem:[#allocation3 + $0x14] sm:$0xff] %vm9612, %v9602
    %vm9616 = vcmask 322816
    %9617 = vst.msk [vmem:[#allocation3 + $0x1c] sm:$0xf] %vm9616, %v9604
    %v9618 = vsel %vm9363, %v9347, %v9251
    %v9619 = vsel %vm9366, %v9350, %v9618
    %v9620 = vsel %vm9348, %v9356, %v9353
    %v9621 = vsel %vm9351, %v9359, %v9620
    %v9622 = vsel %vm9354, %v9362, %v9621
    %v9623 = vsel %vm9357, %v9365, %v9622
    %v9624 = vsel %vm9360, %v9267, %v9623
    %v9625 = vsel %vm9363, %v9368, %v9624
    %v9626 = vsel %vm9366, %v9370, %v9625
    %v9627 = vsel %vm9348, %v9374, %v9372
    %v9628 = vsel %vm9351, %v9376, %v9627
    %v9629 = vsel %vm9354, %v9378, %v9628
    %v9630 = vsel %vm9357, %v9380, %v9629
    %v9631 = vsel %vm9360, %v9283, %v9630
    %v9632 = vsel %vm9363, %v9382, %v9631
    %v9633 = vsel %vm9366, %v9384, %v9632
    %v9634 = vsel %vm9348, %v9388, %v9386
    %v9635 = vsel %vm9351, %v9390, %v9634
    %v9636 = vsel %vm9354, %v9392, %v9635
    %v9637 = vsel %vm9357, %v9394, %v9636
    %v9638 = vsel %vm9360, %v9299, %v9637
    %v9639 = vsel %vm9363, %v9396, %v9638
    %v9640 = vsel %vm9366, %v9398, %v9639
    %v9641 = vsel %vm9348, %v9402, %v9400
    %v9642 = vsel %vm9351, %v9404, %v9641
    %v9643 = vsel %vm9354, %v9406, %v9642
    %v9644 = vsel %vm9357, %v9408, %v9643
    %9645 = vrot.lane.b32.xlu0 %v9619, 40
    %v9646 = vpop.permute.xlu0 %9645
    %9647 = vrot.lane.b32.xlu0 %v9626, 40
    %v9648 = vpop.permute.xlu0 %9647
    %9649 = vrot.lane.b32.xlu0 %v9633, 40
    %v9650 = vpop.permute.xlu0 %9649
    %9651 = vrot.lane.b32.xlu0 %v9640, 40
    %v9652 = vpop.permute.xlu0 %9651
    %9653 = vrot.lane.b32.xlu0 %v9644, 40
    %v9654 = vpop.permute.xlu0 %9653
    %vm9660 = vcmask 392517
    %9661 = vst.msk [vmem:[#allocation3 - $0x5] sm:$0xe0] %vm9660, %v9646
    %vm9662 = vcmask 392512
    %9663 = vst.msk [vmem:[#allocation3 + $0x3] sm:$0xff] %vm9662, %v9648
    %9664 = vst.msk [vmem:[#allocation3 + $0xb] sm:$0xff] %vm9662, %v9650
    %9665 = vst.msk [vmem:[#allocation3 + $0x13] sm:$0xff] %vm9662, %v9652
    %vm9666 = vcmask 389440
    %9667 = vst.msk [vmem:[#allocation3 + $0x1b] sm:$0x1f] %vm9666, %v9654
    %v9668 = vsel %vm9366, %v9347, %v9251
    %v9669 = vsel %vm9348, %v9353, %v9350
    %v9670 = vsel %vm9351, %v9356, %v9669
    %v9671 = vsel %vm9354, %v9359, %v9670
    %v9672 = vsel %vm9357, %v9362, %v9671
    %v9673 = vsel %vm9360, %v9365, %v9672
    %v9674 = vsel %vm9363, %v9267, %v9673
    %v9675 = vsel %vm9366, %v9368, %v9674
    %v9676 = vsel %vm9348, %v9372, %v9370
    %v9677 = vsel %vm9351, %v9374, %v9676
    %v9678 = vsel %vm9354, %v9376, %v9677
    %v9679 = vsel %vm9357, %v9378, %v9678
    %v9680 = vsel %vm9360, %v9380, %v9679
    %v9681 = vsel %vm9363, %v9283, %v9680
    %v9682 = vsel %vm9366, %v9382, %v9681
    %v9683 = vsel %vm9348, %v9386, %v9384
    %v9684 = vsel %vm9351, %v9388, %v9683
    %v9685 = vsel %vm9354, %v9390, %v9684
    %v9686 = vsel %vm9357, %v9392, %v9685
    %v9687 = vsel %vm9360, %v9394, %v9686
    %v9688 = vsel %vm9363, %v9299, %v9687
    %v9689 = vsel %vm9366, %v9396, %v9688
    %v9690 = vsel %vm9348, %v9400, %v9398
    %v9691 = vsel %vm9351, %v9402, %v9690
    %v9692 = vsel %vm9354, %v9404, %v9691
    %v9693 = vsel %vm9357, %v9406, %v9692
    %v9694 = vsel %vm9360, %v9408, %v9693
    %9695 = vrot.lane.b32.xlu0 %v9668, 48
    %v9696 = vpop.permute.xlu0 %9695
    %9697 = vrot.lane.b32.xlu0 %v9675, 48
    %v9698 = vpop.permute.xlu0 %9697
    %9699 = vrot.lane.b32.xlu0 %v9682, 48
    %v9700 = vpop.permute.xlu0 %9699
    %9701 = vrot.lane.b32.xlu0 %v9689, 48
    %v9702 = vpop.permute.xlu0 %9701
    %9703 = vrot.lane.b32.xlu0 %v9694, 48
    %v9704 = vpop.permute.xlu0 %9703
    %vm9710 = vcmask 458118
    %9711 = vst.msk [vmem:[#allocation3 - $0x6] sm:$0xc0] %vm9710, %v9696
    %vm9712 = vcmask 458112
    %9713 = vst.msk [vmem:[#allocation3 + $0x2] sm:$0xff] %vm9712, %v9698
    %9714 = vst.msk [vmem:[#allocation3 + $0xa] sm:$0xff] %vm9712, %v9700
    %9715 = vst.msk [vmem:[#allocation3 + $0x12] sm:$0xff] %vm9712, %v9702
    %vm9716 = vcmask 456064
    %9717 = vst.msk [vmem:[#allocation3 + $0x1a] sm:$0x3f] %vm9716, %v9704
    %v9718 = vsel %vm9348, %v9350, %v9347
    %v9719 = vsel %vm9351, %v9353, %v9718
    %v9720 = vsel %vm9354, %v9356, %v9719
    %v9721 = vsel %vm9357, %v9359, %v9720
    %v9722 = vsel %vm9360, %v9362, %v9721
    %v9723 = vsel %vm9363, %v9365, %v9722
    %v9724 = vsel %vm9366, %v9267, %v9723
    %v9725 = vsel %vm9348, %v9370, %v9368
    %v9726 = vsel %vm9351, %v9372, %v9725
    %v9727 = vsel %vm9354, %v9374, %v9726
    %v9728 = vsel %vm9357, %v9376, %v9727
    %v9729 = vsel %vm9360, %v9378, %v9728
    %v9730 = vsel %vm9363, %v9380, %v9729
    %v9731 = vsel %vm9366, %v9283, %v9730
    %v9732 = vsel %vm9348, %v9384, %v9382
    %v9733 = vsel %vm9351, %v9386, %v9732
    %v9734 = vsel %vm9354, %v9388, %v9733
    %v9735 = vsel %vm9357, %v9390, %v9734
    %v9736 = vsel %vm9360, %v9392, %v9735
    %v9737 = vsel %vm9363, %v9394, %v9736
    %v9738 = vsel %vm9366, %v9299, %v9737
    %v9739 = vsel %vm9348, %v9398, %v9396
    %v9740 = vsel %vm9351, %v9400, %v9739
    %v9741 = vsel %vm9354, %v9402, %v9740
    %v9742 = vsel %vm9357, %v9404, %v9741
    %v9743 = vsel %vm9360, %v9406, %v9742
    %v9744 = vsel %vm9363, %v9408, %v9743
    %9745 = vrot.lane.b32.xlu0 %v9251, 56
    %v9746 = vpop.permute.xlu0 %9745
    %9747 = vrot.lane.b32.xlu0 %v9724, 56
    %v9748 = vpop.permute.xlu0 %9747
    %9749 = vrot.lane.b32.xlu0 %v9731, 56
    %v9750 = vpop.permute.xlu0 %9749
    %9751 = vrot.lane.b32.xlu0 %v9738, 56
    %v9752 = vpop.permute.xlu0 %9751
    %9753 = vrot.lane.b32.xlu0 %v9744, 56
    %v9754 = vpop.permute.xlu0 %9753
    %vm9760 = vcmask 523719
    %9761 = vst.msk [vmem:[#allocation3 - $0x7] sm:$0x80] %vm9760, %v9746
    %vm9762 = vcmask 523712
    %9763 = vst.msk [vmem:[#allocation3 + $0x1] sm:$0xff] %vm9762, %v9748
    %9764 = vst.msk [vmem:[#allocation3 + $0x9] sm:$0xff] %vm9762, %v9750
    %9765 = vst.msk [vmem:[#allocation3 + $0x11] sm:$0xff] %vm9762, %v9752
    %vm9766 = vcmask 522688
    %9767 = vst.msk [vmem:[#allocation3 + $0x19] sm:$0x7f] %vm9766, %v9754
    %v9800 = vrot.slane %v9254, 7
    %v9801 = vsel %vm9348, %v9800, %v9252
    %v9802 = vrot.slane %v9256, 6
    %v9803 = vsel %vm9351, %v9802, %v9801
    %v9804 = vrot.slane %v9258, 5
    %v9805 = vsel %vm9354, %v9804, %v9803
    %v9806 = vrot.slane %v9260, 4
    %v9807 = vsel %vm9357, %v9806, %v9805
    %v9808 = vrot.slane %v9262, 3
    %v9809 = vsel %vm9360, %v9808, %v9807
    %v9810 = vrot.slane %v9264, 2
    %v9811 = vsel %vm9363, %v9810, %v9809
    %v9812 = vrot.slane %v9266, 1
    %v9813 = vsel %vm9366, %v9812, %v9811
    %v9814 = vrot.slane %v9270, 7
    %v9815 = vsel %vm9348, %v9814, %v9268
    %v9816 = vrot.slane %v9272, 6
    %v9817 = vsel %vm9351, %v9816, %v9815
    %v9818 = vrot.slane %v9274, 5
    %v9819 = vsel %vm9354, %v9818, %v9817
    %v9820 = vrot.slane %v9276, 4
    %v9821 = vsel %vm9357, %v9820, %v9819
    %v9822 = vrot.slane %v9278, 3
    %v9823 = vsel %vm9360, %v9822, %v9821
    %v9824 = vrot.slane %v9280, 2
    %v9825 = vsel %vm9363, %v9824, %v9823
    %v9826 = vrot.slane %v9282, 1
    %v9827 = vsel %vm9366, %v9826, %v9825
    %v9828 = vrot.slane %v9286, 7
    %v9829 = vsel %vm9348, %v9828, %v9284
    %v9830 = vrot.slane %v9288, 6
    %v9831 = vsel %vm9351, %v9830, %v9829
    %v9832 = vrot.slane %v9290, 5
    %v9833 = vsel %vm9354, %v9832, %v9831
    %v9834 = vrot.slane %v9292, 4
    %v9835 = vsel %vm9357, %v9834, %v9833
    %v9836 = vrot.slane %v9294, 3
    %v9837 = vsel %vm9360, %v9836, %v9835
    %v9838 = vrot.slane %v9296, 2
    %v9839 = vsel %vm9363, %v9838, %v9837
    %v9840 = vrot.slane %v9298, 1
    %v9841 = vsel %vm9366, %v9840, %v9839
    %v9842 = vrot.slane %v9302, 7
    %v9843 = vsel %vm9348, %v9842, %v9300
    %v9844 = vrot.slane %v9304, 6
    %v9845 = vsel %vm9351, %v9844, %v9843
    %v9846 = vrot.slane %v9306, 5
    %v9847 = vsel %vm9354, %v9846, %v9845
    %v9848 = vrot.slane %v9308, 4
    %v9849 = vsel %vm9357, %v9848, %v9847
    %v9850 = vrot.slane %v9310, 3
    %v9851 = vsel %vm9360, %v9850, %v9849
    %v9852 = vrot.slane %v9312, 2
    %v9853 = vsel %vm9363, %v9852, %v9851
    %v9854 = vrot.slane %v9314, 1
    %v9855 = vsel %vm9366, %v9854, %v9853
    %9856 = vrot.lane.b32.xlu0 %v9813, 64
    %v9857 = vpop.permute.xlu0 %9856
    %9858 = vrot.lane.b32.xlu0 %v9827, 64
    %v9859 = vpop.permute.xlu0 %9858
    %9860 = vrot.lane.b32.xlu0 %v9841, 64
    %v9861 = vpop.permute.xlu0 %9860
    %9862 = vrot.lane.b32.xlu0 %v9855, 64
    %v9863 = vpop.permute.xlu0 %9862
    %vm9868 = vcmask 589312
    %9869 = vst.msk [vmem:[#allocation3] sm:$0xff] %vm9868, %v9857
    %9870 = vst.msk [vmem:[#allocation3 + $0x8] sm:$0xff] %vm9868, %v9859
    %9871 = vst.msk [vmem:[#allocation3 + $0x10] sm:$0xff] %vm9868, %v9861
    %9872 = vst.msk [vmem:[#allocation3 + $0x18] sm:$0xff] %vm9868, %v9863
    %v9873 = vsel %vm9351, %v9800, %v9252
    %v9874 = vsel %vm9354, %v9802, %v9873
    %v9875 = vsel %vm9357, %v9804, %v9874
    %v9876 = vsel %vm9360, %v9806, %v9875
    %v9877 = vsel %vm9363, %v9808, %v9876
    %v9878 = vsel %vm9366, %v9810, %v9877
    %v9879 = vsel %vm9348, %v9268, %v9812
    %v9880 = vsel %vm9351, %v9814, %v9879
    %v9881 = vsel %vm9354, %v9816, %v9880
    %v9882 = vsel %vm9357, %v9818, %v9881
    %v9883 = vsel %vm9360, %v9820, %v9882
    %v9884 = vsel %vm9363, %v9822, %v9883
    %v9885 = vsel %vm9366, %v9824, %v9884
    %v9886 = vsel %vm9348, %v9284, %v9826
    %v9887 = vsel %vm9351, %v9828, %v9886
    %v9888 = vsel %vm9354, %v9830, %v9887
    %v9889 = vsel %vm9357, %v9832, %v9888
    %v9890 = vsel %vm9360, %v9834, %v9889
    %v9891 = vsel %vm9363, %v9836, %v9890
    %v9892 = vsel %vm9366, %v9838, %v9891
    %v9893 = vsel %vm9348, %v9300, %v9840
    %v9894 = vsel %vm9351, %v9842, %v9893
    %v9895 = vsel %vm9354, %v9844, %v9894
    %v9896 = vsel %vm9357, %v9846, %v9895
    %v9897 = vsel %vm9360, %v9848, %v9896
    %v9898 = vsel %vm9363, %v9850, %v9897
    %v9899 = vsel %vm9366, %v9852, %v9898
    %9900 = vrot.lane.b32.xlu0 %v9878, 72
    %v9901 = vpop.permute.xlu0 %9900
    %9902 = vrot.lane.b32.xlu0 %v9885, 72
    %v9903 = vpop.permute.xlu0 %9902
    %9904 = vrot.lane.b32.xlu0 %v9892, 72
    %v9905 = vpop.permute.xlu0 %9904
    %9906 = vrot.lane.b32.xlu0 %v9899, 72
    %v9907 = vpop.permute.xlu0 %9906
    %9908 = vrot.lane.b32.xlu0 %v9854, 72
    %v9909 = vpop.permute.xlu0 %9908
    %vm9915 = vcmask 654913
    %9916 = vst.msk [vmem:[#allocation3 - $0x1] sm:$0xfe] %vm9915, %v9901
    %vm9917 = vcmask 654912
    %9918 = vst.msk [vmem:[#allocation3 + $0x7] sm:$0xff] %vm9917, %v9903
    %9919 = vst.msk [vmem:[#allocation3 + $0xf] sm:$0xff] %vm9917, %v9905
    %9920 = vst.msk [vmem:[#allocation3 + $0x17] sm:$0xff] %vm9917, %v9907
    %vm9921 = vcmask 647744
    %9922 = vst.msk [vmem:[#allocation3 + $0x1f] sm:$0x1] %vm9921, %v9909
    %v9923 = vsel %vm9354, %v9800, %v9252
    %v9924 = vsel %vm9357, %v9802, %v9923
    %v9925 = vsel %vm9360, %v9804, %v9924
    %v9926 = vsel %vm9363, %v9806, %v9925
    %v9927 = vsel %vm9366, %v9808, %v9926
    %v9928 = vsel %vm9348, %v9812, %v9810
    %v9929 = vsel %vm9351, %v9268, %v9928
    %v9930 = vsel %vm9354, %v9814, %v9929
    %v9931 = vsel %vm9357, %v9816, %v9930
    %v9932 = vsel %vm9360, %v9818, %v9931
    %v9933 = vsel %vm9363, %v9820, %v9932
    %v9934 = vsel %vm9366, %v9822, %v9933
    %v9935 = vsel %vm9348, %v9826, %v9824
    %v9936 = vsel %vm9351, %v9284, %v9935
    %v9937 = vsel %vm9354, %v9828, %v9936
    %v9938 = vsel %vm9357, %v9830, %v9937
    %v9939 = vsel %vm9360, %v9832, %v9938
    %v9940 = vsel %vm9363, %v9834, %v9939
    %v9941 = vsel %vm9366, %v9836, %v9940
    %v9942 = vsel %vm9348, %v9840, %v9838
    %v9943 = vsel %vm9351, %v9300, %v9942
    %v9944 = vsel %vm9354, %v9842, %v9943
    %v9945 = vsel %vm9357, %v9844, %v9944
    %v9946 = vsel %vm9360, %v9846, %v9945
    %v9947 = vsel %vm9363, %v9848, %v9946
    %v9948 = vsel %vm9366, %v9850, %v9947
    %v9949 = vsel %vm9348, %v9854, %v9852
    %9950 = vrot.lane.b32.xlu0 %v9927, 80
    %v9951 = vpop.permute.xlu0 %9950
    %9952 = vrot.lane.b32.xlu0 %v9934, 80
    %v9953 = vpop.permute.xlu0 %9952
    %9954 = vrot.lane.b32.xlu0 %v9941, 80
    %v9955 = vpop.permute.xlu0 %9954
    %9956 = vrot.lane.b32.xlu0 %v9948, 80
    %v9957 = vpop.permute.xlu0 %9956
    %9958 = vrot.lane.b32.xlu0 %v9949, 80
    %v9959 = vpop.permute.xlu0 %9958
    %vm9965 = vcmask 720514
    %9966 = vst.msk [vmem:[#allocation3 - $0x2] sm:$0xfc] %vm9965, %v9951
    %vm9967 = vcmask 720512
    %9968 = vst.msk [vmem:[#allocation3 + $0x6] sm:$0xff] %vm9967, %v9953
    %9969 = vst.msk [vmem:[#allocation3 + $0xe] sm:$0xff] %vm9967, %v9955
    %9970 = vst.msk [vmem:[#allocation3 + $0x16] sm:$0xff] %vm9967, %v9957
    %vm9971 = vcmask 714368
    %9972 = vst.msk [vmem:[#allocation3 + $0x1e] sm:$0x3] %vm9971, %v9959
    %v9973 = vsel %vm9357, %v9800, %v9252
    %v9974 = vsel %vm9360, %v9802, %v9973
    %v9975 = vsel %vm9363, %v9804, %v9974
    %v9976 = vsel %vm9366, %v9806, %v9975
    %v9977 = vsel %vm9348, %v9810, %v9808
    %v9978 = vsel %vm9351, %v9812, %v9977
    %v9979 = vsel %vm9354, %v9268, %v9978
    %v9980 = vsel %vm9357, %v9814, %v9979
    %v9981 = vsel %vm9360, %v9816, %v9980
    %v9982 = vsel %vm9363, %v9818, %v9981
    %v9983 = vsel %vm9366, %v9820, %v9982
    %v9984 = vsel %vm9348, %v9824, %v9822
    %v9985 = vsel %vm9351, %v9826, %v9984
    %v9986 = vsel %vm9354, %v9284, %v9985
    %v9987 = vsel %vm9357, %v9828, %v9986
    %v9988 = vsel %vm9360, %v9830, %v9987
    %v9989 = vsel %vm9363, %v9832, %v9988
    %v9990 = vsel %vm9366, %v9834, %v9989
    %v9991 = vsel %vm9348, %v9838, %v9836
    %v9992 = vsel %vm9351, %v9840, %v9991
    %v9993 = vsel %vm9354, %v9300, %v9992
    %v9994 = vsel %vm9357, %v9842, %v9993
    %v9995 = vsel %vm9360, %v9844, %v9994
    %v9996 = vsel %vm9363, %v9846, %v9995
    %v9997 = vsel %vm9366, %v9848, %v9996
    %v9998 = vsel %vm9348, %v9852, %v9850
    %v9999 = vsel %vm9351, %v9854, %v9998
    %10000 = vrot.lane.b32.xlu0 %v9976, 88
    %v10001 = vpop.permute.xlu0 %10000
    %10002 = vrot.lane.b32.xlu0 %v9983, 88
    %v10003 = vpop.permute.xlu0 %10002
    %10004 = vrot.lane.b32.xlu0 %v9990, 88
    %v10005 = vpop.permute.xlu0 %10004
    %10006 = vrot.lane.b32.xlu0 %v9997, 88
    %v10007 = vpop.permute.xlu0 %10006
    %10008 = vrot.lane.b32.xlu0 %v9999, 88
    %v10009 = vpop.permute.xlu0 %10008
    %vm10015 = vcmask 786115
    %10016 = vst.msk [vmem:[#allocation3 - $0x3] sm:$0xf8] %vm10015, %v10001
    %vm10017 = vcmask 786112
    %10018 = vst.msk [vmem:[#allocation3 + $0x5] sm:$0xff] %vm10017, %v10003
    %10019 = vst.msk [vmem:[#allocation3 + $0xd] sm:$0xff] %vm10017, %v10005
    %10020 = vst.msk [vmem:[#allocation3 + $0x15] sm:$0xff] %vm10017, %v10007
    %vm10021 = vcmask 780992
    %10022 = vst.msk [vmem:[#allocation3 + $0x1d] sm:$0x7] %vm10021, %v10009
    %v10023 = vsel %vm9360, %v9800, %v9252
    %v10024 = vsel %vm9363, %v9802, %v10023
    %v10025 = vsel %vm9366, %v9804, %v10024
    %v10026 = vsel %vm9348, %v9808, %v9806
    %v10027 = vsel %vm9351, %v9810, %v10026
    %v10028 = vsel %vm9354, %v9812, %v10027
    %v10029 = vsel %vm9357, %v9268, %v10028
    %v10030 = vsel %vm9360, %v9814, %v10029
    %v10031 = vsel %vm9363, %v9816, %v10030
    %v10032 = vsel %vm9366, %v9818, %v10031
    %v10033 = vsel %vm9348, %v9822, %v9820
    %v10034 = vsel %vm9351, %v9824, %v10033
    %v10035 = vsel %vm9354, %v9826, %v10034
    %v10036 = vsel %vm9357, %v9284, %v10035
    %v10037 = vsel %vm9360, %v9828, %v10036
    %v10038 = vsel %vm9363, %v9830, %v10037
    %v10039 = vsel %vm9366, %v9832, %v10038
    %v10040 = vsel %vm9348, %v9836, %v9834
    %v10041 = vsel %vm9351, %v9838, %v10040
    %v10042 = vsel %vm9354, %v9840, %v10041
    %v10043 = vsel %vm9357, %v9300, %v10042
    %v10044 = vsel %vm9360, %v9842, %v10043
    %v10045 = vsel %vm9363, %v9844, %v10044
    %v10046 = vsel %vm9366, %v9846, %v10045
    %v10047 = vsel %vm9348, %v9850, %v9848
    %v10048 = vsel %vm9351, %v9852, %v10047
    %v10049 = vsel %vm9354, %v9854, %v10048
    %10050 = vrot.lane.b32.xlu0 %v10025, 96
    %v10051 = vpop.permute.xlu0 %10050
    %10052 = vrot.lane.b32.xlu0 %v10032, 96
    %v10053 = vpop.permute.xlu0 %10052
    %10054 = vrot.lane.b32.xlu0 %v10039, 96
    %v10055 = vpop.permute.xlu0 %10054
    %10056 = vrot.lane.b32.xlu0 %v10046, 96
    %v10057 = vpop.permute.xlu0 %10056
    %10058 = vrot.lane.b32.xlu0 %v10049, 96
    %v10059 = vpop.permute.xlu0 %10058
    %vm10065 = vcmask 851716
    %10066 = vst.msk [vmem:[#allocation3 - $0x4] sm:$0xf0] %vm10065, %v10051
    %vm10067 = vcmask 851712
    %10068 = vst.msk [vmem:[#allocation3 + $0x4] sm:$0xff] %vm10067, %v10053
    %10069 = vst.msk [vmem:[#allocation3 + $0xc] sm:$0xff] %vm10067, %v10055
    %10070 = vst.msk [vmem:[#allocation3 + $0x14] sm:$0xff] %vm10067, %v10057
    %vm10071 = vcmask 847616
    %10072 = vst.msk [vmem:[#allocation3 + $0x1c] sm:$0xf] %vm10071, %v10059
    %v10073 = vsel %vm9363, %v9800, %v9252
    %v10074 = vsel %vm9366, %v9802, %v10073
    %v10075 = vsel %vm9348, %v9806, %v9804
    %v10076 = vsel %vm9351, %v9808, %v10075
    %v10077 = vsel %vm9354, %v9810, %v10076
    %v10078 = vsel %vm9357, %v9812, %v10077
    %v10079 = vsel %vm9360, %v9268, %v10078
    %v10080 = vsel %vm9363, %v9814, %v10079
    %v10081 = vsel %vm9366, %v9816, %v10080
    %v10082 = vsel %vm9348, %v9820, %v9818
    %v10083 = vsel %vm9351, %v9822, %v10082
    %v10084 = vsel %vm9354, %v9824, %v10083
    %v10085 = vsel %vm9357, %v9826, %v10084
    %v10086 = vsel %vm9360, %v9284, %v10085
    %v10087 = vsel %vm9363, %v9828, %v10086
    %v10088 = vsel %vm9366, %v9830, %v10087
    %v10089 = vsel %vm9348, %v9834, %v9832
    %v10090 = vsel %vm9351, %v9836, %v10089
    %v10091 = vsel %vm9354, %v9838, %v10090
    %v10092 = vsel %vm9357, %v9840, %v10091
    %v10093 = vsel %vm9360, %v9300, %v10092
    %v10094 = vsel %vm9363, %v9842, %v10093
    %v10095 = vsel %vm9366, %v9844, %v10094
    %v10096 = vsel %vm9348, %v9848, %v9846
    %v10097 = vsel %vm9351, %v9850, %v10096
    %v10098 = vsel %vm9354, %v9852, %v10097
    %v10099 = vsel %vm9357, %v9854, %v10098
    %10100 = vrot.lane.b32.xlu0 %v10074, 104
    %v10101 = vpop.permute.xlu0 %10100
    %10102 = vrot.lane.b32.xlu0 %v10081, 104
    %v10103 = vpop.permute.xlu0 %10102
    %10104 = vrot.lane.b32.xlu0 %v10088, 104
    %v10105 = vpop.permute.xlu0 %10104
    %10106 = vrot.lane.b32.xlu0 %v10095, 104
    %v10107 = vpop.permute.xlu0 %10106
    %10108 = vrot.lane.b32.xlu0 %v10099, 104
    %v10109 = vpop.permute.xlu0 %10108
    %vm10115 = vcmask 917317
    %10116 = vst.msk [vmem:[#allocation3 - $0x5] sm:$0xe0] %vm10115, %v10101
    %vm10117 = vcmask 917312
    %10118 = vst.msk [vmem:[#allocation3 + $0x3] sm:$0xff] %vm10117, %v10103
    %10119 = vst.msk [vmem:[#allocation3 + $0xb] sm:$0xff] %vm10117, %v10105
    %10120 = vst.msk [vmem:[#allocation3 + $0x13] sm:$0xff] %vm10117, %v10107
    %vm10121 = vcmask 914240
    %10122 = vst.msk [vmem:[#allocation3 + $0x1b] sm:$0x1f] %vm10121, %v10109
    %v10123 = vsel %vm9366, %v9800, %v9252
    %v10124 = vsel %vm9348, %v9804, %v9802
    %v10125 = vsel %vm9351, %v9806, %v10124
    %v10126 = vsel %vm9354, %v9808, %v10125
    %v10127 = vsel %vm9357, %v9810, %v10126
    %v10128 = vsel %vm9360, %v9812, %v10127
    %v10129 = vsel %vm9363, %v9268, %v10128
    %v10130 = vsel %vm9366, %v9814, %v10129
    %v10131 = vsel %vm9348, %v9818, %v9816
    %v10132 = vsel %vm9351, %v9820, %v10131
    %v10133 = vsel %vm9354, %v9822, %v10132
    %v10134 = vsel %vm9357, %v9824, %v10133
    %v10135 = vsel %vm9360, %v9826, %v10134
    %v10136 = vsel %vm9363, %v9284, %v10135
    %v10137 = vsel %vm9366, %v9828, %v10136
    %v10138 = vsel %vm9348, %v9832, %v9830
    %v10139 = vsel %vm9351, %v9834, %v10138
    %v10140 = vsel %vm9354, %v9836, %v10139
    %v10141 = vsel %vm9357, %v9838, %v10140
    %v10142 = vsel %vm9360, %v9840, %v10141
    %v10143 = vsel %vm9363, %v9300, %v10142
    %v10144 = vsel %vm9366, %v9842, %v10143
    %v10145 = vsel %vm9348, %v9846, %v9844
    %v10146 = vsel %vm9351, %v9848, %v10145
    %v10147 = vsel %vm9354, %v9850, %v10146
    %v10148 = vsel %vm9357, %v9852, %v10147
    %v10149 = vsel %vm9360, %v9854, %v10148
    %10150 = vrot.lane.b32.xlu0 %v10123, 112
    %v10151 = vpop.permute.xlu0 %10150
    %10152 = vrot.lane.b32.xlu0 %v10130, 112
    %v10153 = vpop.permute.xlu0 %10152
    %10154 = vrot.lane.b32.xlu0 %v10137, 112
    %v10155 = vpop.permute.xlu0 %10154
    %10156 = vrot.lane.b32.xlu0 %v10144, 112
    %v10157 = vpop.permute.xlu0 %10156
    %10158 = vrot.lane.b32.xlu0 %v10149, 112
    %v10159 = vpop.permute.xlu0 %10158
    %vm10165 = vcmask 982918
    %10166 = vst.msk [vmem:[#allocation3 - $0x6] sm:$0xc0] %vm10165, %v10151
    %vm10167 = vcmask 982912
    %10168 = vst.msk [vmem:[#allocation3 + $0x2] sm:$0xff] %vm10167, %v10153
    %10169 = vst.msk [vmem:[#allocation3 + $0xa] sm:$0xff] %vm10167, %v10155
    %10170 = vst.msk [vmem:[#allocation3 + $0x12] sm:$0xff] %vm10167, %v10157
    %vm10171 = vcmask 980864
    %10172 = vst.msk [vmem:[#allocation3 + $0x1a] sm:$0x3f] %vm10171, %v10159
    %v10173 = vsel %vm9348, %v9802, %v9800
    %v10174 = vsel %vm9351, %v9804, %v10173
    %v10175 = vsel %vm9354, %v9806, %v10174
    %v10176 = vsel %vm9357, %v9808, %v10175
    %v10177 = vsel %vm9360, %v9810, %v10176
    %v10178 = vsel %vm9363, %v9812, %v10177
    %v10179 = vsel %vm9366, %v9268, %v10178
    %v10180 = vsel %vm9348, %v9816, %v9814
    %v10181 = vsel %vm9351, %v9818, %v10180
    %v10182 = vsel %vm9354, %v9820, %v10181
    %v10183 = vsel %vm9357, %v9822, %v10182
    %v10184 = vsel %vm9360, %v9824, %v10183
    %v10185 = vsel %vm9363, %v9826, %v10184
    %v10186 = vsel %vm9366, %v9284, %v10185
    %v10187 = vsel %vm9348, %v9830, %v9828
    %v10188 = vsel %vm9351, %v9832, %v10187
    %v10189 = vsel %vm9354, %v9834, %v10188
    %v10190 = vsel %vm9357, %v9836, %v10189
    %v10191 = vsel %vm9360, %v9838, %v10190
    %v10192 = vsel %vm9363, %v9840, %v10191
    %v10193 = vsel %vm9366, %v9300, %v10192
    %v10194 = vsel %vm9348, %v9844, %v9842
    %v10195 = vsel %vm9351, %v9846, %v10194
    %v10196 = vsel %vm9354, %v9848, %v10195
    %v10197 = vsel %vm9357, %v9850, %v10196
    %v10198 = vsel %vm9360, %v9852, %v10197
    %v10199 = vsel %vm9363, %v9854, %v10198
    %10200 = vrot.lane.b32.xlu0 %v9252, 120
    %v10201 = vpop.permute.xlu0 %10200
    %10202 = vrot.lane.b32.xlu0 %v10179, 120
    %v10203 = vpop.permute.xlu0 %10202
    %10204 = vrot.lane.b32.xlu0 %v10186, 120
    %v10205 = vpop.permute.xlu0 %10204
    %10206 = vrot.lane.b32.xlu0 %v10193, 120
    %v10207 = vpop.permute.xlu0 %10206
    %10208 = vrot.lane.b32.xlu0 %v10199, 120
    %v10209 = vpop.permute.xlu0 %10208
    %vm10215 = vcmask 1048519
    %10216 = vst.msk [vmem:[#allocation3 - $0x7] sm:$0x80] %vm10215, %v10201
    %vm10217 = vcmask 1048512
    %10218 = vst.msk [vmem:[#allocation3 + $0x1] sm:$0xff] %vm10217, %v10203
    %10219 = vst.msk [vmem:[#allocation3 + $0x9] sm:$0xff] %vm10217, %v10205
    %10220 = vst.msk [vmem:[#allocation3 + $0x11] sm:$0xff] %vm10217, %v10207
    %vm10221 = vcmask 1047488
    %10222 = vst.msk [vmem:[#allocation3 + $0x19] sm:$0x7f] %vm10221, %v10209
    // Predicated region
    $region30: #{tpu_custom_call.1} parent=1 // pred_check
      _
    $region31: #{tpu_custom_call.1} parent=1 // pred_check_branch
      %10224 = sbr.rel (0) target = $region33
    $region32: #{tpu_custom_call.1} parent=1 // pred_region
      %s10226 = ssub.s32 512, 512
      %10227 = vsyncadd [#allocation4], %s10226
      %s10228 = sshll.u32 [#allocation3], 4
      %s10229 = int_to_ptr.vmem [resolvable:$true] %s10228
      %10234 = dma.vmem_to_hbm [thread:$0]  %s10229, 512, %s7, [#allocation4], 128, 128, 8
    $region33: #{tpu_custom_call.1} parent=1 // pred_fallthru
      _
    // Predicated region
    $region34: #{tpu_custom_call.1} parent=1 // pred_check
      _
    $region35: #{tpu_custom_call.1} parent=1 // pred_check_branch
      %10236 = sbr.rel (0) target = $region37
    $region36: #{tpu_custom_call.1} parent=1 // pred_region
      %10237 = dma.done [#allocation4], 512
    $region37: #{tpu_custom_call.1} parent=1 // pred_fallthru
      _
    %10238 = vsyncpa [#allocation4], 1

</llo_original>
